<compile_context>
chip_gen: v6e
topology: v6e:2x2x1
jax: 0.10.0
libtpu: 0.0.40
codegen_flags: <defaults>
</compile_context>

<pallas_src>
import jax
import jax.numpy as jnp
from jax import lax
from jax.experimental import pallas as pl
from jax.experimental.pallas import tpu as pltpu

VSPEC = pl.BlockSpec(memory_space=pltpu.MemorySpace.VMEM)
LANE = 128


# ----------------------------------------------------------------------------
# Weight packing helpers (run once, outside jit)
# ----------------------------------------------------------------------------
def _round_up(x, m):
    return ((x + m - 1) // m) * m


def _pad2(x, rows, cols):
    r, c = x.shape
    return jnp.pad(x, ((0, rows - r), (0, cols - c)))


def _gate_pack(w, n_gates, H, HP, in_rows):
    """torch [n_gates*H, In] -> transposed, per-gate 128-lane padded [in_rows, n_gates*HP]."""
    In = w.shape[1]
    blocks = [_pad2(w[g * H:(g + 1) * H, :].T, In, HP) for g in range(n_gates)]
    return _pad2(jnp.concatenate(blocks, axis=1), in_rows, n_gates * HP)


def _gate_bias(b, n_gates, H, HP):
    blocks = [jnp.pad(b[g * H:(g + 1) * H], (0, HP - H)) for g in range(n_gates)]
    return jnp.concatenate(blocks, axis=0).reshape(1, n_gates * HP)


# ----------------------------------------------------------------------------
# The fused Pallas kernel
# ----------------------------------------------------------------------------
def _make_vae_kernel(S, B, HP, LATP, L):
    def kernel(*refs):
        it = iter(refs)
        # ---- inputs -------------------------------------------------------
        emb_ref = next(it)        # [S*B, E]   raw embeddings, time-major flat
        sos_ref = next(it)        # [B, E]     raw sos embedding (not normed)
        ln_g_ref = next(it)       # [1, E]
        ln_b_ref = next(it)       # [1, E]
        enc = [(next(it), next(it), next(it)) for _ in range(L)]       # wih, whh, bias
        heads_w_ref = next(it)    # [HP, 2*LATP]   ([mu_s|mu_c|pad] | [lv_s|lv_c|pad])
        heads_b_ref = next(it)    # [1, 2*LATP]
        eps_ref = next(it)        # [L*B, LATP]    padded eps (zeros in padding)
        fc_w_ref = next(it)       # [LATP, HP]
        fc_b_ref = next(it)       # [1, HP]
        dec = [(next(it), next(it), next(it), next(it)) for _ in range(L)]  # wih, whh, bih, bhh
        out_w_ref = next(it)      # [HP, VP]
        out_b_ref = next(it)      # [1, VP]
        # ---- outputs ------------------------------------------------------
        heads_out_ref = next(it)  # [L*B, 2*LATP]
        lat_out_ref = next(it)    # [L*B, LATP]   (style | content | zeros)
        logits_ref = next(it)     # [S*B, VP]
        # ---- scratch ------------------------------------------------------
        xseq_sc = next(it)        # [S*B, HP]  layer-to-layer hidden sequence
        din_sc = next(it)         # [S*B, E]   decoder input assembly
        hn_sc = next(it)          # [L*B, HP]  per-layer final hidden states

        f32 = jnp.float32

        # LayerNorm over the embedding dim (eps = 1e-5, biased variance).
        x = emb_ref[...]
        mean = jnp.mean(x, axis=-1, keepdims=True)
        var = jnp.mean((x - mean) ** 2, axis=-1, keepdims=True)
        xln = (x - mean) * lax.rsqrt(var + 1e-5) * ln_g_ref[...] + ln_b_ref[...]

        # ---- encoder LSTM stack ------------------------------------------
        # Hoisted sequence-level input projection; only h @ Whh per serial step.
        x_cur = xln
        for l in range(L):
            wih_ref, whh_ref, b_ref = enc[l]
            whh = whh_ref[...]
            gi = jnp.dot(x_cur, wih_ref[...], preferred_element_type=f32) + b_ref[...]
            h = jnp.zeros((B, HP), f32)
            c = jnp.zeros((B, HP), f32)
            for t in range(S):
                gates = gi[t * B:(t + 1) * B, :] + jnp.dot(
                    h, whh, preferred_element_type=f32)
                i_g = jax.nn.sigmoid(gates[:, 0 * HP:1 * HP])   # vreg-aligned slices
                f_g = jax.nn.sigmoid(gates[:, 1 * HP:2 * HP])
                g_g = jnp.tanh(gates[:, 2 * HP:3 * HP])
                o_g = jax.nn.sigmoid(gates[:, 3 * HP:4 * HP])
                c = f_g * c + i_g * g_g
                h = o_g * jnp.tanh(c)
                if l + 1 < L:
                    xseq_sc[t * B:(t + 1) * B, :] = h
            hn_sc[l * B:(l + 1) * B, :] = h
            if l + 1 < L:
                x_cur = xseq_sc[...]

        # ---- fused latent heads + reparametrization + fc ------------------
        hn = hn_sc[...]                                              # [L*B, HP]
        heads = jnp.dot(hn, heads_w_ref[...], preferred_element_type=f32) + heads_b_ref[...]
        heads_out_ref[...] = heads
        mu = heads[:, 0:LATP]                                        # vreg-aligned
        logvar = heads[:, LATP:2 * LATP]                             # vreg-aligned
        z = mu + eps_ref[...] * jnp.exp(0.5 * logvar)                # [style|content|0]
        lat_out_ref[...] = z                                         # lane-dense store
        z0 = jnp.dot(z, fc_w_ref[...], preferred_element_type=f32) + fc_b_ref[...]

        # ---- decoder input: raw sos embedding, then normed embs, drop last
        din_sc[0:B, :] = sos_ref[...]
        din_sc[B:S * B, :] = xln[0:(S - 1) * B, :]
        x_cur = din_sc[...]

        # ---- decoder GRU stack (single full pass == torch prefix loop) ----
        for l in range(L):
            wih_ref, whh_ref, bih_ref, bhh_ref = dec[l]
            whh = whh_ref[...]
            bhh = bhh_ref[...]
            gi = jnp.dot(x_cur, wih_ref[...], preferred_element_type=f32) + bih_ref[...]
            h = z0[l * B:(l + 1) * B, :]
            for t in range(S):
                gh = jnp.dot(h, whh, preferred_element_type=f32) + bhh
                gi_t = gi[t * B:(t + 1) * B, :]
                r_g = jax.nn.sigmoid(gi_t[:, 0 * HP:1 * HP] + gh[:, 0 * HP:1 * HP])
                u_g = jax.nn.sigmoid(gi_t[:, 1 * HP:2 * HP] + gh[:, 1 * HP:2 * HP])
                n_g = jnp.tanh(gi_t[:, 2 * HP:3 * HP] + r_g * gh[:, 2 * HP:3 * HP])
                h = (1.0 - u_g) * n_g + u_g * h
                xseq_sc[t * B:(t + 1) * B, :] = h
            x_cur = xseq_sc[...]

        # ---- vocab projection (lane-dense, padded to VP) ------------------
        logits_ref[...] = (
            jnp.dot(x_cur, out_w_ref[...], preferred_element_type=f32) + out_b_ref[...]
        )

    return kernel


# ----------------------------------------------------------------------------
# Parameters (deterministic, synthetic — mirrors the PyTorch module layout)
# ----------------------------------------------------------------------------
def init_params(key, vocab_size, emb_dim, hidden_dim, style_dim, content_dim,
                num_layers):
    latent_dim = style_dim + content_dim
    keys = iter(jax.random.split(key, 64))

    def rnd(shape, scale=0.1):
        return (scale * jax.random.normal(next(keys), shape)).astype(jnp.float32)

    p = {
        "embedding": rnd((vocab_size, emb_dim), 1.0),
        "ln_gamma": jnp.ones((emb_dim,), jnp.float32),
        "ln_beta": jnp.zeros((emb_dim,), jnp.float32),
        "fcmu_s_w": rnd((style_dim, hidden_dim)), "fcmu_s_b": rnd((style_dim,)),
        "fcvar_s_w": rnd((style_dim, hidden_dim)), "fcvar_s_b": rnd((style_dim,)),
        "fcmu_c_w": rnd((content_dim, hidden_dim)), "fcmu_c_b": rnd((content_dim,)),
        "fcvar_c_w": rnd((content_dim, hidden_dim)), "fcvar_c_b": rnd((content_dim,)),
        "fc_w": rnd((hidden_dim, latent_dim)), "fc_b": rnd((hidden_dim,)),
        "fc_out_w": rnd((vocab_size, hidden_dim)), "fc_out_b": rnd((vocab_size,)),
        "sos_token": jnp.array([1], dtype=jnp.int32),
    }
    for l in range(num_layers):
        in_dim = emb_dim if l == 0 else hidden_dim
        p[f"enc_wih_{l}"] = rnd((4 * hidden_dim, in_dim))
        p[f"enc_whh_{l}"] = rnd((4 * hidden_dim, hidden_dim))
        p[f"enc_bih_{l}"] = rnd((4 * hidden_dim,))
        p[f"enc_bhh_{l}"] = rnd((4 * hidden_dim,))
        p[f"dec_wih_{l}"] = rnd((3 * hidden_dim, in_dim))
        p[f"dec_whh_{l}"] = rnd((3 * hidden_dim, hidden_dim))
        p[f"dec_bih_{l}"] = rnd((3 * hidden_dim,))
        p[f"dec_bhh_{l}"] = rnd((3 * hidden_dim,))
    return p


def prepare_params(params, *, hidden_dim, style_dim, content_dim, num_layers):
    """One-time (outside jit) transpose / gate-pack / pad of all weights."""
    H = hidden_dim
    HP = _round_up(H, LANE)
    SD, CD = style_dim, content_dim
    LAT = SD + CD
    LATP = _round_up(LAT, LANE)
    E = params["embedding"].shape[1]
    V = params["fc_out_w"].shape[0]
    VP = _round_up(V, LANE)

    prep = {
        "embedding": params["embedding"],
        "sos_vec": params["embedding"][params["sos_token"][0]].reshape(1, E),
        "ln_g": params["ln_gamma"].reshape(1, E),
        "ln_b": params["ln_beta"].reshape(1, E),
        "enc": [],
        "dec": [],
    }
    for l in range(num_layers):
        in_rows = E if l == 0 else HP
        prep["enc"].append((
            _gate_pack(params[f"enc_wih_{l}"], 4, H, HP, in_rows),
            _gate_pack(params[f"enc_whh_{l}"], 4, H, HP, HP),
            _gate_bias(params[f"enc_bih_{l}"] + params[f"enc_bhh_{l}"], 4, H, HP),
        ))
        prep["dec"].append((
            _gate_pack(params[f"dec_wih_{l}"], 3, H, HP, in_rows),
            _gate_pack(params[f"dec_whh_{l}"], 3, H, HP, HP),
            _gate_bias(params[f"dec_bih_{l}"], 3, H, HP),
            _gate_bias(params[f"dec_bhh_{l}"], 3, H, HP),
        ))
    # Fused latent heads: [ mu_s | mu_c | pad->LATP | logvar_s | logvar_c | pad->LATP ]
    mu_w = jnp.concatenate([params["fcmu_s_w"].T, params["fcmu_c_w"].T], axis=1)   # [H, LAT]
    var_w = jnp.concatenate([params["fcvar_s_w"].T, params["fcvar_c_w"].T], axis=1)
    prep["heads_w"] = jnp.concatenate(
        [_pad2(mu_w, HP, LATP), _pad2(var_w, HP, LATP)], axis=1)                   # [HP, 2*LATP]
    mu_b = jnp.pad(jnp.concatenate([params["fcmu_s_b"], params["fcmu_c_b"]]),
                   (0, LATP - LAT))
    var_b = jnp.pad(jnp.concatenate([params["fcvar_s_b"], params["fcvar_c_b"]]),
                    (0, LATP - LAT))
    prep["heads_b"] = jnp.concatenate([mu_b, var_b]).reshape(1, 2 * LATP)
    prep["fc_w"] = _pad2(params["fc_w"].T, LATP, HP)
    prep["fc_b"] = jnp.pad(params["fc_b"], (0, HP - H)).reshape(1, HP)
    prep["out_w"] = _pad2(params["fc_out_w"].T, HP, VP)
    prep["out_b"] = jnp.pad(params["fc_out_b"], (0, VP - V)).reshape(1, VP)
    return prep


def _draw_eps(rng_key, L, B, SD, CD):
    k_s, k_c = jax.random.split(rng_key)
    eps_s = jax.random.normal(k_s, (L, B, SD), jnp.float32)
    eps_c = jax.random.normal(k_c, (L, B, CD), jnp.float32)
    return eps_s, eps_c


# ----------------------------------------------------------------------------
# Forward pass (matches LSTMVAE.forward semantics)
# ----------------------------------------------------------------------------
def lstmvae_forward(prep, x_tokens, rng_key, *, hidden_dim, style_dim,
                    content_dim, num_layers):
    B, S = x_tokens.shape
    E = prep["ln_g"].shape[1]
    SD, CD = style_dim, content_dim
    LAT = SD + CD
    L = num_layers
    LATP = prep["fc_w"].shape[0]
    HP = prep["fc_w"].shape[1]
    HEADS_P = prep["heads_w"].shape[1]
    VP = prep["out_w"].shape[1]
    V = prep["embedding"].shape[0]

    # Embedding gather (frozen table lookup) kept as JAX glue.
    emb = jnp.take(prep["embedding"], x_tokens, axis=0)                 # [B, S, E]
    emb_flat = jnp.transpose(emb, (1, 0, 2)).reshape(S * B, E)          # row = t*B + b
    sos = jnp.broadcast_to(prep["sos_vec"], (B, E))

    eps_s, eps_c = _draw_eps(rng_key, L, B, SD, CD)
    eps = jnp.concatenate([eps_s, eps_c], axis=-1).reshape(L * B, LAT)
    eps_p = jnp.pad(eps, ((0, 0), (0, LATP - LAT)))                     # zeros in pad lanes

    inputs = [emb_flat, sos, prep["ln_g"], prep["ln_b"]]
    for l in range(L):
        inputs.extend(prep["enc"][l])
    inputs += [prep["heads_w"], prep["heads_b"], eps_p, prep["fc_w"], prep["fc_b"]]
    for l in range(L):
        inputs.extend(prep["dec"][l])
    inputs += [prep["out_w"], prep["out_b"]]

    kernel = _make_vae_kernel(S, B, HP, LATP, L)
    heads, z_pre, logits_p = pl.pallas_call(
        kernel,
        out_shape=(
            jax.ShapeDtypeStruct((L * B, HEADS_P), jnp.float32),
            jax.ShapeDtypeStruct((L * B, LATP), jnp.float32),
            jax.ShapeDtypeStruct((S * B, VP), jnp.float32),
        ),
        in_specs=[VSPEC] * len(inputs),
        out_specs=(VSPEC, VSPEC, VSPEC),
        scratch_shapes=[
            pltpu.VMEM((S * B, HP), jnp.float32),
            pltpu.VMEM((S * B, E), jnp.float32),
            pltpu.VMEM((L * B, HP), jnp.float32),
        ],
    )(*inputs)

    # Un-pad / reshape back to the PyTorch output layout (tiny JAX slices).
    mu_s = heads[:, 0:SD].reshape(L, B, SD)
    mu_c = heads[:, SD:LAT].reshape(L, B, CD)
    logvar_s = heads[:, LATP:LATP + SD].reshape(L, B, SD)
    logvar_c = heads[:, LATP + SD:LATP + LAT].reshape(L, B, CD)
    style = z_pre[:, 0:SD].reshape(L, B, SD)
    content = z_pre[:, SD:LAT].reshape(L, B, CD)
    logits = logits_p[:, 0:V].reshape(S, B, V).transpose(1, 0, 2)       # [B, S, V]
    return logits, style, content, mu_s, logvar_s, mu_c, logvar_c


# ----------------------------------------------------------------------------
# Pure-JAX reference (numerics check only)
# ----------------------------------------------------------------------------
def reference_forward(params, x_tokens, rng_key, *, hidden_dim, style_dim,
                      content_dim, num_layers):
    with jax.default_matmul_precision("float32"):
        B, S = x_tokens.shape
        E = params["embedding"].shape[1]
        H = hidden_dim
        L = num_layers

        emb = jnp.take(params["embedding"], x_tokens, axis=0)
        mean = jnp.mean(emb, -1, keepdims=True)
        var = jnp.mean((emb - mean) ** 2, -1, keepdims=True)
        xln = (emb - mean) / jnp.sqrt(var + 1e-5) * params["ln_gamma"] + params["ln_beta"]

        x = xln
        hns = []
        for l in range(L):
            wih, whh = params[f"enc_wih_{l}"], params[f"enc_whh_{l}"]
            b = params[f"enc_bih_{l}"] + params[f"enc_bhh_{l}"]
            h = jnp.zeros((B, H)); c = jnp.zeros((B, H))
            outs = []
            for t in range(S):
                gates = x[:, t, :] @ wih.T + h @ whh.T + b
                i = jax.nn.sigmoid(gates[:, :H]); f = jax.nn.sigmoid(gates[:, H:2 * H])
                g = jnp.tanh(gates[:, 2 * H:3 * H]); o = jax.nn.sigmoid(gates[:, 3 * H:])
                c = f * c + i * g
                h = o * jnp.tanh(c)
                outs.append(h)
            x = jnp.stack(outs, axis=1)
            hns.append(h)
        hn = jnp.stack(hns, axis=0)

        mu_s = hn @ params["fcmu_s_w"].T + params["fcmu_s_b"]
        logvar_s = hn @ params["fcvar_s_w"].T + params["fcvar_s_b"]
        mu_c = hn @ params["fcmu_c_w"].T + params["fcmu_c_b"]
        logvar_c = hn @ params["fcvar_c_w"].T + params["fcvar_c_b"]

        eps_s, eps_c = _draw_eps(rng_key, L, B, style_dim, content_dim)
        style = mu_s + eps_s * jnp.exp(0.5 * logvar_s)
        content = mu_c + eps_c * jnp.exp(0.5 * logvar_c)
        z = jnp.concatenate([style, content], -1) @ params["fc_w"].T + params["fc_b"]

        sos = params["embedding"][params["sos_token"][0]]
        dec_in = jnp.concatenate(
            [jnp.broadcast_to(sos, (B, 1, E)), xln[:, :-1, :]], axis=1)
        x = dec_in
        for l in range(L):
            wih, whh = params[f"dec_wih_{l}"], params[f"dec_whh_{l}"]
            bih, bhh = params[f"dec_bih_{l}"], params[f"dec_bhh_{l}"]
            h = z[l]
            outs = []
            for t in range(S):
                gi = x[:, t, :] @ wih.T + bih
                gh = h @ whh.T + bhh
                r = jax.nn.sigmoid(gi[:, :H] + gh[:, :H])
                u = jax.nn.sigmoid(gi[:, H:2 * H] + gh[:, H:2 * H])
                n = jnp.tanh(gi[:, 2 * H:] + r * gh[:, 2 * H:])
                h = (1.0 - u) * n + u * h
                outs.append(h)
            x = jnp.stack(outs, axis=1)
        logits = x @ params["fc_out_w"].T + params["fc_out_b"]
        return logits, style, content, mu_s, logvar_s, mu_c, logvar_c


# ----------------------------------------------------------------------------
if __name__ == "__main__":
    B, S = 2, 8
    vocab_size = 50
    emb_dim = 16
    hidden_dim = 32
    style_dim = 8
    content_dim = 24
    num_layers = 2

    root = jax.random.PRNGKey(0)
    k_param, k_tok, k_eps = jax.random.split(root, 3)

    params = init_params(k_param, vocab_size, emb_dim, hidden_dim,
                         style_dim, content_dim, num_layers)
    prep = prepare_params(params, hidden_dim=hidden_dim, style_dim=style_dim,
                          content_dim=content_dim, num_layers=num_layers)
    x_tokens = jax.random.randint(k_tok, (B, S), 0, vocab_size, dtype=jnp.int32)

    fwd = jax.jit(lambda pr, x, k: lstmvae_forward(
        pr, x, k, hidden_dim=hidden_dim, style_dim=style_dim,
        content_dim=content_dim, num_layers=num_layers))

    outs = jax.block_until_ready(fwd(prep, x_tokens, k_eps))
    recon, style, content, mu_s, logvar_s, mu_c, logvar_c = outs

    assert recon.shape == (B, S, vocab_size)
    assert style.shape == (num_layers, B, style_dim)
    assert content.shape == (num_layers, B, content_dim)
    assert mu_s.shape == logvar_s.shape == (num_layers, B, style_dim)
    assert mu_c.shape == logvar_c.shape == (num_layers, B, content_dim)
    assert all(bool(jnp.all(jnp.isfinite(o))) for o in outs)

    ref_outs = reference_forward(params, x_tokens, k_eps, hidden_dim=hidden_dim,
                                 style_dim=style_dim, content_dim=content_dim,
                                 num_layers=num_layers)
    max_err = max(float(jnp.max(jnp.abs(a - b))) for a, b in zip(outs, ref_outs))
    assert max_err < 5e-2, f"kernel vs reference mismatch: max abs err = {max_err}"

    print("KERNEL_OK")
</pallas_src>

<mosaic_0001>
module attributes {stable_mosaic.version = 11 : i64} {
  func.func @kernel(%arg0: memref<16x16xf32, #tpu.memory_space<vmem>>, %arg1: memref<2x16xf32, #tpu.memory_space<vmem>>, %arg2: memref<1x16xf32, #tpu.memory_space<vmem>>, %arg3: memref<1x16xf32, #tpu.memory_space<vmem>>, %arg4: memref<16x512xf32, #tpu.memory_space<vmem>>, %arg5: memref<128x512xf32, #tpu.memory_space<vmem>>, %arg6: memref<1x512xf32, #tpu.memory_space<vmem>>, %arg7: memref<128x512xf32, #tpu.memory_space<vmem>>, %arg8: memref<128x512xf32, #tpu.memory_space<vmem>>, %arg9: memref<1x512xf32, #tpu.memory_space<vmem>>, %arg10: memref<128x256xf32, #tpu.memory_space<vmem>>, %arg11: memref<1x256xf32, #tpu.memory_space<vmem>>, %arg12: memref<4x128xf32, #tpu.memory_space<vmem>>, %arg13: memref<128x128xf32, #tpu.memory_space<vmem>>, %arg14: memref<1x128xf32, #tpu.memory_space<vmem>>, %arg15: memref<16x384xf32, #tpu.memory_space<vmem>>, %arg16: memref<128x384xf32, #tpu.memory_space<vmem>>, %arg17: memref<1x384xf32, #tpu.memory_space<vmem>>, %arg18: memref<1x384xf32, #tpu.memory_space<vmem>>, %arg19: memref<128x384xf32, #tpu.memory_space<vmem>>, %arg20: memref<128x384xf32, #tpu.memory_space<vmem>>, %arg21: memref<1x384xf32, #tpu.memory_space<vmem>>, %arg22: memref<1x384xf32, #tpu.memory_space<vmem>>, %arg23: memref<128x128xf32, #tpu.memory_space<vmem>>, %arg24: memref<1x128xf32, #tpu.memory_space<vmem>>, %arg25: memref<4x256xf32, #tpu.memory_space<vmem>>, %arg26: memref<4x128xf32, #tpu.memory_space<vmem>>, %arg27: memref<16x128xf32, #tpu.memory_space<vmem>>, %arg28: memref<16x128xf32, #tpu.memory_space<vmem>>, %arg29: memref<16x16xf32, #tpu.memory_space<vmem>>, %arg30: memref<4x128xf32, #tpu.memory_space<vmem>>) attributes {dimension_semantics = [], scalar_prefetch = 0 : i64, scratch_operands = 3 : i64, tpu.core_type = #tpu.core_type<tc>} {
    %c0 = arith.constant 0 : index
    %c0_0 = arith.constant 0 : index
    %0 = vector.load %arg0[%c0, %c0_0] : memref<16x16xf32, #tpu.memory_space<vmem>>, vector<16x16xf32>
    %cst = arith.constant dense<0.000000e+00> : vector<16xf32>
    %1 = vector.multi_reduction <add>, %0, %cst [1] : vector<16x16xf32> to vector<16xf32>
    %2 = vector.shape_cast %1 : vector<16xf32> to vector<16x1xf32>
    %cst_1 = arith.constant 1.600000e+01 : f32
    %3 = vector.broadcast %cst_1 : f32 to vector<16x1xf32>
    %4 = arith.divf %2, %3 : vector<16x1xf32>
    %5 = vector.broadcast %4 : vector<16x1xf32> to vector<16x16xf32>
    %6 = arith.subf %0, %5 : vector<16x16xf32>
    %7 = arith.mulf %6, %6 : vector<16x16xf32>
    %cst_2 = arith.constant dense<0.000000e+00> : vector<16xf32>
    %8 = vector.multi_reduction <add>, %7, %cst_2 [1] : vector<16x16xf32> to vector<16xf32>
    %9 = vector.shape_cast %8 : vector<16xf32> to vector<16x1xf32>
    %cst_3 = arith.constant 1.600000e+01 : f32
    %10 = vector.broadcast %cst_3 : f32 to vector<16x1xf32>
    %11 = arith.divf %9, %10 : vector<16x1xf32>
    %12 = vector.broadcast %4 : vector<16x1xf32> to vector<16x16xf32>
    %13 = arith.subf %0, %12 : vector<16x16xf32>
    %cst_4 = arith.constant 9.99999974E-6 : f32
    %14 = vector.broadcast %cst_4 : f32 to vector<16x1xf32>
    %15 = arith.addf %11, %14 : vector<16x1xf32>
    %16 = math.rsqrt %15 : vector<16x1xf32>
    %17 = vector.broadcast %16 : vector<16x1xf32> to vector<16x16xf32>
    %18 = arith.mulf %13, %17 : vector<16x16xf32>
    %c0_5 = arith.constant 0 : index
    %c0_6 = arith.constant 0 : index
    %19 = vector.load %arg2[%c0_5, %c0_6] : memref<1x16xf32, #tpu.memory_space<vmem>>, vector<1x16xf32>
    %20 = vector.broadcast %19 : vector<1x16xf32> to vector<16x16xf32>
    %21 = arith.mulf %18, %20 : vector<16x16xf32>
    %c0_7 = arith.constant 0 : index
    %c0_8 = arith.constant 0 : index
    %22 = vector.load %arg3[%c0_7, %c0_8] : memref<1x16xf32, #tpu.memory_space<vmem>>, vector<1x16xf32>
    %23 = vector.broadcast %22 : vector<1x16xf32> to vector<16x16xf32>
    %24 = arith.addf %21, %23 : vector<16x16xf32>
    %c0_9 = arith.constant 0 : index
    %c0_10 = arith.constant 0 : index
    %25 = vector.load %arg5[%c0_9, %c0_10] : memref<128x512xf32, #tpu.memory_space<vmem>>, vector<128x512xf32>
    %c0_11 = arith.constant 0 : index
    %c0_12 = arith.constant 0 : index
    %26 = vector.load %arg4[%c0_11, %c0_12] : memref<16x512xf32, #tpu.memory_space<vmem>>, vector<16x512xf32>
    %cst_13 = arith.constant dense<0.000000e+00> : vector<16x512xf32>
    %27 = tpu.matmul %24, %26, %cst_13 {dimension_numbers = #tpu.dot_dimension_numbers<[1], [0], [0], [1], [0, 0, 1, 1], [], []>} : vector<16x16xf32>, vector<16x512xf32>, vector<16x512xf32> -> vector<16x512xf32>
    %c0_14 = arith.constant 0 : index
    %c0_15 = arith.constant 0 : index
    %28 = vector.load %arg6[%c0_14, %c0_15] : memref<1x512xf32, #tpu.memory_space<vmem>>, vector<1x512xf32>
    %29 = vector.broadcast %28 : vector<1x512xf32> to vector<16x512xf32>
    %30 = arith.addf %27, %29 : vector<16x512xf32>
    %cst_16 = arith.constant 0.000000e+00 : f32
    %31 = vector.broadcast %cst_16 : f32 to vector<2x128xf32>
    %cst_17 = arith.constant 0.000000e+00 : f32
    %32 = vector.broadcast %cst_17 : f32 to vector<2x128xf32>
    %33 = vector.extract_strided_slice %30 {offsets = [0, 0], sizes = [2, 512], strides = [1, 1]} : vector<16x512xf32> to vector<2x512xf32>
    %cst_18 = arith.constant dense<0.000000e+00> : vector<2x512xf32>
    %34 = tpu.matmul %31, %25, %cst_18 {dimension_numbers = #tpu.dot_dimension_numbers<[1], [0], [0], [1], [0, 0, 1, 1], [], []>} : vector<2x128xf32>, vector<128x512xf32>, vector<2x512xf32> -> vector<2x512xf32>
    %35 = arith.addf %33, %34 : vector<2x512xf32>
    %36 = vector.extract_strided_slice %35 {offsets = [0, 0], sizes = [2, 128], strides = [1, 1]} : vector<2x512xf32> to vector<2x128xf32>
    %37 = arith.negf %36 : vector<2x128xf32>
    %38 = math.exp %37 : vector<2x128xf32>
    %cst_19 = arith.constant 1.000000e+00 : f32
    %39 = vector.broadcast %cst_19 : f32 to vector<2x128xf32>
    %40 = arith.addf %39, %38 : vector<2x128xf32>
    %41 = arith.divf %39, %40 : vector<2x128xf32>
    %42 = vector.extract_strided_slice %35 {offsets = [0, 128], sizes = [2, 128], strides = [1, 1]} : vector<2x512xf32> to vector<2x128xf32>
    %43 = arith.negf %42 : vector<2x128xf32>
    %44 = math.exp %43 : vector<2x128xf32>
    %cst_20 = arith.constant 1.000000e+00 : f32
    %45 = vector.broadcast %cst_20 : f32 to vector<2x128xf32>
    %46 = arith.addf %45, %44 : vector<2x128xf32>
    %47 = arith.divf %45, %46 : vector<2x128xf32>
    %48 = vector.extract_strided_slice %35 {offsets = [0, 256], sizes = [2, 128], strides = [1, 1]} : vector<2x512xf32> to vector<2x128xf32>
    %49 = math.tanh %48 : vector<2x128xf32>
    %50 = vector.extract_strided_slice %35 {offsets = [0, 384], sizes = [2, 128], strides = [1, 1]} : vector<2x512xf32> to vector<2x128xf32>
    %51 = arith.negf %50 : vector<2x128xf32>
    %52 = math.exp %51 : vector<2x128xf32>
    %cst_21 = arith.constant 1.000000e+00 : f32
    %53 = vector.broadcast %cst_21 : f32 to vector<2x128xf32>
    %54 = arith.addf %53, %52 : vector<2x128xf32>
    %55 = arith.divf %53, %54 : vector<2x128xf32>
    %56 = arith.mulf %47, %32 : vector<2x128xf32>
    %57 = arith.mulf %41, %49 : vector<2x128xf32>
    %58 = arith.addf %56, %57 : vector<2x128xf32>
    %59 = math.tanh %58 : vector<2x128xf32>
    %60 = arith.mulf %55, %59 : vector<2x128xf32>
    %c0_22 = arith.constant 0 : index
    %c0_23 = arith.constant 0 : index
    %61 = vector.load %arg28[%c0_22, %c0_23] : memref<16x128xf32, #tpu.memory_space<vmem>>, vector<2x128xf32>
    tpu.vector_store %arg28[%c0_22, %c0_23], %60 {strides = array<i32>} : memref<16x128xf32, #tpu.memory_space<vmem>>, vector<2x128xf32>,
    %62 = vector.extract_strided_slice %30 {offsets = [2, 0], sizes = [2, 512], strides = [1, 1]} : vector<16x512xf32> to vector<2x512xf32>
    %cst_24 = arith.constant dense<0.000000e+00> : vector<2x512xf32>
    %63 = tpu.matmul %60, %25, %cst_24 {dimension_numbers = #tpu.dot_dimension_numbers<[1], [0], [0], [1], [0, 0, 1, 1], [], []>} : vector<2x128xf32>, vector<128x512xf32>, vector<2x512xf32> -> vector<2x512xf32>
    %64 = arith.addf %62, %63 : vector<2x512xf32>
    %65 = vector.extract_strided_slice %64 {offsets = [0, 0], sizes = [2, 128], strides = [1, 1]} : vector<2x512xf32> to vector<2x128xf32>
    %66 = arith.negf %65 : vector<2x128xf32>
    %67 = math.exp %66 : vector<2x128xf32>
    %cst_25 = arith.constant 1.000000e+00 : f32
    %68 = vector.broadcast %cst_25 : f32 to vector<2x128xf32>
    %69 = arith.addf %68, %67 : vector<2x128xf32>
    %70 = arith.divf %68, %69 : vector<2x128xf32>
    %71 = vector.extract_strided_slice %64 {offsets = [0, 128], sizes = [2, 128], strides = [1, 1]} : vector<2x512xf32> to vector<2x128xf32>
    %72 = arith.negf %71 : vector<2x128xf32>
    %73 = math.exp %72 : vector<2x128xf32>
    %cst_26 = arith.constant 1.000000e+00 : f32
    %74 = vector.broadcast %cst_26 : f32 to vector<2x128xf32>
    %75 = arith.addf %74, %73 : vector<2x128xf32>
    %76 = arith.divf %74, %75 : vector<2x128xf32>
    %77 = vector.extract_strided_slice %64 {offsets = [0, 256], sizes = [2, 128], strides = [1, 1]} : vector<2x512xf32> to vector<2x128xf32>
    %78 = math.tanh %77 : vector<2x128xf32>
    %79 = vector.extract_strided_slice %64 {offsets = [0, 384], sizes = [2, 128], strides = [1, 1]} : vector<2x512xf32> to vector<2x128xf32>
    %80 = arith.negf %79 : vector<2x128xf32>
    %81 = math.exp %80 : vector<2x128xf32>
    %cst_27 = arith.constant 1.000000e+00 : f32
    %82 = vector.broadcast %cst_27 : f32 to vector<2x128xf32>
    %83 = arith.addf %82, %81 : vector<2x128xf32>
    %84 = arith.divf %82, %83 : vector<2x128xf32>
    %85 = arith.mulf %76, %58 : vector<2x128xf32>
    %86 = arith.mulf %70, %78 : vector<2x128xf32>
    %87 = arith.addf %85, %86 : vector<2x128xf32>
    %88 = math.tanh %87 : vector<2x128xf32>
    %89 = arith.mulf %84, %88 : vector<2x128xf32>
    %c2 = arith.constant 2 : index
    %c0_28 = arith.constant 0 : index
    %90 = vector.load %arg28[%c2, %c0_28] : memref<16x128xf32, #tpu.memory_space<vmem>>, vector<2x128xf32>
    tpu.vector_store %arg28[%c2, %c0_28], %89 {strides = array<i32>} : memref<16x128xf32, #tpu.memory_space<vmem>>, vector<2x128xf32>,
    %91 = vector.extract_strided_slice %30 {offsets = [4, 0], sizes = [2, 512], strides = [1, 1]} : vector<16x512xf32> to vector<2x512xf32>
    %cst_29 = arith.constant dense<0.000000e+00> : vector<2x512xf32>
    %92 = tpu.matmul %89, %25, %cst_29 {dimension_numbers = #tpu.dot_dimension_numbers<[1], [0], [0], [1], [0, 0, 1, 1], [], []>} : vector<2x128xf32>, vector<128x512xf32>, vector<2x512xf32> -> vector<2x512xf32>
    %93 = arith.addf %91, %92 : vector<2x512xf32>
    %94 = vector.extract_strided_slice %93 {offsets = [0, 0], sizes = [2, 128], strides = [1, 1]} : vector<2x512xf32> to vector<2x128xf32>
    %95 = arith.negf %94 : vector<2x128xf32>
    %96 = math.exp %95 : vector<2x128xf32>
    %cst_30 = arith.constant 1.000000e+00 : f32
    %97 = vector.broadcast %cst_30 : f32 to vector<2x128xf32>
    %98 = arith.addf %97, %96 : vector<2x128xf32>
    %99 = arith.divf %97, %98 : vector<2x128xf32>
    %100 = vector.extract_strided_slice %93 {offsets = [0, 128], sizes = [2, 128], strides = [1, 1]} : vector<2x512xf32> to vector<2x128xf32>
    %101 = arith.negf %100 : vector<2x128xf32>
    %102 = math.exp %101 : vector<2x128xf32>
    %cst_31 = arith.constant 1.000000e+00 : f32
    %103 = vector.broadcast %cst_31 : f32 to vector<2x128xf32>
    %104 = arith.addf %103, %102 : vector<2x128xf32>
    %105 = arith.divf %103, %104 : vector<2x128xf32>
    %106 = vector.extract_strided_slice %93 {offsets = [0, 256], sizes = [2, 128], strides = [1, 1]} : vector<2x512xf32> to vector<2x128xf32>
    %107 = math.tanh %106 : vector<2x128xf32>
    %108 = vector.extract_strided_slice %93 {offsets = [0, 384], sizes = [2, 128], strides = [1, 1]} : vector<2x512xf32> to vector<2x128xf32>
    %109 = arith.negf %108 : vector<2x128xf32>
    %110 = math.exp %109 : vector<2x128xf32>
    %cst_32 = arith.constant 1.000000e+00 : f32
    %111 = vector.broadcast %cst_32 : f32 to vector<2x128xf32>
    %112 = arith.addf %111, %110 : vector<2x128xf32>
    %113 = arith.divf %111, %112 : vector<2x128xf32>
    %114 = arith.mulf %105, %87 : vector<2x128xf32>
    %115 = arith.mulf %99, %107 : vector<2x128xf32>
    %116 = arith.addf %114, %115 : vector<2x128xf32>
    %117 = math.tanh %116 : vector<2x128xf32>
    %118 = arith.mulf %113, %117 : vector<2x128xf32>
    %c4 = arith.constant 4 : index
    %c0_33 = arith.constant 0 : index
    %119 = vector.load %arg28[%c4, %c0_33] : memref<16x128xf32, #tpu.memory_space<vmem>>, vector<2x128xf32>
    tpu.vector_store %arg28[%c4, %c0_33], %118 {strides = array<i32>} : memref<16x128xf32, #tpu.memory_space<vmem>>, vector<2x128xf32>,
    %120 = vector.extract_strided_slice %30 {offsets = [6, 0], sizes = [2, 512], strides = [1, 1]} : vector<16x512xf32> to vector<2x512xf32>
    %cst_34 = arith.constant dense<0.000000e+00> : vector<2x512xf32>
    %121 = tpu.matmul %118, %25, %cst_34 {dimension_numbers = #tpu.dot_dimension_numbers<[1], [0], [0], [1], [0, 0, 1, 1], [], []>} : vector<2x128xf32>, vector<128x512xf32>, vector<2x512xf32> -> vector<2x512xf32>
    %122 = arith.addf %120, %121 : vector<2x512xf32>
    %123 = vector.extract_strided_slice %122 {offsets = [0, 0], sizes = [2, 128], strides = [1, 1]} : vector<2x512xf32> to vector<2x128xf32>
    %124 = arith.negf %123 : vector<2x128xf32>
    %125 = math.exp %124 : vector<2x128xf32>
    %cst_35 = arith.constant 1.000000e+00 : f32
    %126 = vector.broadcast %cst_35 : f32 to vector<2x128xf32>
    %127 = arith.addf %126, %125 : vector<2x128xf32>
    %128 = arith.divf %126, %127 : vector<2x128xf32>
    %129 = vector.extract_strided_slice %122 {offsets = [0, 128], sizes = [2, 128], strides = [1, 1]} : vector<2x512xf32> to vector<2x128xf32>
    %130 = arith.negf %129 : vector<2x128xf32>
    %131 = math.exp %130 : vector<2x128xf32>
    %cst_36 = arith.constant 1.000000e+00 : f32
    %132 = vector.broadcast %cst_36 : f32 to vector<2x128xf32>
    %133 = arith.addf %132, %131 : vector<2x128xf32>
    %134 = arith.divf %132, %133 : vector<2x128xf32>
    %135 = vector.extract_strided_slice %122 {offsets = [0, 256], sizes = [2, 128], strides = [1, 1]} : vector<2x512xf32> to vector<2x128xf32>
    %136 = math.tanh %135 : vector<2x128xf32>
    %137 = vector.extract_strided_slice %122 {offsets = [0, 384], sizes = [2, 128], strides = [1, 1]} : vector<2x512xf32> to vector<2x128xf32>
    %138 = arith.negf %137 : vector<2x128xf32>
    %139 = math.exp %138 : vector<2x128xf32>
    %cst_37 = arith.constant 1.000000e+00 : f32
    %140 = vector.broadcast %cst_37 : f32 to vector<2x128xf32>
    %141 = arith.addf %140, %139 : vector<2x128xf32>
    %142 = arith.divf %140, %141 : vector<2x128xf32>
    %143 = arith.mulf %134, %116 : vector<2x128xf32>
    %144 = arith.mulf %128, %136 : vector<2x128xf32>
    %145 = arith.addf %143, %144 : vector<2x128xf32>
    %146 = math.tanh %145 : vector<2x128xf32>
    %147 = arith.mulf %142, %146 : vector<2x128xf32>
    %c6 = arith.constant 6 : index
    %c0_38 = arith.constant 0 : index
    %148 = vector.load %arg28[%c6, %c0_38] : memref<16x128xf32, #tpu.memory_space<vmem>>, vector<2x128xf32>
    tpu.vector_store %arg28[%c6, %c0_38], %147 {strides = array<i32>} : memref<16x128xf32, #tpu.memory_space<vmem>>, vector<2x128xf32>,
    %149 = vector.extract_strided_slice %30 {offsets = [8, 0], sizes = [2, 512], strides = [1, 1]} : vector<16x512xf32> to vector<2x512xf32>
    %cst_39 = arith.constant dense<0.000000e+00> : vector<2x512xf32>
    %150 = tpu.matmul %147, %25, %cst_39 {dimension_numbers = #tpu.dot_dimension_numbers<[1], [0], [0], [1], [0, 0, 1, 1], [], []>} : vector<2x128xf32>, vector<128x512xf32>, vector<2x512xf32> -> vector<2x512xf32>
    %151 = arith.addf %149, %150 : vector<2x512xf32>
    %152 = vector.extract_strided_slice %151 {offsets = [0, 0], sizes = [2, 128], strides = [1, 1]} : vector<2x512xf32> to vector<2x128xf32>
    %153 = arith.negf %152 : vector<2x128xf32>
    %154 = math.exp %153 : vector<2x128xf32>
    %cst_40 = arith.constant 1.000000e+00 : f32
    %155 = vector.broadcast %cst_40 : f32 to vector<2x128xf32>
    %156 = arith.addf %155, %154 : vector<2x128xf32>
    %157 = arith.divf %155, %156 : vector<2x128xf32>
    %158 = vector.extract_strided_slice %151 {offsets = [0, 128], sizes = [2, 128], strides = [1, 1]} : vector<2x512xf32> to vector<2x128xf32>
    %159 = arith.negf %158 : vector<2x128xf32>
    %160 = math.exp %159 : vector<2x128xf32>
    %cst_41 = arith.constant 1.000000e+00 : f32
    %161 = vector.broadcast %cst_41 : f32 to vector<2x128xf32>
    %162 = arith.addf %161, %160 : vector<2x128xf32>
    %163 = arith.divf %161, %162 : vector<2x128xf32>
    %164 = vector.extract_strided_slice %151 {offsets = [0, 256], sizes = [2, 128], strides = [1, 1]} : vector<2x512xf32> to vector<2x128xf32>
    %165 = math.tanh %164 : vector<2x128xf32>
    %166 = vector.extract_strided_slice %151 {offsets = [0, 384], sizes = [2, 128], strides = [1, 1]} : vector<2x512xf32> to vector<2x128xf32>
    %167 = arith.negf %166 : vector<2x128xf32>
    %168 = math.exp %167 : vector<2x128xf32>
    %cst_42 = arith.constant 1.000000e+00 : f32
    %169 = vector.broadcast %cst_42 : f32 to vector<2x128xf32>
    %170 = arith.addf %169, %168 : vector<2x128xf32>
    %171 = arith.divf %169, %170 : vector<2x128xf32>
    %172 = arith.mulf %163, %145 : vector<2x128xf32>
    %173 = arith.mulf %157, %165 : vector<2x128xf32>
    %174 = arith.addf %172, %173 : vector<2x128xf32>
    %175 = math.tanh %174 : vector<2x128xf32>
    %176 = arith.mulf %171, %175 : vector<2x128xf32>
    %c8 = arith.constant 8 : index
    %c0_43 = arith.constant 0 : index
    %177 = vector.load %arg28[%c8, %c0_43] : memref<16x128xf32, #tpu.memory_space<vmem>>, vector<2x128xf32>
    tpu.vector_store %arg28[%c8, %c0_43], %176 {strides = array<i32>} : memref<16x128xf32, #tpu.memory_space<vmem>>, vector<2x128xf32>,
    %178 = vector.extract_strided_slice %30 {offsets = [10, 0], sizes = [2, 512], strides = [1, 1]} : vector<16x512xf32> to vector<2x512xf32>
    %cst_44 = arith.constant dense<0.000000e+00> : vector<2x512xf32>
    %179 = tpu.matmul %176, %25, %cst_44 {dimension_numbers = #tpu.dot_dimension_numbers<[1], [0], [0], [1], [0, 0, 1, 1], [], []>} : vector<2x128xf32>, vector<128x512xf32>, vector<2x512xf32> -> vector<2x512xf32>
    %180 = arith.addf %178, %179 : vector<2x512xf32>
    %181 = vector.extract_strided_slice %180 {offsets = [0, 0], sizes = [2, 128], strides = [1, 1]} : vector<2x512xf32> to vector<2x128xf32>
    %182 = arith.negf %181 : vector<2x128xf32>
    %183 = math.exp %182 : vector<2x128xf32>
    %cst_45 = arith.constant 1.000000e+00 : f32
    %184 = vector.broadcast %cst_45 : f32 to vector<2x128xf32>
    %185 = arith.addf %184, %183 : vector<2x128xf32>
    %186 = arith.divf %184, %185 : vector<2x128xf32>
    %187 = vector.extract_strided_slice %180 {offsets = [0, 128], sizes = [2, 128], strides = [1, 1]} : vector<2x512xf32> to vector<2x128xf32>
    %188 = arith.negf %187 : vector<2x128xf32>
    %189 = math.exp %188 : vector<2x128xf32>
    %cst_46 = arith.constant 1.000000e+00 : f32
    %190 = vector.broadcast %cst_46 : f32 to vector<2x128xf32>
    %191 = arith.addf %190, %189 : vector<2x128xf32>
    %192 = arith.divf %190, %191 : vector<2x128xf32>
    %193 = vector.extract_strided_slice %180 {offsets = [0, 256], sizes = [2, 128], strides = [1, 1]} : vector<2x512xf32> to vector<2x128xf32>
    %194 = math.tanh %193 : vector<2x128xf32>
    %195 = vector.extract_strided_slice %180 {offsets = [0, 384], sizes = [2, 128], strides = [1, 1]} : vector<2x512xf32> to vector<2x128xf32>
    %196 = arith.negf %195 : vector<2x128xf32>
    %197 = math.exp %196 : vector<2x128xf32>
    %cst_47 = arith.constant 1.000000e+00 : f32
    %198 = vector.broadcast %cst_47 : f32 to vector<2x128xf32>
    %199 = arith.addf %198, %197 : vector<2x128xf32>
    %200 = arith.divf %198, %199 : vector<2x128xf32>
    %201 = arith.mulf %192, %174 : vector<2x128xf32>
    %202 = arith.mulf %186, %194 : vector<2x128xf32>
    %203 = arith.addf %201, %202 : vector<2x128xf32>
    %204 = math.tanh %203 : vector<2x128xf32>
    %205 = arith.mulf %200, %204 : vector<2x128xf32>
    %c10 = arith.constant 10 : index
    %c0_48 = arith.constant 0 : index
    %206 = vector.load %arg28[%c10, %c0_48] : memref<16x128xf32, #tpu.memory_space<vmem>>, vector<2x128xf32>
    tpu.vector_store %arg28[%c10, %c0_48], %205 {strides = array<i32>} : memref<16x128xf32, #tpu.memory_space<vmem>>, vector<2x128xf32>,
    %207 = vector.extract_strided_slice %30 {offsets = [12, 0], sizes = [2, 512], strides = [1, 1]} : vector<16x512xf32> to vector<2x512xf32>
    %cst_49 = arith.constant dense<0.000000e+00> : vector<2x512xf32>
    %208 = tpu.matmul %205, %25, %cst_49 {dimension_numbers = #tpu.dot_dimension_numbers<[1], [0], [0], [1], [0, 0, 1, 1], [], []>} : vector<2x128xf32>, vector<128x512xf32>, vector<2x512xf32> -> vector<2x512xf32>
    %209 = arith.addf %207, %208 : vector<2x512xf32>
    %210 = vector.extract_strided_slice %209 {offsets = [0, 0], sizes = [2, 128], strides = [1, 1]} : vector<2x512xf32> to vector<2x128xf32>
    %211 = arith.negf %210 : vector<2x128xf32>
    %212 = math.exp %211 : vector<2x128xf32>
    %cst_50 = arith.constant 1.000000e+00 : f32
    %213 = vector.broadcast %cst_50 : f32 to vector<2x128xf32>
    %214 = arith.addf %213, %212 : vector<2x128xf32>
    %215 = arith.divf %213, %214 : vector<2x128xf32>
    %216 = vector.extract_strided_slice %209 {offsets = [0, 128], sizes = [2, 128], strides = [1, 1]} : vector<2x512xf32> to vector<2x128xf32>
    %217 = arith.negf %216 : vector<2x128xf32>
    %218 = math.exp %217 : vector<2x128xf32>
    %cst_51 = arith.constant 1.000000e+00 : f32
    %219 = vector.broadcast %cst_51 : f32 to vector<2x128xf32>
    %220 = arith.addf %219, %218 : vector<2x128xf32>
    %221 = arith.divf %219, %220 : vector<2x128xf32>
    %222 = vector.extract_strided_slice %209 {offsets = [0, 256], sizes = [2, 128], strides = [1, 1]} : vector<2x512xf32> to vector<2x128xf32>
    %223 = math.tanh %222 : vector<2x128xf32>
    %224 = vector.extract_strided_slice %209 {offsets = [0, 384], sizes = [2, 128], strides = [1, 1]} : vector<2x512xf32> to vector<2x128xf32>
    %225 = arith.negf %224 : vector<2x128xf32>
    %226 = math.exp %225 : vector<2x128xf32>
    %cst_52 = arith.constant 1.000000e+00 : f32
    %227 = vector.broadcast %cst_52 : f32 to vector<2x128xf32>
    %228 = arith.addf %227, %226 : vector<2x128xf32>
    %229 = arith.divf %227, %228 : vector<2x128xf32>
    %230 = arith.mulf %221, %203 : vector<2x128xf32>
    %231 = arith.mulf %215, %223 : vector<2x128xf32>
    %232 = arith.addf %230, %231 : vector<2x128xf32>
    %233 = math.tanh %232 : vector<2x128xf32>
    %234 = arith.mulf %229, %233 : vector<2x128xf32>
    %c12 = arith.constant 12 : index
    %c0_53 = arith.constant 0 : index
    %235 = vector.load %arg28[%c12, %c0_53] : memref<16x128xf32, #tpu.memory_space<vmem>>, vector<2x128xf32>
    tpu.vector_store %arg28[%c12, %c0_53], %234 {strides = array<i32>} : memref<16x128xf32, #tpu.memory_space<vmem>>, vector<2x128xf32>,
    %236 = vector.extract_strided_slice %30 {offsets = [14, 0], sizes = [2, 512], strides = [1, 1]} : vector<16x512xf32> to vector<2x512xf32>
    %cst_54 = arith.constant dense<0.000000e+00> : vector<2x512xf32>
    %237 = tpu.matmul %234, %25, %cst_54 {dimension_numbers = #tpu.dot_dimension_numbers<[1], [0], [0], [1], [0, 0, 1, 1], [], []>} : vector<2x128xf32>, vector<128x512xf32>, vector<2x512xf32> -> vector<2x512xf32>
    %238 = arith.addf %236, %237 : vector<2x512xf32>
    %239 = vector.extract_strided_slice %238 {offsets = [0, 0], sizes = [2, 128], strides = [1, 1]} : vector<2x512xf32> to vector<2x128xf32>
    %240 = arith.negf %239 : vector<2x128xf32>
    %241 = math.exp %240 : vector<2x128xf32>
    %cst_55 = arith.constant 1.000000e+00 : f32
    %242 = vector.broadcast %cst_55 : f32 to vector<2x128xf32>
    %243 = arith.addf %242, %241 : vector<2x128xf32>
    %244 = arith.divf %242, %243 : vector<2x128xf32>
    %245 = vector.extract_strided_slice %238 {offsets = [0, 128], sizes = [2, 128], strides = [1, 1]} : vector<2x512xf32> to vector<2x128xf32>
    %246 = arith.negf %245 : vector<2x128xf32>
    %247 = math.exp %246 : vector<2x128xf32>
    %cst_56 = arith.constant 1.000000e+00 : f32
    %248 = vector.broadcast %cst_56 : f32 to vector<2x128xf32>
    %249 = arith.addf %248, %247 : vector<2x128xf32>
    %250 = arith.divf %248, %249 : vector<2x128xf32>
    %251 = vector.extract_strided_slice %238 {offsets = [0, 256], sizes = [2, 128], strides = [1, 1]} : vector<2x512xf32> to vector<2x128xf32>
    %252 = math.tanh %251 : vector<2x128xf32>
    %253 = vector.extract_strided_slice %238 {offsets = [0, 384], sizes = [2, 128], strides = [1, 1]} : vector<2x512xf32> to vector<2x128xf32>
    %254 = arith.negf %253 : vector<2x128xf32>
    %255 = math.exp %254 : vector<2x128xf32>
    %cst_57 = arith.constant 1.000000e+00 : f32
    %256 = vector.broadcast %cst_57 : f32 to vector<2x128xf32>
    %257 = arith.addf %256, %255 : vector<2x128xf32>
    %258 = arith.divf %256, %257 : vector<2x128xf32>
    %259 = arith.mulf %250, %232 : vector<2x128xf32>
    %260 = arith.mulf %244, %252 : vector<2x128xf32>
    %261 = arith.addf %259, %260 : vector<2x128xf32>
    %262 = math.tanh %261 : vector<2x128xf32>
    %263 = arith.mulf %258, %262 : vector<2x128xf32>
    %c14 = arith.constant 14 : index
    %c0_58 = arith.constant 0 : index
    %264 = vector.load %arg28[%c14, %c0_58] : memref<16x128xf32, #tpu.memory_space<vmem>>, vector<2x128xf32>
    tpu.vector_store %arg28[%c14, %c0_58], %263 {strides = array<i32>} : memref<16x128xf32, #tpu.memory_space<vmem>>, vector<2x128xf32>,
    %c0_59 = arith.constant 0 : index
    %c0_60 = arith.constant 0 : index
    %265 = vector.load %arg30[%c0_59, %c0_60] : memref<4x128xf32, #tpu.memory_space<vmem>>, vector<2x128xf32>
    tpu.vector_store %arg30[%c0_59, %c0_60], %263 {strides = array<i32>} : memref<4x128xf32, #tpu.memory_space<vmem>>, vector<2x128xf32>,
    %c0_61 = arith.constant 0 : index
    %c0_62 = arith.constant 0 : index
    %266 = vector.load %arg28[%c0_61, %c0_62] : memref<16x128xf32, #tpu.memory_space<vmem>>, vector<16x128xf32>
    %c0_63 = arith.constant 0 : index
    %c0_64 = arith.constant 0 : index
    %267 = vector.load %arg8[%c0_63, %c0_64] : memref<128x512xf32, #tpu.memory_space<vmem>>, vector<128x512xf32>
    %c0_65 = arith.constant 0 : index
    %c0_66 = arith.constant 0 : index
    %268 = vector.load %arg7[%c0_65, %c0_66] : memref<128x512xf32, #tpu.memory_space<vmem>>, vector<128x512xf32>
    %cst_67 = arith.constant dense<0.000000e+00> : vector<16x512xf32>
    %269 = tpu.matmul %266, %268, %cst_67 {dimension_numbers = #tpu.dot_dimension_numbers<[1], [0], [0], [1], [0, 0, 1, 1], [], []>} : vector<16x128xf32>, vector<128x512xf32>, vector<16x512xf32> -> vector<16x512xf32>
    %c0_68 = arith.constant 0 : index
    %c0_69 = arith.constant 0 : index
    %270 = vector.load %arg9[%c0_68, %c0_69] : memref<1x512xf32, #tpu.memory_space<vmem>>, vector<1x512xf32>
    %271 = vector.broadcast %270 : vector<1x512xf32> to vector<16x512xf32>
    %272 = arith.addf %269, %271 : vector<16x512xf32>
    %cst_70 = arith.constant 0.000000e+00 : f32
    %273 = vector.broadcast %cst_70 : f32 to vector<2x128xf32>
    %cst_71 = arith.constant 0.000000e+00 : f32
    %274 = vector.broadcast %cst_71 : f32 to vector<2x128xf32>
    %275 = vector.extract_strided_slice %272 {offsets = [0, 0], sizes = [2, 512], strides = [1, 1]} : vector<16x512xf32> to vector<2x512xf32>
    %cst_72 = arith.constant dense<0.000000e+00> : vector<2x512xf32>
    %276 = tpu.matmul %273, %267, %cst_72 {dimension_numbers = #tpu.dot_dimension_numbers<[1], [0], [0], [1], [0, 0, 1, 1], [], []>} : vector<2x128xf32>, vector<128x512xf32>, vector<2x512xf32> -> vector<2x512xf32>
    %277 = arith.addf %275, %276 : vector<2x512xf32>
    %278 = vector.extract_strided_slice %277 {offsets = [0, 0], sizes = [2, 128], strides = [1, 1]} : vector<2x512xf32> to vector<2x128xf32>
    %279 = arith.negf %278 : vector<2x128xf32>
    %280 = math.exp %279 : vector<2x128xf32>
    %cst_73 = arith.constant 1.000000e+00 : f32
    %281 = vector.broadcast %cst_73 : f32 to vector<2x128xf32>
    %282 = arith.addf %281, %280 : vector<2x128xf32>
    %283 = arith.divf %281, %282 : vector<2x128xf32>
    %284 = vector.extract_strided_slice %277 {offsets = [0, 128], sizes = [2, 128], strides = [1, 1]} : vector<2x512xf32> to vector<2x128xf32>
    %285 = arith.negf %284 : vector<2x128xf32>
    %286 = math.exp %285 : vector<2x128xf32>
    %cst_74 = arith.constant 1.000000e+00 : f32
    %287 = vector.broadcast %cst_74 : f32 to vector<2x128xf32>
    %288 = arith.addf %287, %286 : vector<2x128xf32>
    %289 = arith.divf %287, %288 : vector<2x128xf32>
    %290 = vector.extract_strided_slice %277 {offsets = [0, 256], sizes = [2, 128], strides = [1, 1]} : vector<2x512xf32> to vector<2x128xf32>
    %291 = math.tanh %290 : vector<2x128xf32>
    %292 = vector.extract_strided_slice %277 {offsets = [0, 384], sizes = [2, 128], strides = [1, 1]} : vector<2x512xf32> to vector<2x128xf32>
    %293 = arith.negf %292 : vector<2x128xf32>
    %294 = math.exp %293 : vector<2x128xf32>
    %cst_75 = arith.constant 1.000000e+00 : f32
    %295 = vector.broadcast %cst_75 : f32 to vector<2x128xf32>
    %296 = arith.addf %295, %294 : vector<2x128xf32>
    %297 = arith.divf %295, %296 : vector<2x128xf32>
    %298 = arith.mulf %289, %274 : vector<2x128xf32>
    %299 = arith.mulf %283, %291 : vector<2x128xf32>
    %300 = arith.addf %298, %299 : vector<2x128xf32>
    %301 = math.tanh %300 : vector<2x128xf32>
    %302 = arith.mulf %297, %301 : vector<2x128xf32>
    %303 = vector.extract_strided_slice %272 {offsets = [2, 0], sizes = [2, 512], strides = [1, 1]} : vector<16x512xf32> to vector<2x512xf32>
    %cst_76 = arith.constant dense<0.000000e+00> : vector<2x512xf32>
    %304 = tpu.matmul %302, %267, %cst_76 {dimension_numbers = #tpu.dot_dimension_numbers<[1], [0], [0], [1], [0, 0, 1, 1], [], []>} : vector<2x128xf32>, vector<128x512xf32>, vector<2x512xf32> -> vector<2x512xf32>
    %305 = arith.addf %303, %304 : vector<2x512xf32>
    %306 = vector.extract_strided_slice %305 {offsets = [0, 0], sizes = [2, 128], strides = [1, 1]} : vector<2x512xf32> to vector<2x128xf32>
    %307 = arith.negf %306 : vector<2x128xf32>
    %308 = math.exp %307 : vector<2x128xf32>
    %cst_77 = arith.constant 1.000000e+00 : f32
    %309 = vector.broadcast %cst_77 : f32 to vector<2x128xf32>
    %310 = arith.addf %309, %308 : vector<2x128xf32>
    %311 = arith.divf %309, %310 : vector<2x128xf32>
    %312 = vector.extract_strided_slice %305 {offsets = [0, 128], sizes = [2, 128], strides = [1, 1]} : vector<2x512xf32> to vector<2x128xf32>
    %313 = arith.negf %312 : vector<2x128xf32>
    %314 = math.exp %313 : vector<2x128xf32>
    %cst_78 = arith.constant 1.000000e+00 : f32
    %315 = vector.broadcast %cst_78 : f32 to vector<2x128xf32>
    %316 = arith.addf %315, %314 : vector<2x128xf32>
    %317 = arith.divf %315, %316 : vector<2x128xf32>
    %318 = vector.extract_strided_slice %305 {offsets = [0, 256], sizes = [2, 128], strides = [1, 1]} : vector<2x512xf32> to vector<2x128xf32>
    %319 = math.tanh %318 : vector<2x128xf32>
    %320 = vector.extract_strided_slice %305 {offsets = [0, 384], sizes = [2, 128], strides = [1, 1]} : vector<2x512xf32> to vector<2x128xf32>
    %321 = arith.negf %320 : vector<2x128xf32>
    %322 = math.exp %321 : vector<2x128xf32>
    %cst_79 = arith.constant 1.000000e+00 : f32
    %323 = vector.broadcast %cst_79 : f32 to vector<2x128xf32>
    %324 = arith.addf %323, %322 : vector<2x128xf32>
    %325 = arith.divf %323, %324 : vector<2x128xf32>
    %326 = arith.mulf %317, %300 : vector<2x128xf32>
    %327 = arith.mulf %311, %319 : vector<2x128xf32>
    %328 = arith.addf %326, %327 : vector<2x128xf32>
    %329 = math.tanh %328 : vector<2x128xf32>
    %330 = arith.mulf %325, %329 : vector<2x128xf32>
    %331 = vector.extract_strided_slice %272 {offsets = [4, 0], sizes = [2, 512], strides = [1, 1]} : vector<16x512xf32> to vector<2x512xf32>
    %cst_80 = arith.constant dense<0.000000e+00> : vector<2x512xf32>
    %332 = tpu.matmul %330, %267, %cst_80 {dimension_numbers = #tpu.dot_dimension_numbers<[1], [0], [0], [1], [0, 0, 1, 1], [], []>} : vector<2x128xf32>, vector<128x512xf32>, vector<2x512xf32> -> vector<2x512xf32>
    %333 = arith.addf %331, %332 : vector<2x512xf32>
    %334 = vector.extract_strided_slice %333 {offsets = [0, 0], sizes = [2, 128], strides = [1, 1]} : vector<2x512xf32> to vector<2x128xf32>
    %335 = arith.negf %334 : vector<2x128xf32>
    %336 = math.exp %335 : vector<2x128xf32>
    %cst_81 = arith.constant 1.000000e+00 : f32
    %337 = vector.broadcast %cst_81 : f32 to vector<2x128xf32>
    %338 = arith.addf %337, %336 : vector<2x128xf32>
    %339 = arith.divf %337, %338 : vector<2x128xf32>
    %340 = vector.extract_strided_slice %333 {offsets = [0, 128], sizes = [2, 128], strides = [1, 1]} : vector<2x512xf32> to vector<2x128xf32>
    %341 = arith.negf %340 : vector<2x128xf32>
    %342 = math.exp %341 : vector<2x128xf32>
    %cst_82 = arith.constant 1.000000e+00 : f32
    %343 = vector.broadcast %cst_82 : f32 to vector<2x128xf32>
    %344 = arith.addf %343, %342 : vector<2x128xf32>
    %345 = arith.divf %343, %344 : vector<2x128xf32>
    %346 = vector.extract_strided_slice %333 {offsets = [0, 256], sizes = [2, 128], strides = [1, 1]} : vector<2x512xf32> to vector<2x128xf32>
    %347 = math.tanh %346 : vector<2x128xf32>
    %348 = vector.extract_strided_slice %333 {offsets = [0, 384], sizes = [2, 128], strides = [1, 1]} : vector<2x512xf32> to vector<2x128xf32>
    %349 = arith.negf %348 : vector<2x128xf32>
    %350 = math.exp %349 : vector<2x128xf32>
    %cst_83 = arith.constant 1.000000e+00 : f32
    %351 = vector.broadcast %cst_83 : f32 to vector<2x128xf32>
    %352 = arith.addf %351, %350 : vector<2x128xf32>
    %353 = arith.divf %351, %352 : vector<2x128xf32>
    %354 = arith.mulf %345, %328 : vector<2x128xf32>
    %355 = arith.mulf %339, %347 : vector<2x128xf32>
    %356 = arith.addf %354, %355 : vector<2x128xf32>
    %357 = math.tanh %356 : vector<2x128xf32>
    %358 = arith.mulf %353, %357 : vector<2x128xf32>
    %359 = vector.extract_strided_slice %272 {offsets = [6, 0], sizes = [2, 512], strides = [1, 1]} : vector<16x512xf32> to vector<2x512xf32>
    %cst_84 = arith.constant dense<0.000000e+00> : vector<2x512xf32>
    %360 = tpu.matmul %358, %267, %cst_84 {dimension_numbers = #tpu.dot_dimension_numbers<[1], [0], [0], [1], [0, 0, 1, 1], [], []>} : vector<2x128xf32>, vector<128x512xf32>, vector<2x512xf32> -> vector<2x512xf32>
    %361 = arith.addf %359, %360 : vector<2x512xf32>
    %362 = vector.extract_strided_slice %361 {offsets = [0, 0], sizes = [2, 128], strides = [1, 1]} : vector<2x512xf32> to vector<2x128xf32>
    %363 = arith.negf %362 : vector<2x128xf32>
    %364 = math.exp %363 : vector<2x128xf32>
    %cst_85 = arith.constant 1.000000e+00 : f32
    %365 = vector.broadcast %cst_85 : f32 to vector<2x128xf32>
    %366 = arith.addf %365, %364 : vector<2x128xf32>
    %367 = arith.divf %365, %366 : vector<2x128xf32>
    %368 = vector.extract_strided_slice %361 {offsets = [0, 128], sizes = [2, 128], strides = [1, 1]} : vector<2x512xf32> to vector<2x128xf32>
    %369 = arith.negf %368 : vector<2x128xf32>
    %370 = math.exp %369 : vector<2x128xf32>
    %cst_86 = arith.constant 1.000000e+00 : f32
    %371 = vector.broadcast %cst_86 : f32 to vector<2x128xf32>
    %372 = arith.addf %371, %370 : vector<2x128xf32>
    %373 = arith.divf %371, %372 : vector<2x128xf32>
    %374 = vector.extract_strided_slice %361 {offsets = [0, 256], sizes = [2, 128], strides = [1, 1]} : vector<2x512xf32> to vector<2x128xf32>
    %375 = math.tanh %374 : vector<2x128xf32>
    %376 = vector.extract_strided_slice %361 {offsets = [0, 384], sizes = [2, 128], strides = [1, 1]} : vector<2x512xf32> to vector<2x128xf32>
    %377 = arith.negf %376 : vector<2x128xf32>
    %378 = math.exp %377 : vector<2x128xf32>
    %cst_87 = arith.constant 1.000000e+00 : f32
    %379 = vector.broadcast %cst_87 : f32 to vector<2x128xf32>
    %380 = arith.addf %379, %378 : vector<2x128xf32>
    %381 = arith.divf %379, %380 : vector<2x128xf32>
    %382 = arith.mulf %373, %356 : vector<2x128xf32>
    %383 = arith.mulf %367, %375 : vector<2x128xf32>
    %384 = arith.addf %382, %383 : vector<2x128xf32>
    %385 = math.tanh %384 : vector<2x128xf32>
    %386 = arith.mulf %381, %385 : vector<2x128xf32>
    %387 = vector.extract_strided_slice %272 {offsets = [8, 0], sizes = [2, 512], strides = [1, 1]} : vector<16x512xf32> to vector<2x512xf32>
    %cst_88 = arith.constant dense<0.000000e+00> : vector<2x512xf32>
    %388 = tpu.matmul %386, %267, %cst_88 {dimension_numbers = #tpu.dot_dimension_numbers<[1], [0], [0], [1], [0, 0, 1, 1], [], []>} : vector<2x128xf32>, vector<128x512xf32>, vector<2x512xf32> -> vector<2x512xf32>
    %389 = arith.addf %387, %388 : vector<2x512xf32>
    %390 = vector.extract_strided_slice %389 {offsets = [0, 0], sizes = [2, 128], strides = [1, 1]} : vector<2x512xf32> to vector<2x128xf32>
    %391 = arith.negf %390 : vector<2x128xf32>
    %392 = math.exp %391 : vector<2x128xf32>
    %cst_89 = arith.constant 1.000000e+00 : f32
    %393 = vector.broadcast %cst_89 : f32 to vector<2x128xf32>
    %394 = arith.addf %393, %392 : vector<2x128xf32>
    %395 = arith.divf %393, %394 : vector<2x128xf32>
    %396 = vector.extract_strided_slice %389 {offsets = [0, 128], sizes = [2, 128], strides = [1, 1]} : vector<2x512xf32> to vector<2x128xf32>
    %397 = arith.negf %396 : vector<2x128xf32>
    %398 = math.exp %397 : vector<2x128xf32>
    %cst_90 = arith.constant 1.000000e+00 : f32
    %399 = vector.broadcast %cst_90 : f32 to vector<2x128xf32>
    %400 = arith.addf %399, %398 : vector<2x128xf32>
    %401 = arith.divf %399, %400 : vector<2x128xf32>
    %402 = vector.extract_strided_slice %389 {offsets = [0, 256], sizes = [2, 128], strides = [1, 1]} : vector<2x512xf32> to vector<2x128xf32>
    %403 = math.tanh %402 : vector<2x128xf32>
    %404 = vector.extract_strided_slice %389 {offsets = [0, 384], sizes = [2, 128], strides = [1, 1]} : vector<2x512xf32> to vector<2x128xf32>
    %405 = arith.negf %404 : vector<2x128xf32>
    %406 = math.exp %405 : vector<2x128xf32>
    %cst_91 = arith.constant 1.000000e+00 : f32
    %407 = vector.broadcast %cst_91 : f32 to vector<2x128xf32>
    %408 = arith.addf %407, %406 : vector<2x128xf32>
    %409 = arith.divf %407, %408 : vector<2x128xf32>
    %410 = arith.mulf %401, %384 : vector<2x128xf32>
    %411 = arith.mulf %395, %403 : vector<2x128xf32>
    %412 = arith.addf %410, %411 : vector<2x128xf32>
    %413 = math.tanh %412 : vector<2x128xf32>
    %414 = arith.mulf %409, %413 : vector<2x128xf32>
    %415 = vector.extract_strided_slice %272 {offsets = [10, 0], sizes = [2, 512], strides = [1, 1]} : vector<16x512xf32> to vector<2x512xf32>
    %cst_92 = arith.constant dense<0.000000e+00> : vector<2x512xf32>
    %416 = tpu.matmul %414, %267, %cst_92 {dimension_numbers = #tpu.dot_dimension_numbers<[1], [0], [0], [1], [0, 0, 1, 1], [], []>} : vector<2x128xf32>, vector<128x512xf32>, vector<2x512xf32> -> vector<2x512xf32>
    %417 = arith.addf %415, %416 : vector<2x512xf32>
    %418 = vector.extract_strided_slice %417 {offsets = [0, 0], sizes = [2, 128], strides = [1, 1]} : vector<2x512xf32> to vector<2x128xf32>
    %419 = arith.negf %418 : vector<2x128xf32>
    %420 = math.exp %419 : vector<2x128xf32>
    %cst_93 = arith.constant 1.000000e+00 : f32
    %421 = vector.broadcast %cst_93 : f32 to vector<2x128xf32>
    %422 = arith.addf %421, %420 : vector<2x128xf32>
    %423 = arith.divf %421, %422 : vector<2x128xf32>
    %424 = vector.extract_strided_slice %417 {offsets = [0, 128], sizes = [2, 128], strides = [1, 1]} : vector<2x512xf32> to vector<2x128xf32>
    %425 = arith.negf %424 : vector<2x128xf32>
    %426 = math.exp %425 : vector<2x128xf32>
    %cst_94 = arith.constant 1.000000e+00 : f32
    %427 = vector.broadcast %cst_94 : f32 to vector<2x128xf32>
    %428 = arith.addf %427, %426 : vector<2x128xf32>
    %429 = arith.divf %427, %428 : vector<2x128xf32>
    %430 = vector.extract_strided_slice %417 {offsets = [0, 256], sizes = [2, 128], strides = [1, 1]} : vector<2x512xf32> to vector<2x128xf32>
    %431 = math.tanh %430 : vector<2x128xf32>
    %432 = vector.extract_strided_slice %417 {offsets = [0, 384], sizes = [2, 128], strides = [1, 1]} : vector<2x512xf32> to vector<2x128xf32>
    %433 = arith.negf %432 : vector<2x128xf32>
    %434 = math.exp %433 : vector<2x128xf32>
    %cst_95 = arith.constant 1.000000e+00 : f32
    %435 = vector.broadcast %cst_95 : f32 to vector<2x128xf32>
    %436 = arith.addf %435, %434 : vector<2x128xf32>
    %437 = arith.divf %435, %436 : vector<2x128xf32>
    %438 = arith.mulf %429, %412 : vector<2x128xf32>
    %439 = arith.mulf %423, %431 : vector<2x128xf32>
    %440 = arith.addf %438, %439 : vector<2x128xf32>
    %441 = math.tanh %440 : vector<2x128xf32>
    %442 = arith.mulf %437, %441 : vector<2x128xf32>
    %443 = vector.extract_strided_slice %272 {offsets = [12, 0], sizes = [2, 512], strides = [1, 1]} : vector<16x512xf32> to vector<2x512xf32>
    %cst_96 = arith.constant dense<0.000000e+00> : vector<2x512xf32>
    %444 = tpu.matmul %442, %267, %cst_96 {dimension_numbers = #tpu.dot_dimension_numbers<[1], [0], [0], [1], [0, 0, 1, 1], [], []>} : vector<2x128xf32>, vector<128x512xf32>, vector<2x512xf32> -> vector<2x512xf32>
    %445 = arith.addf %443, %444 : vector<2x512xf32>
    %446 = vector.extract_strided_slice %445 {offsets = [0, 0], sizes = [2, 128], strides = [1, 1]} : vector<2x512xf32> to vector<2x128xf32>
    %447 = arith.negf %446 : vector<2x128xf32>
    %448 = math.exp %447 : vector<2x128xf32>
    %cst_97 = arith.constant 1.000000e+00 : f32
    %449 = vector.broadcast %cst_97 : f32 to vector<2x128xf32>
    %450 = arith.addf %449, %448 : vector<2x128xf32>
    %451 = arith.divf %449, %450 : vector<2x128xf32>
    %452 = vector.extract_strided_slice %445 {offsets = [0, 128], sizes = [2, 128], strides = [1, 1]} : vector<2x512xf32> to vector<2x128xf32>
    %453 = arith.negf %452 : vector<2x128xf32>
    %454 = math.exp %453 : vector<2x128xf32>
    %cst_98 = arith.constant 1.000000e+00 : f32
    %455 = vector.broadcast %cst_98 : f32 to vector<2x128xf32>
    %456 = arith.addf %455, %454 : vector<2x128xf32>
    %457 = arith.divf %455, %456 : vector<2x128xf32>
    %458 = vector.extract_strided_slice %445 {offsets = [0, 256], sizes = [2, 128], strides = [1, 1]} : vector<2x512xf32> to vector<2x128xf32>
    %459 = math.tanh %458 : vector<2x128xf32>
    %460 = vector.extract_strided_slice %445 {offsets = [0, 384], sizes = [2, 128], strides = [1, 1]} : vector<2x512xf32> to vector<2x128xf32>
    %461 = arith.negf %460 : vector<2x128xf32>
    %462 = math.exp %461 : vector<2x128xf32>
    %cst_99 = arith.constant 1.000000e+00 : f32
    %463 = vector.broadcast %cst_99 : f32 to vector<2x128xf32>
    %464 = arith.addf %463, %462 : vector<2x128xf32>
    %465 = arith.divf %463, %464 : vector<2x128xf32>
    %466 = arith.mulf %457, %440 : vector<2x128xf32>
    %467 = arith.mulf %451, %459 : vector<2x128xf32>
    %468 = arith.addf %466, %467 : vector<2x128xf32>
    %469 = math.tanh %468 : vector<2x128xf32>
    %470 = arith.mulf %465, %469 : vector<2x128xf32>
    %471 = vector.extract_strided_slice %272 {offsets = [14, 0], sizes = [2, 512], strides = [1, 1]} : vector<16x512xf32> to vector<2x512xf32>
    %cst_100 = arith.constant dense<0.000000e+00> : vector<2x512xf32>
    %472 = tpu.matmul %470, %267, %cst_100 {dimension_numbers = #tpu.dot_dimension_numbers<[1], [0], [0], [1], [0, 0, 1, 1], [], []>} : vector<2x128xf32>, vector<128x512xf32>, vector<2x512xf32> -> vector<2x512xf32>
    %473 = arith.addf %471, %472 : vector<2x512xf32>
    %474 = vector.extract_strided_slice %473 {offsets = [0, 0], sizes = [2, 128], strides = [1, 1]} : vector<2x512xf32> to vector<2x128xf32>
    %475 = arith.negf %474 : vector<2x128xf32>
    %476 = math.exp %475 : vector<2x128xf32>
    %cst_101 = arith.constant 1.000000e+00 : f32
    %477 = vector.broadcast %cst_101 : f32 to vector<2x128xf32>
    %478 = arith.addf %477, %476 : vector<2x128xf32>
    %479 = arith.divf %477, %478 : vector<2x128xf32>
    %480 = vector.extract_strided_slice %473 {offsets = [0, 128], sizes = [2, 128], strides = [1, 1]} : vector<2x512xf32> to vector<2x128xf32>
    %481 = arith.negf %480 : vector<2x128xf32>
    %482 = math.exp %481 : vector<2x128xf32>
    %cst_102 = arith.constant 1.000000e+00 : f32
    %483 = vector.broadcast %cst_102 : f32 to vector<2x128xf32>
    %484 = arith.addf %483, %482 : vector<2x128xf32>
    %485 = arith.divf %483, %484 : vector<2x128xf32>
    %486 = vector.extract_strided_slice %473 {offsets = [0, 256], sizes = [2, 128], strides = [1, 1]} : vector<2x512xf32> to vector<2x128xf32>
    %487 = math.tanh %486 : vector<2x128xf32>
    %488 = vector.extract_strided_slice %473 {offsets = [0, 384], sizes = [2, 128], strides = [1, 1]} : vector<2x512xf32> to vector<2x128xf32>
    %489 = arith.negf %488 : vector<2x128xf32>
    %490 = math.exp %489 : vector<2x128xf32>
    %cst_103 = arith.constant 1.000000e+00 : f32
    %491 = vector.broadcast %cst_103 : f32 to vector<2x128xf32>
    %492 = arith.addf %491, %490 : vector<2x128xf32>
    %493 = arith.divf %491, %492 : vector<2x128xf32>
    %494 = arith.mulf %485, %468 : vector<2x128xf32>
    %495 = arith.mulf %479, %487 : vector<2x128xf32>
    %496 = arith.addf %494, %495 : vector<2x128xf32>
    %497 = math.tanh %496 : vector<2x128xf32>
    %498 = arith.mulf %493, %497 : vector<2x128xf32>
    %c2_104 = arith.constant 2 : index
    %c0_105 = arith.constant 0 : index
    %499 = vector.load %arg30[%c2_104, %c0_105] : memref<4x128xf32, #tpu.memory_space<vmem>>, vector<2x128xf32>
    tpu.vector_store %arg30[%c2_104, %c0_105], %498 {strides = array<i32>} : memref<4x128xf32, #tpu.memory_space<vmem>>, vector<2x128xf32>,
    %c0_106 = arith.constant 0 : index
    %c0_107 = arith.constant 0 : index
    %500 = vector.load %arg30[%c0_106, %c0_107] : memref<4x128xf32, #tpu.memory_space<vmem>>, vector<4x128xf32>
    %c0_108 = arith.constant 0 : index
    %c0_109 = arith.constant 0 : index
    %501 = vector.load %arg10[%c0_108, %c0_109] : memref<128x256xf32, #tpu.memory_space<vmem>>, vector<128x256xf32>
    %cst_110 = arith.constant dense<0.000000e+00> : vector<4x256xf32>
    %502 = tpu.matmul %500, %501, %cst_110 {dimension_numbers = #tpu.dot_dimension_numbers<[1], [0], [0], [1], [0, 0, 1, 1], [], []>} : vector<4x128xf32>, vector<128x256xf32>, vector<4x256xf32> -> vector<4x256xf32>
    %c0_111 = arith.constant 0 : index
    %c0_112 = arith.constant 0 : index
    %503 = vector.load %arg11[%c0_111, %c0_112] : memref<1x256xf32, #tpu.memory_space<vmem>>, vector<1x256xf32>
    %504 = vector.broadcast %503 : vector<1x256xf32> to vector<4x256xf32>
    %505 = arith.addf %502, %504 : vector<4x256xf32>
    %c0_113 = arith.constant 0 : index
    %c0_114 = arith.constant 0 : index
    %506 = vector.load %arg25[%c0_113, %c0_114] : memref<4x256xf32, #tpu.memory_space<vmem>>, vector<4x256xf32>
    tpu.vector_store %arg25[%c0_113, %c0_114], %505 {strides = array<i32>} : memref<4x256xf32, #tpu.memory_space<vmem>>, vector<4x256xf32>,
    %507 = vector.extract_strided_slice %505 {offsets = [0, 0], sizes = [4, 128], strides = [1, 1]} : vector<4x256xf32> to vector<4x128xf32>
    %508 = vector.extract_strided_slice %505 {offsets = [0, 128], sizes = [4, 128], strides = [1, 1]} : vector<4x256xf32> to vector<4x128xf32>
    %c0_115 = arith.constant 0 : index
    %c0_116 = arith.constant 0 : index
    %509 = vector.load %arg12[%c0_115, %c0_116] : memref<4x128xf32, #tpu.memory_space<vmem>>, vector<4x128xf32>
    %cst_117 = arith.constant 5.000000e-01 : f32
    %510 = vector.broadcast %cst_117 : f32 to vector<4x128xf32>
    %511 = arith.mulf %510, %508 : vector<4x128xf32>
    %512 = math.exp %511 : vector<4x128xf32>
    %513 = arith.mulf %509, %512 : vector<4x128xf32>
    %514 = arith.addf %507, %513 : vector<4x128xf32>
    %c0_118 = arith.constant 0 : index
    %c0_119 = arith.constant 0 : index
    %515 = vector.load %arg26[%c0_118, %c0_119] : memref<4x128xf32, #tpu.memory_space<vmem>>, vector<4x128xf32>
    tpu.vector_store %arg26[%c0_118, %c0_119], %514 {strides = array<i32>} : memref<4x128xf32, #tpu.memory_space<vmem>>, vector<4x128xf32>,
    %c0_120 = arith.constant 0 : index
    %c0_121 = arith.constant 0 : index
    %516 = vector.load %arg13[%c0_120, %c0_121] : memref<128x128xf32, #tpu.memory_space<vmem>>, vector<128x128xf32>
    %cst_122 = arith.constant dense<0.000000e+00> : vector<4x128xf32>
    %517 = tpu.matmul %514, %516, %cst_122 {dimension_numbers = #tpu.dot_dimension_numbers<[1], [0], [0], [1], [0, 0, 1, 1], [], []>} : vector<4x128xf32>, vector<128x128xf32>, vector<4x128xf32> -> vector<4x128xf32>
    %c0_123 = arith.constant 0 : index
    %c0_124 = arith.constant 0 : index
    %518 = vector.load %arg14[%c0_123, %c0_124] : memref<1x128xf32, #tpu.memory_space<vmem>>, vector<1x128xf32>
    %519 = vector.broadcast %518 : vector<1x128xf32> to vector<4x128xf32>
    %520 = arith.addf %517, %519 : vector<4x128xf32>
    %c0_125 = arith.constant 0 : index
    %c0_126 = arith.constant 0 : index
    %521 = vector.load %arg1[%c0_125, %c0_126] : memref<2x16xf32, #tpu.memory_space<vmem>>, vector<2x16xf32>
    %c0_127 = arith.constant 0 : index
    %c0_128 = arith.constant 0 : index
    %522 = vector.load %arg29[%c0_127, %c0_128] : memref<16x16xf32, #tpu.memory_space<vmem>>, vector<2x16xf32>
    tpu.vector_store %arg29[%c0_127, %c0_128], %521 {strides = array<i32>} : memref<16x16xf32, #tpu.memory_space<vmem>>, vector<2x16xf32>,
    %523 = vector.extract_strided_slice %24 {offsets = [0, 0], sizes = [14, 16], strides = [1, 1]} : vector<16x16xf32> to vector<14x16xf32>
    %c2_129 = arith.constant 2 : index
    %c0_130 = arith.constant 0 : index
    %524 = vector.load %arg29[%c2_129, %c0_130] : memref<16x16xf32, #tpu.memory_space<vmem>>, vector<14x16xf32>
    tpu.vector_store %arg29[%c2_129, %c0_130], %523 {strides = array<i32>} : memref<16x16xf32, #tpu.memory_space<vmem>>, vector<14x16xf32>,
    %c0_131 = arith.constant 0 : index
    %c0_132 = arith.constant 0 : index
    %525 = vector.load %arg29[%c0_131, %c0_132] : memref<16x16xf32, #tpu.memory_space<vmem>>, vector<16x16xf32>
    %c0_133 = arith.constant 0 : index
    %c0_134 = arith.constant 0 : index
    %526 = vector.load %arg16[%c0_133, %c0_134] : memref<128x384xf32, #tpu.memory_space<vmem>>, vector<128x384xf32>
    %c0_135 = arith.constant 0 : index
    %c0_136 = arith.constant 0 : index
    %527 = vector.load %arg18[%c0_135, %c0_136] : memref<1x384xf32, #tpu.memory_space<vmem>>, vector<1x384xf32>
    %c0_137 = arith.constant 0 : index
    %c0_138 = arith.constant 0 : index
    %528 = vector.load %arg15[%c0_137, %c0_138] : memref<16x384xf32, #tpu.memory_space<vmem>>, vector<16x384xf32>
    %cst_139 = arith.constant dense<0.000000e+00> : vector<16x384xf32>
    %529 = tpu.matmul %525, %528, %cst_139 {dimension_numbers = #tpu.dot_dimension_numbers<[1], [0], [0], [1], [0, 0, 1, 1], [], []>} : vector<16x16xf32>, vector<16x384xf32>, vector<16x384xf32> -> vector<16x384xf32>
    %c0_140 = arith.constant 0 : index
    %c0_141 = arith.constant 0 : index
    %530 = vector.load %arg17[%c0_140, %c0_141] : memref<1x384xf32, #tpu.memory_space<vmem>>, vector<1x384xf32>
    %531 = vector.broadcast %530 : vector<1x384xf32> to vector<16x384xf32>
    %532 = arith.addf %529, %531 : vector<16x384xf32>
    %533 = vector.extract_strided_slice %520 {offsets = [0, 0], sizes = [2, 128], strides = [1, 1]} : vector<4x128xf32> to vector<2x128xf32>
    %cst_142 = arith.constant dense<0.000000e+00> : vector<2x384xf32>
    %534 = tpu.matmul %533, %526, %cst_142 {dimension_numbers = #tpu.dot_dimension_numbers<[1], [0], [0], [1], [0, 0, 1, 1], [], []>} : vector<2x128xf32>, vector<128x384xf32>, vector<2x384xf32> -> vector<2x384xf32>
    %535 = vector.broadcast %527 : vector<1x384xf32> to vector<2x384xf32>
    %536 = arith.addf %534, %535 : vector<2x384xf32>
    %537 = vector.extract_strided_slice %532 {offsets = [0, 0], sizes = [2, 384], strides = [1, 1]} : vector<16x384xf32> to vector<2x384xf32>
    %538 = vector.extract_strided_slice %537 {offsets = [0, 0], sizes = [2, 128], strides = [1, 1]} : vector<2x384xf32> to vector<2x128xf32>
    %539 = vector.extract_strided_slice %536 {offsets = [0, 0], sizes = [2, 128], strides = [1, 1]} : vector<2x384xf32> to vector<2x128xf32>
    %540 = arith.addf %538, %539 : vector<2x128xf32>
    %541 = arith.negf %540 : vector<2x128xf32>
    %542 = math.exp %541 : vector<2x128xf32>
    %cst_143 = arith.constant 1.000000e+00 : f32
    %543 = vector.broadcast %cst_143 : f32 to vector<2x128xf32>
    %544 = arith.addf %543, %542 : vector<2x128xf32>
    %545 = arith.divf %543, %544 : vector<2x128xf32>
    %546 = vector.extract_strided_slice %537 {offsets = [0, 128], sizes = [2, 128], strides = [1, 1]} : vector<2x384xf32> to vector<2x128xf32>
    %547 = vector.extract_strided_slice %536 {offsets = [0, 128], sizes = [2, 128], strides = [1, 1]} : vector<2x384xf32> to vector<2x128xf32>
    %548 = arith.addf %546, %547 : vector<2x128xf32>
    %549 = arith.negf %548 : vector<2x128xf32>
    %550 = math.exp %549 : vector<2x128xf32>
    %cst_144 = arith.constant 1.000000e+00 : f32
    %551 = vector.broadcast %cst_144 : f32 to vector<2x128xf32>
    %552 = arith.addf %551, %550 : vector<2x128xf32>
    %553 = arith.divf %551, %552 : vector<2x128xf32>
    %554 = vector.extract_strided_slice %537 {offsets = [0, 256], sizes = [2, 128], strides = [1, 1]} : vector<2x384xf32> to vector<2x128xf32>
    %555 = vector.extract_strided_slice %536 {offsets = [0, 256], sizes = [2, 128], strides = [1, 1]} : vector<2x384xf32> to vector<2x128xf32>
    %556 = arith.mulf %545, %555 : vector<2x128xf32>
    %557 = arith.addf %554, %556 : vector<2x128xf32>
    %558 = math.tanh %557 : vector<2x128xf32>
    %cst_145 = arith.constant 1.000000e+00 : f32
    %559 = vector.broadcast %cst_145 : f32 to vector<2x128xf32>
    %560 = arith.subf %559, %553 : vector<2x128xf32>
    %561 = arith.mulf %560, %558 : vector<2x128xf32>
    %562 = arith.mulf %553, %533 : vector<2x128xf32>
    %563 = arith.addf %561, %562 : vector<2x128xf32>
    %c0_146 = arith.constant 0 : index
    %c0_147 = arith.constant 0 : index
    %564 = vector.load %arg28[%c0_146, %c0_147] : memref<16x128xf32, #tpu.memory_space<vmem>>, vector<2x128xf32>
    tpu.vector_store %arg28[%c0_146, %c0_147], %563 {strides = array<i32>} : memref<16x128xf32, #tpu.memory_space<vmem>>, vector<2x128xf32>,
    %cst_148 = arith.constant dense<0.000000e+00> : vector<2x384xf32>
    %565 = tpu.matmul %563, %526, %cst_148 {dimension_numbers = #tpu.dot_dimension_numbers<[1], [0], [0], [1], [0, 0, 1, 1], [], []>} : vector<2x128xf32>, vector<128x384xf32>, vector<2x384xf32> -> vector<2x384xf32>
    %566 = vector.broadcast %527 : vector<1x384xf32> to vector<2x384xf32>
    %567 = arith.addf %565, %566 : vector<2x384xf32>
    %568 = vector.extract_strided_slice %532 {offsets = [2, 0], sizes = [2, 384], strides = [1, 1]} : vector<16x384xf32> to vector<2x384xf32>
    %569 = vector.extract_strided_slice %568 {offsets = [0, 0], sizes = [2, 128], strides = [1, 1]} : vector<2x384xf32> to vector<2x128xf32>
    %570 = vector.extract_strided_slice %567 {offsets = [0, 0], sizes = [2, 128], strides = [1, 1]} : vector<2x384xf32> to vector<2x128xf32>
    %571 = arith.addf %569, %570 : vector<2x128xf32>
    %572 = arith.negf %571 : vector<2x128xf32>
    %573 = math.exp %572 : vector<2x128xf32>
    %cst_149 = arith.constant 1.000000e+00 : f32
    %574 = vector.broadcast %cst_149 : f32 to vector<2x128xf32>
    %575 = arith.addf %574, %573 : vector<2x128xf32>
    %576 = arith.divf %574, %575 : vector<2x128xf32>
    %577 = vector.extract_strided_slice %568 {offsets = [0, 128], sizes = [2, 128], strides = [1, 1]} : vector<2x384xf32> to vector<2x128xf32>
    %578 = vector.extract_strided_slice %567 {offsets = [0, 128], sizes = [2, 128], strides = [1, 1]} : vector<2x384xf32> to vector<2x128xf32>
    %579 = arith.addf %577, %578 : vector<2x128xf32>
    %580 = arith.negf %579 : vector<2x128xf32>
    %581 = math.exp %580 : vector<2x128xf32>
    %cst_150 = arith.constant 1.000000e+00 : f32
    %582 = vector.broadcast %cst_150 : f32 to vector<2x128xf32>
    %583 = arith.addf %582, %581 : vector<2x128xf32>
    %584 = arith.divf %582, %583 : vector<2x128xf32>
    %585 = vector.extract_strided_slice %568 {offsets = [0, 256], sizes = [2, 128], strides = [1, 1]} : vector<2x384xf32> to vector<2x128xf32>
    %586 = vector.extract_strided_slice %567 {offsets = [0, 256], sizes = [2, 128], strides = [1, 1]} : vector<2x384xf32> to vector<2x128xf32>
    %587 = arith.mulf %576, %586 : vector<2x128xf32>
    %588 = arith.addf %585, %587 : vector<2x128xf32>
    %589 = math.tanh %588 : vector<2x128xf32>
    %cst_151 = arith.constant 1.000000e+00 : f32
    %590 = vector.broadcast %cst_151 : f32 to vector<2x128xf32>
    %591 = arith.subf %590, %584 : vector<2x128xf32>
    %592 = arith.mulf %591, %589 : vector<2x128xf32>
    %593 = arith.mulf %584, %563 : vector<2x128xf32>
    %594 = arith.addf %592, %593 : vector<2x128xf32>
    %c2_152 = arith.constant 2 : index
    %c0_153 = arith.constant 0 : index
    %595 = vector.load %arg28[%c2_152, %c0_153] : memref<16x128xf32, #tpu.memory_space<vmem>>, vector<2x128xf32>
    tpu.vector_store %arg28[%c2_152, %c0_153], %594 {strides = array<i32>} : memref<16x128xf32, #tpu.memory_space<vmem>>, vector<2x128xf32>,
    %cst_154 = arith.constant dense<0.000000e+00> : vector<2x384xf32>
    %596 = tpu.matmul %594, %526, %cst_154 {dimension_numbers = #tpu.dot_dimension_numbers<[1], [0], [0], [1], [0, 0, 1, 1], [], []>} : vector<2x128xf32>, vector<128x384xf32>, vector<2x384xf32> -> vector<2x384xf32>
    %597 = vector.broadcast %527 : vector<1x384xf32> to vector<2x384xf32>
    %598 = arith.addf %596, %597 : vector<2x384xf32>
    %599 = vector.extract_strided_slice %532 {offsets = [4, 0], sizes = [2, 384], strides = [1, 1]} : vector<16x384xf32> to vector<2x384xf32>
    %600 = vector.extract_strided_slice %599 {offsets = [0, 0], sizes = [2, 128], strides = [1, 1]} : vector<2x384xf32> to vector<2x128xf32>
    %601 = vector.extract_strided_slice %598 {offsets = [0, 0], sizes = [2, 128], strides = [1, 1]} : vector<2x384xf32> to vector<2x128xf32>
    %602 = arith.addf %600, %601 : vector<2x128xf32>
    %603 = arith.negf %602 : vector<2x128xf32>
    %604 = math.exp %603 : vector<2x128xf32>
    %cst_155 = arith.constant 1.000000e+00 : f32
    %605 = vector.broadcast %cst_155 : f32 to vector<2x128xf32>
    %606 = arith.addf %605, %604 : vector<2x128xf32>
    %607 = arith.divf %605, %606 : vector<2x128xf32>
    %608 = vector.extract_strided_slice %599 {offsets = [0, 128], sizes = [2, 128], strides = [1, 1]} : vector<2x384xf32> to vector<2x128xf32>
    %609 = vector.extract_strided_slice %598 {offsets = [0, 128], sizes = [2, 128], strides = [1, 1]} : vector<2x384xf32> to vector<2x128xf32>
    %610 = arith.addf %608, %609 : vector<2x128xf32>
    %611 = arith.negf %610 : vector<2x128xf32>
    %612 = math.exp %611 : vector<2x128xf32>
    %cst_156 = arith.constant 1.000000e+00 : f32
    %613 = vector.broadcast %cst_156 : f32 to vector<2x128xf32>
    %614 = arith.addf %613, %612 : vector<2x128xf32>
    %615 = arith.divf %613, %614 : vector<2x128xf32>
    %616 = vector.extract_strided_slice %599 {offsets = [0, 256], sizes = [2, 128], strides = [1, 1]} : vector<2x384xf32> to vector<2x128xf32>
    %617 = vector.extract_strided_slice %598 {offsets = [0, 256], sizes = [2, 128], strides = [1, 1]} : vector<2x384xf32> to vector<2x128xf32>
    %618 = arith.mulf %607, %617 : vector<2x128xf32>
    %619 = arith.addf %616, %618 : vector<2x128xf32>
    %620 = math.tanh %619 : vector<2x128xf32>
    %cst_157 = arith.constant 1.000000e+00 : f32
    %621 = vector.broadcast %cst_157 : f32 to vector<2x128xf32>
    %622 = arith.subf %621, %615 : vector<2x128xf32>
    %623 = arith.mulf %622, %620 : vector<2x128xf32>
    %624 = arith.mulf %615, %594 : vector<2x128xf32>
    %625 = arith.addf %623, %624 : vector<2x128xf32>
    %c4_158 = arith.constant 4 : index
    %c0_159 = arith.constant 0 : index
    %626 = vector.load %arg28[%c4_158, %c0_159] : memref<16x128xf32, #tpu.memory_space<vmem>>, vector<2x128xf32>
    tpu.vector_store %arg28[%c4_158, %c0_159], %625 {strides = array<i32>} : memref<16x128xf32, #tpu.memory_space<vmem>>, vector<2x128xf32>,
    %cst_160 = arith.constant dense<0.000000e+00> : vector<2x384xf32>
    %627 = tpu.matmul %625, %526, %cst_160 {dimension_numbers = #tpu.dot_dimension_numbers<[1], [0], [0], [1], [0, 0, 1, 1], [], []>} : vector<2x128xf32>, vector<128x384xf32>, vector<2x384xf32> -> vector<2x384xf32>
    %628 = vector.broadcast %527 : vector<1x384xf32> to vector<2x384xf32>
    %629 = arith.addf %627, %628 : vector<2x384xf32>
    %630 = vector.extract_strided_slice %532 {offsets = [6, 0], sizes = [2, 384], strides = [1, 1]} : vector<16x384xf32> to vector<2x384xf32>
    %631 = vector.extract_strided_slice %630 {offsets = [0, 0], sizes = [2, 128], strides = [1, 1]} : vector<2x384xf32> to vector<2x128xf32>
    %632 = vector.extract_strided_slice %629 {offsets = [0, 0], sizes = [2, 128], strides = [1, 1]} : vector<2x384xf32> to vector<2x128xf32>
    %633 = arith.addf %631, %632 : vector<2x128xf32>
    %634 = arith.negf %633 : vector<2x128xf32>
    %635 = math.exp %634 : vector<2x128xf32>
    %cst_161 = arith.constant 1.000000e+00 : f32
    %636 = vector.broadcast %cst_161 : f32 to vector<2x128xf32>
    %637 = arith.addf %636, %635 : vector<2x128xf32>
    %638 = arith.divf %636, %637 : vector<2x128xf32>
    %639 = vector.extract_strided_slice %630 {offsets = [0, 128], sizes = [2, 128], strides = [1, 1]} : vector<2x384xf32> to vector<2x128xf32>
    %640 = vector.extract_strided_slice %629 {offsets = [0, 128], sizes = [2, 128], strides = [1, 1]} : vector<2x384xf32> to vector<2x128xf32>
    %641 = arith.addf %639, %640 : vector<2x128xf32>
    %642 = arith.negf %641 : vector<2x128xf32>
    %643 = math.exp %642 : vector<2x128xf32>
    %cst_162 = arith.constant 1.000000e+00 : f32
    %644 = vector.broadcast %cst_162 : f32 to vector<2x128xf32>
    %645 = arith.addf %644, %643 : vector<2x128xf32>
    %646 = arith.divf %644, %645 : vector<2x128xf32>
    %647 = vector.extract_strided_slice %630 {offsets = [0, 256], sizes = [2, 128], strides = [1, 1]} : vector<2x384xf32> to vector<2x128xf32>
    %648 = vector.extract_strided_slice %629 {offsets = [0, 256], sizes = [2, 128], strides = [1, 1]} : vector<2x384xf32> to vector<2x128xf32>
    %649 = arith.mulf %638, %648 : vector<2x128xf32>
    %650 = arith.addf %647, %649 : vector<2x128xf32>
    %651 = math.tanh %650 : vector<2x128xf32>
    %cst_163 = arith.constant 1.000000e+00 : f32
    %652 = vector.broadcast %cst_163 : f32 to vector<2x128xf32>
    %653 = arith.subf %652, %646 : vector<2x128xf32>
    %654 = arith.mulf %653, %651 : vector<2x128xf32>
    %655 = arith.mulf %646, %625 : vector<2x128xf32>
    %656 = arith.addf %654, %655 : vector<2x128xf32>
    %c6_164 = arith.constant 6 : index
    %c0_165 = arith.constant 0 : index
    %657 = vector.load %arg28[%c6_164, %c0_165] : memref<16x128xf32, #tpu.memory_space<vmem>>, vector<2x128xf32>
    tpu.vector_store %arg28[%c6_164, %c0_165], %656 {strides = array<i32>} : memref<16x128xf32, #tpu.memory_space<vmem>>, vector<2x128xf32>,
    %cst_166 = arith.constant dense<0.000000e+00> : vector<2x384xf32>
    %658 = tpu.matmul %656, %526, %cst_166 {dimension_numbers = #tpu.dot_dimension_numbers<[1], [0], [0], [1], [0, 0, 1, 1], [], []>} : vector<2x128xf32>, vector<128x384xf32>, vector<2x384xf32> -> vector<2x384xf32>
    %659 = vector.broadcast %527 : vector<1x384xf32> to vector<2x384xf32>
    %660 = arith.addf %658, %659 : vector<2x384xf32>
    %661 = vector.extract_strided_slice %532 {offsets = [8, 0], sizes = [2, 384], strides = [1, 1]} : vector<16x384xf32> to vector<2x384xf32>
    %662 = vector.extract_strided_slice %661 {offsets = [0, 0], sizes = [2, 128], strides = [1, 1]} : vector<2x384xf32> to vector<2x128xf32>
    %663 = vector.extract_strided_slice %660 {offsets = [0, 0], sizes = [2, 128], strides = [1, 1]} : vector<2x384xf32> to vector<2x128xf32>
    %664 = arith.addf %662, %663 : vector<2x128xf32>
    %665 = arith.negf %664 : vector<2x128xf32>
    %666 = math.exp %665 : vector<2x128xf32>
    %cst_167 = arith.constant 1.000000e+00 : f32
    %667 = vector.broadcast %cst_167 : f32 to vector<2x128xf32>
    %668 = arith.addf %667, %666 : vector<2x128xf32>
    %669 = arith.divf %667, %668 : vector<2x128xf32>
    %670 = vector.extract_strided_slice %661 {offsets = [0, 128], sizes = [2, 128], strides = [1, 1]} : vector<2x384xf32> to vector<2x128xf32>
    %671 = vector.extract_strided_slice %660 {offsets = [0, 128], sizes = [2, 128], strides = [1, 1]} : vector<2x384xf32> to vector<2x128xf32>
    %672 = arith.addf %670, %671 : vector<2x128xf32>
    %673 = arith.negf %672 : vector<2x128xf32>
    %674 = math.exp %673 : vector<2x128xf32>
    %cst_168 = arith.constant 1.000000e+00 : f32
    %675 = vector.broadcast %cst_168 : f32 to vector<2x128xf32>
    %676 = arith.addf %675, %674 : vector<2x128xf32>
    %677 = arith.divf %675, %676 : vector<2x128xf32>
    %678 = vector.extract_strided_slice %661 {offsets = [0, 256], sizes = [2, 128], strides = [1, 1]} : vector<2x384xf32> to vector<2x128xf32>
    %679 = vector.extract_strided_slice %660 {offsets = [0, 256], sizes = [2, 128], strides = [1, 1]} : vector<2x384xf32> to vector<2x128xf32>
    %680 = arith.mulf %669, %679 : vector<2x128xf32>
    %681 = arith.addf %678, %680 : vector<2x128xf32>
    %682 = math.tanh %681 : vector<2x128xf32>
    %cst_169 = arith.constant 1.000000e+00 : f32
    %683 = vector.broadcast %cst_169 : f32 to vector<2x128xf32>
    %684 = arith.subf %683, %677 : vector<2x128xf32>
    %685 = arith.mulf %684, %682 : vector<2x128xf32>
    %686 = arith.mulf %677, %656 : vector<2x128xf32>
    %687 = arith.addf %685, %686 : vector<2x128xf32>
    %c8_170 = arith.constant 8 : index
    %c0_171 = arith.constant 0 : index
    %688 = vector.load %arg28[%c8_170, %c0_171] : memref<16x128xf32, #tpu.memory_space<vmem>>, vector<2x128xf32>
    tpu.vector_store %arg28[%c8_170, %c0_171], %687 {strides = array<i32>} : memref<16x128xf32, #tpu.memory_space<vmem>>, vector<2x128xf32>,
    %cst_172 = arith.constant dense<0.000000e+00> : vector<2x384xf32>
    %689 = tpu.matmul %687, %526, %cst_172 {dimension_numbers = #tpu.dot_dimension_numbers<[1], [0], [0], [1], [0, 0, 1, 1], [], []>} : vector<2x128xf32>, vector<128x384xf32>, vector<2x384xf32> -> vector<2x384xf32>
    %690 = vector.broadcast %527 : vector<1x384xf32> to vector<2x384xf32>
    %691 = arith.addf %689, %690 : vector<2x384xf32>
    %692 = vector.extract_strided_slice %532 {offsets = [10, 0], sizes = [2, 384], strides = [1, 1]} : vector<16x384xf32> to vector<2x384xf32>
    %693 = vector.extract_strided_slice %692 {offsets = [0, 0], sizes = [2, 128], strides = [1, 1]} : vector<2x384xf32> to vector<2x128xf32>
    %694 = vector.extract_strided_slice %691 {offsets = [0, 0], sizes = [2, 128], strides = [1, 1]} : vector<2x384xf32> to vector<2x128xf32>
    %695 = arith.addf %693, %694 : vector<2x128xf32>
    %696 = arith.negf %695 : vector<2x128xf32>
    %697 = math.exp %696 : vector<2x128xf32>
    %cst_173 = arith.constant 1.000000e+00 : f32
    %698 = vector.broadcast %cst_173 : f32 to vector<2x128xf32>
    %699 = arith.addf %698, %697 : vector<2x128xf32>
    %700 = arith.divf %698, %699 : vector<2x128xf32>
    %701 = vector.extract_strided_slice %692 {offsets = [0, 128], sizes = [2, 128], strides = [1, 1]} : vector<2x384xf32> to vector<2x128xf32>
    %702 = vector.extract_strided_slice %691 {offsets = [0, 128], sizes = [2, 128], strides = [1, 1]} : vector<2x384xf32> to vector<2x128xf32>
    %703 = arith.addf %701, %702 : vector<2x128xf32>
    %704 = arith.negf %703 : vector<2x128xf32>
    %705 = math.exp %704 : vector<2x128xf32>
    %cst_174 = arith.constant 1.000000e+00 : f32
    %706 = vector.broadcast %cst_174 : f32 to vector<2x128xf32>
    %707 = arith.addf %706, %705 : vector<2x128xf32>
    %708 = arith.divf %706, %707 : vector<2x128xf32>
    %709 = vector.extract_strided_slice %692 {offsets = [0, 256], sizes = [2, 128], strides = [1, 1]} : vector<2x384xf32> to vector<2x128xf32>
    %710 = vector.extract_strided_slice %691 {offsets = [0, 256], sizes = [2, 128], strides = [1, 1]} : vector<2x384xf32> to vector<2x128xf32>
    %711 = arith.mulf %700, %710 : vector<2x128xf32>
    %712 = arith.addf %709, %711 : vector<2x128xf32>
    %713 = math.tanh %712 : vector<2x128xf32>
    %cst_175 = arith.constant 1.000000e+00 : f32
    %714 = vector.broadcast %cst_175 : f32 to vector<2x128xf32>
    %715 = arith.subf %714, %708 : vector<2x128xf32>
    %716 = arith.mulf %715, %713 : vector<2x128xf32>
    %717 = arith.mulf %708, %687 : vector<2x128xf32>
    %718 = arith.addf %716, %717 : vector<2x128xf32>
    %c10_176 = arith.constant 10 : index
    %c0_177 = arith.constant 0 : index
    %719 = vector.load %arg28[%c10_176, %c0_177] : memref<16x128xf32, #tpu.memory_space<vmem>>, vector<2x128xf32>
    tpu.vector_store %arg28[%c10_176, %c0_177], %718 {strides = array<i32>} : memref<16x128xf32, #tpu.memory_space<vmem>>, vector<2x128xf32>,
    %cst_178 = arith.constant dense<0.000000e+00> : vector<2x384xf32>
    %720 = tpu.matmul %718, %526, %cst_178 {dimension_numbers = #tpu.dot_dimension_numbers<[1], [0], [0], [1], [0, 0, 1, 1], [], []>} : vector<2x128xf32>, vector<128x384xf32>, vector<2x384xf32> -> vector<2x384xf32>
    %721 = vector.broadcast %527 : vector<1x384xf32> to vector<2x384xf32>
    %722 = arith.addf %720, %721 : vector<2x384xf32>
    %723 = vector.extract_strided_slice %532 {offsets = [12, 0], sizes = [2, 384], strides = [1, 1]} : vector<16x384xf32> to vector<2x384xf32>
    %724 = vector.extract_strided_slice %723 {offsets = [0, 0], sizes = [2, 128], strides = [1, 1]} : vector<2x384xf32> to vector<2x128xf32>
    %725 = vector.extract_strided_slice %722 {offsets = [0, 0], sizes = [2, 128], strides = [1, 1]} : vector<2x384xf32> to vector<2x128xf32>
    %726 = arith.addf %724, %725 : vector<2x128xf32>
    %727 = arith.negf %726 : vector<2x128xf32>
    %728 = math.exp %727 : vector<2x128xf32>
    %cst_179 = arith.constant 1.000000e+00 : f32
    %729 = vector.broadcast %cst_179 : f32 to vector<2x128xf32>
    %730 = arith.addf %729, %728 : vector<2x128xf32>
    %731 = arith.divf %729, %730 : vector<2x128xf32>
    %732 = vector.extract_strided_slice %723 {offsets = [0, 128], sizes = [2, 128], strides = [1, 1]} : vector<2x384xf32> to vector<2x128xf32>
    %733 = vector.extract_strided_slice %722 {offsets = [0, 128], sizes = [2, 128], strides = [1, 1]} : vector<2x384xf32> to vector<2x128xf32>
    %734 = arith.addf %732, %733 : vector<2x128xf32>
    %735 = arith.negf %734 : vector<2x128xf32>
    %736 = math.exp %735 : vector<2x128xf32>
    %cst_180 = arith.constant 1.000000e+00 : f32
    %737 = vector.broadcast %cst_180 : f32 to vector<2x128xf32>
    %738 = arith.addf %737, %736 : vector<2x128xf32>
    %739 = arith.divf %737, %738 : vector<2x128xf32>
    %740 = vector.extract_strided_slice %723 {offsets = [0, 256], sizes = [2, 128], strides = [1, 1]} : vector<2x384xf32> to vector<2x128xf32>
    %741 = vector.extract_strided_slice %722 {offsets = [0, 256], sizes = [2, 128], strides = [1, 1]} : vector<2x384xf32> to vector<2x128xf32>
    %742 = arith.mulf %731, %741 : vector<2x128xf32>
    %743 = arith.addf %740, %742 : vector<2x128xf32>
    %744 = math.tanh %743 : vector<2x128xf32>
    %cst_181 = arith.constant 1.000000e+00 : f32
    %745 = vector.broadcast %cst_181 : f32 to vector<2x128xf32>
    %746 = arith.subf %745, %739 : vector<2x128xf32>
    %747 = arith.mulf %746, %744 : vector<2x128xf32>
    %748 = arith.mulf %739, %718 : vector<2x128xf32>
    %749 = arith.addf %747, %748 : vector<2x128xf32>
    %c12_182 = arith.constant 12 : index
    %c0_183 = arith.constant 0 : index
    %750 = vector.load %arg28[%c12_182, %c0_183] : memref<16x128xf32, #tpu.memory_space<vmem>>, vector<2x128xf32>
    tpu.vector_store %arg28[%c12_182, %c0_183], %749 {strides = array<i32>} : memref<16x128xf32, #tpu.memory_space<vmem>>, vector<2x128xf32>,
    %cst_184 = arith.constant dense<0.000000e+00> : vector<2x384xf32>
    %751 = tpu.matmul %749, %526, %cst_184 {dimension_numbers = #tpu.dot_dimension_numbers<[1], [0], [0], [1], [0, 0, 1, 1], [], []>} : vector<2x128xf32>, vector<128x384xf32>, vector<2x384xf32> -> vector<2x384xf32>
    %752 = vector.broadcast %527 : vector<1x384xf32> to vector<2x384xf32>
    %753 = arith.addf %751, %752 : vector<2x384xf32>
    %754 = vector.extract_strided_slice %532 {offsets = [14, 0], sizes = [2, 384], strides = [1, 1]} : vector<16x384xf32> to vector<2x384xf32>
    %755 = vector.extract_strided_slice %754 {offsets = [0, 0], sizes = [2, 128], strides = [1, 1]} : vector<2x384xf32> to vector<2x128xf32>
    %756 = vector.extract_strided_slice %753 {offsets = [0, 0], sizes = [2, 128], strides = [1, 1]} : vector<2x384xf32> to vector<2x128xf32>
    %757 = arith.addf %755, %756 : vector<2x128xf32>
    %758 = arith.negf %757 : vector<2x128xf32>
    %759 = math.exp %758 : vector<2x128xf32>
    %cst_185 = arith.constant 1.000000e+00 : f32
    %760 = vector.broadcast %cst_185 : f32 to vector<2x128xf32>
    %761 = arith.addf %760, %759 : vector<2x128xf32>
    %762 = arith.divf %760, %761 : vector<2x128xf32>
    %763 = vector.extract_strided_slice %754 {offsets = [0, 128], sizes = [2, 128], strides = [1, 1]} : vector<2x384xf32> to vector<2x128xf32>
    %764 = vector.extract_strided_slice %753 {offsets = [0, 128], sizes = [2, 128], strides = [1, 1]} : vector<2x384xf32> to vector<2x128xf32>
    %765 = arith.addf %763, %764 : vector<2x128xf32>
    %766 = arith.negf %765 : vector<2x128xf32>
    %767 = math.exp %766 : vector<2x128xf32>
    %cst_186 = arith.constant 1.000000e+00 : f32
    %768 = vector.broadcast %cst_186 : f32 to vector<2x128xf32>
    %769 = arith.addf %768, %767 : vector<2x128xf32>
    %770 = arith.divf %768, %769 : vector<2x128xf32>
    %771 = vector.extract_strided_slice %754 {offsets = [0, 256], sizes = [2, 128], strides = [1, 1]} : vector<2x384xf32> to vector<2x128xf32>
    %772 = vector.extract_strided_slice %753 {offsets = [0, 256], sizes = [2, 128], strides = [1, 1]} : vector<2x384xf32> to vector<2x128xf32>
    %773 = arith.mulf %762, %772 : vector<2x128xf32>
    %774 = arith.addf %771, %773 : vector<2x128xf32>
    %775 = math.tanh %774 : vector<2x128xf32>
    %cst_187 = arith.constant 1.000000e+00 : f32
    %776 = vector.broadcast %cst_187 : f32 to vector<2x128xf32>
    %777 = arith.subf %776, %770 : vector<2x128xf32>
    %778 = arith.mulf %777, %775 : vector<2x128xf32>
    %779 = arith.mulf %770, %749 : vector<2x128xf32>
    %780 = arith.addf %778, %779 : vector<2x128xf32>
    %c14_188 = arith.constant 14 : index
    %c0_189 = arith.constant 0 : index
    %781 = vector.load %arg28[%c14_188, %c0_189] : memref<16x128xf32, #tpu.memory_space<vmem>>, vector<2x128xf32>
    tpu.vector_store %arg28[%c14_188, %c0_189], %780 {strides = array<i32>} : memref<16x128xf32, #tpu.memory_space<vmem>>, vector<2x128xf32>,
    %c0_190 = arith.constant 0 : index
    %c0_191 = arith.constant 0 : index
    %782 = vector.load %arg28[%c0_190, %c0_191] : memref<16x128xf32, #tpu.memory_space<vmem>>, vector<16x128xf32>
    %c0_192 = arith.constant 0 : index
    %c0_193 = arith.constant 0 : index
    %783 = vector.load %arg20[%c0_192, %c0_193] : memref<128x384xf32, #tpu.memory_space<vmem>>, vector<128x384xf32>
    %c0_194 = arith.constant 0 : index
    %c0_195 = arith.constant 0 : index
    %784 = vector.load %arg22[%c0_194, %c0_195] : memref<1x384xf32, #tpu.memory_space<vmem>>, vector<1x384xf32>
    %c0_196 = arith.constant 0 : index
    %c0_197 = arith.constant 0 : index
    %785 = vector.load %arg19[%c0_196, %c0_197] : memref<128x384xf32, #tpu.memory_space<vmem>>, vector<128x384xf32>
    %cst_198 = arith.constant dense<0.000000e+00> : vector<16x384xf32>
    %786 = tpu.matmul %782, %785, %cst_198 {dimension_numbers = #tpu.dot_dimension_numbers<[1], [0], [0], [1], [0, 0, 1, 1], [], []>} : vector<16x128xf32>, vector<128x384xf32>, vector<16x384xf32> -> vector<16x384xf32>
    %c0_199 = arith.constant 0 : index
    %c0_200 = arith.constant 0 : index
    %787 = vector.load %arg21[%c0_199, %c0_200] : memref<1x384xf32, #tpu.memory_space<vmem>>, vector<1x384xf32>
    %788 = vector.broadcast %787 : vector<1x384xf32> to vector<16x384xf32>
    %789 = arith.addf %786, %788 : vector<16x384xf32>
    %790 = vector.extract_strided_slice %520 {offsets = [2, 0], sizes = [2, 128], strides = [1, 1]} : vector<4x128xf32> to vector<2x128xf32>
    %cst_201 = arith.constant dense<0.000000e+00> : vector<2x384xf32>
    %791 = tpu.matmul %790, %783, %cst_201 {dimension_numbers = #tpu.dot_dimension_numbers<[1], [0], [0], [1], [0, 0, 1, 1], [], []>} : vector<2x128xf32>, vector<128x384xf32>, vector<2x384xf32> -> vector<2x384xf32>
    %792 = vector.broadcast %784 : vector<1x384xf32> to vector<2x384xf32>
    %793 = arith.addf %791, %792 : vector<2x384xf32>
    %794 = vector.extract_strided_slice %789 {offsets = [0, 0], sizes = [2, 384], strides = [1, 1]} : vector<16x384xf32> to vector<2x384xf32>
    %795 = vector.extract_strided_slice %794 {offsets = [0, 0], sizes = [2, 128], strides = [1, 1]} : vector<2x384xf32> to vector<2x128xf32>
    %796 = vector.extract_strided_slice %793 {offsets = [0, 0], sizes = [2, 128], strides = [1, 1]} : vector<2x384xf32> to vector<2x128xf32>
    %797 = arith.addf %795, %796 : vector<2x128xf32>
    %798 = arith.negf %797 : vector<2x128xf32>
    %799 = math.exp %798 : vector<2x128xf32>
    %cst_202 = arith.constant 1.000000e+00 : f32
    %800 = vector.broadcast %cst_202 : f32 to vector<2x128xf32>
    %801 = arith.addf %800, %799 : vector<2x128xf32>
    %802 = arith.divf %800, %801 : vector<2x128xf32>
    %803 = vector.extract_strided_slice %794 {offsets = [0, 128], sizes = [2, 128], strides = [1, 1]} : vector<2x384xf32> to vector<2x128xf32>
    %804 = vector.extract_strided_slice %793 {offsets = [0, 128], sizes = [2, 128], strides = [1, 1]} : vector<2x384xf32> to vector<2x128xf32>
    %805 = arith.addf %803, %804 : vector<2x128xf32>
    %806 = arith.negf %805 : vector<2x128xf32>
    %807 = math.exp %806 : vector<2x128xf32>
    %cst_203 = arith.constant 1.000000e+00 : f32
    %808 = vector.broadcast %cst_203 : f32 to vector<2x128xf32>
    %809 = arith.addf %808, %807 : vector<2x128xf32>
    %810 = arith.divf %808, %809 : vector<2x128xf32>
    %811 = vector.extract_strided_slice %794 {offsets = [0, 256], sizes = [2, 128], strides = [1, 1]} : vector<2x384xf32> to vector<2x128xf32>
    %812 = vector.extract_strided_slice %793 {offsets = [0, 256], sizes = [2, 128], strides = [1, 1]} : vector<2x384xf32> to vector<2x128xf32>
    %813 = arith.mulf %802, %812 : vector<2x128xf32>
    %814 = arith.addf %811, %813 : vector<2x128xf32>
    %815 = math.tanh %814 : vector<2x128xf32>
    %cst_204 = arith.constant 1.000000e+00 : f32
    %816 = vector.broadcast %cst_204 : f32 to vector<2x128xf32>
    %817 = arith.subf %816, %810 : vector<2x128xf32>
    %818 = arith.mulf %817, %815 : vector<2x128xf32>
    %819 = arith.mulf %810, %790 : vector<2x128xf32>
    %820 = arith.addf %818, %819 : vector<2x128xf32>
    %c0_205 = arith.constant 0 : index
    %c0_206 = arith.constant 0 : index
    %821 = vector.load %arg28[%c0_205, %c0_206] : memref<16x128xf32, #tpu.memory_space<vmem>>, vector<2x128xf32>
    tpu.vector_store %arg28[%c0_205, %c0_206], %820 {strides = array<i32>} : memref<16x128xf32, #tpu.memory_space<vmem>>, vector<2x128xf32>,
    %cst_207 = arith.constant dense<0.000000e+00> : vector<2x384xf32>
    %822 = tpu.matmul %820, %783, %cst_207 {dimension_numbers = #tpu.dot_dimension_numbers<[1], [0], [0], [1], [0, 0, 1, 1], [], []>} : vector<2x128xf32>, vector<128x384xf32>, vector<2x384xf32> -> vector<2x384xf32>
    %823 = vector.broadcast %784 : vector<1x384xf32> to vector<2x384xf32>
    %824 = arith.addf %822, %823 : vector<2x384xf32>
    %825 = vector.extract_strided_slice %789 {offsets = [2, 0], sizes = [2, 384], strides = [1, 1]} : vector<16x384xf32> to vector<2x384xf32>
    %826 = vector.extract_strided_slice %825 {offsets = [0, 0], sizes = [2, 128], strides = [1, 1]} : vector<2x384xf32> to vector<2x128xf32>
    %827 = vector.extract_strided_slice %824 {offsets = [0, 0], sizes = [2, 128], strides = [1, 1]} : vector<2x384xf32> to vector<2x128xf32>
    %828 = arith.addf %826, %827 : vector<2x128xf32>
    %829 = arith.negf %828 : vector<2x128xf32>
    %830 = math.exp %829 : vector<2x128xf32>
    %cst_208 = arith.constant 1.000000e+00 : f32
    %831 = vector.broadcast %cst_208 : f32 to vector<2x128xf32>
    %832 = arith.addf %831, %830 : vector<2x128xf32>
    %833 = arith.divf %831, %832 : vector<2x128xf32>
    %834 = vector.extract_strided_slice %825 {offsets = [0, 128], sizes = [2, 128], strides = [1, 1]} : vector<2x384xf32> to vector<2x128xf32>
    %835 = vector.extract_strided_slice %824 {offsets = [0, 128], sizes = [2, 128], strides = [1, 1]} : vector<2x384xf32> to vector<2x128xf32>
    %836 = arith.addf %834, %835 : vector<2x128xf32>
    %837 = arith.negf %836 : vector<2x128xf32>
    %838 = math.exp %837 : vector<2x128xf32>
    %cst_209 = arith.constant 1.000000e+00 : f32
    %839 = vector.broadcast %cst_209 : f32 to vector<2x128xf32>
    %840 = arith.addf %839, %838 : vector<2x128xf32>
    %841 = arith.divf %839, %840 : vector<2x128xf32>
    %842 = vector.extract_strided_slice %825 {offsets = [0, 256], sizes = [2, 128], strides = [1, 1]} : vector<2x384xf32> to vector<2x128xf32>
    %843 = vector.extract_strided_slice %824 {offsets = [0, 256], sizes = [2, 128], strides = [1, 1]} : vector<2x384xf32> to vector<2x128xf32>
    %844 = arith.mulf %833, %843 : vector<2x128xf32>
    %845 = arith.addf %842, %844 : vector<2x128xf32>
    %846 = math.tanh %845 : vector<2x128xf32>
    %cst_210 = arith.constant 1.000000e+00 : f32
    %847 = vector.broadcast %cst_210 : f32 to vector<2x128xf32>
    %848 = arith.subf %847, %841 : vector<2x128xf32>
    %849 = arith.mulf %848, %846 : vector<2x128xf32>
    %850 = arith.mulf %841, %820 : vector<2x128xf32>
    %851 = arith.addf %849, %850 : vector<2x128xf32>
    %c2_211 = arith.constant 2 : index
    %c0_212 = arith.constant 0 : index
    %852 = vector.load %arg28[%c2_211, %c0_212] : memref<16x128xf32, #tpu.memory_space<vmem>>, vector<2x128xf32>
    tpu.vector_store %arg28[%c2_211, %c0_212], %851 {strides = array<i32>} : memref<16x128xf32, #tpu.memory_space<vmem>>, vector<2x128xf32>,
    %cst_213 = arith.constant dense<0.000000e+00> : vector<2x384xf32>
    %853 = tpu.matmul %851, %783, %cst_213 {dimension_numbers = #tpu.dot_dimension_numbers<[1], [0], [0], [1], [0, 0, 1, 1], [], []>} : vector<2x128xf32>, vector<128x384xf32>, vector<2x384xf32> -> vector<2x384xf32>
    %854 = vector.broadcast %784 : vector<1x384xf32> to vector<2x384xf32>
    %855 = arith.addf %853, %854 : vector<2x384xf32>
    %856 = vector.extract_strided_slice %789 {offsets = [4, 0], sizes = [2, 384], strides = [1, 1]} : vector<16x384xf32> to vector<2x384xf32>
    %857 = vector.extract_strided_slice %856 {offsets = [0, 0], sizes = [2, 128], strides = [1, 1]} : vector<2x384xf32> to vector<2x128xf32>
    %858 = vector.extract_strided_slice %855 {offsets = [0, 0], sizes = [2, 128], strides = [1, 1]} : vector<2x384xf32> to vector<2x128xf32>
    %859 = arith.addf %857, %858 : vector<2x128xf32>
    %860 = arith.negf %859 : vector<2x128xf32>
    %861 = math.exp %860 : vector<2x128xf32>
    %cst_214 = arith.constant 1.000000e+00 : f32
    %862 = vector.broadcast %cst_214 : f32 to vector<2x128xf32>
    %863 = arith.addf %862, %861 : vector<2x128xf32>
    %864 = arith.divf %862, %863 : vector<2x128xf32>
    %865 = vector.extract_strided_slice %856 {offsets = [0, 128], sizes = [2, 128], strides = [1, 1]} : vector<2x384xf32> to vector<2x128xf32>
    %866 = vector.extract_strided_slice %855 {offsets = [0, 128], sizes = [2, 128], strides = [1, 1]} : vector<2x384xf32> to vector<2x128xf32>
    %867 = arith.addf %865, %866 : vector<2x128xf32>
    %868 = arith.negf %867 : vector<2x128xf32>
    %869 = math.exp %868 : vector<2x128xf32>
    %cst_215 = arith.constant 1.000000e+00 : f32
    %870 = vector.broadcast %cst_215 : f32 to vector<2x128xf32>
    %871 = arith.addf %870, %869 : vector<2x128xf32>
    %872 = arith.divf %870, %871 : vector<2x128xf32>
    %873 = vector.extract_strided_slice %856 {offsets = [0, 256], sizes = [2, 128], strides = [1, 1]} : vector<2x384xf32> to vector<2x128xf32>
    %874 = vector.extract_strided_slice %855 {offsets = [0, 256], sizes = [2, 128], strides = [1, 1]} : vector<2x384xf32> to vector<2x128xf32>
    %875 = arith.mulf %864, %874 : vector<2x128xf32>
    %876 = arith.addf %873, %875 : vector<2x128xf32>
    %877 = math.tanh %876 : vector<2x128xf32>
    %cst_216 = arith.constant 1.000000e+00 : f32
    %878 = vector.broadcast %cst_216 : f32 to vector<2x128xf32>
    %879 = arith.subf %878, %872 : vector<2x128xf32>
    %880 = arith.mulf %879, %877 : vector<2x128xf32>
    %881 = arith.mulf %872, %851 : vector<2x128xf32>
    %882 = arith.addf %880, %881 : vector<2x128xf32>
    %c4_217 = arith.constant 4 : index
    %c0_218 = arith.constant 0 : index
    %883 = vector.load %arg28[%c4_217, %c0_218] : memref<16x128xf32, #tpu.memory_space<vmem>>, vector<2x128xf32>
    tpu.vector_store %arg28[%c4_217, %c0_218], %882 {strides = array<i32>} : memref<16x128xf32, #tpu.memory_space<vmem>>, vector<2x128xf32>,
    %cst_219 = arith.constant dense<0.000000e+00> : vector<2x384xf32>
    %884 = tpu.matmul %882, %783, %cst_219 {dimension_numbers = #tpu.dot_dimension_numbers<[1], [0], [0], [1], [0, 0, 1, 1], [], []>} : vector<2x128xf32>, vector<128x384xf32>, vector<2x384xf32> -> vector<2x384xf32>
    %885 = vector.broadcast %784 : vector<1x384xf32> to vector<2x384xf32>
    %886 = arith.addf %884, %885 : vector<2x384xf32>
    %887 = vector.extract_strided_slice %789 {offsets = [6, 0], sizes = [2, 384], strides = [1, 1]} : vector<16x384xf32> to vector<2x384xf32>
    %888 = vector.extract_strided_slice %887 {offsets = [0, 0], sizes = [2, 128], strides = [1, 1]} : vector<2x384xf32> to vector<2x128xf32>
    %889 = vector.extract_strided_slice %886 {offsets = [0, 0], sizes = [2, 128], strides = [1, 1]} : vector<2x384xf32> to vector<2x128xf32>
    %890 = arith.addf %888, %889 : vector<2x128xf32>
    %891 = arith.negf %890 : vector<2x128xf32>
    %892 = math.exp %891 : vector<2x128xf32>
    %cst_220 = arith.constant 1.000000e+00 : f32
    %893 = vector.broadcast %cst_220 : f32 to vector<2x128xf32>
    %894 = arith.addf %893, %892 : vector<2x128xf32>
    %895 = arith.divf %893, %894 : vector<2x128xf32>
    %896 = vector.extract_strided_slice %887 {offsets = [0, 128], sizes = [2, 128], strides = [1, 1]} : vector<2x384xf32> to vector<2x128xf32>
    %897 = vector.extract_strided_slice %886 {offsets = [0, 128], sizes = [2, 128], strides = [1, 1]} : vector<2x384xf32> to vector<2x128xf32>
    %898 = arith.addf %896, %897 : vector<2x128xf32>
    %899 = arith.negf %898 : vector<2x128xf32>
    %900 = math.exp %899 : vector<2x128xf32>
    %cst_221 = arith.constant 1.000000e+00 : f32
    %901 = vector.broadcast %cst_221 : f32 to vector<2x128xf32>
    %902 = arith.addf %901, %900 : vector<2x128xf32>
    %903 = arith.divf %901, %902 : vector<2x128xf32>
    %904 = vector.extract_strided_slice %887 {offsets = [0, 256], sizes = [2, 128], strides = [1, 1]} : vector<2x384xf32> to vector<2x128xf32>
    %905 = vector.extract_strided_slice %886 {offsets = [0, 256], sizes = [2, 128], strides = [1, 1]} : vector<2x384xf32> to vector<2x128xf32>
    %906 = arith.mulf %895, %905 : vector<2x128xf32>
    %907 = arith.addf %904, %906 : vector<2x128xf32>
    %908 = math.tanh %907 : vector<2x128xf32>
    %cst_222 = arith.constant 1.000000e+00 : f32
    %909 = vector.broadcast %cst_222 : f32 to vector<2x128xf32>
    %910 = arith.subf %909, %903 : vector<2x128xf32>
    %911 = arith.mulf %910, %908 : vector<2x128xf32>
    %912 = arith.mulf %903, %882 : vector<2x128xf32>
    %913 = arith.addf %911, %912 : vector<2x128xf32>
    %c6_223 = arith.constant 6 : index
    %c0_224 = arith.constant 0 : index
    %914 = vector.load %arg28[%c6_223, %c0_224] : memref<16x128xf32, #tpu.memory_space<vmem>>, vector<2x128xf32>
    tpu.vector_store %arg28[%c6_223, %c0_224], %913 {strides = array<i32>} : memref<16x128xf32, #tpu.memory_space<vmem>>, vector<2x128xf32>,
    %cst_225 = arith.constant dense<0.000000e+00> : vector<2x384xf32>
    %915 = tpu.matmul %913, %783, %cst_225 {dimension_numbers = #tpu.dot_dimension_numbers<[1], [0], [0], [1], [0, 0, 1, 1], [], []>} : vector<2x128xf32>, vector<128x384xf32>, vector<2x384xf32> -> vector<2x384xf32>
    %916 = vector.broadcast %784 : vector<1x384xf32> to vector<2x384xf32>
    %917 = arith.addf %915, %916 : vector<2x384xf32>
    %918 = vector.extract_strided_slice %789 {offsets = [8, 0], sizes = [2, 384], strides = [1, 1]} : vector<16x384xf32> to vector<2x384xf32>
    %919 = vector.extract_strided_slice %918 {offsets = [0, 0], sizes = [2, 128], strides = [1, 1]} : vector<2x384xf32> to vector<2x128xf32>
    %920 = vector.extract_strided_slice %917 {offsets = [0, 0], sizes = [2, 128], strides = [1, 1]} : vector<2x384xf32> to vector<2x128xf32>
    %921 = arith.addf %919, %920 : vector<2x128xf32>
    %922 = arith.negf %921 : vector<2x128xf32>
    %923 = math.exp %922 : vector<2x128xf32>
    %cst_226 = arith.constant 1.000000e+00 : f32
    %924 = vector.broadcast %cst_226 : f32 to vector<2x128xf32>
    %925 = arith.addf %924, %923 : vector<2x128xf32>
    %926 = arith.divf %924, %925 : vector<2x128xf32>
    %927 = vector.extract_strided_slice %918 {offsets = [0, 128], sizes = [2, 128], strides = [1, 1]} : vector<2x384xf32> to vector<2x128xf32>
    %928 = vector.extract_strided_slice %917 {offsets = [0, 128], sizes = [2, 128], strides = [1, 1]} : vector<2x384xf32> to vector<2x128xf32>
    %929 = arith.addf %927, %928 : vector<2x128xf32>
    %930 = arith.negf %929 : vector<2x128xf32>
    %931 = math.exp %930 : vector<2x128xf32>
    %cst_227 = arith.constant 1.000000e+00 : f32
    %932 = vector.broadcast %cst_227 : f32 to vector<2x128xf32>
    %933 = arith.addf %932, %931 : vector<2x128xf32>
    %934 = arith.divf %932, %933 : vector<2x128xf32>
    %935 = vector.extract_strided_slice %918 {offsets = [0, 256], sizes = [2, 128], strides = [1, 1]} : vector<2x384xf32> to vector<2x128xf32>
    %936 = vector.extract_strided_slice %917 {offsets = [0, 256], sizes = [2, 128], strides = [1, 1]} : vector<2x384xf32> to vector<2x128xf32>
    %937 = arith.mulf %926, %936 : vector<2x128xf32>
    %938 = arith.addf %935, %937 : vector<2x128xf32>
    %939 = math.tanh %938 : vector<2x128xf32>
    %cst_228 = arith.constant 1.000000e+00 : f32
    %940 = vector.broadcast %cst_228 : f32 to vector<2x128xf32>
    %941 = arith.subf %940, %934 : vector<2x128xf32>
    %942 = arith.mulf %941, %939 : vector<2x128xf32>
    %943 = arith.mulf %934, %913 : vector<2x128xf32>
    %944 = arith.addf %942, %943 : vector<2x128xf32>
    %c8_229 = arith.constant 8 : index
    %c0_230 = arith.constant 0 : index
    %945 = vector.load %arg28[%c8_229, %c0_230] : memref<16x128xf32, #tpu.memory_space<vmem>>, vector<2x128xf32>
    tpu.vector_store %arg28[%c8_229, %c0_230], %944 {strides = array<i32>} : memref<16x128xf32, #tpu.memory_space<vmem>>, vector<2x128xf32>,
    %cst_231 = arith.constant dense<0.000000e+00> : vector<2x384xf32>
    %946 = tpu.matmul %944, %783, %cst_231 {dimension_numbers = #tpu.dot_dimension_numbers<[1], [0], [0], [1], [0, 0, 1, 1], [], []>} : vector<2x128xf32>, vector<128x384xf32>, vector<2x384xf32> -> vector<2x384xf32>
    %947 = vector.broadcast %784 : vector<1x384xf32> to vector<2x384xf32>
    %948 = arith.addf %946, %947 : vector<2x384xf32>
    %949 = vector.extract_strided_slice %789 {offsets = [10, 0], sizes = [2, 384], strides = [1, 1]} : vector<16x384xf32> to vector<2x384xf32>
    %950 = vector.extract_strided_slice %949 {offsets = [0, 0], sizes = [2, 128], strides = [1, 1]} : vector<2x384xf32> to vector<2x128xf32>
    %951 = vector.extract_strided_slice %948 {offsets = [0, 0], sizes = [2, 128], strides = [1, 1]} : vector<2x384xf32> to vector<2x128xf32>
    %952 = arith.addf %950, %951 : vector<2x128xf32>
    %953 = arith.negf %952 : vector<2x128xf32>
    %954 = math.exp %953 : vector<2x128xf32>
    %cst_232 = arith.constant 1.000000e+00 : f32
    %955 = vector.broadcast %cst_232 : f32 to vector<2x128xf32>
    %956 = arith.addf %955, %954 : vector<2x128xf32>
    %957 = arith.divf %955, %956 : vector<2x128xf32>
    %958 = vector.extract_strided_slice %949 {offsets = [0, 128], sizes = [2, 128], strides = [1, 1]} : vector<2x384xf32> to vector<2x128xf32>
    %959 = vector.extract_strided_slice %948 {offsets = [0, 128], sizes = [2, 128], strides = [1, 1]} : vector<2x384xf32> to vector<2x128xf32>
    %960 = arith.addf %958, %959 : vector<2x128xf32>
    %961 = arith.negf %960 : vector<2x128xf32>
    %962 = math.exp %961 : vector<2x128xf32>
    %cst_233 = arith.constant 1.000000e+00 : f32
    %963 = vector.broadcast %cst_233 : f32 to vector<2x128xf32>
    %964 = arith.addf %963, %962 : vector<2x128xf32>
    %965 = arith.divf %963, %964 : vector<2x128xf32>
    %966 = vector.extract_strided_slice %949 {offsets = [0, 256], sizes = [2, 128], strides = [1, 1]} : vector<2x384xf32> to vector<2x128xf32>
    %967 = vector.extract_strided_slice %948 {offsets = [0, 256], sizes = [2, 128], strides = [1, 1]} : vector<2x384xf32> to vector<2x128xf32>
    %968 = arith.mulf %957, %967 : vector<2x128xf32>
    %969 = arith.addf %966, %968 : vector<2x128xf32>
    %970 = math.tanh %969 : vector<2x128xf32>
    %cst_234 = arith.constant 1.000000e+00 : f32
    %971 = vector.broadcast %cst_234 : f32 to vector<2x128xf32>
    %972 = arith.subf %971, %965 : vector<2x128xf32>
    %973 = arith.mulf %972, %970 : vector<2x128xf32>
    %974 = arith.mulf %965, %944 : vector<2x128xf32>
    %975 = arith.addf %973, %974 : vector<2x128xf32>
    %c10_235 = arith.constant 10 : index
    %c0_236 = arith.constant 0 : index
    %976 = vector.load %arg28[%c10_235, %c0_236] : memref<16x128xf32, #tpu.memory_space<vmem>>, vector<2x128xf32>
    tpu.vector_store %arg28[%c10_235, %c0_236], %975 {strides = array<i32>} : memref<16x128xf32, #tpu.memory_space<vmem>>, vector<2x128xf32>,
    %cst_237 = arith.constant dense<0.000000e+00> : vector<2x384xf32>
    %977 = tpu.matmul %975, %783, %cst_237 {dimension_numbers = #tpu.dot_dimension_numbers<[1], [0], [0], [1], [0, 0, 1, 1], [], []>} : vector<2x128xf32>, vector<128x384xf32>, vector<2x384xf32> -> vector<2x384xf32>
    %978 = vector.broadcast %784 : vector<1x384xf32> to vector<2x384xf32>
    %979 = arith.addf %977, %978 : vector<2x384xf32>
    %980 = vector.extract_strided_slice %789 {offsets = [12, 0], sizes = [2, 384], strides = [1, 1]} : vector<16x384xf32> to vector<2x384xf32>
    %981 = vector.extract_strided_slice %980 {offsets = [0, 0], sizes = [2, 128], strides = [1, 1]} : vector<2x384xf32> to vector<2x128xf32>
    %982 = vector.extract_strided_slice %979 {offsets = [0, 0], sizes = [2, 128], strides = [1, 1]} : vector<2x384xf32> to vector<2x128xf32>
    %983 = arith.addf %981, %982 : vector<2x128xf32>
    %984 = arith.negf %983 : vector<2x128xf32>
    %985 = math.exp %984 : vector<2x128xf32>
    %cst_238 = arith.constant 1.000000e+00 : f32
    %986 = vector.broadcast %cst_238 : f32 to vector<2x128xf32>
    %987 = arith.addf %986, %985 : vector<2x128xf32>
    %988 = arith.divf %986, %987 : vector<2x128xf32>
    %989 = vector.extract_strided_slice %980 {offsets = [0, 128], sizes = [2, 128], strides = [1, 1]} : vector<2x384xf32> to vector<2x128xf32>
    %990 = vector.extract_strided_slice %979 {offsets = [0, 128], sizes = [2, 128], strides = [1, 1]} : vector<2x384xf32> to vector<2x128xf32>
    %991 = arith.addf %989, %990 : vector<2x128xf32>
    %992 = arith.negf %991 : vector<2x128xf32>
    %993 = math.exp %992 : vector<2x128xf32>
    %cst_239 = arith.constant 1.000000e+00 : f32
    %994 = vector.broadcast %cst_239 : f32 to vector<2x128xf32>
    %995 = arith.addf %994, %993 : vector<2x128xf32>
    %996 = arith.divf %994, %995 : vector<2x128xf32>
    %997 = vector.extract_strided_slice %980 {offsets = [0, 256], sizes = [2, 128], strides = [1, 1]} : vector<2x384xf32> to vector<2x128xf32>
    %998 = vector.extract_strided_slice %979 {offsets = [0, 256], sizes = [2, 128], strides = [1, 1]} : vector<2x384xf32> to vector<2x128xf32>
    %999 = arith.mulf %988, %998 : vector<2x128xf32>
    %1000 = arith.addf %997, %999 : vector<2x128xf32>
    %1001 = math.tanh %1000 : vector<2x128xf32>
    %cst_240 = arith.constant 1.000000e+00 : f32
    %1002 = vector.broadcast %cst_240 : f32 to vector<2x128xf32>
    %1003 = arith.subf %1002, %996 : vector<2x128xf32>
    %1004 = arith.mulf %1003, %1001 : vector<2x128xf32>
    %1005 = arith.mulf %996, %975 : vector<2x128xf32>
    %1006 = arith.addf %1004, %1005 : vector<2x128xf32>
    %c12_241 = arith.constant 12 : index
    %c0_242 = arith.constant 0 : index
    %1007 = vector.load %arg28[%c12_241, %c0_242] : memref<16x128xf32, #tpu.memory_space<vmem>>, vector<2x128xf32>
    tpu.vector_store %arg28[%c12_241, %c0_242], %1006 {strides = array<i32>} : memref<16x128xf32, #tpu.memory_space<vmem>>, vector<2x128xf32>,
    %cst_243 = arith.constant dense<0.000000e+00> : vector<2x384xf32>
    %1008 = tpu.matmul %1006, %783, %cst_243 {dimension_numbers = #tpu.dot_dimension_numbers<[1], [0], [0], [1], [0, 0, 1, 1], [], []>} : vector<2x128xf32>, vector<128x384xf32>, vector<2x384xf32> -> vector<2x384xf32>
    %1009 = vector.broadcast %784 : vector<1x384xf32> to vector<2x384xf32>
    %1010 = arith.addf %1008, %1009 : vector<2x384xf32>
    %1011 = vector.extract_strided_slice %789 {offsets = [14, 0], sizes = [2, 384], strides = [1, 1]} : vector<16x384xf32> to vector<2x384xf32>
    %1012 = vector.extract_strided_slice %1011 {offsets = [0, 0], sizes = [2, 128], strides = [1, 1]} : vector<2x384xf32> to vector<2x128xf32>
    %1013 = vector.extract_strided_slice %1010 {offsets = [0, 0], sizes = [2, 128], strides = [1, 1]} : vector<2x384xf32> to vector<2x128xf32>
    %1014 = arith.addf %1012, %1013 : vector<2x128xf32>
    %1015 = arith.negf %1014 : vector<2x128xf32>
    %1016 = math.exp %1015 : vector<2x128xf32>
    %cst_244 = arith.constant 1.000000e+00 : f32
    %1017 = vector.broadcast %cst_244 : f32 to vector<2x128xf32>
    %1018 = arith.addf %1017, %1016 : vector<2x128xf32>
    %1019 = arith.divf %1017, %1018 : vector<2x128xf32>
    %1020 = vector.extract_strided_slice %1011 {offsets = [0, 128], sizes = [2, 128], strides = [1, 1]} : vector<2x384xf32> to vector<2x128xf32>
    %1021 = vector.extract_strided_slice %1010 {offsets = [0, 128], sizes = [2, 128], strides = [1, 1]} : vector<2x384xf32> to vector<2x128xf32>
    %1022 = arith.addf %1020, %1021 : vector<2x128xf32>
    %1023 = arith.negf %1022 : vector<2x128xf32>
    %1024 = math.exp %1023 : vector<2x128xf32>
    %cst_245 = arith.constant 1.000000e+00 : f32
    %1025 = vector.broadcast %cst_245 : f32 to vector<2x128xf32>
    %1026 = arith.addf %1025, %1024 : vector<2x128xf32>
    %1027 = arith.divf %1025, %1026 : vector<2x128xf32>
    %1028 = vector.extract_strided_slice %1011 {offsets = [0, 256], sizes = [2, 128], strides = [1, 1]} : vector<2x384xf32> to vector<2x128xf32>
    %1029 = vector.extract_strided_slice %1010 {offsets = [0, 256], sizes = [2, 128], strides = [1, 1]} : vector<2x384xf32> to vector<2x128xf32>
    %1030 = arith.mulf %1019, %1029 : vector<2x128xf32>
    %1031 = arith.addf %1028, %1030 : vector<2x128xf32>
    %1032 = math.tanh %1031 : vector<2x128xf32>
    %cst_246 = arith.constant 1.000000e+00 : f32
    %1033 = vector.broadcast %cst_246 : f32 to vector<2x128xf32>
    %1034 = arith.subf %1033, %1027 : vector<2x128xf32>
    %1035 = arith.mulf %1034, %1032 : vector<2x128xf32>
    %1036 = arith.mulf %1027, %1006 : vector<2x128xf32>
    %1037 = arith.addf %1035, %1036 : vector<2x128xf32>
    %c14_247 = arith.constant 14 : index
    %c0_248 = arith.constant 0 : index
    %1038 = vector.load %arg28[%c14_247, %c0_248] : memref<16x128xf32, #tpu.memory_space<vmem>>, vector<2x128xf32>
    tpu.vector_store %arg28[%c14_247, %c0_248], %1037 {strides = array<i32>} : memref<16x128xf32, #tpu.memory_space<vmem>>, vector<2x128xf32>,
    %c0_249 = arith.constant 0 : index
    %c0_250 = arith.constant 0 : index
    %1039 = vector.load %arg28[%c0_249, %c0_250] : memref<16x128xf32, #tpu.memory_space<vmem>>, vector<16x128xf32>
    %c0_251 = arith.constant 0 : index
    %c0_252 = arith.constant 0 : index
    %1040 = vector.load %arg23[%c0_251, %c0_252] : memref<128x128xf32, #tpu.memory_space<vmem>>, vector<128x128xf32>
    %cst_253 = arith.constant dense<0.000000e+00> : vector<16x128xf32>
    %1041 = tpu.matmul %1039, %1040, %cst_253 {dimension_numbers = #tpu.dot_dimension_numbers<[1], [0], [0], [1], [0, 0, 1, 1], [], []>} : vector<16x128xf32>, vector<128x128xf32>, vector<16x128xf32> -> vector<16x128xf32>
    %c0_254 = arith.constant 0 : index
    %c0_255 = arith.constant 0 : index
    %1042 = vector.load %arg24[%c0_254, %c0_255] : memref<1x128xf32, #tpu.memory_space<vmem>>, vector<1x128xf32>
    %1043 = vector.broadcast %1042 : vector<1x128xf32> to vector<16x128xf32>
    %1044 = arith.addf %1041, %1043 : vector<16x128xf32>
    %c0_256 = arith.constant 0 : index
    %c0_257 = arith.constant 0 : index
    %1045 = vector.load %arg27[%c0_256, %c0_257] : memref<16x128xf32, #tpu.memory_space<vmem>>, vector<16x128xf32>
    tpu.vector_store %arg27[%c0_256, %c0_257], %1044 {strides = array<i32>} : memref<16x128xf32, #tpu.memory_space<vmem>>, vector<16x128xf32>,
    return
  }
}

</mosaic_0001>

<llo_original>
// kernel: _lambda_.1
$region0: #{_lambda_.1}
  #allocation0 [shape = 'u32[]', space=smem, size = 0x4, offset = 0x4, fixed_abs, tag = 'smem constant byte address 0x4 - core index']
  #allocation1 [shape = 'u32[144,128]{1,0:T(1,128)}', space=vmem, size = 0x12000, scoped, tag = 'internal scratch']
  #allocation2 [shape = 'f32[16,128]{1,0:T(8,128)}', space=vmem, size = 0x2000, scoped, tag = 'scratch operand']
  #allocation3 [shape = 'f32[16,16]{1,0:T(8,128)}', space=vmem, size = 0x2000, scoped, tag = 'scratch operand']
  #allocation4 [shape = 'f32[4,128]{1,0:T(4,128)}', space=vmem, size = 0x800, scoped, tag = 'scratch operand']
  %s0 = inlined_call_operand.vmem [shape: f32[16,16], index: 0, kind: input, shape index: {}]
  %s1 = inlined_call_operand.vmem [shape: f32[2,16], index: 1, kind: input, shape index: {}]
  %s2 = inlined_call_operand.vmem [shape: f32[1,16], index: 2, kind: input, shape index: {}]
  %s3 = inlined_call_operand.vmem [shape: f32[1,16], index: 3, kind: input, shape index: {}]
  %s4 = inlined_call_operand.vmem [shape: f32[16,512], index: 4, kind: input, shape index: {}]
  %s5 = inlined_call_operand.hbm [shape: f32[128,512], index: 5, kind: input, shape index: {}]
  %s6 = inlined_call_operand.vmem [shape: f32[1,512], index: 6, kind: input, shape index: {}]
  %s7 = inlined_call_operand.hbm [shape: f32[128,512], index: 7, kind: input, shape index: {}]
  %s8 = inlined_call_operand.hbm [shape: f32[128,512], index: 8, kind: input, shape index: {}]
  %s9 = inlined_call_operand.vmem [shape: f32[1,512], index: 9, kind: input, shape index: {}]
  %s10 = inlined_call_operand.hbm [shape: f32[128,256], index: 10, kind: input, shape index: {}]
  %s11 = inlined_call_operand.vmem [shape: f32[1,256], index: 11, kind: input, shape index: {}]
  %s12 = inlined_call_operand.vmem [shape: f32[4,128], index: 12, kind: input, shape index: {}]
  %s13 = inlined_call_operand.hbm [shape: f32[128,128], index: 13, kind: input, shape index: {}]
  %s14 = inlined_call_operand.vmem [shape: f32[1,128], index: 14, kind: input, shape index: {}]
  %s15 = inlined_call_operand.hbm [shape: f32[16,384], index: 15, kind: input, shape index: {}]
  %s16 = inlined_call_operand.vmem [shape: f32[128,384], index: 16, kind: input, shape index: {}]
  %s17 = inlined_call_operand.vmem [shape: f32[1,384], index: 17, kind: input, shape index: {}]
  %s18 = inlined_call_operand.vmem [shape: f32[1,384], index: 18, kind: input, shape index: {}]
  %s19 = inlined_call_operand.hbm [shape: f32[128,384], index: 19, kind: input, shape index: {}]
  %s20 = inlined_call_operand.hbm [shape: f32[128,384], index: 20, kind: input, shape index: {}]
  %s21 = inlined_call_operand.vmem [shape: f32[1,384], index: 21, kind: input, shape index: {}]
  %s22 = inlined_call_operand.vmem [shape: f32[1,384], index: 22, kind: input, shape index: {}]
  %s23 = inlined_call_operand.hbm [shape: f32[128,128], index: 23, kind: input, shape index: {}]
  %s24 = inlined_call_operand.vmem [shape: f32[1,128], index: 24, kind: input, shape index: {}]
  %s25 = inlined_call_operand.vmem [shape: f32[4,256], index: 25, kind: output, shape index: {0}]
  %s26 = inlined_call_operand.vmem [shape: f32[4,128], index: 26, kind: output, shape index: {1}]
  %s27 = inlined_call_operand.vmem [shape: f32[16,128], index: 27, kind: output, shape index: {2}]
  %28 = xla_tuple %s25, %s26, %s27
  %s29 = sld [smem:[#allocation0]]
  $region162: #{_lambda_.1} parent=0
    _
  %s31 = ssub.s32 1, %s29
  %s32 = scalar_select 0, %s31, %s29
  $region1: #{_lambda_.1} parent=0
    #allocation5 [shape = 'u8[262144]{0}', space=vmem, size = 0x40000, scoped, tag = 'input window, operand 5, single buffered']
    #allocation6 [shape = 's32[1]{0}', space=sflag, size = 0x4, scoped, tag = 'scoped memory for _lambda_.1']
    #allocation7 [shape = 'u8[262144]{0}', space=vmem, size = 0x40000, scoped, tag = 'input window, operand 7, single buffered']
    #allocation8 [shape = 's32[1]{0}', space=sflag, size = 0x4, scoped, tag = 'scoped memory for _lambda_.1']
    #allocation9 [shape = 'u8[262144]{0}', space=vmem, size = 0x40000, scoped, tag = 'input window, operand 8, single buffered']
    #allocation10 [shape = 'u8[131072]{0}', space=vmem, size = 0x20000, scoped, tag = 'input window, operand 10, single buffered']
    #allocation11 [shape = 's32[1]{0}', space=sflag, size = 0x4, scoped, tag = 'scoped memory for _lambda_.1']
    #allocation12 [shape = 'u8[65536]{0}', space=vmem, size = 0x10000, scoped, tag = 'input window, operand 13, single buffered']
    #allocation13 [shape = 'u8[24576]{0}', space=vmem, size = 0x6000, scoped, tag = 'input window, operand 15, single buffered']
    #allocation14 [shape = 's32[1]{0}', space=sflag, size = 0x4, scoped, tag = 'scoped memory for _lambda_.1']
    #allocation15 [shape = 'u8[196608]{0}', space=vmem, size = 0x30000, scoped, tag = 'input window, operand 19, single buffered']
    #allocation16 [shape = 'u8[196608]{0}', space=vmem, size = 0x30000, scoped, tag = 'input window, operand 20, single buffered']
    #allocation17 [shape = 's32[1]{0}', space=sflag, size = 0x4, scoped, tag = 'scoped memory for _lambda_.1']
    #allocation18 [shape = 'u8[65536]{0}', space=vmem, size = 0x10000, scoped, tag = 'input window, operand 23, single buffered']
    %33 = vsyncpa [#allocation6], 0
    %34 = vsyncpa [#allocation8], 0
    %35 = vsyncpa [#allocation11], 0
    %36 = vsyncpa [#allocation14], 0
    %37 = vsyncpa [#allocation17], 0
    // Predicated region
    $region2: #{_lambda_.1} parent=1 // pred_check
      _
    $region3: #{_lambda_.1} parent=1 // pred_check_branch
      %39 = sbr.rel (0) target = $region5
    $region4: #{_lambda_.1} parent=1 // pred_region
      _
    $region5: #{_lambda_.1} parent=1 // pred_fallthru
      _
    // Predicated region
    $region6: #{_lambda_.1} parent=1 // pred_check
      _
    $region7: #{_lambda_.1} parent=1 // pred_check_branch
      %41 = sbr.rel (0) target = $region9
    $region8: #{_lambda_.1} parent=1 // pred_region
      _
    $region9: #{_lambda_.1} parent=1 // pred_fallthru
      _
    // Predicated region
    $region10: #{_lambda_.1} parent=1 // pred_check
      _
    $region11: #{_lambda_.1} parent=1 // pred_check_branch
      %43 = sbr.rel (0) target = $region13
    $region12: #{_lambda_.1} parent=1 // pred_region
      _
    $region13: #{_lambda_.1} parent=1 // pred_fallthru
      _
    // Predicated region
    $region14: #{_lambda_.1} parent=1 // pred_check
      _
    $region15: #{_lambda_.1} parent=1 // pred_check_branch
      %45 = sbr.rel (0) target = $region17
    $region16: #{_lambda_.1} parent=1 // pred_region
      _
    $region17: #{_lambda_.1} parent=1 // pred_fallthru
      _
    // Predicated region
    $region18: #{_lambda_.1} parent=1 // pred_check
      _
    $region19: #{_lambda_.1} parent=1 // pred_check_branch
      %47 = sbr.rel (0) target = $region21
    $region20: #{_lambda_.1} parent=1 // pred_region
      _
    $region21: #{_lambda_.1} parent=1 // pred_fallthru
      _
    // Predicated region
    $region22: #{_lambda_.1} parent=1 // pred_check
      _
    $region23: #{_lambda_.1} parent=1 // pred_check_branch
      %49 = sbr.rel (0) target = $region25
    $region24: #{_lambda_.1} parent=1 // pred_region
      %s51 = ssub.s32 8192, 8192
      %52 = vsyncadd [#allocation6], %s51
      %s53 = sshll.u32 [#allocation5], 4
      %s54 = int_to_ptr.vmem [resolvable:$true] %s53
      %59 = dma.hbm_to_vmem [thread:$0]  %s5, 8192, %s54, [#allocation6], 512, 512, 32
    $region25: #{_lambda_.1} parent=1 // pred_fallthru
      _
    // Predicated region
    $region26: #{_lambda_.1} parent=1 // pred_check
      _
    $region27: #{_lambda_.1} parent=1 // pred_check_branch
      %61 = sbr.rel (0) target = $region29
    $region28: #{_lambda_.1} parent=1 // pred_region
      _
    $region29: #{_lambda_.1} parent=1 // pred_fallthru
      _
    // Predicated region
    $region30: #{_lambda_.1} parent=1 // pred_check
      _
    $region31: #{_lambda_.1} parent=1 // pred_check_branch
      %63 = sbr.rel (0) target = $region33
    $region32: #{_lambda_.1} parent=1 // pred_region
      %s65 = ssub.s32 8192, 8192
      %66 = vsyncadd [#allocation8], %s65
      %s67 = sshll.u32 [#allocation7], 4
      %s68 = int_to_ptr.vmem [resolvable:$true] %s67
      %73 = dma.hbm_to_vmem [thread:$0]  %s7, 8192, %s68, [#allocation8], 512, 512, 32
    $region33: #{_lambda_.1} parent=1 // pred_fallthru
      _
    // Predicated region
    $region34: #{_lambda_.1} parent=1 // pred_check
      _
    $region35: #{_lambda_.1} parent=1 // pred_check_branch
      %75 = sbr.rel (0) target = $region37
    $region36: #{_lambda_.1} parent=1 // pred_region
      %s77 = ssub.s32 8192, 8192
      %78 = vsyncadd [#allocation8], %s77
      %s79 = sshll.u32 [#allocation9], 4
      %s80 = int_to_ptr.vmem [resolvable:$true] %s79
      %85 = dma.hbm_to_vmem [thread:$0]  %s8, 8192, %s80, [#allocation8], 512, 512, 32
    $region37: #{_lambda_.1} parent=1 // pred_fallthru
      _
    // Predicated region
    $region38: #{_lambda_.1} parent=1 // pred_check
      _
    $region39: #{_lambda_.1} parent=1 // pred_check_branch
      %87 = sbr.rel (0) target = $region41
    $region40: #{_lambda_.1} parent=1 // pred_region
      _
    $region41: #{_lambda_.1} parent=1 // pred_fallthru
      _
    // Predicated region
    $region42: #{_lambda_.1} parent=1 // pred_check
      _
    $region43: #{_lambda_.1} parent=1 // pred_check_branch
      %89 = sbr.rel (0) target = $region45
    $region44: #{_lambda_.1} parent=1 // pred_region
      %s91 = ssub.s32 4096, 4096
      %92 = vsyncadd [#allocation11], %s91
      %s93 = sshll.u32 [#allocation10], 4
      %s94 = int_to_ptr.vmem [resolvable:$true] %s93
      %99 = dma.hbm_to_vmem [thread:$0]  %s10, 4096, %s94, [#allocation11], 256, 256, 16
    $region45: #{_lambda_.1} parent=1 // pred_fallthru
      _
    // Predicated region
    $region46: #{_lambda_.1} parent=1 // pred_check
      _
    $region47: #{_lambda_.1} parent=1 // pred_check_branch
      %101 = sbr.rel (0) target = $region49
    $region48: #{_lambda_.1} parent=1 // pred_region
      _
    $region49: #{_lambda_.1} parent=1 // pred_fallthru
      _
    // Predicated region
    $region50: #{_lambda_.1} parent=1 // pred_check
      _
    $region51: #{_lambda_.1} parent=1 // pred_check_branch
      %103 = sbr.rel (0) target = $region53
    $region52: #{_lambda_.1} parent=1 // pred_region
      _
    $region53: #{_lambda_.1} parent=1 // pred_fallthru
      _
    // Predicated region
    $region54: #{_lambda_.1} parent=1 // pred_check
      _
    $region55: #{_lambda_.1} parent=1 // pred_check_branch
      %105 = sbr.rel (0) target = $region57
    $region56: #{_lambda_.1} parent=1 // pred_region
      %s107 = ssub.s32 2048, 2048
      %108 = vsyncadd [#allocation11], %s107
      %s109 = sshll.u32 [#allocation12], 4
      %s110 = int_to_ptr.vmem [resolvable:$true] %s109
      %115 = dma.hbm_to_vmem [thread:$0]  %s13, 2048, %s110, [#allocation11], 128, 128, 8
    $region57: #{_lambda_.1} parent=1 // pred_fallthru
      _
    // Predicated region
    $region58: #{_lambda_.1} parent=1 // pred_check
      _
    $region59: #{_lambda_.1} parent=1 // pred_check_branch
      %117 = sbr.rel (0) target = $region61
    $region60: #{_lambda_.1} parent=1 // pred_region
      _
    $region61: #{_lambda_.1} parent=1 // pred_fallthru
      _
    // Predicated region
    $region62: #{_lambda_.1} parent=1 // pred_check
      _
    $region63: #{_lambda_.1} parent=1 // pred_check_branch
      %119 = sbr.rel (0) target = $region65
    $region64: #{_lambda_.1} parent=1 // pred_region
      %s121 = ssub.s32 768, 768
      %122 = vsyncadd [#allocation14], %s121
      %s123 = sshll.u32 [#allocation13], 4
      %s124 = int_to_ptr.vmem [resolvable:$true] %s123
      %129 = dma.hbm_to_vmem [thread:$0]  %s15, 768, %s124, [#allocation14], 384, 384, 24
    $region65: #{_lambda_.1} parent=1 // pred_fallthru
      _
    // Predicated region
    $region66: #{_lambda_.1} parent=1 // pred_check
      _
    $region67: #{_lambda_.1} parent=1 // pred_check_branch
      %131 = sbr.rel (0) target = $region69
    $region68: #{_lambda_.1} parent=1 // pred_region
      _
    $region69: #{_lambda_.1} parent=1 // pred_fallthru
      _
    // Predicated region
    $region70: #{_lambda_.1} parent=1 // pred_check
      _
    $region71: #{_lambda_.1} parent=1 // pred_check_branch
      %133 = sbr.rel (0) target = $region73
    $region72: #{_lambda_.1} parent=1 // pred_region
      _
    $region73: #{_lambda_.1} parent=1 // pred_fallthru
      _
    // Predicated region
    $region74: #{_lambda_.1} parent=1 // pred_check
      _
    $region75: #{_lambda_.1} parent=1 // pred_check_branch
      %135 = sbr.rel (0) target = $region77
    $region76: #{_lambda_.1} parent=1 // pred_region
      _
    $region77: #{_lambda_.1} parent=1 // pred_fallthru
      _
    // Predicated region
    $region78: #{_lambda_.1} parent=1 // pred_check
      _
    $region79: #{_lambda_.1} parent=1 // pred_check_branch
      %137 = sbr.rel (0) target = $region81
    $region80: #{_lambda_.1} parent=1 // pred_region
      %s139 = ssub.s32 6144, 6144
      %140 = vsyncadd [#allocation14], %s139
      %s141 = sshll.u32 [#allocation15], 4
      %s142 = int_to_ptr.vmem [resolvable:$true] %s141
      %147 = dma.hbm_to_vmem [thread:$0]  %s19, 6144, %s142, [#allocation14], 384, 384, 24
    $region81: #{_lambda_.1} parent=1 // pred_fallthru
      _
    // Predicated region
    $region82: #{_lambda_.1} parent=1 // pred_check
      _
    $region83: #{_lambda_.1} parent=1 // pred_check_branch
      %149 = sbr.rel (0) target = $region85
    $region84: #{_lambda_.1} parent=1 // pred_region
      %s151 = ssub.s32 6144, 6144
      %152 = vsyncadd [#allocation17], %s151
      %s153 = sshll.u32 [#allocation16], 4
      %s154 = int_to_ptr.vmem [resolvable:$true] %s153
      %159 = dma.hbm_to_vmem [thread:$0]  %s20, 6144, %s154, [#allocation17], 384, 384, 24
    $region85: #{_lambda_.1} parent=1 // pred_fallthru
      _
    // Predicated region
    $region86: #{_lambda_.1} parent=1 // pred_check
      _
    $region87: #{_lambda_.1} parent=1 // pred_check_branch
      %161 = sbr.rel (0) target = $region89
    $region88: #{_lambda_.1} parent=1 // pred_region
      _
    $region89: #{_lambda_.1} parent=1 // pred_fallthru
      _
    // Predicated region
    $region90: #{_lambda_.1} parent=1 // pred_check
      _
    $region91: #{_lambda_.1} parent=1 // pred_check_branch
      %163 = sbr.rel (0) target = $region93
    $region92: #{_lambda_.1} parent=1 // pred_region
      _
    $region93: #{_lambda_.1} parent=1 // pred_fallthru
      _
    // Predicated region
    $region94: #{_lambda_.1} parent=1 // pred_check
      _
    $region95: #{_lambda_.1} parent=1 // pred_check_branch
      %165 = sbr.rel (0) target = $region97
    $region96: #{_lambda_.1} parent=1 // pred_region
      %s167 = ssub.s32 2048, 2048
      %168 = vsyncadd [#allocation17], %s167
      %s169 = sshll.u32 [#allocation18], 4
      %s170 = int_to_ptr.vmem [resolvable:$true] %s169
      %175 = dma.hbm_to_vmem [thread:$0]  %s23, 2048, %s170, [#allocation17], 128, 128, 8
    $region97: #{_lambda_.1} parent=1 // pred_fallthru
      _
    // Predicated region
    $region98: #{_lambda_.1} parent=1 // pred_check
      _
    $region99: #{_lambda_.1} parent=1 // pred_check_branch
      %177 = sbr.rel (0) target = $region101
    $region100: #{_lambda_.1} parent=1 // pred_region
      _
    $region101: #{_lambda_.1} parent=1 // pred_fallthru
      _
    // Predicated region
    $region102: #{_lambda_.1} parent=1 // pred_check
      _
    $region103: #{_lambda_.1} parent=1 // pred_check_branch
      %179 = sbr.rel (0) target = $region105
    $region104: #{_lambda_.1} parent=1 // pred_region
      %180 = dma.done [#allocation6], 8192
    $region105: #{_lambda_.1} parent=1 // pred_fallthru
      _
    // Predicated region
    $region106: #{_lambda_.1} parent=1 // pred_check
      _
    $region107: #{_lambda_.1} parent=1 // pred_check_branch
      %182 = sbr.rel (0) target = $region109
    $region108: #{_lambda_.1} parent=1 // pred_region
      %183 = dma.done [#allocation8], 8192
    $region109: #{_lambda_.1} parent=1 // pred_fallthru
      _
    // Predicated region
    $region110: #{_lambda_.1} parent=1 // pred_check
      _
    $region111: #{_lambda_.1} parent=1 // pred_check_branch
      %185 = sbr.rel (0) target = $region113
    $region112: #{_lambda_.1} parent=1 // pred_region
      %186 = dma.done [#allocation8], 8192
    $region113: #{_lambda_.1} parent=1 // pred_fallthru
      _
    // Predicated region
    $region114: #{_lambda_.1} parent=1 // pred_check
      _
    $region115: #{_lambda_.1} parent=1 // pred_check_branch
      %188 = sbr.rel (0) target = $region117
    $region116: #{_lambda_.1} parent=1 // pred_region
      %189 = dma.done [#allocation11], 4096
    $region117: #{_lambda_.1} parent=1 // pred_fallthru
      _
    // Predicated region
    $region118: #{_lambda_.1} parent=1 // pred_check
      _
    $region119: #{_lambda_.1} parent=1 // pred_check_branch
      %191 = sbr.rel (0) target = $region121
    $region120: #{_lambda_.1} parent=1 // pred_region
      %192 = dma.done [#allocation11], 2048
    $region121: #{_lambda_.1} parent=1 // pred_fallthru
      _
    // Predicated region
    $region122: #{_lambda_.1} parent=1 // pred_check
      _
    $region123: #{_lambda_.1} parent=1 // pred_check_branch
      %194 = sbr.rel (0) target = $region125
    $region124: #{_lambda_.1} parent=1 // pred_region
      %195 = dma.done [#allocation14], 768
    $region125: #{_lambda_.1} parent=1 // pred_fallthru
      _
    // Predicated region
    $region126: #{_lambda_.1} parent=1 // pred_check
      _
    $region127: #{_lambda_.1} parent=1 // pred_check_branch
      %197 = sbr.rel (0) target = $region129
    $region128: #{_lambda_.1} parent=1 // pred_region
      %198 = dma.done [#allocation14], 6144
    $region129: #{_lambda_.1} parent=1 // pred_fallthru
      _
    // Predicated region
    $region130: #{_lambda_.1} parent=1 // pred_check
      _
    $region131: #{_lambda_.1} parent=1 // pred_check_branch
      %200 = sbr.rel (0) target = $region133
    $region132: #{_lambda_.1} parent=1 // pred_region
      %201 = dma.done [#allocation17], 6144
    $region133: #{_lambda_.1} parent=1 // pred_fallthru
      _
    // Predicated region
    $region134: #{_lambda_.1} parent=1 // pred_check
      _
    $region135: #{_lambda_.1} parent=1 // pred_check_branch
      %203 = sbr.rel (0) target = $region137
    $region136: #{_lambda_.1} parent=1 // pred_region
      %204 = dma.done [#allocation17], 2048
    $region137: #{_lambda_.1} parent=1 // pred_fallthru
      _
    %v205 = vld [vmem:[%s0] sm:$0xff]
    %v206 = vld [vmem:[%s0 + $0x8] sm:$0xff]
    %vm207 = vcmask 130048
    %v208 = vsel %vm207, %v205, 0.0
    %209 = vadd.xlane.f32.xlu0 %v208
    %v210 = vpop.xlane.xlu0 %209
    %v211 = vsel %vm207, %v206, 0.0
    %212 = vadd.xlane.f32.xlu0 %v211
    %v213 = vpop.xlane.xlu0 %212
    %v214 = vrcp.pop 16.0
    %v215 = vmul.f32 %v210, %v214
    %v216 = vmul.f32 %v213, %v214
    %v217 = vsub.f32 %v205, %v215
    %v218 = vsub.f32 %v206, %v216
    %v219 = vmul.f32 %v217, %v217
    %v220 = vmul.f32 %v218, %v218
    %v221 = vsel %vm207, %v219, 0.0
    %222 = vadd.xlane.f32.xlu0 %v221
    %v223 = vpop.xlane.xlu0 %222
    %v224 = vsel %vm207, %v220, 0.0
    %225 = vadd.xlane.f32.xlu0 %v224
    %v226 = vpop.xlane.xlu0 %225
    %v227 = vmul.f32 %v223, %v214
    %v228 = vmul.f32 %v226, %v214
    %v229 = vadd.f32 %v227, 1e-05
    %v230 = vadd.f32 %v228, 1e-05
    %v231 = vrsqrt.pop %v229
    %v232 = vrsqrt.pop %v230
    %v233 = vmul.f32 %v217, %v231
    %v234 = vmul.f32 %v218, %v232
    %v235 = vld [vmem:[%s2] sm:$0x1]
    %v237 = vlaneseq
    %v238 = vshrl.u32 %v237, 7
    %v239 = vsub.s32 0, %v238
    %v240 = vrot.slane %v235, %v239
    %v242 = vmul.f32 %v233, %v240
    %v243 = vmul.f32 %v234, %v240
    %v244 = vld [vmem:[%s3] sm:$0x1]
    %v246 = vlaneseq
    %v247 = vshrl.u32 %v246, 7
    %v248 = vsub.s32 0, %v247
    %v249 = vrot.slane %v244, %v248
    %v251 = vadd.f32 %v242, %v249
    %v252 = vadd.f32 %v243, %v249
    %v253 = vld [vmem:[#allocation5] sm:$0xff]
    %v254 = vld [vmem:[#allocation5 + $0x8] sm:$0xff]
    %v255 = vld [vmem:[#allocation5 + $0x10] sm:$0xff]
    %v256 = vld [vmem:[#allocation5 + $0x18] sm:$0xff]
    %v257 = vld [vmem:[#allocation5 + $0x20] sm:$0xff]
    %v258 = vld [vmem:[#allocation5 + $0x28] sm:$0xff]
    %v259 = vld [vmem:[#allocation5 + $0x30] sm:$0xff]
    %v260 = vld [vmem:[#allocation5 + $0x38] sm:$0xff]
    %v261 = vld [vmem:[#allocation5 + $0x40] sm:$0xff]
    %v262 = vld [vmem:[#allocation5 + $0x48] sm:$0xff]
    %v263 = vld [vmem:[#allocation5 + $0x50] sm:$0xff]
    %v264 = vld [vmem:[#allocation5 + $0x58] sm:$0xff]
    %v265 = vld [vmem:[#allocation5 + $0x60] sm:$0xff]
    %v266 = vld [vmem:[#allocation5 + $0x68] sm:$0xff]
    %v267 = vld [vmem:[#allocation5 + $0x70] sm:$0xff]
    %v268 = vld [vmem:[#allocation5 + $0x78] sm:$0xff]
    %v269 = vld [vmem:[#allocation5 + $0x80] sm:$0xff]
    %v270 = vld [vmem:[#allocation5 + $0x88] sm:$0xff]
    %v271 = vld [vmem:[#allocation5 + $0x90] sm:$0xff]
    %v272 = vld [vmem:[#allocation5 + $0x98] sm:$0xff]
    %v273 = vld [vmem:[#allocation5 + $0xa0] sm:$0xff]
    %v274 = vld [vmem:[#allocation5 + $0xa8] sm:$0xff]
    %v275 = vld [vmem:[#allocation5 + $0xb0] sm:$0xff]
    %v276 = vld [vmem:[#allocation5 + $0xb8] sm:$0xff]
    %v277 = vld [vmem:[#allocation5 + $0xc0] sm:$0xff]
    %v278 = vld [vmem:[#allocation5 + $0xc8] sm:$0xff]
    %v279 = vld [vmem:[#allocation5 + $0xd0] sm:$0xff]
    %v280 = vld [vmem:[#allocation5 + $0xd8] sm:$0xff]
    %v281 = vld [vmem:[#allocation5 + $0xe0] sm:$0xff]
    %v282 = vld [vmem:[#allocation5 + $0xe8] sm:$0xff]
    %v283 = vld [vmem:[#allocation5 + $0xf0] sm:$0xff]
    %v284 = vld [vmem:[#allocation5 + $0xf8] sm:$0xff]
    %v285 = vld [vmem:[#allocation5 + $0x100] sm:$0xff]
    %v286 = vld [vmem:[#allocation5 + $0x108] sm:$0xff]
    %v287 = vld [vmem:[#allocation5 + $0x110] sm:$0xff]
    %v288 = vld [vmem:[#allocation5 + $0x118] sm:$0xff]
    %v289 = vld [vmem:[#allocation5 + $0x120] sm:$0xff]
    %v290 = vld [vmem:[#allocation5 + $0x128] sm:$0xff]
    %v291 = vld [vmem:[#allocation5 + $0x130] sm:$0xff]
    %v292 = vld [vmem:[#allocation5 + $0x138] sm:$0xff]
    %v293 = vld [vmem:[#allocation5 + $0x140] sm:$0xff]
    %v294 = vld [vmem:[#allocation5 + $0x148] sm:$0xff]
    %v295 = vld [vmem:[#allocation5 + $0x150] sm:$0xff]
    %v296 = vld [vmem:[#allocation5 + $0x158] sm:$0xff]
    %v297 = vld [vmem:[#allocation5 + $0x160] sm:$0xff]
    %v298 = vld [vmem:[#allocation5 + $0x168] sm:$0xff]
    %v299 = vld [vmem:[#allocation5 + $0x170] sm:$0xff]
    %v300 = vld [vmem:[#allocation5 + $0x178] sm:$0xff]
    %v301 = vld [vmem:[#allocation5 + $0x180] sm:$0xff]
    %v302 = vld [vmem:[#allocation5 + $0x188] sm:$0xff]
    %v303 = vld [vmem:[#allocation5 + $0x190] sm:$0xff]
    %v304 = vld [vmem:[#allocation5 + $0x198] sm:$0xff]
    %v305 = vld [vmem:[#allocation5 + $0x1a0] sm:$0xff]
    %v306 = vld [vmem:[#allocation5 + $0x1a8] sm:$0xff]
    %v307 = vld [vmem:[#allocation5 + $0x1b0] sm:$0xff]
    %v308 = vld [vmem:[#allocation5 + $0x1b8] sm:$0xff]
    %v309 = vld [vmem:[#allocation5 + $0x1c0] sm:$0xff]
    %v310 = vld [vmem:[#allocation5 + $0x1c8] sm:$0xff]
    %v311 = vld [vmem:[#allocation5 + $0x1d0] sm:$0xff]
    %v312 = vld [vmem:[#allocation5 + $0x1d8] sm:$0xff]
    %v313 = vld [vmem:[#allocation5 + $0x1e0] sm:$0xff]
    %v314 = vld [vmem:[#allocation5 + $0x1e8] sm:$0xff]
    %v315 = vld [vmem:[#allocation5 + $0x1f0] sm:$0xff]
    %v316 = vld [vmem:[#allocation5 + $0x1f8] sm:$0xff]
    %v317 = vld [vmem:[%s4] sm:$0xff]
    %v318 = vld [vmem:[%s4 + $0x8] sm:$0xff]
    %v319 = vld [vmem:[%s4 + $0x10] sm:$0xff]
    %v320 = vld [vmem:[%s4 + $0x18] sm:$0xff]
    %v321 = vld [vmem:[%s4 + $0x20] sm:$0xff]
    %v322 = vld [vmem:[%s4 + $0x28] sm:$0xff]
    %v323 = vld [vmem:[%s4 + $0x30] sm:$0xff]
    %v324 = vld [vmem:[%s4 + $0x38] sm:$0xff]
    %v325 = vld [vmem:[%s6] sm:$0xf]
    %v327 = vlaneseq
    %v328 = vshrl.u32 %v327, 7
    %v329 = vsub.s32 0, %v328
    %v330 = vrot.slane %v325, %v329
    %v331 = vlaneseq
    %v332 = vshrl.u32 %v331, 7
    %v333 = vsub.s32 1, %v332
    %v334 = vrot.slane %v325, %v333
    %v335 = vlaneseq
    %v336 = vshrl.u32 %v335, 7
    %v337 = vsub.s32 2, %v336
    %v338 = vrot.slane %v325, %v337
    %v339 = vlaneseq
    %v340 = vshrl.u32 %v339, 7
    %v341 = vsub.s32 3, %v340
    %v342 = vrot.slane %v325, %v341
    %v348 = vsel %vm207, %v251, 0
    %v351 = vsel %vm207, %v252, 0
    %353 = vmatprep.subr.mxu0 0.0
    %354 = vmatpush1.msra.mxu0 0.0
    %355 = vmatprep.subr.mxu0 0.0
    %356 = vmatpush1.msra.mxu0 0.0
    %357 = vmatprep.subr.mxu0 0.0
    %358 = vmatpush1.msra.mxu0 0.0
    %359 = vmatprep.subr.mxu0 0.0
    %360 = vmatpush1.msra.mxu0 0.0
    %361 = vmatprep.subr.mxu0 0.0
    %362 = vmatpush1.msra.mxu0 0.0
    %363 = vmatprep.subr.mxu0 0.0
    %364 = vmatpush1.msra.mxu0 0.0
    %365 = vmatprep.subr.mxu0 0.0
    %366 = vmatpush1.msra.mxu0 0.0
    %367 = vmatprep.subr.mxu0 0.0
    %368 = vmatpush1.msra.mxu0 0.0
    %369 = vmatprep.subr.mxu0 0.0
    %370 = vmatpush1.msra.mxu0 0.0
    %371 = vmatprep.subr.mxu0 0.0
    %372 = vmatpush1.msra.mxu0 0.0
    %373 = vmatprep.subr.mxu0 0.0
    %374 = vmatpush1.msra.mxu0 0.0
    %375 = vmatprep.subr.mxu0 0.0
    %376 = vmatpush1.msra.mxu0 0.0
    %377 = vmatprep.subr.mxu0 0.0
    %378 = vmatpush1.msra.mxu0 0.0
    %379 = vmatprep.subr.mxu0 0.0
    %380 = vmatpush1.msra.mxu0 0.0
    %381 = vmatprep.subr.mxu0 %v322
    %382 = vmatpush1.msra.mxu0 %v321
    %383 = vmatprep.subr.mxu0 %v318
    %384 = vmatpush1.msra.mxu0 %v317
    %385 = vmatprep.subr.mxu0 0.0
    %386 = vmatpush2.msra.mxu0 0.0
    %387 = vmatprep.subr.mxu0 0.0
    %388 = vmatpush2.msra.mxu0 0.0
    %389 = vmatprep.subr.mxu0 0.0
    %390 = vmatpush2.msra.mxu0 0.0
    %391 = vmatprep.subr.mxu0 0.0
    %392 = vmatpush2.msra.mxu0 0.0
    %393 = vmatprep.subr.mxu0 0.0
    %394 = vmatpush2.msra.mxu0 0.0
    %395 = vmatprep.subr.mxu0 0.0
    %396 = vmatpush2.msra.mxu0 0.0
    %397 = vmatprep.subr.mxu0 0.0
    %398 = vmatpush2.msra.mxu0 0.0
    %399 = vmatprep.subr.mxu0 0.0
    %400 = vmatpush2.msra.mxu0 0.0
    %401 = vmatprep.subr.mxu0 0.0
    %402 = vmatpush2.msra.mxu0 0.0
    %403 = vmatprep.subr.mxu0 0.0
    %404 = vmatpush2.msra.mxu0 0.0
    %405 = vmatprep.subr.mxu0 0.0
    %406 = vmatpush2.msra.mxu0 0.0
    %407 = vmatprep.subr.mxu0 0.0
    %408 = vmatpush2.msra.mxu0 0.0
    %409 = vmatprep.subr.mxu0 0.0
    %410 = vmatpush2.msra.mxu0 0.0
    %411 = vmatprep.subr.mxu0 0.0
    %412 = vmatpush2.msra.mxu0 0.0
    %413 = vmatprep.subr.mxu0 0.0
    %414 = vmatpush2.msra.mxu0 0.0
    %415 = vmatprep.subr.mxu0 0.0
    %416 = vmatpush2.msra.mxu0 0.0
    %417 = vmatprep.mubr.f32.mxu0 0.0
    %418 = vmatmul.mubr.f32.gmra.mxu0 %v348
    %v419 = vpop.f32.mrf.mxu0
    %v420 = vadd.f32 %v330, %v419
    %v421 = vpop.f32.mrf.mxu0
    %v422 = vadd.f32 %v334, %v421
    %423 = vmatprep.mubr.f32.mxu0 0.0
    %424 = vmatmul.mubr.f32.gmra.mxu0 %v351
    %v425 = vpop.f32.mrf.mxu0
    %v426 = vadd.f32 %v330, %v425
    %v427 = vpop.f32.mrf.mxu0
    %v428 = vadd.f32 %v334, %v427
    %429 = vdwg.mxu0
    %430 = vmatprep.subr.mxu0 0.0
    %431 = vmatpush1.msra.mxu0 0.0
    %432 = vmatprep.subr.mxu0 0.0
    %433 = vmatpush1.msra.mxu0 0.0
    %434 = vmatprep.subr.mxu0 0.0
    %435 = vmatpush1.msra.mxu0 0.0
    %436 = vmatprep.subr.mxu0 0.0
    %437 = vmatpush1.msra.mxu0 0.0
    %438 = vmatprep.subr.mxu0 0.0
    %439 = vmatpush1.msra.mxu0 0.0
    %440 = vmatprep.subr.mxu0 0.0
    %441 = vmatpush1.msra.mxu0 0.0
    %442 = vmatprep.subr.mxu0 0.0
    %443 = vmatpush1.msra.mxu0 0.0
    %444 = vmatprep.subr.mxu0 0.0
    %445 = vmatpush1.msra.mxu0 0.0
    %446 = vmatprep.subr.mxu0 0.0
    %447 = vmatpush1.msra.mxu0 0.0
    %448 = vmatprep.subr.mxu0 0.0
    %449 = vmatpush1.msra.mxu0 0.0
    %450 = vmatprep.subr.mxu0 0.0
    %451 = vmatpush1.msra.mxu0 0.0
    %452 = vmatprep.subr.mxu0 0.0
    %453 = vmatpush1.msra.mxu0 0.0
    %454 = vmatprep.subr.mxu0 0.0
    %455 = vmatpush1.msra.mxu0 0.0
    %456 = vmatprep.subr.mxu0 0.0
    %457 = vmatpush1.msra.mxu0 0.0
    %458 = vmatprep.subr.mxu0 %v324
    %459 = vmatpush1.msra.mxu0 %v323
    %460 = vmatprep.subr.mxu0 %v320
    %461 = vmatpush1.msra.mxu0 %v319
    %462 = vmatprep.subr.mxu0 0.0
    %463 = vmatpush2.msra.mxu0 0.0
    %464 = vmatprep.subr.mxu0 0.0
    %465 = vmatpush2.msra.mxu0 0.0
    %466 = vmatprep.subr.mxu0 0.0
    %467 = vmatpush2.msra.mxu0 0.0
    %468 = vmatprep.subr.mxu0 0.0
    %469 = vmatpush2.msra.mxu0 0.0
    %470 = vmatprep.subr.mxu0 0.0
    %471 = vmatpush2.msra.mxu0 0.0
    %472 = vmatprep.subr.mxu0 0.0
    %473 = vmatpush2.msra.mxu0 0.0
    %474 = vmatprep.subr.mxu0 0.0
    %475 = vmatpush2.msra.mxu0 0.0
    %476 = vmatprep.subr.mxu0 0.0
    %477 = vmatpush2.msra.mxu0 0.0
    %478 = vmatprep.subr.mxu0 0.0
    %479 = vmatpush2.msra.mxu0 0.0
    %480 = vmatprep.subr.mxu0 0.0
    %481 = vmatpush2.msra.mxu0 0.0
    %482 = vmatprep.subr.mxu0 0.0
    %483 = vmatpush2.msra.mxu0 0.0
    %484 = vmatprep.subr.mxu0 0.0
    %485 = vmatpush2.msra.mxu0 0.0
    %486 = vmatprep.subr.mxu0 0.0
    %487 = vmatpush2.msra.mxu0 0.0
    %488 = vmatprep.subr.mxu0 0.0
    %489 = vmatpush2.msra.mxu0 0.0
    %490 = vmatprep.subr.mxu0 0.0
    %491 = vmatpush2.msra.mxu0 0.0
    %492 = vmatprep.subr.mxu0 0.0
    %493 = vmatpush2.msra.mxu0 0.0
    %494 = vmatprep.mubr.f32.mxu0 0.0
    %495 = vmatmul.mubr.f32.gmra.mxu0 %v348
    %v496 = vpop.f32.mrf.mxu0
    %v497 = vadd.f32 %v338, %v496
    %v498 = vpop.f32.mrf.mxu0
    %v499 = vadd.f32 %v342, %v498
    %500 = vmatprep.mubr.f32.mxu0 0.0
    %501 = vmatmul.mubr.f32.gmra.mxu0 %v351
    %v502 = vpop.f32.mrf.mxu0
    %v503 = vadd.f32 %v338, %v502
    %v504 = vpop.f32.mrf.mxu0
    %v505 = vadd.f32 %v342, %v504
    %506 = vdwg.mxu0
    %507 = vmatprep.subr.mxu0 %v314
    %508 = vmatpush1.msra.mxu0 %v313
    %509 = vmatprep.subr.mxu0 %v310
    %510 = vmatpush1.msra.mxu0 %v309
    %511 = vmatprep.subr.mxu0 %v306
    %512 = vmatpush1.msra.mxu0 %v305
    %513 = vmatprep.subr.mxu0 %v302
    %514 = vmatpush1.msra.mxu0 %v301
    %515 = vmatprep.subr.mxu0 %v298
    %516 = vmatpush1.msra.mxu0 %v297
    %517 = vmatprep.subr.mxu0 %v294
    %518 = vmatpush1.msra.mxu0 %v293
    %519 = vmatprep.subr.mxu0 %v290
    %520 = vmatpush1.msra.mxu0 %v289
    %521 = vmatprep.subr.mxu0 %v286
    %522 = vmatpush1.msra.mxu0 %v285
    %523 = vmatprep.subr.mxu0 %v282
    %524 = vmatpush1.msra.mxu0 %v281
    %525 = vmatprep.subr.mxu0 %v278
    %526 = vmatpush1.msra.mxu0 %v277
    %527 = vmatprep.subr.mxu0 %v274
    %528 = vmatpush1.msra.mxu0 %v273
    %529 = vmatprep.subr.mxu0 %v270
    %530 = vmatpush1.msra.mxu0 %v269
    %531 = vmatprep.subr.mxu0 %v266
    %532 = vmatpush1.msra.mxu0 %v265
    %533 = vmatprep.subr.mxu0 %v262
    %534 = vmatpush1.msra.mxu0 %v261
    %535 = vmatprep.subr.mxu0 %v258
    %536 = vmatpush1.msra.mxu0 %v257
    %537 = vmatprep.subr.mxu0 %v254
    %538 = vmatpush1.msra.mxu0 %v253
    %539 = vmatprep.subr.mxu0 0.0
    %540 = vmatpush2.msra.mxu0 0.0
    %541 = vmatprep.subr.mxu0 0.0
    %542 = vmatpush2.msra.mxu0 0.0
    %543 = vmatprep.subr.mxu0 0.0
    %544 = vmatpush2.msra.mxu0 0.0
    %545 = vmatprep.subr.mxu0 0.0
    %546 = vmatpush2.msra.mxu0 0.0
    %547 = vmatprep.subr.mxu0 0.0
    %548 = vmatpush2.msra.mxu0 0.0
    %549 = vmatprep.subr.mxu0 0.0
    %550 = vmatpush2.msra.mxu0 0.0
    %551 = vmatprep.subr.mxu0 0.0
    %552 = vmatpush2.msra.mxu0 0.0
    %553 = vmatprep.subr.mxu0 0.0
    %554 = vmatpush2.msra.mxu0 0.0
    %555 = vmatprep.subr.mxu0 0.0
    %556 = vmatpush2.msra.mxu0 0.0
    %557 = vmatprep.subr.mxu0 0.0
    %558 = vmatpush2.msra.mxu0 0.0
    %559 = vmatprep.subr.mxu0 0.0
    %560 = vmatpush2.msra.mxu0 0.0
    %561 = vmatprep.subr.mxu0 0.0
    %562 = vmatpush2.msra.mxu0 0.0
    %563 = vmatprep.subr.mxu0 0.0
    %564 = vmatpush2.msra.mxu0 0.0
    %565 = vmatprep.subr.mxu0 0.0
    %566 = vmatpush2.msra.mxu0 0.0
    %567 = vmatprep.subr.mxu0 0.0
    %568 = vmatpush2.msra.mxu0 0.0
    %569 = vmatprep.subr.mxu0 0.0
    %570 = vmatpush2.msra.mxu0 0.0
    %571 = vmatprep.mubr.f32.mxu0 0.0
    %572 = vmatmul.mubr.f32.gmra.mxu0 0.0
    %v573 = vpop.f32.mrf.mxu0
    %v574 = vadd.f32 0.0, %v573
    %v575 = vpop.f32.mrf.mxu0
    %v576 = vadd.f32 0.0, %v575
    %577 = vdwg.mxu0
    %578 = vmatprep.subr.mxu0 %v316
    %579 = vmatpush1.msra.mxu0 %v315
    %580 = vmatprep.subr.mxu0 %v312
    %581 = vmatpush1.msra.mxu0 %v311
    %582 = vmatprep.subr.mxu0 %v308
    %583 = vmatpush1.msra.mxu0 %v307
    %584 = vmatprep.subr.mxu0 %v304
    %585 = vmatpush1.msra.mxu0 %v303
    %586 = vmatprep.subr.mxu0 %v300
    %587 = vmatpush1.msra.mxu0 %v299
    %588 = vmatprep.subr.mxu0 %v296
    %589 = vmatpush1.msra.mxu0 %v295
    %590 = vmatprep.subr.mxu0 %v292
    %591 = vmatpush1.msra.mxu0 %v291
    %592 = vmatprep.subr.mxu0 %v288
    %593 = vmatpush1.msra.mxu0 %v287
    %594 = vmatprep.subr.mxu0 %v284
    %595 = vmatpush1.msra.mxu0 %v283
    %596 = vmatprep.subr.mxu0 %v280
    %597 = vmatpush1.msra.mxu0 %v279
    %598 = vmatprep.subr.mxu0 %v276
    %599 = vmatpush1.msra.mxu0 %v275
    %600 = vmatprep.subr.mxu0 %v272
    %601 = vmatpush1.msra.mxu0 %v271
    %602 = vmatprep.subr.mxu0 %v268
    %603 = vmatpush1.msra.mxu0 %v267
    %604 = vmatprep.subr.mxu0 %v264
    %605 = vmatpush1.msra.mxu0 %v263
    %606 = vmatprep.subr.mxu0 %v260
    %607 = vmatpush1.msra.mxu0 %v259
    %608 = vmatprep.subr.mxu0 %v256
    %609 = vmatpush1.msra.mxu0 %v255
    %610 = vmatprep.subr.mxu0 0.0
    %611 = vmatpush2.msra.mxu0 0.0
    %612 = vmatprep.subr.mxu0 0.0
    %613 = vmatpush2.msra.mxu0 0.0
    %614 = vmatprep.subr.mxu0 0.0
    %615 = vmatpush2.msra.mxu0 0.0
    %616 = vmatprep.subr.mxu0 0.0
    %617 = vmatpush2.msra.mxu0 0.0
    %618 = vmatprep.subr.mxu0 0.0
    %619 = vmatpush2.msra.mxu0 0.0
    %620 = vmatprep.subr.mxu0 0.0
    %621 = vmatpush2.msra.mxu0 0.0
    %622 = vmatprep.subr.mxu0 0.0
    %623 = vmatpush2.msra.mxu0 0.0
    %624 = vmatprep.subr.mxu0 0.0
    %625 = vmatpush2.msra.mxu0 0.0
    %626 = vmatprep.subr.mxu0 0.0
    %627 = vmatpush2.msra.mxu0 0.0
    %628 = vmatprep.subr.mxu0 0.0
    %629 = vmatpush2.msra.mxu0 0.0
    %630 = vmatprep.subr.mxu0 0.0
    %631 = vmatpush2.msra.mxu0 0.0
    %632 = vmatprep.subr.mxu0 0.0
    %633 = vmatpush2.msra.mxu0 0.0
    %634 = vmatprep.subr.mxu0 0.0
    %635 = vmatpush2.msra.mxu0 0.0
    %636 = vmatprep.subr.mxu0 0.0
    %637 = vmatpush2.msra.mxu0 0.0
    %638 = vmatprep.subr.mxu0 0.0
    %639 = vmatpush2.msra.mxu0 0.0
    %640 = vmatprep.subr.mxu0 0.0
    %641 = vmatpush2.msra.mxu0 0.0
    %642 = vmatprep.mubr.f32.mxu0 0.0
    %643 = vmatmul.mubr.f32.gmra.mxu0 0.0
    %v644 = vpop.f32.mrf.mxu0
    %v645 = vadd.f32 0.0, %v644
    %v646 = vpop.f32.mrf.mxu0
    %v647 = vadd.f32 0.0, %v646
    %648 = vdwg.mxu0
    %v649 = vadd.f32 %v420, %v574
    %v650 = vadd.f32 %v422, %v576
    %v651 = vadd.f32 %v497, %v645
    %v652 = vadd.f32 %v499, %v647
    %v653 = vxor.u32 %v649, 2147483648
    %v654 = vmul.f32 %v653, 1.442695
    %v655 = vpow.pop %v654
    %v656 = vadd.f32 %v655, 1.0
    %v657 = vrcp.pop %v656
    %v658 = vmul.f32 1.0, %v657
    %v659 = vxor.u32 %v650, 2147483648
    %v660 = vmul.f32 %v659, 1.442695
    %v661 = vpow.pop %v660
    %v662 = vadd.f32 %v661, 1.0
    %v663 = vrcp.pop %v662
    %v664 = vmul.f32 1.0, %v663
    %v665 = vtanh.pop %v651
    %v666 = vxor.u32 %v652, 2147483648
    %v667 = vmul.f32 %v666, 1.442695
    %v668 = vpow.pop %v667
    %v669 = vadd.f32 %v668, 1.0
    %v670 = vrcp.pop %v669
    %v671 = vmul.f32 1.0, %v670
    %v672 = vmul.f32 %v664, 0.0
    %v673 = vmul.f32 %v658, %v665
    %v674 = vadd.f32 %v672, %v673
    %v675 = vtanh.pop %v674
    %v676 = vmul.f32 %v671, %v675
    %677 = vst [vmem:[#allocation2] sm:$0x3] %v676
    %678 = vmatprep.subr.mxu0 %v314
    %679 = vmatpush1.msra.mxu0 %v313
    %680 = vmatprep.subr.mxu0 %v310
    %681 = vmatpush1.msra.mxu0 %v309
    %682 = vmatprep.subr.mxu0 %v306
    %683 = vmatpush1.msra.mxu0 %v305
    %684 = vmatprep.subr.mxu0 %v302
    %685 = vmatpush1.msra.mxu0 %v301
    %686 = vmatprep.subr.mxu0 %v298
    %687 = vmatpush1.msra.mxu0 %v297
    %688 = vmatprep.subr.mxu0 %v294
    %689 = vmatpush1.msra.mxu0 %v293
    %690 = vmatprep.subr.mxu0 %v290
    %691 = vmatpush1.msra.mxu0 %v289
    %692 = vmatprep.subr.mxu0 %v286
    %693 = vmatpush1.msra.mxu0 %v285
    %694 = vmatprep.subr.mxu0 %v282
    %695 = vmatpush1.msra.mxu0 %v281
    %696 = vmatprep.subr.mxu0 %v278
    %697 = vmatpush1.msra.mxu0 %v277
    %698 = vmatprep.subr.mxu0 %v274
    %699 = vmatpush1.msra.mxu0 %v273
    %700 = vmatprep.subr.mxu0 %v270
    %701 = vmatpush1.msra.mxu0 %v269
    %702 = vmatprep.subr.mxu0 %v266
    %703 = vmatpush1.msra.mxu0 %v265
    %704 = vmatprep.subr.mxu0 %v262
    %705 = vmatpush1.msra.mxu0 %v261
    %706 = vmatprep.subr.mxu0 %v258
    %707 = vmatpush1.msra.mxu0 %v257
    %708 = vmatprep.subr.mxu0 %v254
    %709 = vmatpush1.msra.mxu0 %v253
    %710 = vmatprep.subr.mxu0 0.0
    %711 = vmatpush2.msra.mxu0 0.0
    %712 = vmatprep.subr.mxu0 0.0
    %713 = vmatpush2.msra.mxu0 0.0
    %714 = vmatprep.subr.mxu0 0.0
    %715 = vmatpush2.msra.mxu0 0.0
    %716 = vmatprep.subr.mxu0 0.0
    %717 = vmatpush2.msra.mxu0 0.0
    %718 = vmatprep.subr.mxu0 0.0
    %719 = vmatpush2.msra.mxu0 0.0
    %720 = vmatprep.subr.mxu0 0.0
    %721 = vmatpush2.msra.mxu0 0.0
    %722 = vmatprep.subr.mxu0 0.0
    %723 = vmatpush2.msra.mxu0 0.0
    %724 = vmatprep.subr.mxu0 0.0
    %725 = vmatpush2.msra.mxu0 0.0
    %726 = vmatprep.subr.mxu0 0.0
    %727 = vmatpush2.msra.mxu0 0.0
    %728 = vmatprep.subr.mxu0 0.0
    %729 = vmatpush2.msra.mxu0 0.0
    %730 = vmatprep.subr.mxu0 0.0
    %731 = vmatpush2.msra.mxu0 0.0
    %732 = vmatprep.subr.mxu0 0.0
    %733 = vmatpush2.msra.mxu0 0.0
    %734 = vmatprep.subr.mxu0 0.0
    %735 = vmatpush2.msra.mxu0 0.0
    %736 = vmatprep.subr.mxu0 0.0
    %737 = vmatpush2.msra.mxu0 0.0
    %738 = vmatprep.subr.mxu0 0.0
    %739 = vmatpush2.msra.mxu0 0.0
    %740 = vmatprep.subr.mxu0 0.0
    %741 = vmatpush2.msra.mxu0 0.0
    %742 = vmatprep.mubr.f32.mxu0 0.0
    %743 = vmatmul.mubr.f32.gmra.mxu0 %v676
    %v744 = vpop.f32.mrf.mxu0
    %v745 = vadd.f32 0.0, %v744
    %v746 = vpop.f32.mrf.mxu0
    %v747 = vadd.f32 0.0, %v746
    %748 = vdwg.mxu0
    %749 = vmatprep.subr.mxu0 %v316
    %750 = vmatpush1.msra.mxu0 %v315
    %751 = vmatprep.subr.mxu0 %v312
    %752 = vmatpush1.msra.mxu0 %v311
    %753 = vmatprep.subr.mxu0 %v308
    %754 = vmatpush1.msra.mxu0 %v307
    %755 = vmatprep.subr.mxu0 %v304
    %756 = vmatpush1.msra.mxu0 %v303
    %757 = vmatprep.subr.mxu0 %v300
    %758 = vmatpush1.msra.mxu0 %v299
    %759 = vmatprep.subr.mxu0 %v296
    %760 = vmatpush1.msra.mxu0 %v295
    %761 = vmatprep.subr.mxu0 %v292
    %762 = vmatpush1.msra.mxu0 %v291
    %763 = vmatprep.subr.mxu0 %v288
    %764 = vmatpush1.msra.mxu0 %v287
    %765 = vmatprep.subr.mxu0 %v284
    %766 = vmatpush1.msra.mxu0 %v283
    %767 = vmatprep.subr.mxu0 %v280
    %768 = vmatpush1.msra.mxu0 %v279
    %769 = vmatprep.subr.mxu0 %v276
    %770 = vmatpush1.msra.mxu0 %v275
    %771 = vmatprep.subr.mxu0 %v272
    %772 = vmatpush1.msra.mxu0 %v271
    %773 = vmatprep.subr.mxu0 %v268
    %774 = vmatpush1.msra.mxu0 %v267
    %775 = vmatprep.subr.mxu0 %v264
    %776 = vmatpush1.msra.mxu0 %v263
    %777 = vmatprep.subr.mxu0 %v260
    %778 = vmatpush1.msra.mxu0 %v259
    %779 = vmatprep.subr.mxu0 %v256
    %780 = vmatpush1.msra.mxu0 %v255
    %781 = vmatprep.subr.mxu0 0.0
    %782 = vmatpush2.msra.mxu0 0.0
    %783 = vmatprep.subr.mxu0 0.0
    %784 = vmatpush2.msra.mxu0 0.0
    %785 = vmatprep.subr.mxu0 0.0
    %786 = vmatpush2.msra.mxu0 0.0
    %787 = vmatprep.subr.mxu0 0.0
    %788 = vmatpush2.msra.mxu0 0.0
    %789 = vmatprep.subr.mxu0 0.0
    %790 = vmatpush2.msra.mxu0 0.0
    %791 = vmatprep.subr.mxu0 0.0
    %792 = vmatpush2.msra.mxu0 0.0
    %793 = vmatprep.subr.mxu0 0.0
    %794 = vmatpush2.msra.mxu0 0.0
    %795 = vmatprep.subr.mxu0 0.0
    %796 = vmatpush2.msra.mxu0 0.0
    %797 = vmatprep.subr.mxu0 0.0
    %798 = vmatpush2.msra.mxu0 0.0
    %799 = vmatprep.subr.mxu0 0.0
    %800 = vmatpush2.msra.mxu0 0.0
    %801 = vmatprep.subr.mxu0 0.0
    %802 = vmatpush2.msra.mxu0 0.0
    %803 = vmatprep.subr.mxu0 0.0
    %804 = vmatpush2.msra.mxu0 0.0
    %805 = vmatprep.subr.mxu0 0.0
    %806 = vmatpush2.msra.mxu0 0.0
    %807 = vmatprep.subr.mxu0 0.0
    %808 = vmatpush2.msra.mxu0 0.0
    %809 = vmatprep.subr.mxu0 0.0
    %810 = vmatpush2.msra.mxu0 0.0
    %811 = vmatprep.subr.mxu0 0.0
    %812 = vmatpush2.msra.mxu0 0.0
    %813 = vmatprep.mubr.f32.mxu0 0.0
    %814 = vmatmul.mubr.f32.gmra.mxu0 %v676
    %v815 = vpop.f32.mrf.mxu0
    %v816 = vadd.f32 0.0, %v815
    %v817 = vpop.f32.mrf.mxu0
    %v818 = vadd.f32 0.0, %v817
    %819 = vdwg.mxu0
    %v824 = vrot.slane %v745, 6
    %v825 = vrot.slane %v747, 6
    %v826 = vrot.slane %v816, 6
    %v827 = vrot.slane %v818, 6
    %v832 = vadd.f32 %v420, %v824
    %v833 = vadd.f32 %v422, %v825
    %v834 = vadd.f32 %v497, %v826
    %v835 = vadd.f32 %v499, %v827
    %v836 = vxor.u32 %v832, 2147483648
    %v837 = vmul.f32 %v836, 1.442695
    %v838 = vpow.pop %v837
    %v839 = vadd.f32 %v838, 1.0
    %v840 = vrcp.pop %v839
    %v841 = vmul.f32 1.0, %v840
    %v842 = vxor.u32 %v833, 2147483648
    %v843 = vmul.f32 %v842, 1.442695
    %v844 = vpow.pop %v843
    %v845 = vadd.f32 %v844, 1.0
    %v846 = vrcp.pop %v845
    %v847 = vmul.f32 1.0, %v846
    %v848 = vtanh.pop %v834
    %v849 = vxor.u32 %v835, 2147483648
    %v850 = vmul.f32 %v849, 1.442695
    %v851 = vpow.pop %v850
    %v852 = vadd.f32 %v851, 1.0
    %v853 = vrcp.pop %v852
    %v854 = vmul.f32 1.0, %v853
    %v856 = vrot.slane %v674, 6
    %v858 = vmul.f32 %v847, %v856
    %v859 = vmul.f32 %v841, %v848
    %v860 = vadd.f32 %v858, %v859
    %v861 = vtanh.pop %v860
    %v862 = vmul.f32 %v854, %v861
    %863 = vst [vmem:[#allocation2] sm:$0xc] %v862
    %v865 = vrot.slane %v862, 2
    %867 = vmatprep.subr.mxu0 %v314
    %868 = vmatpush1.msra.mxu0 %v313
    %869 = vmatprep.subr.mxu0 %v310
    %870 = vmatpush1.msra.mxu0 %v309
    %871 = vmatprep.subr.mxu0 %v306
    %872 = vmatpush1.msra.mxu0 %v305
    %873 = vmatprep.subr.mxu0 %v302
    %874 = vmatpush1.msra.mxu0 %v301
    %875 = vmatprep.subr.mxu0 %v298
    %876 = vmatpush1.msra.mxu0 %v297
    %877 = vmatprep.subr.mxu0 %v294
    %878 = vmatpush1.msra.mxu0 %v293
    %879 = vmatprep.subr.mxu0 %v290
    %880 = vmatpush1.msra.mxu0 %v289
    %881 = vmatprep.subr.mxu0 %v286
    %882 = vmatpush1.msra.mxu0 %v285
    %883 = vmatprep.subr.mxu0 %v282
    %884 = vmatpush1.msra.mxu0 %v281
    %885 = vmatprep.subr.mxu0 %v278
    %886 = vmatpush1.msra.mxu0 %v277
    %887 = vmatprep.subr.mxu0 %v274
    %888 = vmatpush1.msra.mxu0 %v273
    %889 = vmatprep.subr.mxu0 %v270
    %890 = vmatpush1.msra.mxu0 %v269
    %891 = vmatprep.subr.mxu0 %v266
    %892 = vmatpush1.msra.mxu0 %v265
    %893 = vmatprep.subr.mxu0 %v262
    %894 = vmatpush1.msra.mxu0 %v261
    %895 = vmatprep.subr.mxu0 %v258
    %896 = vmatpush1.msra.mxu0 %v257
    %897 = vmatprep.subr.mxu0 %v254
    %898 = vmatpush1.msra.mxu0 %v253
    %899 = vmatprep.subr.mxu0 0.0
    %900 = vmatpush2.msra.mxu0 0.0
    %901 = vmatprep.subr.mxu0 0.0
    %902 = vmatpush2.msra.mxu0 0.0
    %903 = vmatprep.subr.mxu0 0.0
    %904 = vmatpush2.msra.mxu0 0.0
    %905 = vmatprep.subr.mxu0 0.0
    %906 = vmatpush2.msra.mxu0 0.0
    %907 = vmatprep.subr.mxu0 0.0
    %908 = vmatpush2.msra.mxu0 0.0
    %909 = vmatprep.subr.mxu0 0.0
    %910 = vmatpush2.msra.mxu0 0.0
    %911 = vmatprep.subr.mxu0 0.0
    %912 = vmatpush2.msra.mxu0 0.0
    %913 = vmatprep.subr.mxu0 0.0
    %914 = vmatpush2.msra.mxu0 0.0
    %915 = vmatprep.subr.mxu0 0.0
    %916 = vmatpush2.msra.mxu0 0.0
    %917 = vmatprep.subr.mxu0 0.0
    %918 = vmatpush2.msra.mxu0 0.0
    %919 = vmatprep.subr.mxu0 0.0
    %920 = vmatpush2.msra.mxu0 0.0
    %921 = vmatprep.subr.mxu0 0.0
    %922 = vmatpush2.msra.mxu0 0.0
    %923 = vmatprep.subr.mxu0 0.0
    %924 = vmatpush2.msra.mxu0 0.0
    %925 = vmatprep.subr.mxu0 0.0
    %926 = vmatpush2.msra.mxu0 0.0
    %927 = vmatprep.subr.mxu0 0.0
    %928 = vmatpush2.msra.mxu0 0.0
    %929 = vmatprep.subr.mxu0 0.0
    %930 = vmatpush2.msra.mxu0 0.0
    %931 = vmatprep.mubr.f32.mxu0 0.0
    %932 = vmatmul.mubr.f32.gmra.mxu0 %v865
    %v933 = vpop.f32.mrf.mxu0
    %v934 = vadd.f32 0.0, %v933
    %v935 = vpop.f32.mrf.mxu0
    %v936 = vadd.f32 0.0, %v935
    %937 = vdwg.mxu0
    %938 = vmatprep.subr.mxu0 %v316
    %939 = vmatpush1.msra.mxu0 %v315
    %940 = vmatprep.subr.mxu0 %v312
    %941 = vmatpush1.msra.mxu0 %v311
    %942 = vmatprep.subr.mxu0 %v308
    %943 = vmatpush1.msra.mxu0 %v307
    %944 = vmatprep.subr.mxu0 %v304
    %945 = vmatpush1.msra.mxu0 %v303
    %946 = vmatprep.subr.mxu0 %v300
    %947 = vmatpush1.msra.mxu0 %v299
    %948 = vmatprep.subr.mxu0 %v296
    %949 = vmatpush1.msra.mxu0 %v295
    %950 = vmatprep.subr.mxu0 %v292
    %951 = vmatpush1.msra.mxu0 %v291
    %952 = vmatprep.subr.mxu0 %v288
    %953 = vmatpush1.msra.mxu0 %v287
    %954 = vmatprep.subr.mxu0 %v284
    %955 = vmatpush1.msra.mxu0 %v283
    %956 = vmatprep.subr.mxu0 %v280
    %957 = vmatpush1.msra.mxu0 %v279
    %958 = vmatprep.subr.mxu0 %v276
    %959 = vmatpush1.msra.mxu0 %v275
    %960 = vmatprep.subr.mxu0 %v272
    %961 = vmatpush1.msra.mxu0 %v271
    %962 = vmatprep.subr.mxu0 %v268
    %963 = vmatpush1.msra.mxu0 %v267
    %964 = vmatprep.subr.mxu0 %v264
    %965 = vmatpush1.msra.mxu0 %v263
    %966 = vmatprep.subr.mxu0 %v260
    %967 = vmatpush1.msra.mxu0 %v259
    %968 = vmatprep.subr.mxu0 %v256
    %969 = vmatpush1.msra.mxu0 %v255
    %970 = vmatprep.subr.mxu0 0.0
    %971 = vmatpush2.msra.mxu0 0.0
    %972 = vmatprep.subr.mxu0 0.0
    %973 = vmatpush2.msra.mxu0 0.0
    %974 = vmatprep.subr.mxu0 0.0
    %975 = vmatpush2.msra.mxu0 0.0
    %976 = vmatprep.subr.mxu0 0.0
    %977 = vmatpush2.msra.mxu0 0.0
    %978 = vmatprep.subr.mxu0 0.0
    %979 = vmatpush2.msra.mxu0 0.0
    %980 = vmatprep.subr.mxu0 0.0
    %981 = vmatpush2.msra.mxu0 0.0
    %982 = vmatprep.subr.mxu0 0.0
    %983 = vmatpush2.msra.mxu0 0.0
    %984 = vmatprep.subr.mxu0 0.0
    %985 = vmatpush2.msra.mxu0 0.0
    %986 = vmatprep.subr.mxu0 0.0
    %987 = vmatpush2.msra.mxu0 0.0
    %988 = vmatprep.subr.mxu0 0.0
    %989 = vmatpush2.msra.mxu0 0.0
    %990 = vmatprep.subr.mxu0 0.0
    %991 = vmatpush2.msra.mxu0 0.0
    %992 = vmatprep.subr.mxu0 0.0
    %993 = vmatpush2.msra.mxu0 0.0
    %994 = vmatprep.subr.mxu0 0.0
    %995 = vmatpush2.msra.mxu0 0.0
    %996 = vmatprep.subr.mxu0 0.0
    %997 = vmatpush2.msra.mxu0 0.0
    %998 = vmatprep.subr.mxu0 0.0
    %999 = vmatpush2.msra.mxu0 0.0
    %1000 = vmatprep.subr.mxu0 0.0
    %1001 = vmatpush2.msra.mxu0 0.0
    %1002 = vmatprep.mubr.f32.mxu0 0.0
    %1003 = vmatmul.mubr.f32.gmra.mxu0 %v865
    %v1004 = vpop.f32.mrf.mxu0
    %v1005 = vadd.f32 0.0, %v1004
    %v1006 = vpop.f32.mrf.mxu0
    %v1007 = vadd.f32 0.0, %v1006
    %1008 = vdwg.mxu0
    %v1013 = vrot.slane %v934, 4
    %v1014 = vrot.slane %v936, 4
    %v1015 = vrot.slane %v1005, 4
    %v1016 = vrot.slane %v1007, 4
    %v1021 = vadd.f32 %v420, %v1013
    %v1022 = vadd.f32 %v422, %v1014
    %v1023 = vadd.f32 %v497, %v1015
    %v1024 = vadd.f32 %v499, %v1016
    %v1025 = vxor.u32 %v1021, 2147483648
    %v1026 = vmul.f32 %v1025, 1.442695
    %v1027 = vpow.pop %v1026
    %v1028 = vadd.f32 %v1027, 1.0
    %v1029 = vrcp.pop %v1028
    %v1030 = vmul.f32 1.0, %v1029
    %v1031 = vxor.u32 %v1022, 2147483648
    %v1032 = vmul.f32 %v1031, 1.442695
    %v1033 = vpow.pop %v1032
    %v1034 = vadd.f32 %v1033, 1.0
    %v1035 = vrcp.pop %v1034
    %v1036 = vmul.f32 1.0, %v1035
    %v1037 = vtanh.pop %v1023
    %v1038 = vxor.u32 %v1024, 2147483648
    %v1039 = vmul.f32 %v1038, 1.442695
    %v1040 = vpow.pop %v1039
    %v1041 = vadd.f32 %v1040, 1.0
    %v1042 = vrcp.pop %v1041
    %v1043 = vmul.f32 1.0, %v1042
    %v1045 = vrot.slane %v860, 6
    %v1047 = vmul.f32 %v1036, %v1045
    %v1048 = vmul.f32 %v1030, %v1037
    %v1049 = vadd.f32 %v1047, %v1048
    %v1050 = vtanh.pop %v1049
    %v1051 = vmul.f32 %v1043, %v1050
    %1052 = vst [vmem:[#allocation2] sm:$0x30] %v1051
    %v1054 = vrot.slane %v1051, 4
    %1056 = vmatprep.subr.mxu0 %v314
    %1057 = vmatpush1.msra.mxu0 %v313
    %1058 = vmatprep.subr.mxu0 %v310
    %1059 = vmatpush1.msra.mxu0 %v309
    %1060 = vmatprep.subr.mxu0 %v306
    %1061 = vmatpush1.msra.mxu0 %v305
    %1062 = vmatprep.subr.mxu0 %v302
    %1063 = vmatpush1.msra.mxu0 %v301
    %1064 = vmatprep.subr.mxu0 %v298
    %1065 = vmatpush1.msra.mxu0 %v297
    %1066 = vmatprep.subr.mxu0 %v294
    %1067 = vmatpush1.msra.mxu0 %v293
    %1068 = vmatprep.subr.mxu0 %v290
    %1069 = vmatpush1.msra.mxu0 %v289
    %1070 = vmatprep.subr.mxu0 %v286
    %1071 = vmatpush1.msra.mxu0 %v285
    %1072 = vmatprep.subr.mxu0 %v282
    %1073 = vmatpush1.msra.mxu0 %v281
    %1074 = vmatprep.subr.mxu0 %v278
    %1075 = vmatpush1.msra.mxu0 %v277
    %1076 = vmatprep.subr.mxu0 %v274
    %1077 = vmatpush1.msra.mxu0 %v273
    %1078 = vmatprep.subr.mxu0 %v270
    %1079 = vmatpush1.msra.mxu0 %v269
    %1080 = vmatprep.subr.mxu0 %v266
    %1081 = vmatpush1.msra.mxu0 %v265
    %1082 = vmatprep.subr.mxu0 %v262
    %1083 = vmatpush1.msra.mxu0 %v261
    %1084 = vmatprep.subr.mxu0 %v258
    %1085 = vmatpush1.msra.mxu0 %v257
    %1086 = vmatprep.subr.mxu0 %v254
    %1087 = vmatpush1.msra.mxu0 %v253
    %1088 = vmatprep.subr.mxu0 0.0
    %1089 = vmatpush2.msra.mxu0 0.0
    %1090 = vmatprep.subr.mxu0 0.0
    %1091 = vmatpush2.msra.mxu0 0.0
    %1092 = vmatprep.subr.mxu0 0.0
    %1093 = vmatpush2.msra.mxu0 0.0
    %1094 = vmatprep.subr.mxu0 0.0
    %1095 = vmatpush2.msra.mxu0 0.0
    %1096 = vmatprep.subr.mxu0 0.0
    %1097 = vmatpush2.msra.mxu0 0.0
    %1098 = vmatprep.subr.mxu0 0.0
    %1099 = vmatpush2.msra.mxu0 0.0
    %1100 = vmatprep.subr.mxu0 0.0
    %1101 = vmatpush2.msra.mxu0 0.0
    %1102 = vmatprep.subr.mxu0 0.0
    %1103 = vmatpush2.msra.mxu0 0.0
    %1104 = vmatprep.subr.mxu0 0.0
    %1105 = vmatpush2.msra.mxu0 0.0
    %1106 = vmatprep.subr.mxu0 0.0
    %1107 = vmatpush2.msra.mxu0 0.0
    %1108 = vmatprep.subr.mxu0 0.0
    %1109 = vmatpush2.msra.mxu0 0.0
    %1110 = vmatprep.subr.mxu0 0.0
    %1111 = vmatpush2.msra.mxu0 0.0
    %1112 = vmatprep.subr.mxu0 0.0
    %1113 = vmatpush2.msra.mxu0 0.0
    %1114 = vmatprep.subr.mxu0 0.0
    %1115 = vmatpush2.msra.mxu0 0.0
    %1116 = vmatprep.subr.mxu0 0.0
    %1117 = vmatpush2.msra.mxu0 0.0
    %1118 = vmatprep.subr.mxu0 0.0
    %1119 = vmatpush2.msra.mxu0 0.0
    %1120 = vmatprep.mubr.f32.mxu0 0.0
    %1121 = vmatmul.mubr.f32.gmra.mxu0 %v1054
    %v1122 = vpop.f32.mrf.mxu0
    %v1123 = vadd.f32 0.0, %v1122
    %v1124 = vpop.f32.mrf.mxu0
    %v1125 = vadd.f32 0.0, %v1124
    %1126 = vdwg.mxu0
    %1127 = vmatprep.subr.mxu0 %v316
    %1128 = vmatpush1.msra.mxu0 %v315
    %1129 = vmatprep.subr.mxu0 %v312
    %1130 = vmatpush1.msra.mxu0 %v311
    %1131 = vmatprep.subr.mxu0 %v308
    %1132 = vmatpush1.msra.mxu0 %v307
    %1133 = vmatprep.subr.mxu0 %v304
    %1134 = vmatpush1.msra.mxu0 %v303
    %1135 = vmatprep.subr.mxu0 %v300
    %1136 = vmatpush1.msra.mxu0 %v299
    %1137 = vmatprep.subr.mxu0 %v296
    %1138 = vmatpush1.msra.mxu0 %v295
    %1139 = vmatprep.subr.mxu0 %v292
    %1140 = vmatpush1.msra.mxu0 %v291
    %1141 = vmatprep.subr.mxu0 %v288
    %1142 = vmatpush1.msra.mxu0 %v287
    %1143 = vmatprep.subr.mxu0 %v284
    %1144 = vmatpush1.msra.mxu0 %v283
    %1145 = vmatprep.subr.mxu0 %v280
    %1146 = vmatpush1.msra.mxu0 %v279
    %1147 = vmatprep.subr.mxu0 %v276
    %1148 = vmatpush1.msra.mxu0 %v275
    %1149 = vmatprep.subr.mxu0 %v272
    %1150 = vmatpush1.msra.mxu0 %v271
    %1151 = vmatprep.subr.mxu0 %v268
    %1152 = vmatpush1.msra.mxu0 %v267
    %1153 = vmatprep.subr.mxu0 %v264
    %1154 = vmatpush1.msra.mxu0 %v263
    %1155 = vmatprep.subr.mxu0 %v260
    %1156 = vmatpush1.msra.mxu0 %v259
    %1157 = vmatprep.subr.mxu0 %v256
    %1158 = vmatpush1.msra.mxu0 %v255
    %1159 = vmatprep.subr.mxu0 0.0
    %1160 = vmatpush2.msra.mxu0 0.0
    %1161 = vmatprep.subr.mxu0 0.0
    %1162 = vmatpush2.msra.mxu0 0.0
    %1163 = vmatprep.subr.mxu0 0.0
    %1164 = vmatpush2.msra.mxu0 0.0
    %1165 = vmatprep.subr.mxu0 0.0
    %1166 = vmatpush2.msra.mxu0 0.0
    %1167 = vmatprep.subr.mxu0 0.0
    %1168 = vmatpush2.msra.mxu0 0.0
    %1169 = vmatprep.subr.mxu0 0.0
    %1170 = vmatpush2.msra.mxu0 0.0
    %1171 = vmatprep.subr.mxu0 0.0
    %1172 = vmatpush2.msra.mxu0 0.0
    %1173 = vmatprep.subr.mxu0 0.0
    %1174 = vmatpush2.msra.mxu0 0.0
    %1175 = vmatprep.subr.mxu0 0.0
    %1176 = vmatpush2.msra.mxu0 0.0
    %1177 = vmatprep.subr.mxu0 0.0
    %1178 = vmatpush2.msra.mxu0 0.0
    %1179 = vmatprep.subr.mxu0 0.0
    %1180 = vmatpush2.msra.mxu0 0.0
    %1181 = vmatprep.subr.mxu0 0.0
    %1182 = vmatpush2.msra.mxu0 0.0
    %1183 = vmatprep.subr.mxu0 0.0
    %1184 = vmatpush2.msra.mxu0 0.0
    %1185 = vmatprep.subr.mxu0 0.0
    %1186 = vmatpush2.msra.mxu0 0.0
    %1187 = vmatprep.subr.mxu0 0.0
    %1188 = vmatpush2.msra.mxu0 0.0
    %1189 = vmatprep.subr.mxu0 0.0
    %1190 = vmatpush2.msra.mxu0 0.0
    %1191 = vmatprep.mubr.f32.mxu0 0.0
    %1192 = vmatmul.mubr.f32.gmra.mxu0 %v1054
    %v1193 = vpop.f32.mrf.mxu0
    %v1194 = vadd.f32 0.0, %v1193
    %v1195 = vpop.f32.mrf.mxu0
    %v1196 = vadd.f32 0.0, %v1195
    %1197 = vdwg.mxu0
    %v1202 = vrot.slane %v1123, 2
    %v1203 = vrot.slane %v1125, 2
    %v1204 = vrot.slane %v1194, 2
    %v1205 = vrot.slane %v1196, 2
    %v1210 = vadd.f32 %v420, %v1202
    %v1211 = vadd.f32 %v422, %v1203
    %v1212 = vadd.f32 %v497, %v1204
    %v1213 = vadd.f32 %v499, %v1205
    %v1214 = vxor.u32 %v1210, 2147483648
    %v1215 = vmul.f32 %v1214, 1.442695
    %v1216 = vpow.pop %v1215
    %v1217 = vadd.f32 %v1216, 1.0
    %v1218 = vrcp.pop %v1217
    %v1219 = vmul.f32 1.0, %v1218
    %v1220 = vxor.u32 %v1211, 2147483648
    %v1221 = vmul.f32 %v1220, 1.442695
    %v1222 = vpow.pop %v1221
    %v1223 = vadd.f32 %v1222, 1.0
    %v1224 = vrcp.pop %v1223
    %v1225 = vmul.f32 1.0, %v1224
    %v1226 = vtanh.pop %v1212
    %v1227 = vxor.u32 %v1213, 2147483648
    %v1228 = vmul.f32 %v1227, 1.442695
    %v1229 = vpow.pop %v1228
    %v1230 = vadd.f32 %v1229, 1.0
    %v1231 = vrcp.pop %v1230
    %v1232 = vmul.f32 1.0, %v1231
    %v1234 = vrot.slane %v1049, 6
    %v1236 = vmul.f32 %v1225, %v1234
    %v1237 = vmul.f32 %v1219, %v1226
    %v1238 = vadd.f32 %v1236, %v1237
    %v1239 = vtanh.pop %v1238
    %v1240 = vmul.f32 %v1232, %v1239
    %1241 = vst [vmem:[#allocation2] sm:$0xc0] %v1240
    %v1243 = vrot.slane %v1240, 6
    %1245 = vmatprep.subr.mxu0 %v314
    %1246 = vmatpush1.msra.mxu0 %v313
    %1247 = vmatprep.subr.mxu0 %v310
    %1248 = vmatpush1.msra.mxu0 %v309
    %1249 = vmatprep.subr.mxu0 %v306
    %1250 = vmatpush1.msra.mxu0 %v305
    %1251 = vmatprep.subr.mxu0 %v302
    %1252 = vmatpush1.msra.mxu0 %v301
    %1253 = vmatprep.subr.mxu0 %v298
    %1254 = vmatpush1.msra.mxu0 %v297
    %1255 = vmatprep.subr.mxu0 %v294
    %1256 = vmatpush1.msra.mxu0 %v293
    %1257 = vmatprep.subr.mxu0 %v290
    %1258 = vmatpush1.msra.mxu0 %v289
    %1259 = vmatprep.subr.mxu0 %v286
    %1260 = vmatpush1.msra.mxu0 %v285
    %1261 = vmatprep.subr.mxu0 %v282
    %1262 = vmatpush1.msra.mxu0 %v281
    %1263 = vmatprep.subr.mxu0 %v278
    %1264 = vmatpush1.msra.mxu0 %v277
    %1265 = vmatprep.subr.mxu0 %v274
    %1266 = vmatpush1.msra.mxu0 %v273
    %1267 = vmatprep.subr.mxu0 %v270
    %1268 = vmatpush1.msra.mxu0 %v269
    %1269 = vmatprep.subr.mxu0 %v266
    %1270 = vmatpush1.msra.mxu0 %v265
    %1271 = vmatprep.subr.mxu0 %v262
    %1272 = vmatpush1.msra.mxu0 %v261
    %1273 = vmatprep.subr.mxu0 %v258
    %1274 = vmatpush1.msra.mxu0 %v257
    %1275 = vmatprep.subr.mxu0 %v254
    %1276 = vmatpush1.msra.mxu0 %v253
    %1277 = vmatprep.subr.mxu0 0.0
    %1278 = vmatpush2.msra.mxu0 0.0
    %1279 = vmatprep.subr.mxu0 0.0
    %1280 = vmatpush2.msra.mxu0 0.0
    %1281 = vmatprep.subr.mxu0 0.0
    %1282 = vmatpush2.msra.mxu0 0.0
    %1283 = vmatprep.subr.mxu0 0.0
    %1284 = vmatpush2.msra.mxu0 0.0
    %1285 = vmatprep.subr.mxu0 0.0
    %1286 = vmatpush2.msra.mxu0 0.0
    %1287 = vmatprep.subr.mxu0 0.0
    %1288 = vmatpush2.msra.mxu0 0.0
    %1289 = vmatprep.subr.mxu0 0.0
    %1290 = vmatpush2.msra.mxu0 0.0
    %1291 = vmatprep.subr.mxu0 0.0
    %1292 = vmatpush2.msra.mxu0 0.0
    %1293 = vmatprep.subr.mxu0 0.0
    %1294 = vmatpush2.msra.mxu0 0.0
    %1295 = vmatprep.subr.mxu0 0.0
    %1296 = vmatpush2.msra.mxu0 0.0
    %1297 = vmatprep.subr.mxu0 0.0
    %1298 = vmatpush2.msra.mxu0 0.0
    %1299 = vmatprep.subr.mxu0 0.0
    %1300 = vmatpush2.msra.mxu0 0.0
    %1301 = vmatprep.subr.mxu0 0.0
    %1302 = vmatpush2.msra.mxu0 0.0
    %1303 = vmatprep.subr.mxu0 0.0
    %1304 = vmatpush2.msra.mxu0 0.0
    %1305 = vmatprep.subr.mxu0 0.0
    %1306 = vmatpush2.msra.mxu0 0.0
    %1307 = vmatprep.subr.mxu0 0.0
    %1308 = vmatpush2.msra.mxu0 0.0
    %1309 = vmatprep.mubr.f32.mxu0 0.0
    %1310 = vmatmul.mubr.f32.gmra.mxu0 %v1243
    %v1311 = vpop.f32.mrf.mxu0
    %v1312 = vadd.f32 0.0, %v1311
    %v1313 = vpop.f32.mrf.mxu0
    %v1314 = vadd.f32 0.0, %v1313
    %1315 = vdwg.mxu0
    %1316 = vmatprep.subr.mxu0 %v316
    %1317 = vmatpush1.msra.mxu0 %v315
    %1318 = vmatprep.subr.mxu0 %v312
    %1319 = vmatpush1.msra.mxu0 %v311
    %1320 = vmatprep.subr.mxu0 %v308
    %1321 = vmatpush1.msra.mxu0 %v307
    %1322 = vmatprep.subr.mxu0 %v304
    %1323 = vmatpush1.msra.mxu0 %v303
    %1324 = vmatprep.subr.mxu0 %v300
    %1325 = vmatpush1.msra.mxu0 %v299
    %1326 = vmatprep.subr.mxu0 %v296
    %1327 = vmatpush1.msra.mxu0 %v295
    %1328 = vmatprep.subr.mxu0 %v292
    %1329 = vmatpush1.msra.mxu0 %v291
    %1330 = vmatprep.subr.mxu0 %v288
    %1331 = vmatpush1.msra.mxu0 %v287
    %1332 = vmatprep.subr.mxu0 %v284
    %1333 = vmatpush1.msra.mxu0 %v283
    %1334 = vmatprep.subr.mxu0 %v280
    %1335 = vmatpush1.msra.mxu0 %v279
    %1336 = vmatprep.subr.mxu0 %v276
    %1337 = vmatpush1.msra.mxu0 %v275
    %1338 = vmatprep.subr.mxu0 %v272
    %1339 = vmatpush1.msra.mxu0 %v271
    %1340 = vmatprep.subr.mxu0 %v268
    %1341 = vmatpush1.msra.mxu0 %v267
    %1342 = vmatprep.subr.mxu0 %v264
    %1343 = vmatpush1.msra.mxu0 %v263
    %1344 = vmatprep.subr.mxu0 %v260
    %1345 = vmatpush1.msra.mxu0 %v259
    %1346 = vmatprep.subr.mxu0 %v256
    %1347 = vmatpush1.msra.mxu0 %v255
    %1348 = vmatprep.subr.mxu0 0.0
    %1349 = vmatpush2.msra.mxu0 0.0
    %1350 = vmatprep.subr.mxu0 0.0
    %1351 = vmatpush2.msra.mxu0 0.0
    %1352 = vmatprep.subr.mxu0 0.0
    %1353 = vmatpush2.msra.mxu0 0.0
    %1354 = vmatprep.subr.mxu0 0.0
    %1355 = vmatpush2.msra.mxu0 0.0
    %1356 = vmatprep.subr.mxu0 0.0
    %1357 = vmatpush2.msra.mxu0 0.0
    %1358 = vmatprep.subr.mxu0 0.0
    %1359 = vmatpush2.msra.mxu0 0.0
    %1360 = vmatprep.subr.mxu0 0.0
    %1361 = vmatpush2.msra.mxu0 0.0
    %1362 = vmatprep.subr.mxu0 0.0
    %1363 = vmatpush2.msra.mxu0 0.0
    %1364 = vmatprep.subr.mxu0 0.0
    %1365 = vmatpush2.msra.mxu0 0.0
    %1366 = vmatprep.subr.mxu0 0.0
    %1367 = vmatpush2.msra.mxu0 0.0
    %1368 = vmatprep.subr.mxu0 0.0
    %1369 = vmatpush2.msra.mxu0 0.0
    %1370 = vmatprep.subr.mxu0 0.0
    %1371 = vmatpush2.msra.mxu0 0.0
    %1372 = vmatprep.subr.mxu0 0.0
    %1373 = vmatpush2.msra.mxu0 0.0
    %1374 = vmatprep.subr.mxu0 0.0
    %1375 = vmatpush2.msra.mxu0 0.0
    %1376 = vmatprep.subr.mxu0 0.0
    %1377 = vmatpush2.msra.mxu0 0.0
    %1378 = vmatprep.subr.mxu0 0.0
    %1379 = vmatpush2.msra.mxu0 0.0
    %1380 = vmatprep.mubr.f32.mxu0 0.0
    %1381 = vmatmul.mubr.f32.gmra.mxu0 %v1243
    %v1382 = vpop.f32.mrf.mxu0
    %v1383 = vadd.f32 0.0, %v1382
    %v1384 = vpop.f32.mrf.mxu0
    %v1385 = vadd.f32 0.0, %v1384
    %1386 = vdwg.mxu0
    %v1387 = vadd.f32 %v426, %v1312
    %v1388 = vadd.f32 %v428, %v1314
    %v1389 = vadd.f32 %v503, %v1383
    %v1390 = vadd.f32 %v505, %v1385
    %v1391 = vxor.u32 %v1387, 2147483648
    %v1392 = vmul.f32 %v1391, 1.442695
    %v1393 = vpow.pop %v1392
    %v1394 = vadd.f32 %v1393, 1.0
    %v1395 = vrcp.pop %v1394
    %v1396 = vmul.f32 1.0, %v1395
    %v1397 = vxor.u32 %v1388, 2147483648
    %v1398 = vmul.f32 %v1397, 1.442695
    %v1399 = vpow.pop %v1398
    %v1400 = vadd.f32 %v1399, 1.0
    %v1401 = vrcp.pop %v1400
    %v1402 = vmul.f32 1.0, %v1401
    %v1403 = vtanh.pop %v1389
    %v1404 = vxor.u32 %v1390, 2147483648
    %v1405 = vmul.f32 %v1404, 1.442695
    %v1406 = vpow.pop %v1405
    %v1407 = vadd.f32 %v1406, 1.0
    %v1408 = vrcp.pop %v1407
    %v1409 = vmul.f32 1.0, %v1408
    %v1411 = vrot.slane %v1238, 6
    %v1413 = vmul.f32 %v1402, %v1411
    %v1414 = vmul.f32 %v1396, %v1403
    %v1415 = vadd.f32 %v1413, %v1414
    %v1416 = vtanh.pop %v1415
    %v1417 = vmul.f32 %v1409, %v1416
    %1418 = vst [vmem:[#allocation2 + $0x8] sm:$0x3] %v1417
    %1419 = vmatprep.subr.mxu0 %v314
    %1420 = vmatpush1.msra.mxu0 %v313
    %1421 = vmatprep.subr.mxu0 %v310
    %1422 = vmatpush1.msra.mxu0 %v309
    %1423 = vmatprep.subr.mxu0 %v306
    %1424 = vmatpush1.msra.mxu0 %v305
    %1425 = vmatprep.subr.mxu0 %v302
    %1426 = vmatpush1.msra.mxu0 %v301
    %1427 = vmatprep.subr.mxu0 %v298
    %1428 = vmatpush1.msra.mxu0 %v297
    %1429 = vmatprep.subr.mxu0 %v294
    %1430 = vmatpush1.msra.mxu0 %v293
    %1431 = vmatprep.subr.mxu0 %v290
    %1432 = vmatpush1.msra.mxu0 %v289
    %1433 = vmatprep.subr.mxu0 %v286
    %1434 = vmatpush1.msra.mxu0 %v285
    %1435 = vmatprep.subr.mxu0 %v282
    %1436 = vmatpush1.msra.mxu0 %v281
    %1437 = vmatprep.subr.mxu0 %v278
    %1438 = vmatpush1.msra.mxu0 %v277
    %1439 = vmatprep.subr.mxu0 %v274
    %1440 = vmatpush1.msra.mxu0 %v273
    %1441 = vmatprep.subr.mxu0 %v270
    %1442 = vmatpush1.msra.mxu0 %v269
    %1443 = vmatprep.subr.mxu0 %v266
    %1444 = vmatpush1.msra.mxu0 %v265
    %1445 = vmatprep.subr.mxu0 %v262
    %1446 = vmatpush1.msra.mxu0 %v261
    %1447 = vmatprep.subr.mxu0 %v258
    %1448 = vmatpush1.msra.mxu0 %v257
    %1449 = vmatprep.subr.mxu0 %v254
    %1450 = vmatpush1.msra.mxu0 %v253
    %1451 = vmatprep.subr.mxu0 0.0
    %1452 = vmatpush2.msra.mxu0 0.0
    %1453 = vmatprep.subr.mxu0 0.0
    %1454 = vmatpush2.msra.mxu0 0.0
    %1455 = vmatprep.subr.mxu0 0.0
    %1456 = vmatpush2.msra.mxu0 0.0
    %1457 = vmatprep.subr.mxu0 0.0
    %1458 = vmatpush2.msra.mxu0 0.0
    %1459 = vmatprep.subr.mxu0 0.0
    %1460 = vmatpush2.msra.mxu0 0.0
    %1461 = vmatprep.subr.mxu0 0.0
    %1462 = vmatpush2.msra.mxu0 0.0
    %1463 = vmatprep.subr.mxu0 0.0
    %1464 = vmatpush2.msra.mxu0 0.0
    %1465 = vmatprep.subr.mxu0 0.0
    %1466 = vmatpush2.msra.mxu0 0.0
    %1467 = vmatprep.subr.mxu0 0.0
    %1468 = vmatpush2.msra.mxu0 0.0
    %1469 = vmatprep.subr.mxu0 0.0
    %1470 = vmatpush2.msra.mxu0 0.0
    %1471 = vmatprep.subr.mxu0 0.0
    %1472 = vmatpush2.msra.mxu0 0.0
    %1473 = vmatprep.subr.mxu0 0.0
    %1474 = vmatpush2.msra.mxu0 0.0
    %1475 = vmatprep.subr.mxu0 0.0
    %1476 = vmatpush2.msra.mxu0 0.0
    %1477 = vmatprep.subr.mxu0 0.0
    %1478 = vmatpush2.msra.mxu0 0.0
    %1479 = vmatprep.subr.mxu0 0.0
    %1480 = vmatpush2.msra.mxu0 0.0
    %1481 = vmatprep.subr.mxu0 0.0
    %1482 = vmatpush2.msra.mxu0 0.0
    %1483 = vmatprep.mubr.f32.mxu0 0.0
    %1484 = vmatmul.mubr.f32.gmra.mxu0 %v1417
    %v1485 = vpop.f32.mrf.mxu0
    %v1486 = vadd.f32 0.0, %v1485
    %v1487 = vpop.f32.mrf.mxu0
    %v1488 = vadd.f32 0.0, %v1487
    %1489 = vdwg.mxu0
    %1490 = vmatprep.subr.mxu0 %v316
    %1491 = vmatpush1.msra.mxu0 %v315
    %1492 = vmatprep.subr.mxu0 %v312
    %1493 = vmatpush1.msra.mxu0 %v311
    %1494 = vmatprep.subr.mxu0 %v308
    %1495 = vmatpush1.msra.mxu0 %v307
    %1496 = vmatprep.subr.mxu0 %v304
    %1497 = vmatpush1.msra.mxu0 %v303
    %1498 = vmatprep.subr.mxu0 %v300
    %1499 = vmatpush1.msra.mxu0 %v299
    %1500 = vmatprep.subr.mxu0 %v296
    %1501 = vmatpush1.msra.mxu0 %v295
    %1502 = vmatprep.subr.mxu0 %v292
    %1503 = vmatpush1.msra.mxu0 %v291
    %1504 = vmatprep.subr.mxu0 %v288
    %1505 = vmatpush1.msra.mxu0 %v287
    %1506 = vmatprep.subr.mxu0 %v284
    %1507 = vmatpush1.msra.mxu0 %v283
    %1508 = vmatprep.subr.mxu0 %v280
    %1509 = vmatpush1.msra.mxu0 %v279
    %1510 = vmatprep.subr.mxu0 %v276
    %1511 = vmatpush1.msra.mxu0 %v275
    %1512 = vmatprep.subr.mxu0 %v272
    %1513 = vmatpush1.msra.mxu0 %v271
    %1514 = vmatprep.subr.mxu0 %v268
    %1515 = vmatpush1.msra.mxu0 %v267
    %1516 = vmatprep.subr.mxu0 %v264
    %1517 = vmatpush1.msra.mxu0 %v263
    %1518 = vmatprep.subr.mxu0 %v260
    %1519 = vmatpush1.msra.mxu0 %v259
    %1520 = vmatprep.subr.mxu0 %v256
    %1521 = vmatpush1.msra.mxu0 %v255
    %1522 = vmatprep.subr.mxu0 0.0
    %1523 = vmatpush2.msra.mxu0 0.0
    %1524 = vmatprep.subr.mxu0 0.0
    %1525 = vmatpush2.msra.mxu0 0.0
    %1526 = vmatprep.subr.mxu0 0.0
    %1527 = vmatpush2.msra.mxu0 0.0
    %1528 = vmatprep.subr.mxu0 0.0
    %1529 = vmatpush2.msra.mxu0 0.0
    %1530 = vmatprep.subr.mxu0 0.0
    %1531 = vmatpush2.msra.mxu0 0.0
    %1532 = vmatprep.subr.mxu0 0.0
    %1533 = vmatpush2.msra.mxu0 0.0
    %1534 = vmatprep.subr.mxu0 0.0
    %1535 = vmatpush2.msra.mxu0 0.0
    %1536 = vmatprep.subr.mxu0 0.0
    %1537 = vmatpush2.msra.mxu0 0.0
    %1538 = vmatprep.subr.mxu0 0.0
    %1539 = vmatpush2.msra.mxu0 0.0
    %1540 = vmatprep.subr.mxu0 0.0
    %1541 = vmatpush2.msra.mxu0 0.0
    %1542 = vmatprep.subr.mxu0 0.0
    %1543 = vmatpush2.msra.mxu0 0.0
    %1544 = vmatprep.subr.mxu0 0.0
    %1545 = vmatpush2.msra.mxu0 0.0
    %1546 = vmatprep.subr.mxu0 0.0
    %1547 = vmatpush2.msra.mxu0 0.0
    %1548 = vmatprep.subr.mxu0 0.0
    %1549 = vmatpush2.msra.mxu0 0.0
    %1550 = vmatprep.subr.mxu0 0.0
    %1551 = vmatpush2.msra.mxu0 0.0
    %1552 = vmatprep.subr.mxu0 0.0
    %1553 = vmatpush2.msra.mxu0 0.0
    %1554 = vmatprep.mubr.f32.mxu0 0.0
    %1555 = vmatmul.mubr.f32.gmra.mxu0 %v1417
    %v1556 = vpop.f32.mrf.mxu0
    %v1557 = vadd.f32 0.0, %v1556
    %v1558 = vpop.f32.mrf.mxu0
    %v1559 = vadd.f32 0.0, %v1558
    %1560 = vdwg.mxu0
    %v1565 = vrot.slane %v1486, 6
    %v1566 = vrot.slane %v1488, 6
    %v1567 = vrot.slane %v1557, 6
    %v1568 = vrot.slane %v1559, 6
    %v1573 = vadd.f32 %v426, %v1565
    %v1574 = vadd.f32 %v428, %v1566
    %v1575 = vadd.f32 %v503, %v1567
    %v1576 = vadd.f32 %v505, %v1568
    %v1577 = vxor.u32 %v1573, 2147483648
    %v1578 = vmul.f32 %v1577, 1.442695
    %v1579 = vpow.pop %v1578
    %v1580 = vadd.f32 %v1579, 1.0
    %v1581 = vrcp.pop %v1580
    %v1582 = vmul.f32 1.0, %v1581
    %v1583 = vxor.u32 %v1574, 2147483648
    %v1584 = vmul.f32 %v1583, 1.442695
    %v1585 = vpow.pop %v1584
    %v1586 = vadd.f32 %v1585, 1.0
    %v1587 = vrcp.pop %v1586
    %v1588 = vmul.f32 1.0, %v1587
    %v1589 = vtanh.pop %v1575
    %v1590 = vxor.u32 %v1576, 2147483648
    %v1591 = vmul.f32 %v1590, 1.442695
    %v1592 = vpow.pop %v1591
    %v1593 = vadd.f32 %v1592, 1.0
    %v1594 = vrcp.pop %v1593
    %v1595 = vmul.f32 1.0, %v1594
    %v1597 = vrot.slane %v1415, 6
    %v1599 = vmul.f32 %v1588, %v1597
    %v1600 = vmul.f32 %v1582, %v1589
    %v1601 = vadd.f32 %v1599, %v1600
    %v1602 = vtanh.pop %v1601
    %v1603 = vmul.f32 %v1595, %v1602
    %1604 = vst [vmem:[#allocation2 + $0x8] sm:$0xc] %v1603
    %v1606 = vrot.slane %v1603, 2
    %1608 = vmatprep.subr.mxu0 %v314
    %1609 = vmatpush1.msra.mxu0 %v313
    %1610 = vmatprep.subr.mxu0 %v310
    %1611 = vmatpush1.msra.mxu0 %v309
    %1612 = vmatprep.subr.mxu0 %v306
    %1613 = vmatpush1.msra.mxu0 %v305
    %1614 = vmatprep.subr.mxu0 %v302
    %1615 = vmatpush1.msra.mxu0 %v301
    %1616 = vmatprep.subr.mxu0 %v298
    %1617 = vmatpush1.msra.mxu0 %v297
    %1618 = vmatprep.subr.mxu0 %v294
    %1619 = vmatpush1.msra.mxu0 %v293
    %1620 = vmatprep.subr.mxu0 %v290
    %1621 = vmatpush1.msra.mxu0 %v289
    %1622 = vmatprep.subr.mxu0 %v286
    %1623 = vmatpush1.msra.mxu0 %v285
    %1624 = vmatprep.subr.mxu0 %v282
    %1625 = vmatpush1.msra.mxu0 %v281
    %1626 = vmatprep.subr.mxu0 %v278
    %1627 = vmatpush1.msra.mxu0 %v277
    %1628 = vmatprep.subr.mxu0 %v274
    %1629 = vmatpush1.msra.mxu0 %v273
    %1630 = vmatprep.subr.mxu0 %v270
    %1631 = vmatpush1.msra.mxu0 %v269
    %1632 = vmatprep.subr.mxu0 %v266
    %1633 = vmatpush1.msra.mxu0 %v265
    %1634 = vmatprep.subr.mxu0 %v262
    %1635 = vmatpush1.msra.mxu0 %v261
    %1636 = vmatprep.subr.mxu0 %v258
    %1637 = vmatpush1.msra.mxu0 %v257
    %1638 = vmatprep.subr.mxu0 %v254
    %1639 = vmatpush1.msra.mxu0 %v253
    %1640 = vmatprep.subr.mxu0 0.0
    %1641 = vmatpush2.msra.mxu0 0.0
    %1642 = vmatprep.subr.mxu0 0.0
    %1643 = vmatpush2.msra.mxu0 0.0
    %1644 = vmatprep.subr.mxu0 0.0
    %1645 = vmatpush2.msra.mxu0 0.0
    %1646 = vmatprep.subr.mxu0 0.0
    %1647 = vmatpush2.msra.mxu0 0.0
    %1648 = vmatprep.subr.mxu0 0.0
    %1649 = vmatpush2.msra.mxu0 0.0
    %1650 = vmatprep.subr.mxu0 0.0
    %1651 = vmatpush2.msra.mxu0 0.0
    %1652 = vmatprep.subr.mxu0 0.0
    %1653 = vmatpush2.msra.mxu0 0.0
    %1654 = vmatprep.subr.mxu0 0.0
    %1655 = vmatpush2.msra.mxu0 0.0
    %1656 = vmatprep.subr.mxu0 0.0
    %1657 = vmatpush2.msra.mxu0 0.0
    %1658 = vmatprep.subr.mxu0 0.0
    %1659 = vmatpush2.msra.mxu0 0.0
    %1660 = vmatprep.subr.mxu0 0.0
    %1661 = vmatpush2.msra.mxu0 0.0
    %1662 = vmatprep.subr.mxu0 0.0
    %1663 = vmatpush2.msra.mxu0 0.0
    %1664 = vmatprep.subr.mxu0 0.0
    %1665 = vmatpush2.msra.mxu0 0.0
    %1666 = vmatprep.subr.mxu0 0.0
    %1667 = vmatpush2.msra.mxu0 0.0
    %1668 = vmatprep.subr.mxu0 0.0
    %1669 = vmatpush2.msra.mxu0 0.0
    %1670 = vmatprep.subr.mxu0 0.0
    %1671 = vmatpush2.msra.mxu0 0.0
    %1672 = vmatprep.mubr.f32.mxu0 0.0
    %1673 = vmatmul.mubr.f32.gmra.mxu0 %v1606
    %v1674 = vpop.f32.mrf.mxu0
    %v1675 = vadd.f32 0.0, %v1674
    %v1676 = vpop.f32.mrf.mxu0
    %v1677 = vadd.f32 0.0, %v1676
    %1678 = vdwg.mxu0
    %1679 = vmatprep.subr.mxu0 %v316
    %1680 = vmatpush1.msra.mxu0 %v315
    %1681 = vmatprep.subr.mxu0 %v312
    %1682 = vmatpush1.msra.mxu0 %v311
    %1683 = vmatprep.subr.mxu0 %v308
    %1684 = vmatpush1.msra.mxu0 %v307
    %1685 = vmatprep.subr.mxu0 %v304
    %1686 = vmatpush1.msra.mxu0 %v303
    %1687 = vmatprep.subr.mxu0 %v300
    %1688 = vmatpush1.msra.mxu0 %v299
    %1689 = vmatprep.subr.mxu0 %v296
    %1690 = vmatpush1.msra.mxu0 %v295
    %1691 = vmatprep.subr.mxu0 %v292
    %1692 = vmatpush1.msra.mxu0 %v291
    %1693 = vmatprep.subr.mxu0 %v288
    %1694 = vmatpush1.msra.mxu0 %v287
    %1695 = vmatprep.subr.mxu0 %v284
    %1696 = vmatpush1.msra.mxu0 %v283
    %1697 = vmatprep.subr.mxu0 %v280
    %1698 = vmatpush1.msra.mxu0 %v279
    %1699 = vmatprep.subr.mxu0 %v276
    %1700 = vmatpush1.msra.mxu0 %v275
    %1701 = vmatprep.subr.mxu0 %v272
    %1702 = vmatpush1.msra.mxu0 %v271
    %1703 = vmatprep.subr.mxu0 %v268
    %1704 = vmatpush1.msra.mxu0 %v267
    %1705 = vmatprep.subr.mxu0 %v264
    %1706 = vmatpush1.msra.mxu0 %v263
    %1707 = vmatprep.subr.mxu0 %v260
    %1708 = vmatpush1.msra.mxu0 %v259
    %1709 = vmatprep.subr.mxu0 %v256
    %1710 = vmatpush1.msra.mxu0 %v255
    %1711 = vmatprep.subr.mxu0 0.0
    %1712 = vmatpush2.msra.mxu0 0.0
    %1713 = vmatprep.subr.mxu0 0.0
    %1714 = vmatpush2.msra.mxu0 0.0
    %1715 = vmatprep.subr.mxu0 0.0
    %1716 = vmatpush2.msra.mxu0 0.0
    %1717 = vmatprep.subr.mxu0 0.0
    %1718 = vmatpush2.msra.mxu0 0.0
    %1719 = vmatprep.subr.mxu0 0.0
    %1720 = vmatpush2.msra.mxu0 0.0
    %1721 = vmatprep.subr.mxu0 0.0
    %1722 = vmatpush2.msra.mxu0 0.0
    %1723 = vmatprep.subr.mxu0 0.0
    %1724 = vmatpush2.msra.mxu0 0.0
    %1725 = vmatprep.subr.mxu0 0.0
    %1726 = vmatpush2.msra.mxu0 0.0
    %1727 = vmatprep.subr.mxu0 0.0
    %1728 = vmatpush2.msra.mxu0 0.0
    %1729 = vmatprep.subr.mxu0 0.0
    %1730 = vmatpush2.msra.mxu0 0.0
    %1731 = vmatprep.subr.mxu0 0.0
    %1732 = vmatpush2.msra.mxu0 0.0
    %1733 = vmatprep.subr.mxu0 0.0
    %1734 = vmatpush2.msra.mxu0 0.0
    %1735 = vmatprep.subr.mxu0 0.0
    %1736 = vmatpush2.msra.mxu0 0.0
    %1737 = vmatprep.subr.mxu0 0.0
    %1738 = vmatpush2.msra.mxu0 0.0
    %1739 = vmatprep.subr.mxu0 0.0
    %1740 = vmatpush2.msra.mxu0 0.0
    %1741 = vmatprep.subr.mxu0 0.0
    %1742 = vmatpush2.msra.mxu0 0.0
    %1743 = vmatprep.mubr.f32.mxu0 0.0
    %1744 = vmatmul.mubr.f32.gmra.mxu0 %v1606
    %v1745 = vpop.f32.mrf.mxu0
    %v1746 = vadd.f32 0.0, %v1745
    %v1747 = vpop.f32.mrf.mxu0
    %v1748 = vadd.f32 0.0, %v1747
    %1749 = vdwg.mxu0
    %v1754 = vrot.slane %v1675, 4
    %v1755 = vrot.slane %v1677, 4
    %v1756 = vrot.slane %v1746, 4
    %v1757 = vrot.slane %v1748, 4
    %v1762 = vadd.f32 %v426, %v1754
    %v1763 = vadd.f32 %v428, %v1755
    %v1764 = vadd.f32 %v503, %v1756
    %v1765 = vadd.f32 %v505, %v1757
    %v1766 = vxor.u32 %v1762, 2147483648
    %v1767 = vmul.f32 %v1766, 1.442695
    %v1768 = vpow.pop %v1767
    %v1769 = vadd.f32 %v1768, 1.0
    %v1770 = vrcp.pop %v1769
    %v1771 = vmul.f32 1.0, %v1770
    %v1772 = vxor.u32 %v1763, 2147483648
    %v1773 = vmul.f32 %v1772, 1.442695
    %v1774 = vpow.pop %v1773
    %v1775 = vadd.f32 %v1774, 1.0
    %v1776 = vrcp.pop %v1775
    %v1777 = vmul.f32 1.0, %v1776
    %v1778 = vtanh.pop %v1764
    %v1779 = vxor.u32 %v1765, 2147483648
    %v1780 = vmul.f32 %v1779, 1.442695
    %v1781 = vpow.pop %v1780
    %v1782 = vadd.f32 %v1781, 1.0
    %v1783 = vrcp.pop %v1782
    %v1784 = vmul.f32 1.0, %v1783
    %v1786 = vrot.slane %v1601, 6
    %v1788 = vmul.f32 %v1777, %v1786
    %v1789 = vmul.f32 %v1771, %v1778
    %v1790 = vadd.f32 %v1788, %v1789
    %v1791 = vtanh.pop %v1790
    %v1792 = vmul.f32 %v1784, %v1791
    %1793 = vst [vmem:[#allocation2 + $0x8] sm:$0x30] %v1792
    %v1795 = vrot.slane %v1792, 4
    %1797 = vmatprep.subr.mxu0 %v314
    %1798 = vmatpush1.msra.mxu0 %v313
    %1799 = vmatprep.subr.mxu0 %v310
    %1800 = vmatpush1.msra.mxu0 %v309
    %1801 = vmatprep.subr.mxu0 %v306
    %1802 = vmatpush1.msra.mxu0 %v305
    %1803 = vmatprep.subr.mxu0 %v302
    %1804 = vmatpush1.msra.mxu0 %v301
    %1805 = vmatprep.subr.mxu0 %v298
    %1806 = vmatpush1.msra.mxu0 %v297
    %1807 = vmatprep.subr.mxu0 %v294
    %1808 = vmatpush1.msra.mxu0 %v293
    %1809 = vmatprep.subr.mxu0 %v290
    %1810 = vmatpush1.msra.mxu0 %v289
    %1811 = vmatprep.subr.mxu0 %v286
    %1812 = vmatpush1.msra.mxu0 %v285
    %1813 = vmatprep.subr.mxu0 %v282
    %1814 = vmatpush1.msra.mxu0 %v281
    %1815 = vmatprep.subr.mxu0 %v278
    %1816 = vmatpush1.msra.mxu0 %v277
    %1817 = vmatprep.subr.mxu0 %v274
    %1818 = vmatpush1.msra.mxu0 %v273
    %1819 = vmatprep.subr.mxu0 %v270
    %1820 = vmatpush1.msra.mxu0 %v269
    %1821 = vmatprep.subr.mxu0 %v266
    %1822 = vmatpush1.msra.mxu0 %v265
    %1823 = vmatprep.subr.mxu0 %v262
    %1824 = vmatpush1.msra.mxu0 %v261
    %1825 = vmatprep.subr.mxu0 %v258
    %1826 = vmatpush1.msra.mxu0 %v257
    %1827 = vmatprep.subr.mxu0 %v254
    %1828 = vmatpush1.msra.mxu0 %v253
    %1829 = vmatprep.subr.mxu0 0.0
    %1830 = vmatpush2.msra.mxu0 0.0
    %1831 = vmatprep.subr.mxu0 0.0
    %1832 = vmatpush2.msra.mxu0 0.0
    %1833 = vmatprep.subr.mxu0 0.0
    %1834 = vmatpush2.msra.mxu0 0.0
    %1835 = vmatprep.subr.mxu0 0.0
    %1836 = vmatpush2.msra.mxu0 0.0
    %1837 = vmatprep.subr.mxu0 0.0
    %1838 = vmatpush2.msra.mxu0 0.0
    %1839 = vmatprep.subr.mxu0 0.0
    %1840 = vmatpush2.msra.mxu0 0.0
    %1841 = vmatprep.subr.mxu0 0.0
    %1842 = vmatpush2.msra.mxu0 0.0
    %1843 = vmatprep.subr.mxu0 0.0
    %1844 = vmatpush2.msra.mxu0 0.0
    %1845 = vmatprep.subr.mxu0 0.0
    %1846 = vmatpush2.msra.mxu0 0.0
    %1847 = vmatprep.subr.mxu0 0.0
    %1848 = vmatpush2.msra.mxu0 0.0
    %1849 = vmatprep.subr.mxu0 0.0
    %1850 = vmatpush2.msra.mxu0 0.0
    %1851 = vmatprep.subr.mxu0 0.0
    %1852 = vmatpush2.msra.mxu0 0.0
    %1853 = vmatprep.subr.mxu0 0.0
    %1854 = vmatpush2.msra.mxu0 0.0
    %1855 = vmatprep.subr.mxu0 0.0
    %1856 = vmatpush2.msra.mxu0 0.0
    %1857 = vmatprep.subr.mxu0 0.0
    %1858 = vmatpush2.msra.mxu0 0.0
    %1859 = vmatprep.subr.mxu0 0.0
    %1860 = vmatpush2.msra.mxu0 0.0
    %1861 = vmatprep.mubr.f32.mxu0 0.0
    %1862 = vmatmul.mubr.f32.gmra.mxu0 %v1795
    %v1863 = vpop.f32.mrf.mxu0
    %v1864 = vadd.f32 0.0, %v1863
    %v1865 = vpop.f32.mrf.mxu0
    %v1866 = vadd.f32 0.0, %v1865
    %1867 = vdwg.mxu0
    %1868 = vmatprep.subr.mxu0 %v316
    %1869 = vmatpush1.msra.mxu0 %v315
    %1870 = vmatprep.subr.mxu0 %v312
    %1871 = vmatpush1.msra.mxu0 %v311
    %1872 = vmatprep.subr.mxu0 %v308
    %1873 = vmatpush1.msra.mxu0 %v307
    %1874 = vmatprep.subr.mxu0 %v304
    %1875 = vmatpush1.msra.mxu0 %v303
    %1876 = vmatprep.subr.mxu0 %v300
    %1877 = vmatpush1.msra.mxu0 %v299
    %1878 = vmatprep.subr.mxu0 %v296
    %1879 = vmatpush1.msra.mxu0 %v295
    %1880 = vmatprep.subr.mxu0 %v292
    %1881 = vmatpush1.msra.mxu0 %v291
    %1882 = vmatprep.subr.mxu0 %v288
    %1883 = vmatpush1.msra.mxu0 %v287
    %1884 = vmatprep.subr.mxu0 %v284
    %1885 = vmatpush1.msra.mxu0 %v283
    %1886 = vmatprep.subr.mxu0 %v280
    %1887 = vmatpush1.msra.mxu0 %v279
    %1888 = vmatprep.subr.mxu0 %v276
    %1889 = vmatpush1.msra.mxu0 %v275
    %1890 = vmatprep.subr.mxu0 %v272
    %1891 = vmatpush1.msra.mxu0 %v271
    %1892 = vmatprep.subr.mxu0 %v268
    %1893 = vmatpush1.msra.mxu0 %v267
    %1894 = vmatprep.subr.mxu0 %v264
    %1895 = vmatpush1.msra.mxu0 %v263
    %1896 = vmatprep.subr.mxu0 %v260
    %1897 = vmatpush1.msra.mxu0 %v259
    %1898 = vmatprep.subr.mxu0 %v256
    %1899 = vmatpush1.msra.mxu0 %v255
    %1900 = vmatprep.subr.mxu0 0.0
    %1901 = vmatpush2.msra.mxu0 0.0
    %1902 = vmatprep.subr.mxu0 0.0
    %1903 = vmatpush2.msra.mxu0 0.0
    %1904 = vmatprep.subr.mxu0 0.0
    %1905 = vmatpush2.msra.mxu0 0.0
    %1906 = vmatprep.subr.mxu0 0.0
    %1907 = vmatpush2.msra.mxu0 0.0
    %1908 = vmatprep.subr.mxu0 0.0
    %1909 = vmatpush2.msra.mxu0 0.0
    %1910 = vmatprep.subr.mxu0 0.0
    %1911 = vmatpush2.msra.mxu0 0.0
    %1912 = vmatprep.subr.mxu0 0.0
    %1913 = vmatpush2.msra.mxu0 0.0
    %1914 = vmatprep.subr.mxu0 0.0
    %1915 = vmatpush2.msra.mxu0 0.0
    %1916 = vmatprep.subr.mxu0 0.0
    %1917 = vmatpush2.msra.mxu0 0.0
    %1918 = vmatprep.subr.mxu0 0.0
    %1919 = vmatpush2.msra.mxu0 0.0
    %1920 = vmatprep.subr.mxu0 0.0
    %1921 = vmatpush2.msra.mxu0 0.0
    %1922 = vmatprep.subr.mxu0 0.0
    %1923 = vmatpush2.msra.mxu0 0.0
    %1924 = vmatprep.subr.mxu0 0.0
    %1925 = vmatpush2.msra.mxu0 0.0
    %1926 = vmatprep.subr.mxu0 0.0
    %1927 = vmatpush2.msra.mxu0 0.0
    %1928 = vmatprep.subr.mxu0 0.0
    %1929 = vmatpush2.msra.mxu0 0.0
    %1930 = vmatprep.subr.mxu0 0.0
    %1931 = vmatpush2.msra.mxu0 0.0
    %1932 = vmatprep.mubr.f32.mxu0 0.0
    %1933 = vmatmul.mubr.f32.gmra.mxu0 %v1795
    %v1934 = vpop.f32.mrf.mxu0
    %v1935 = vadd.f32 0.0, %v1934
    %v1936 = vpop.f32.mrf.mxu0
    %v1937 = vadd.f32 0.0, %v1936
    %1938 = vdwg.mxu0
    %v1943 = vrot.slane %v1864, 2
    %v1944 = vrot.slane %v1866, 2
    %v1945 = vrot.slane %v1935, 2
    %v1946 = vrot.slane %v1937, 2
    %v1951 = vadd.f32 %v426, %v1943
    %v1952 = vadd.f32 %v428, %v1944
    %v1953 = vadd.f32 %v503, %v1945
    %v1954 = vadd.f32 %v505, %v1946
    %v1955 = vxor.u32 %v1951, 2147483648
    %v1956 = vmul.f32 %v1955, 1.442695
    %v1957 = vpow.pop %v1956
    %v1958 = vadd.f32 %v1957, 1.0
    %v1959 = vrcp.pop %v1958
    %v1960 = vmul.f32 1.0, %v1959
    %v1961 = vxor.u32 %v1952, 2147483648
    %v1962 = vmul.f32 %v1961, 1.442695
    %v1963 = vpow.pop %v1962
    %v1964 = vadd.f32 %v1963, 1.0
    %v1965 = vrcp.pop %v1964
    %v1966 = vmul.f32 1.0, %v1965
    %v1967 = vtanh.pop %v1953
    %v1968 = vxor.u32 %v1954, 2147483648
    %v1969 = vmul.f32 %v1968, 1.442695
    %v1970 = vpow.pop %v1969
    %v1971 = vadd.f32 %v1970, 1.0
    %v1972 = vrcp.pop %v1971
    %v1973 = vmul.f32 1.0, %v1972
    %v1975 = vrot.slane %v1790, 6
    %v1977 = vmul.f32 %v1966, %v1975
    %v1978 = vmul.f32 %v1960, %v1967
    %v1979 = vadd.f32 %v1977, %v1978
    %v1980 = vtanh.pop %v1979
    %v1981 = vmul.f32 %v1973, %v1980
    %1982 = vst [vmem:[#allocation2 + $0x8] sm:$0xc0] %v1981
    %1983 = vst [vmem:[#allocation4 - $0x6] sm:$0xc0] %v1981
    %v1984 = vld [vmem:[#allocation2] sm:$0xff]
    %v1985 = vld [vmem:[#allocation2 + $0x8] sm:$0xff]
    %v1986 = vld [vmem:[#allocation9] sm:$0xff]
    %v1987 = vld [vmem:[#allocation9 + $0x8] sm:$0xff]
    %v1988 = vld [vmem:[#allocation9 + $0x10] sm:$0xff]
    %v1989 = vld [vmem:[#allocation9 + $0x18] sm:$0xff]
    %v1990 = vld [vmem:[#allocation9 + $0x20] sm:$0xff]
    %v1991 = vld [vmem:[#allocation9 + $0x28] sm:$0xff]
    %v1992 = vld [vmem:[#allocation9 + $0x30] sm:$0xff]
    %v1993 = vld [vmem:[#allocation9 + $0x38] sm:$0xff]
    %v1994 = vld [vmem:[#allocation9 + $0x40] sm:$0xff]
    %v1995 = vld [vmem:[#allocation9 + $0x48] sm:$0xff]
    %v1996 = vld [vmem:[#allocation9 + $0x50] sm:$0xff]
    %v1997 = vld [vmem:[#allocation9 + $0x58] sm:$0xff]
    %v1998 = vld [vmem:[#allocation9 + $0x60] sm:$0xff]
    %v1999 = vld [vmem:[#allocation9 + $0x68] sm:$0xff]
    %v2000 = vld [vmem:[#allocation9 + $0x70] sm:$0xff]
    %v2001 = vld [vmem:[#allocation9 + $0x78] sm:$0xff]
    %v2002 = vld [vmem:[#allocation9 + $0x80] sm:$0xff]
    %v2003 = vld [vmem:[#allocation9 + $0x88] sm:$0xff]
    %v2004 = vld [vmem:[#allocation9 + $0x90] sm:$0xff]
    %v2005 = vld [vmem:[#allocation9 + $0x98] sm:$0xff]
    %v2006 = vld [vmem:[#allocation9 + $0xa0] sm:$0xff]
    %v2007 = vld [vmem:[#allocation9 + $0xa8] sm:$0xff]
    %v2008 = vld [vmem:[#allocation9 + $0xb0] sm:$0xff]
    %v2009 = vld [vmem:[#allocation9 + $0xb8] sm:$0xff]
    %v2010 = vld [vmem:[#allocation9 + $0xc0] sm:$0xff]
    %v2011 = vld [vmem:[#allocation9 + $0xc8] sm:$0xff]
    %v2012 = vld [vmem:[#allocation9 + $0xd0] sm:$0xff]
    %v2013 = vld [vmem:[#allocation9 + $0xd8] sm:$0xff]
    %v2014 = vld [vmem:[#allocation9 + $0xe0] sm:$0xff]
    %v2015 = vld [vmem:[#allocation9 + $0xe8] sm:$0xff]
    %v2016 = vld [vmem:[#allocation9 + $0xf0] sm:$0xff]
    %v2017 = vld [vmem:[#allocation9 + $0xf8] sm:$0xff]
    %v2018 = vld [vmem:[#allocation9 + $0x100] sm:$0xff]
    %v2019 = vld [vmem:[#allocation9 + $0x108] sm:$0xff]
    %v2020 = vld [vmem:[#allocation9 + $0x110] sm:$0xff]
    %v2021 = vld [vmem:[#allocation9 + $0x118] sm:$0xff]
    %v2022 = vld [vmem:[#allocation9 + $0x120] sm:$0xff]
    %v2023 = vld [vmem:[#allocation9 + $0x128] sm:$0xff]
    %v2024 = vld [vmem:[#allocation9 + $0x130] sm:$0xff]
    %v2025 = vld [vmem:[#allocation9 + $0x138] sm:$0xff]
    %v2026 = vld [vmem:[#allocation9 + $0x140] sm:$0xff]
    %v2027 = vld [vmem:[#allocation9 + $0x148] sm:$0xff]
    %v2028 = vld [vmem:[#allocation9 + $0x150] sm:$0xff]
    %v2029 = vld [vmem:[#allocation9 + $0x158] sm:$0xff]
    %v2030 = vld [vmem:[#allocation9 + $0x160] sm:$0xff]
    %v2031 = vld [vmem:[#allocation9 + $0x168] sm:$0xff]
    %v2032 = vld [vmem:[#allocation9 + $0x170] sm:$0xff]
    %v2033 = vld [vmem:[#allocation9 + $0x178] sm:$0xff]
    %v2034 = vld [vmem:[#allocation9 + $0x180] sm:$0xff]
    %v2035 = vld [vmem:[#allocation9 + $0x188] sm:$0xff]
    %v2036 = vld [vmem:[#allocation9 + $0x190] sm:$0xff]
    %v2037 = vld [vmem:[#allocation9 + $0x198] sm:$0xff]
    %v2038 = vld [vmem:[#allocation9 + $0x1a0] sm:$0xff]
    %v2039 = vld [vmem:[#allocation9 + $0x1a8] sm:$0xff]
    %v2040 = vld [vmem:[#allocation9 + $0x1b0] sm:$0xff]
    %v2041 = vld [vmem:[#allocation9 + $0x1b8] sm:$0xff]
    %v2042 = vld [vmem:[#allocation9 + $0x1c0] sm:$0xff]
    %v2043 = vld [vmem:[#allocation9 + $0x1c8] sm:$0xff]
    %v2044 = vld [vmem:[#allocation9 + $0x1d0] sm:$0xff]
    %v2045 = vld [vmem:[#allocation9 + $0x1d8] sm:$0xff]
    %v2046 = vld [vmem:[#allocation9 + $0x1e0] sm:$0xff]
    %v2047 = vld [vmem:[#allocation9 + $0x1e8] sm:$0xff]
    %v2048 = vld [vmem:[#allocation9 + $0x1f0] sm:$0xff]
    %v2049 = vld [vmem:[#allocation9 + $0x1f8] sm:$0xff]
    %v2050 = vld [vmem:[#allocation7] sm:$0xff]
    %v2051 = vld [vmem:[#allocation7 + $0x8] sm:$0xff]
    %v2052 = vld [vmem:[#allocation7 + $0x10] sm:$0xff]
    %v2053 = vld [vmem:[#allocation7 + $0x18] sm:$0xff]
    %v2054 = vld [vmem:[#allocation7 + $0x20] sm:$0xff]
    %v2055 = vld [vmem:[#allocation7 + $0x28] sm:$0xff]
    %v2056 = vld [vmem:[#allocation7 + $0x30] sm:$0xff]
    %v2057 = vld [vmem:[#allocation7 + $0x38] sm:$0xff]
    %v2058 = vld [vmem:[#allocation7 + $0x40] sm:$0xff]
    %v2059 = vld [vmem:[#allocation7 + $0x48] sm:$0xff]
    %v2060 = vld [vmem:[#allocation7 + $0x50] sm:$0xff]
    %v2061 = vld [vmem:[#allocation7 + $0x58] sm:$0xff]
    %v2062 = vld [vmem:[#allocation7 + $0x60] sm:$0xff]
    %v2063 = vld [vmem:[#allocation7 + $0x68] sm:$0xff]
    %v2064 = vld [vmem:[#allocation7 + $0x70] sm:$0xff]
    %v2065 = vld [vmem:[#allocation7 + $0x78] sm:$0xff]
    %v2066 = vld [vmem:[#allocation7 + $0x80] sm:$0xff]
    %v2067 = vld [vmem:[#allocation7 + $0x88] sm:$0xff]
    %v2068 = vld [vmem:[#allocation7 + $0x90] sm:$0xff]
    %v2069 = vld [vmem:[#allocation7 + $0x98] sm:$0xff]
    %v2070 = vld [vmem:[#allocation7 + $0xa0] sm:$0xff]
    %v2071 = vld [vmem:[#allocation7 + $0xa8] sm:$0xff]
    %v2072 = vld [vmem:[#allocation7 + $0xb0] sm:$0xff]
    %v2073 = vld [vmem:[#allocation7 + $0xb8] sm:$0xff]
    %v2074 = vld [vmem:[#allocation7 + $0xc0] sm:$0xff]
    %v2075 = vld [vmem:[#allocation7 + $0xc8] sm:$0xff]
    %v2076 = vld [vmem:[#allocation7 + $0xd0] sm:$0xff]
    %v2077 = vld [vmem:[#allocation7 + $0xd8] sm:$0xff]
    %v2078 = vld [vmem:[#allocation7 + $0xe0] sm:$0xff]
    %v2079 = vld [vmem:[#allocation7 + $0xe8] sm:$0xff]
    %v2080 = vld [vmem:[#allocation7 + $0xf0] sm:$0xff]
    %v2081 = vld [vmem:[#allocation7 + $0xf8] sm:$0xff]
    %v2082 = vld [vmem:[#allocation7 + $0x100] sm:$0xff]
    %v2083 = vld [vmem:[#allocation7 + $0x108] sm:$0xff]
    %v2084 = vld [vmem:[#allocation7 + $0x110] sm:$0xff]
    %v2085 = vld [vmem:[#allocation7 + $0x118] sm:$0xff]
    %v2086 = vld [vmem:[#allocation7 + $0x120] sm:$0xff]
    %v2087 = vld [vmem:[#allocation7 + $0x128] sm:$0xff]
    %v2088 = vld [vmem:[#allocation7 + $0x130] sm:$0xff]
    %v2089 = vld [vmem:[#allocation7 + $0x138] sm:$0xff]
    %v2090 = vld [vmem:[#allocation7 + $0x140] sm:$0xff]
    %v2091 = vld [vmem:[#allocation7 + $0x148] sm:$0xff]
    %v2092 = vld [vmem:[#allocation7 + $0x150] sm:$0xff]
    %v2093 = vld [vmem:[#allocation7 + $0x158] sm:$0xff]
    %v2094 = vld [vmem:[#allocation7 + $0x160] sm:$0xff]
    %v2095 = vld [vmem:[#allocation7 + $0x168] sm:$0xff]
    %v2096 = vld [vmem:[#allocation7 + $0x170] sm:$0xff]
    %v2097 = vld [vmem:[#allocation7 + $0x178] sm:$0xff]
    %v2098 = vld [vmem:[#allocation7 + $0x180] sm:$0xff]
    %v2099 = vld [vmem:[#allocation7 + $0x188] sm:$0xff]
    %v2100 = vld [vmem:[#allocation7 + $0x190] sm:$0xff]
    %v2101 = vld [vmem:[#allocation7 + $0x198] sm:$0xff]
    %v2102 = vld [vmem:[#allocation7 + $0x1a0] sm:$0xff]
    %v2103 = vld [vmem:[#allocation7 + $0x1a8] sm:$0xff]
    %v2104 = vld [vmem:[#allocation7 + $0x1b0] sm:$0xff]
    %v2105 = vld [vmem:[#allocation7 + $0x1b8] sm:$0xff]
    %v2106 = vld [vmem:[#allocation7 + $0x1c0] sm:$0xff]
    %v2107 = vld [vmem:[#allocation7 + $0x1c8] sm:$0xff]
    %v2108 = vld [vmem:[#allocation7 + $0x1d0] sm:$0xff]
    %v2109 = vld [vmem:[#allocation7 + $0x1d8] sm:$0xff]
    %v2110 = vld [vmem:[#allocation7 + $0x1e0] sm:$0xff]
    %v2111 = vld [vmem:[#allocation7 + $0x1e8] sm:$0xff]
    %v2112 = vld [vmem:[#allocation7 + $0x1f0] sm:$0xff]
    %v2113 = vld [vmem:[#allocation7 + $0x1f8] sm:$0xff]
    %v2114 = vld [vmem:[%s9] sm:$0xf]
    %v2116 = vlaneseq
    %v2117 = vshrl.u32 %v2116, 7
    %v2118 = vsub.s32 0, %v2117
    %v2119 = vrot.slane %v2114, %v2118
    %v2120 = vlaneseq
    %v2121 = vshrl.u32 %v2120, 7
    %v2122 = vsub.s32 1, %v2121
    %v2123 = vrot.slane %v2114, %v2122
    %v2124 = vlaneseq
    %v2125 = vshrl.u32 %v2124, 7
    %v2126 = vsub.s32 2, %v2125
    %v2127 = vrot.slane %v2114, %v2126
    %v2128 = vlaneseq
    %v2129 = vshrl.u32 %v2128, 7
    %v2130 = vsub.s32 3, %v2129
    %v2131 = vrot.slane %v2114, %v2130
    %2136 = vmatprep.subr.mxu0 %v2111
    %2137 = vmatpush1.msra.mxu0 %v2110
    %2138 = vmatprep.subr.mxu0 %v2107
    %2139 = vmatpush1.msra.mxu0 %v2106
    %2140 = vmatprep.subr.mxu0 %v2103
    %2141 = vmatpush1.msra.mxu0 %v2102
    %2142 = vmatprep.subr.mxu0 %v2099
    %2143 = vmatpush1.msra.mxu0 %v2098
    %2144 = vmatprep.subr.mxu0 %v2095
    %2145 = vmatpush1.msra.mxu0 %v2094
    %2146 = vmatprep.subr.mxu0 %v2091
    %2147 = vmatpush1.msra.mxu0 %v2090
    %2148 = vmatprep.subr.mxu0 %v2087
    %2149 = vmatpush1.msra.mxu0 %v2086
    %2150 = vmatprep.subr.mxu0 %v2083
    %2151 = vmatpush1.msra.mxu0 %v2082
    %2152 = vmatprep.subr.mxu0 %v2079
    %2153 = vmatpush1.msra.mxu0 %v2078
    %2154 = vmatprep.subr.mxu0 %v2075
    %2155 = vmatpush1.msra.mxu0 %v2074
    %2156 = vmatprep.subr.mxu0 %v2071
    %2157 = vmatpush1.msra.mxu0 %v2070
    %2158 = vmatprep.subr.mxu0 %v2067
    %2159 = vmatpush1.msra.mxu0 %v2066
    %2160 = vmatprep.subr.mxu0 %v2063
    %2161 = vmatpush1.msra.mxu0 %v2062
    %2162 = vmatprep.subr.mxu0 %v2059
    %2163 = vmatpush1.msra.mxu0 %v2058
    %2164 = vmatprep.subr.mxu0 %v2055
    %2165 = vmatpush1.msra.mxu0 %v2054
    %2166 = vmatprep.subr.mxu0 %v2051
    %2167 = vmatpush1.msra.mxu0 %v2050
    %2168 = vmatprep.subr.mxu0 0.0
    %2169 = vmatpush2.msra.mxu0 0.0
    %2170 = vmatprep.subr.mxu0 0.0
    %2171 = vmatpush2.msra.mxu0 0.0
    %2172 = vmatprep.subr.mxu0 0.0
    %2173 = vmatpush2.msra.mxu0 0.0
    %2174 = vmatprep.subr.mxu0 0.0
    %2175 = vmatpush2.msra.mxu0 0.0
    %2176 = vmatprep.subr.mxu0 0.0
    %2177 = vmatpush2.msra.mxu0 0.0
    %2178 = vmatprep.subr.mxu0 0.0
    %2179 = vmatpush2.msra.mxu0 0.0
    %2180 = vmatprep.subr.mxu0 0.0
    %2181 = vmatpush2.msra.mxu0 0.0
    %2182 = vmatprep.subr.mxu0 0.0
    %2183 = vmatpush2.msra.mxu0 0.0
    %2184 = vmatprep.subr.mxu0 0.0
    %2185 = vmatpush2.msra.mxu0 0.0
    %2186 = vmatprep.subr.mxu0 0.0
    %2187 = vmatpush2.msra.mxu0 0.0
    %2188 = vmatprep.subr.mxu0 0.0
    %2189 = vmatpush2.msra.mxu0 0.0
    %2190 = vmatprep.subr.mxu0 0.0
    %2191 = vmatpush2.msra.mxu0 0.0
    %2192 = vmatprep.subr.mxu0 0.0
    %2193 = vmatpush2.msra.mxu0 0.0
    %2194 = vmatprep.subr.mxu0 0.0
    %2195 = vmatpush2.msra.mxu0 0.0
    %2196 = vmatprep.subr.mxu0 0.0
    %2197 = vmatpush2.msra.mxu0 0.0
    %2198 = vmatprep.subr.mxu0 0.0
    %2199 = vmatpush2.msra.mxu0 0.0
    %2200 = vmatprep.mubr.f32.mxu0 0.0
    %2201 = vmatmul.mubr.f32.gmra.mxu0 %v1984
    %v2202 = vpop.f32.mrf.mxu0
    %v2203 = vadd.f32 %v2119, %v2202
    %v2204 = vpop.f32.mrf.mxu0
    %v2205 = vadd.f32 %v2123, %v2204
    %2206 = vmatprep.mubr.f32.mxu0 0.0
    %2207 = vmatmul.mubr.f32.gmra.mxu0 %v1985
    %v2208 = vpop.f32.mrf.mxu0
    %v2209 = vadd.f32 %v2119, %v2208
    %v2210 = vpop.f32.mrf.mxu0
    %v2211 = vadd.f32 %v2123, %v2210
    %2212 = vdwg.mxu0
    %2213 = vmatprep.subr.mxu0 %v2113
    %2214 = vmatpush1.msra.mxu0 %v2112
    %2215 = vmatprep.subr.mxu0 %v2109
    %2216 = vmatpush1.msra.mxu0 %v2108
    %2217 = vmatprep.subr.mxu0 %v2105
    %2218 = vmatpush1.msra.mxu0 %v2104
    %2219 = vmatprep.subr.mxu0 %v2101
    %2220 = vmatpush1.msra.mxu0 %v2100
    %2221 = vmatprep.subr.mxu0 %v2097
    %2222 = vmatpush1.msra.mxu0 %v2096
    %2223 = vmatprep.subr.mxu0 %v2093
    %2224 = vmatpush1.msra.mxu0 %v2092
    %2225 = vmatprep.subr.mxu0 %v2089
    %2226 = vmatpush1.msra.mxu0 %v2088
    %2227 = vmatprep.subr.mxu0 %v2085
    %2228 = vmatpush1.msra.mxu0 %v2084
    %2229 = vmatprep.subr.mxu0 %v2081
    %2230 = vmatpush1.msra.mxu0 %v2080
    %2231 = vmatprep.subr.mxu0 %v2077
    %2232 = vmatpush1.msra.mxu0 %v2076
    %2233 = vmatprep.subr.mxu0 %v2073
    %2234 = vmatpush1.msra.mxu0 %v2072
    %2235 = vmatprep.subr.mxu0 %v2069
    %2236 = vmatpush1.msra.mxu0 %v2068
    %2237 = vmatprep.subr.mxu0 %v2065
    %2238 = vmatpush1.msra.mxu0 %v2064
    %2239 = vmatprep.subr.mxu0 %v2061
    %2240 = vmatpush1.msra.mxu0 %v2060
    %2241 = vmatprep.subr.mxu0 %v2057
    %2242 = vmatpush1.msra.mxu0 %v2056
    %2243 = vmatprep.subr.mxu0 %v2053
    %2244 = vmatpush1.msra.mxu0 %v2052
    %2245 = vmatprep.subr.mxu0 0.0
    %2246 = vmatpush2.msra.mxu0 0.0
    %2247 = vmatprep.subr.mxu0 0.0
    %2248 = vmatpush2.msra.mxu0 0.0
    %2249 = vmatprep.subr.mxu0 0.0
    %2250 = vmatpush2.msra.mxu0 0.0
    %2251 = vmatprep.subr.mxu0 0.0
    %2252 = vmatpush2.msra.mxu0 0.0
    %2253 = vmatprep.subr.mxu0 0.0
    %2254 = vmatpush2.msra.mxu0 0.0
    %2255 = vmatprep.subr.mxu0 0.0
    %2256 = vmatpush2.msra.mxu0 0.0
    %2257 = vmatprep.subr.mxu0 0.0
    %2258 = vmatpush2.msra.mxu0 0.0
    %2259 = vmatprep.subr.mxu0 0.0
    %2260 = vmatpush2.msra.mxu0 0.0
    %2261 = vmatprep.subr.mxu0 0.0
    %2262 = vmatpush2.msra.mxu0 0.0
    %2263 = vmatprep.subr.mxu0 0.0
    %2264 = vmatpush2.msra.mxu0 0.0
    %2265 = vmatprep.subr.mxu0 0.0
    %2266 = vmatpush2.msra.mxu0 0.0
    %2267 = vmatprep.subr.mxu0 0.0
    %2268 = vmatpush2.msra.mxu0 0.0
    %2269 = vmatprep.subr.mxu0 0.0
    %2270 = vmatpush2.msra.mxu0 0.0
    %2271 = vmatprep.subr.mxu0 0.0
    %2272 = vmatpush2.msra.mxu0 0.0
    %2273 = vmatprep.subr.mxu0 0.0
    %2274 = vmatpush2.msra.mxu0 0.0
    %2275 = vmatprep.subr.mxu0 0.0
    %2276 = vmatpush2.msra.mxu0 0.0
    %2277 = vmatprep.mubr.f32.mxu0 0.0
    %2278 = vmatmul.mubr.f32.gmra.mxu0 %v1984
    %v2279 = vpop.f32.mrf.mxu0
    %v2280 = vadd.f32 %v2127, %v2279
    %v2281 = vpop.f32.mrf.mxu0
    %v2282 = vadd.f32 %v2131, %v2281
    %2283 = vmatprep.mubr.f32.mxu0 0.0
    %2284 = vmatmul.mubr.f32.gmra.mxu0 %v1985
    %v2285 = vpop.f32.mrf.mxu0
    %v2286 = vadd.f32 %v2127, %v2285
    %v2287 = vpop.f32.mrf.mxu0
    %v2288 = vadd.f32 %v2131, %v2287
    %2289 = vdwg.mxu0
    %2290 = vmatprep.subr.mxu0 %v2047
    %2291 = vmatpush1.msra.mxu0 %v2046
    %2292 = vmatprep.subr.mxu0 %v2043
    %2293 = vmatpush1.msra.mxu0 %v2042
    %2294 = vmatprep.subr.mxu0 %v2039
    %2295 = vmatpush1.msra.mxu0 %v2038
    %2296 = vmatprep.subr.mxu0 %v2035
    %2297 = vmatpush1.msra.mxu0 %v2034
    %2298 = vmatprep.subr.mxu0 %v2031
    %2299 = vmatpush1.msra.mxu0 %v2030
    %2300 = vmatprep.subr.mxu0 %v2027
    %2301 = vmatpush1.msra.mxu0 %v2026
    %2302 = vmatprep.subr.mxu0 %v2023
    %2303 = vmatpush1.msra.mxu0 %v2022
    %2304 = vmatprep.subr.mxu0 %v2019
    %2305 = vmatpush1.msra.mxu0 %v2018
    %2306 = vmatprep.subr.mxu0 %v2015
    %2307 = vmatpush1.msra.mxu0 %v2014
    %2308 = vmatprep.subr.mxu0 %v2011
    %2309 = vmatpush1.msra.mxu0 %v2010
    %2310 = vmatprep.subr.mxu0 %v2007
    %2311 = vmatpush1.msra.mxu0 %v2006
    %2312 = vmatprep.subr.mxu0 %v2003
    %2313 = vmatpush1.msra.mxu0 %v2002
    %2314 = vmatprep.subr.mxu0 %v1999
    %2315 = vmatpush1.msra.mxu0 %v1998
    %2316 = vmatprep.subr.mxu0 %v1995
    %2317 = vmatpush1.msra.mxu0 %v1994
    %2318 = vmatprep.subr.mxu0 %v1991
    %2319 = vmatpush1.msra.mxu0 %v1990
    %2320 = vmatprep.subr.mxu0 %v1987
    %2321 = vmatpush1.msra.mxu0 %v1986
    %2322 = vmatprep.subr.mxu0 0.0
    %2323 = vmatpush2.msra.mxu0 0.0
    %2324 = vmatprep.subr.mxu0 0.0
    %2325 = vmatpush2.msra.mxu0 0.0
    %2326 = vmatprep.subr.mxu0 0.0
    %2327 = vmatpush2.msra.mxu0 0.0
    %2328 = vmatprep.subr.mxu0 0.0
    %2329 = vmatpush2.msra.mxu0 0.0
    %2330 = vmatprep.subr.mxu0 0.0
    %2331 = vmatpush2.msra.mxu0 0.0
    %2332 = vmatprep.subr.mxu0 0.0
    %2333 = vmatpush2.msra.mxu0 0.0
    %2334 = vmatprep.subr.mxu0 0.0
    %2335 = vmatpush2.msra.mxu0 0.0
    %2336 = vmatprep.subr.mxu0 0.0
    %2337 = vmatpush2.msra.mxu0 0.0
    %2338 = vmatprep.subr.mxu0 0.0
    %2339 = vmatpush2.msra.mxu0 0.0
    %2340 = vmatprep.subr.mxu0 0.0
    %2341 = vmatpush2.msra.mxu0 0.0
    %2342 = vmatprep.subr.mxu0 0.0
    %2343 = vmatpush2.msra.mxu0 0.0
    %2344 = vmatprep.subr.mxu0 0.0
    %2345 = vmatpush2.msra.mxu0 0.0
    %2346 = vmatprep.subr.mxu0 0.0
    %2347 = vmatpush2.msra.mxu0 0.0
    %2348 = vmatprep.subr.mxu0 0.0
    %2349 = vmatpush2.msra.mxu0 0.0
    %2350 = vmatprep.subr.mxu0 0.0
    %2351 = vmatpush2.msra.mxu0 0.0
    %2352 = vmatprep.subr.mxu0 0.0
    %2353 = vmatpush2.msra.mxu0 0.0
    %2354 = vmatprep.mubr.f32.mxu0 0.0
    %2355 = vmatmul.mubr.f32.gmra.mxu0 0.0
    %v2356 = vpop.f32.mrf.mxu0
    %v2357 = vadd.f32 0.0, %v2356
    %v2358 = vpop.f32.mrf.mxu0
    %v2359 = vadd.f32 0.0, %v2358
    %2360 = vdwg.mxu0
    %2361 = vmatprep.subr.mxu0 %v2049
    %2362 = vmatpush1.msra.mxu0 %v2048
    %2363 = vmatprep.subr.mxu0 %v2045
    %2364 = vmatpush1.msra.mxu0 %v2044
    %2365 = vmatprep.subr.mxu0 %v2041
    %2366 = vmatpush1.msra.mxu0 %v2040
    %2367 = vmatprep.subr.mxu0 %v2037
    %2368 = vmatpush1.msra.mxu0 %v2036
    %2369 = vmatprep.subr.mxu0 %v2033
    %2370 = vmatpush1.msra.mxu0 %v2032
    %2371 = vmatprep.subr.mxu0 %v2029
    %2372 = vmatpush1.msra.mxu0 %v2028
    %2373 = vmatprep.subr.mxu0 %v2025
    %2374 = vmatpush1.msra.mxu0 %v2024
    %2375 = vmatprep.subr.mxu0 %v2021
    %2376 = vmatpush1.msra.mxu0 %v2020
    %2377 = vmatprep.subr.mxu0 %v2017
    %2378 = vmatpush1.msra.mxu0 %v2016
    %2379 = vmatprep.subr.mxu0 %v2013
    %2380 = vmatpush1.msra.mxu0 %v2012
    %2381 = vmatprep.subr.mxu0 %v2009
    %2382 = vmatpush1.msra.mxu0 %v2008
    %2383 = vmatprep.subr.mxu0 %v2005
    %2384 = vmatpush1.msra.mxu0 %v2004
    %2385 = vmatprep.subr.mxu0 %v2001
    %2386 = vmatpush1.msra.mxu0 %v2000
    %2387 = vmatprep.subr.mxu0 %v1997
    %2388 = vmatpush1.msra.mxu0 %v1996
    %2389 = vmatprep.subr.mxu0 %v1993
    %2390 = vmatpush1.msra.mxu0 %v1992
    %2391 = vmatprep.subr.mxu0 %v1989
    %2392 = vmatpush1.msra.mxu0 %v1988
    %2393 = vmatprep.subr.mxu0 0.0
    %2394 = vmatpush2.msra.mxu0 0.0
    %2395 = vmatprep.subr.mxu0 0.0
    %2396 = vmatpush2.msra.mxu0 0.0
    %2397 = vmatprep.subr.mxu0 0.0
    %2398 = vmatpush2.msra.mxu0 0.0
    %2399 = vmatprep.subr.mxu0 0.0
    %2400 = vmatpush2.msra.mxu0 0.0
    %2401 = vmatprep.subr.mxu0 0.0
    %2402 = vmatpush2.msra.mxu0 0.0
    %2403 = vmatprep.subr.mxu0 0.0
    %2404 = vmatpush2.msra.mxu0 0.0
    %2405 = vmatprep.subr.mxu0 0.0
    %2406 = vmatpush2.msra.mxu0 0.0
    %2407 = vmatprep.subr.mxu0 0.0
    %2408 = vmatpush2.msra.mxu0 0.0
    %2409 = vmatprep.subr.mxu0 0.0
    %2410 = vmatpush2.msra.mxu0 0.0
    %2411 = vmatprep.subr.mxu0 0.0
    %2412 = vmatpush2.msra.mxu0 0.0
    %2413 = vmatprep.subr.mxu0 0.0
    %2414 = vmatpush2.msra.mxu0 0.0
    %2415 = vmatprep.subr.mxu0 0.0
    %2416 = vmatpush2.msra.mxu0 0.0
    %2417 = vmatprep.subr.mxu0 0.0
    %2418 = vmatpush2.msra.mxu0 0.0
    %2419 = vmatprep.subr.mxu0 0.0
    %2420 = vmatpush2.msra.mxu0 0.0
    %2421 = vmatprep.subr.mxu0 0.0
    %2422 = vmatpush2.msra.mxu0 0.0
    %2423 = vmatprep.subr.mxu0 0.0
    %2424 = vmatpush2.msra.mxu0 0.0
    %2425 = vmatprep.mubr.f32.mxu0 0.0
    %2426 = vmatmul.mubr.f32.gmra.mxu0 0.0
    %v2427 = vpop.f32.mrf.mxu0
    %v2428 = vadd.f32 0.0, %v2427
    %v2429 = vpop.f32.mrf.mxu0
    %v2430 = vadd.f32 0.0, %v2429
    %2431 = vdwg.mxu0
    %v2432 = vadd.f32 %v2203, %v2357
    %v2433 = vadd.f32 %v2205, %v2359
    %v2434 = vadd.f32 %v2280, %v2428
    %v2435 = vadd.f32 %v2282, %v2430
    %v2436 = vxor.u32 %v2432, 2147483648
    %v2437 = vmul.f32 %v2436, 1.442695
    %v2438 = vpow.pop %v2437
    %v2439 = vadd.f32 %v2438, 1.0
    %v2440 = vrcp.pop %v2439
    %v2441 = vmul.f32 1.0, %v2440
    %v2442 = vxor.u32 %v2433, 2147483648
    %v2443 = vmul.f32 %v2442, 1.442695
    %v2444 = vpow.pop %v2443
    %v2445 = vadd.f32 %v2444, 1.0
    %v2446 = vrcp.pop %v2445
    %v2447 = vmul.f32 1.0, %v2446
    %v2448 = vtanh.pop %v2434
    %v2449 = vxor.u32 %v2435, 2147483648
    %v2450 = vmul.f32 %v2449, 1.442695
    %v2451 = vpow.pop %v2450
    %v2452 = vadd.f32 %v2451, 1.0
    %v2453 = vrcp.pop %v2452
    %v2454 = vmul.f32 1.0, %v2453
    %v2455 = vmul.f32 %v2447, 0.0
    %v2456 = vmul.f32 %v2441, %v2448
    %v2457 = vadd.f32 %v2455, %v2456
    %v2458 = vtanh.pop %v2457
    %v2459 = vmul.f32 %v2454, %v2458
    %2460 = vmatprep.subr.mxu0 %v2047
    %2461 = vmatpush1.msra.mxu0 %v2046
    %2462 = vmatprep.subr.mxu0 %v2043
    %2463 = vmatpush1.msra.mxu0 %v2042
    %2464 = vmatprep.subr.mxu0 %v2039
    %2465 = vmatpush1.msra.mxu0 %v2038
    %2466 = vmatprep.subr.mxu0 %v2035
    %2467 = vmatpush1.msra.mxu0 %v2034
    %2468 = vmatprep.subr.mxu0 %v2031
    %2469 = vmatpush1.msra.mxu0 %v2030
    %2470 = vmatprep.subr.mxu0 %v2027
    %2471 = vmatpush1.msra.mxu0 %v2026
    %2472 = vmatprep.subr.mxu0 %v2023
    %2473 = vmatpush1.msra.mxu0 %v2022
    %2474 = vmatprep.subr.mxu0 %v2019
    %2475 = vmatpush1.msra.mxu0 %v2018
    %2476 = vmatprep.subr.mxu0 %v2015
    %2477 = vmatpush1.msra.mxu0 %v2014
    %2478 = vmatprep.subr.mxu0 %v2011
    %2479 = vmatpush1.msra.mxu0 %v2010
    %2480 = vmatprep.subr.mxu0 %v2007
    %2481 = vmatpush1.msra.mxu0 %v2006
    %2482 = vmatprep.subr.mxu0 %v2003
    %2483 = vmatpush1.msra.mxu0 %v2002
    %2484 = vmatprep.subr.mxu0 %v1999
    %2485 = vmatpush1.msra.mxu0 %v1998
    %2486 = vmatprep.subr.mxu0 %v1995
    %2487 = vmatpush1.msra.mxu0 %v1994
    %2488 = vmatprep.subr.mxu0 %v1991
    %2489 = vmatpush1.msra.mxu0 %v1990
    %2490 = vmatprep.subr.mxu0 %v1987
    %2491 = vmatpush1.msra.mxu0 %v1986
    %2492 = vmatprep.subr.mxu0 0.0
    %2493 = vmatpush2.msra.mxu0 0.0
    %2494 = vmatprep.subr.mxu0 0.0
    %2495 = vmatpush2.msra.mxu0 0.0
    %2496 = vmatprep.subr.mxu0 0.0
    %2497 = vmatpush2.msra.mxu0 0.0
    %2498 = vmatprep.subr.mxu0 0.0
    %2499 = vmatpush2.msra.mxu0 0.0
    %2500 = vmatprep.subr.mxu0 0.0
    %2501 = vmatpush2.msra.mxu0 0.0
    %2502 = vmatprep.subr.mxu0 0.0
    %2503 = vmatpush2.msra.mxu0 0.0
    %2504 = vmatprep.subr.mxu0 0.0
    %2505 = vmatpush2.msra.mxu0 0.0
    %2506 = vmatprep.subr.mxu0 0.0
    %2507 = vmatpush2.msra.mxu0 0.0
    %2508 = vmatprep.subr.mxu0 0.0
    %2509 = vmatpush2.msra.mxu0 0.0
    %2510 = vmatprep.subr.mxu0 0.0
    %2511 = vmatpush2.msra.mxu0 0.0
    %2512 = vmatprep.subr.mxu0 0.0
    %2513 = vmatpush2.msra.mxu0 0.0
    %2514 = vmatprep.subr.mxu0 0.0
    %2515 = vmatpush2.msra.mxu0 0.0
    %2516 = vmatprep.subr.mxu0 0.0
    %2517 = vmatpush2.msra.mxu0 0.0
    %2518 = vmatprep.subr.mxu0 0.0
    %2519 = vmatpush2.msra.mxu0 0.0
    %2520 = vmatprep.subr.mxu0 0.0
    %2521 = vmatpush2.msra.mxu0 0.0
    %2522 = vmatprep.subr.mxu0 0.0
    %2523 = vmatpush2.msra.mxu0 0.0
    %2524 = vmatprep.mubr.f32.mxu0 0.0
    %2525 = vmatmul.mubr.f32.gmra.mxu0 %v2459
    %v2526 = vpop.f32.mrf.mxu0
    %v2527 = vadd.f32 0.0, %v2526
    %v2528 = vpop.f32.mrf.mxu0
    %v2529 = vadd.f32 0.0, %v2528
    %2530 = vdwg.mxu0
    %2531 = vmatprep.subr.mxu0 %v2049
    %2532 = vmatpush1.msra.mxu0 %v2048
    %2533 = vmatprep.subr.mxu0 %v2045
    %2534 = vmatpush1.msra.mxu0 %v2044
    %2535 = vmatprep.subr.mxu0 %v2041
    %2536 = vmatpush1.msra.mxu0 %v2040
    %2537 = vmatprep.subr.mxu0 %v2037
    %2538 = vmatpush1.msra.mxu0 %v2036
    %2539 = vmatprep.subr.mxu0 %v2033
    %2540 = vmatpush1.msra.mxu0 %v2032
    %2541 = vmatprep.subr.mxu0 %v2029
    %2542 = vmatpush1.msra.mxu0 %v2028
    %2543 = vmatprep.subr.mxu0 %v2025
    %2544 = vmatpush1.msra.mxu0 %v2024
    %2545 = vmatprep.subr.mxu0 %v2021
    %2546 = vmatpush1.msra.mxu0 %v2020
    %2547 = vmatprep.subr.mxu0 %v2017
    %2548 = vmatpush1.msra.mxu0 %v2016
    %2549 = vmatprep.subr.mxu0 %v2013
    %2550 = vmatpush1.msra.mxu0 %v2012
    %2551 = vmatprep.subr.mxu0 %v2009
    %2552 = vmatpush1.msra.mxu0 %v2008
    %2553 = vmatprep.subr.mxu0 %v2005
    %2554 = vmatpush1.msra.mxu0 %v2004
    %2555 = vmatprep.subr.mxu0 %v2001
    %2556 = vmatpush1.msra.mxu0 %v2000
    %2557 = vmatprep.subr.mxu0 %v1997
    %2558 = vmatpush1.msra.mxu0 %v1996
    %2559 = vmatprep.subr.mxu0 %v1993
    %2560 = vmatpush1.msra.mxu0 %v1992
    %2561 = vmatprep.subr.mxu0 %v1989
    %2562 = vmatpush1.msra.mxu0 %v1988
    %2563 = vmatprep.subr.mxu0 0.0
    %2564 = vmatpush2.msra.mxu0 0.0
    %2565 = vmatprep.subr.mxu0 0.0
    %2566 = vmatpush2.msra.mxu0 0.0
    %2567 = vmatprep.subr.mxu0 0.0
    %2568 = vmatpush2.msra.mxu0 0.0
    %2569 = vmatprep.subr.mxu0 0.0
    %2570 = vmatpush2.msra.mxu0 0.0
    %2571 = vmatprep.subr.mxu0 0.0
    %2572 = vmatpush2.msra.mxu0 0.0
    %2573 = vmatprep.subr.mxu0 0.0
    %2574 = vmatpush2.msra.mxu0 0.0
    %2575 = vmatprep.subr.mxu0 0.0
    %2576 = vmatpush2.msra.mxu0 0.0
    %2577 = vmatprep.subr.mxu0 0.0
    %2578 = vmatpush2.msra.mxu0 0.0
    %2579 = vmatprep.subr.mxu0 0.0
    %2580 = vmatpush2.msra.mxu0 0.0
    %2581 = vmatprep.subr.mxu0 0.0
    %2582 = vmatpush2.msra.mxu0 0.0
    %2583 = vmatprep.subr.mxu0 0.0
    %2584 = vmatpush2.msra.mxu0 0.0
    %2585 = vmatprep.subr.mxu0 0.0
    %2586 = vmatpush2.msra.mxu0 0.0
    %2587 = vmatprep.subr.mxu0 0.0
    %2588 = vmatpush2.msra.mxu0 0.0
    %2589 = vmatprep.subr.mxu0 0.0
    %2590 = vmatpush2.msra.mxu0 0.0
    %2591 = vmatprep.subr.mxu0 0.0
    %2592 = vmatpush2.msra.mxu0 0.0
    %2593 = vmatprep.subr.mxu0 0.0
    %2594 = vmatpush2.msra.mxu0 0.0
    %2595 = vmatprep.mubr.f32.mxu0 0.0
    %2596 = vmatmul.mubr.f32.gmra.mxu0 %v2459
    %v2597 = vpop.f32.mrf.mxu0
    %v2598 = vadd.f32 0.0, %v2597
    %v2599 = vpop.f32.mrf.mxu0
    %v2600 = vadd.f32 0.0, %v2599
    %2601 = vdwg.mxu0
    %v2606 = vrot.slane %v2527, 6
    %v2607 = vrot.slane %v2529, 6
    %v2608 = vrot.slane %v2598, 6
    %v2609 = vrot.slane %v2600, 6
    %v2614 = vadd.f32 %v2203, %v2606
    %v2615 = vadd.f32 %v2205, %v2607
    %v2616 = vadd.f32 %v2280, %v2608
    %v2617 = vadd.f32 %v2282, %v2609
    %v2618 = vxor.u32 %v2614, 2147483648
    %v2619 = vmul.f32 %v2618, 1.442695
    %v2620 = vpow.pop %v2619
    %v2621 = vadd.f32 %v2620, 1.0
    %v2622 = vrcp.pop %v2621
    %v2623 = vmul.f32 1.0, %v2622
    %v2624 = vxor.u32 %v2615, 2147483648
    %v2625 = vmul.f32 %v2624, 1.442695
    %v2626 = vpow.pop %v2625
    %v2627 = vadd.f32 %v2626, 1.0
    %v2628 = vrcp.pop %v2627
    %v2629 = vmul.f32 1.0, %v2628
    %v2630 = vtanh.pop %v2616
    %v2631 = vxor.u32 %v2617, 2147483648
    %v2632 = vmul.f32 %v2631, 1.442695
    %v2633 = vpow.pop %v2632
    %v2634 = vadd.f32 %v2633, 1.0
    %v2635 = vrcp.pop %v2634
    %v2636 = vmul.f32 1.0, %v2635
    %v2638 = vrot.slane %v2457, 6
    %v2640 = vmul.f32 %v2629, %v2638
    %v2641 = vmul.f32 %v2623, %v2630
    %v2642 = vadd.f32 %v2640, %v2641
    %v2643 = vtanh.pop %v2642
    %v2644 = vmul.f32 %v2636, %v2643
    %v2646 = vrot.slane %v2644, 2
    %2648 = vmatprep.subr.mxu0 %v2047
    %2649 = vmatpush1.msra.mxu0 %v2046
    %2650 = vmatprep.subr.mxu0 %v2043
    %2651 = vmatpush1.msra.mxu0 %v2042
    %2652 = vmatprep.subr.mxu0 %v2039
    %2653 = vmatpush1.msra.mxu0 %v2038
    %2654 = vmatprep.subr.mxu0 %v2035
    %2655 = vmatpush1.msra.mxu0 %v2034
    %2656 = vmatprep.subr.mxu0 %v2031
    %2657 = vmatpush1.msra.mxu0 %v2030
    %2658 = vmatprep.subr.mxu0 %v2027
    %2659 = vmatpush1.msra.mxu0 %v2026
    %2660 = vmatprep.subr.mxu0 %v2023
    %2661 = vmatpush1.msra.mxu0 %v2022
    %2662 = vmatprep.subr.mxu0 %v2019
    %2663 = vmatpush1.msra.mxu0 %v2018
    %2664 = vmatprep.subr.mxu0 %v2015
    %2665 = vmatpush1.msra.mxu0 %v2014
    %2666 = vmatprep.subr.mxu0 %v2011
    %2667 = vmatpush1.msra.mxu0 %v2010
    %2668 = vmatprep.subr.mxu0 %v2007
    %2669 = vmatpush1.msra.mxu0 %v2006
    %2670 = vmatprep.subr.mxu0 %v2003
    %2671 = vmatpush1.msra.mxu0 %v2002
    %2672 = vmatprep.subr.mxu0 %v1999
    %2673 = vmatpush1.msra.mxu0 %v1998
    %2674 = vmatprep.subr.mxu0 %v1995
    %2675 = vmatpush1.msra.mxu0 %v1994
    %2676 = vmatprep.subr.mxu0 %v1991
    %2677 = vmatpush1.msra.mxu0 %v1990
    %2678 = vmatprep.subr.mxu0 %v1987
    %2679 = vmatpush1.msra.mxu0 %v1986
    %2680 = vmatprep.subr.mxu0 0.0
    %2681 = vmatpush2.msra.mxu0 0.0
    %2682 = vmatprep.subr.mxu0 0.0
    %2683 = vmatpush2.msra.mxu0 0.0
    %2684 = vmatprep.subr.mxu0 0.0
    %2685 = vmatpush2.msra.mxu0 0.0
    %2686 = vmatprep.subr.mxu0 0.0
    %2687 = vmatpush2.msra.mxu0 0.0
    %2688 = vmatprep.subr.mxu0 0.0
    %2689 = vmatpush2.msra.mxu0 0.0
    %2690 = vmatprep.subr.mxu0 0.0
    %2691 = vmatpush2.msra.mxu0 0.0
    %2692 = vmatprep.subr.mxu0 0.0
    %2693 = vmatpush2.msra.mxu0 0.0
    %2694 = vmatprep.subr.mxu0 0.0
    %2695 = vmatpush2.msra.mxu0 0.0
    %2696 = vmatprep.subr.mxu0 0.0
    %2697 = vmatpush2.msra.mxu0 0.0
    %2698 = vmatprep.subr.mxu0 0.0
    %2699 = vmatpush2.msra.mxu0 0.0
    %2700 = vmatprep.subr.mxu0 0.0
    %2701 = vmatpush2.msra.mxu0 0.0
    %2702 = vmatprep.subr.mxu0 0.0
    %2703 = vmatpush2.msra.mxu0 0.0
    %2704 = vmatprep.subr.mxu0 0.0
    %2705 = vmatpush2.msra.mxu0 0.0
    %2706 = vmatprep.subr.mxu0 0.0
    %2707 = vmatpush2.msra.mxu0 0.0
    %2708 = vmatprep.subr.mxu0 0.0
    %2709 = vmatpush2.msra.mxu0 0.0
    %2710 = vmatprep.subr.mxu0 0.0
    %2711 = vmatpush2.msra.mxu0 0.0
    %2712 = vmatprep.mubr.f32.mxu0 0.0
    %2713 = vmatmul.mubr.f32.gmra.mxu0 %v2646
    %v2714 = vpop.f32.mrf.mxu0
    %v2715 = vadd.f32 0.0, %v2714
    %v2716 = vpop.f32.mrf.mxu0
    %v2717 = vadd.f32 0.0, %v2716
    %2718 = vdwg.mxu0
    %2719 = vmatprep.subr.mxu0 %v2049
    %2720 = vmatpush1.msra.mxu0 %v2048
    %2721 = vmatprep.subr.mxu0 %v2045
    %2722 = vmatpush1.msra.mxu0 %v2044
    %2723 = vmatprep.subr.mxu0 %v2041
    %2724 = vmatpush1.msra.mxu0 %v2040
    %2725 = vmatprep.subr.mxu0 %v2037
    %2726 = vmatpush1.msra.mxu0 %v2036
    %2727 = vmatprep.subr.mxu0 %v2033
    %2728 = vmatpush1.msra.mxu0 %v2032
    %2729 = vmatprep.subr.mxu0 %v2029
    %2730 = vmatpush1.msra.mxu0 %v2028
    %2731 = vmatprep.subr.mxu0 %v2025
    %2732 = vmatpush1.msra.mxu0 %v2024
    %2733 = vmatprep.subr.mxu0 %v2021
    %2734 = vmatpush1.msra.mxu0 %v2020
    %2735 = vmatprep.subr.mxu0 %v2017
    %2736 = vmatpush1.msra.mxu0 %v2016
    %2737 = vmatprep.subr.mxu0 %v2013
    %2738 = vmatpush1.msra.mxu0 %v2012
    %2739 = vmatprep.subr.mxu0 %v2009
    %2740 = vmatpush1.msra.mxu0 %v2008
    %2741 = vmatprep.subr.mxu0 %v2005
    %2742 = vmatpush1.msra.mxu0 %v2004
    %2743 = vmatprep.subr.mxu0 %v2001
    %2744 = vmatpush1.msra.mxu0 %v2000
    %2745 = vmatprep.subr.mxu0 %v1997
    %2746 = vmatpush1.msra.mxu0 %v1996
    %2747 = vmatprep.subr.mxu0 %v1993
    %2748 = vmatpush1.msra.mxu0 %v1992
    %2749 = vmatprep.subr.mxu0 %v1989
    %2750 = vmatpush1.msra.mxu0 %v1988
    %2751 = vmatprep.subr.mxu0 0.0
    %2752 = vmatpush2.msra.mxu0 0.0
    %2753 = vmatprep.subr.mxu0 0.0
    %2754 = vmatpush2.msra.mxu0 0.0
    %2755 = vmatprep.subr.mxu0 0.0
    %2756 = vmatpush2.msra.mxu0 0.0
    %2757 = vmatprep.subr.mxu0 0.0
    %2758 = vmatpush2.msra.mxu0 0.0
    %2759 = vmatprep.subr.mxu0 0.0
    %2760 = vmatpush2.msra.mxu0 0.0
    %2761 = vmatprep.subr.mxu0 0.0
    %2762 = vmatpush2.msra.mxu0 0.0
    %2763 = vmatprep.subr.mxu0 0.0
    %2764 = vmatpush2.msra.mxu0 0.0
    %2765 = vmatprep.subr.mxu0 0.0
    %2766 = vmatpush2.msra.mxu0 0.0
    %2767 = vmatprep.subr.mxu0 0.0
    %2768 = vmatpush2.msra.mxu0 0.0
    %2769 = vmatprep.subr.mxu0 0.0
    %2770 = vmatpush2.msra.mxu0 0.0
    %2771 = vmatprep.subr.mxu0 0.0
    %2772 = vmatpush2.msra.mxu0 0.0
    %2773 = vmatprep.subr.mxu0 0.0
    %2774 = vmatpush2.msra.mxu0 0.0
    %2775 = vmatprep.subr.mxu0 0.0
    %2776 = vmatpush2.msra.mxu0 0.0
    %2777 = vmatprep.subr.mxu0 0.0
    %2778 = vmatpush2.msra.mxu0 0.0
    %2779 = vmatprep.subr.mxu0 0.0
    %2780 = vmatpush2.msra.mxu0 0.0
    %2781 = vmatprep.subr.mxu0 0.0
    %2782 = vmatpush2.msra.mxu0 0.0
    %2783 = vmatprep.mubr.f32.mxu0 0.0
    %2784 = vmatmul.mubr.f32.gmra.mxu0 %v2646
    %v2785 = vpop.f32.mrf.mxu0
    %v2786 = vadd.f32 0.0, %v2785
    %v2787 = vpop.f32.mrf.mxu0
    %v2788 = vadd.f32 0.0, %v2787
    %2789 = vdwg.mxu0
    %v2794 = vrot.slane %v2715, 4
    %v2795 = vrot.slane %v2717, 4
    %v2796 = vrot.slane %v2786, 4
    %v2797 = vrot.slane %v2788, 4
    %v2802 = vadd.f32 %v2203, %v2794
    %v2803 = vadd.f32 %v2205, %v2795
    %v2804 = vadd.f32 %v2280, %v2796
    %v2805 = vadd.f32 %v2282, %v2797
    %v2806 = vxor.u32 %v2802, 2147483648
    %v2807 = vmul.f32 %v2806, 1.442695
    %v2808 = vpow.pop %v2807
    %v2809 = vadd.f32 %v2808, 1.0
    %v2810 = vrcp.pop %v2809
    %v2811 = vmul.f32 1.0, %v2810
    %v2812 = vxor.u32 %v2803, 2147483648
    %v2813 = vmul.f32 %v2812, 1.442695
    %v2814 = vpow.pop %v2813
    %v2815 = vadd.f32 %v2814, 1.0
    %v2816 = vrcp.pop %v2815
    %v2817 = vmul.f32 1.0, %v2816
    %v2818 = vtanh.pop %v2804
    %v2819 = vxor.u32 %v2805, 2147483648
    %v2820 = vmul.f32 %v2819, 1.442695
    %v2821 = vpow.pop %v2820
    %v2822 = vadd.f32 %v2821, 1.0
    %v2823 = vrcp.pop %v2822
    %v2824 = vmul.f32 1.0, %v2823
    %v2826 = vrot.slane %v2642, 6
    %v2828 = vmul.f32 %v2817, %v2826
    %v2829 = vmul.f32 %v2811, %v2818
    %v2830 = vadd.f32 %v2828, %v2829
    %v2831 = vtanh.pop %v2830
    %v2832 = vmul.f32 %v2824, %v2831
    %v2834 = vrot.slane %v2832, 4
    %2836 = vmatprep.subr.mxu0 %v2047
    %2837 = vmatpush1.msra.mxu0 %v2046
    %2838 = vmatprep.subr.mxu0 %v2043
    %2839 = vmatpush1.msra.mxu0 %v2042
    %2840 = vmatprep.subr.mxu0 %v2039
    %2841 = vmatpush1.msra.mxu0 %v2038
    %2842 = vmatprep.subr.mxu0 %v2035
    %2843 = vmatpush1.msra.mxu0 %v2034
    %2844 = vmatprep.subr.mxu0 %v2031
    %2845 = vmatpush1.msra.mxu0 %v2030
    %2846 = vmatprep.subr.mxu0 %v2027
    %2847 = vmatpush1.msra.mxu0 %v2026
    %2848 = vmatprep.subr.mxu0 %v2023
    %2849 = vmatpush1.msra.mxu0 %v2022
    %2850 = vmatprep.subr.mxu0 %v2019
    %2851 = vmatpush1.msra.mxu0 %v2018
    %2852 = vmatprep.subr.mxu0 %v2015
    %2853 = vmatpush1.msra.mxu0 %v2014
    %2854 = vmatprep.subr.mxu0 %v2011
    %2855 = vmatpush1.msra.mxu0 %v2010
    %2856 = vmatprep.subr.mxu0 %v2007
    %2857 = vmatpush1.msra.mxu0 %v2006
    %2858 = vmatprep.subr.mxu0 %v2003
    %2859 = vmatpush1.msra.mxu0 %v2002
    %2860 = vmatprep.subr.mxu0 %v1999
    %2861 = vmatpush1.msra.mxu0 %v1998
    %2862 = vmatprep.subr.mxu0 %v1995
    %2863 = vmatpush1.msra.mxu0 %v1994
    %2864 = vmatprep.subr.mxu0 %v1991
    %2865 = vmatpush1.msra.mxu0 %v1990
    %2866 = vmatprep.subr.mxu0 %v1987
    %2867 = vmatpush1.msra.mxu0 %v1986
    %2868 = vmatprep.subr.mxu0 0.0
    %2869 = vmatpush2.msra.mxu0 0.0
    %2870 = vmatprep.subr.mxu0 0.0
    %2871 = vmatpush2.msra.mxu0 0.0
    %2872 = vmatprep.subr.mxu0 0.0
    %2873 = vmatpush2.msra.mxu0 0.0
    %2874 = vmatprep.subr.mxu0 0.0
    %2875 = vmatpush2.msra.mxu0 0.0
    %2876 = vmatprep.subr.mxu0 0.0
    %2877 = vmatpush2.msra.mxu0 0.0
    %2878 = vmatprep.subr.mxu0 0.0
    %2879 = vmatpush2.msra.mxu0 0.0
    %2880 = vmatprep.subr.mxu0 0.0
    %2881 = vmatpush2.msra.mxu0 0.0
    %2882 = vmatprep.subr.mxu0 0.0
    %2883 = vmatpush2.msra.mxu0 0.0
    %2884 = vmatprep.subr.mxu0 0.0
    %2885 = vmatpush2.msra.mxu0 0.0
    %2886 = vmatprep.subr.mxu0 0.0
    %2887 = vmatpush2.msra.mxu0 0.0
    %2888 = vmatprep.subr.mxu0 0.0
    %2889 = vmatpush2.msra.mxu0 0.0
    %2890 = vmatprep.subr.mxu0 0.0
    %2891 = vmatpush2.msra.mxu0 0.0
    %2892 = vmatprep.subr.mxu0 0.0
    %2893 = vmatpush2.msra.mxu0 0.0
    %2894 = vmatprep.subr.mxu0 0.0
    %2895 = vmatpush2.msra.mxu0 0.0
    %2896 = vmatprep.subr.mxu0 0.0
    %2897 = vmatpush2.msra.mxu0 0.0
    %2898 = vmatprep.subr.mxu0 0.0
    %2899 = vmatpush2.msra.mxu0 0.0
    %2900 = vmatprep.mubr.f32.mxu0 0.0
    %2901 = vmatmul.mubr.f32.gmra.mxu0 %v2834
    %v2902 = vpop.f32.mrf.mxu0
    %v2903 = vadd.f32 0.0, %v2902
    %v2904 = vpop.f32.mrf.mxu0
    %v2905 = vadd.f32 0.0, %v2904
    %2906 = vdwg.mxu0
    %2907 = vmatprep.subr.mxu0 %v2049
    %2908 = vmatpush1.msra.mxu0 %v2048
    %2909 = vmatprep.subr.mxu0 %v2045
    %2910 = vmatpush1.msra.mxu0 %v2044
    %2911 = vmatprep.subr.mxu0 %v2041
    %2912 = vmatpush1.msra.mxu0 %v2040
    %2913 = vmatprep.subr.mxu0 %v2037
    %2914 = vmatpush1.msra.mxu0 %v2036
    %2915 = vmatprep.subr.mxu0 %v2033
    %2916 = vmatpush1.msra.mxu0 %v2032
    %2917 = vmatprep.subr.mxu0 %v2029
    %2918 = vmatpush1.msra.mxu0 %v2028
    %2919 = vmatprep.subr.mxu0 %v2025
    %2920 = vmatpush1.msra.mxu0 %v2024
    %2921 = vmatprep.subr.mxu0 %v2021
    %2922 = vmatpush1.msra.mxu0 %v2020
    %2923 = vmatprep.subr.mxu0 %v2017
    %2924 = vmatpush1.msra.mxu0 %v2016
    %2925 = vmatprep.subr.mxu0 %v2013
    %2926 = vmatpush1.msra.mxu0 %v2012
    %2927 = vmatprep.subr.mxu0 %v2009
    %2928 = vmatpush1.msra.mxu0 %v2008
    %2929 = vmatprep.subr.mxu0 %v2005
    %2930 = vmatpush1.msra.mxu0 %v2004
    %2931 = vmatprep.subr.mxu0 %v2001
    %2932 = vmatpush1.msra.mxu0 %v2000
    %2933 = vmatprep.subr.mxu0 %v1997
    %2934 = vmatpush1.msra.mxu0 %v1996
    %2935 = vmatprep.subr.mxu0 %v1993
    %2936 = vmatpush1.msra.mxu0 %v1992
    %2937 = vmatprep.subr.mxu0 %v1989
    %2938 = vmatpush1.msra.mxu0 %v1988
    %2939 = vmatprep.subr.mxu0 0.0
    %2940 = vmatpush2.msra.mxu0 0.0
    %2941 = vmatprep.subr.mxu0 0.0
    %2942 = vmatpush2.msra.mxu0 0.0
    %2943 = vmatprep.subr.mxu0 0.0
    %2944 = vmatpush2.msra.mxu0 0.0
    %2945 = vmatprep.subr.mxu0 0.0
    %2946 = vmatpush2.msra.mxu0 0.0
    %2947 = vmatprep.subr.mxu0 0.0
    %2948 = vmatpush2.msra.mxu0 0.0
    %2949 = vmatprep.subr.mxu0 0.0
    %2950 = vmatpush2.msra.mxu0 0.0
    %2951 = vmatprep.subr.mxu0 0.0
    %2952 = vmatpush2.msra.mxu0 0.0
    %2953 = vmatprep.subr.mxu0 0.0
    %2954 = vmatpush2.msra.mxu0 0.0
    %2955 = vmatprep.subr.mxu0 0.0
    %2956 = vmatpush2.msra.mxu0 0.0
    %2957 = vmatprep.subr.mxu0 0.0
    %2958 = vmatpush2.msra.mxu0 0.0
    %2959 = vmatprep.subr.mxu0 0.0
    %2960 = vmatpush2.msra.mxu0 0.0
    %2961 = vmatprep.subr.mxu0 0.0
    %2962 = vmatpush2.msra.mxu0 0.0
    %2963 = vmatprep.subr.mxu0 0.0
    %2964 = vmatpush2.msra.mxu0 0.0
    %2965 = vmatprep.subr.mxu0 0.0
    %2966 = vmatpush2.msra.mxu0 0.0
    %2967 = vmatprep.subr.mxu0 0.0
    %2968 = vmatpush2.msra.mxu0 0.0
    %2969 = vmatprep.subr.mxu0 0.0
    %2970 = vmatpush2.msra.mxu0 0.0
    %2971 = vmatprep.mubr.f32.mxu0 0.0
    %2972 = vmatmul.mubr.f32.gmra.mxu0 %v2834
    %v2973 = vpop.f32.mrf.mxu0
    %v2974 = vadd.f32 0.0, %v2973
    %v2975 = vpop.f32.mrf.mxu0
    %v2976 = vadd.f32 0.0, %v2975
    %2977 = vdwg.mxu0
    %v2982 = vrot.slane %v2903, 2
    %v2983 = vrot.slane %v2905, 2
    %v2984 = vrot.slane %v2974, 2
    %v2985 = vrot.slane %v2976, 2
    %v2990 = vadd.f32 %v2203, %v2982
    %v2991 = vadd.f32 %v2205, %v2983
    %v2992 = vadd.f32 %v2280, %v2984
    %v2993 = vadd.f32 %v2282, %v2985
    %v2994 = vxor.u32 %v2990, 2147483648
    %v2995 = vmul.f32 %v2994, 1.442695
    %v2996 = vpow.pop %v2995
    %v2997 = vadd.f32 %v2996, 1.0
    %v2998 = vrcp.pop %v2997
    %v2999 = vmul.f32 1.0, %v2998
    %v3000 = vxor.u32 %v2991, 2147483648
    %v3001 = vmul.f32 %v3000, 1.442695
    %v3002 = vpow.pop %v3001
    %v3003 = vadd.f32 %v3002, 1.0
    %v3004 = vrcp.pop %v3003
    %v3005 = vmul.f32 1.0, %v3004
    %v3006 = vtanh.pop %v2992
    %v3007 = vxor.u32 %v2993, 2147483648
    %v3008 = vmul.f32 %v3007, 1.442695
    %v3009 = vpow.pop %v3008
    %v3010 = vadd.f32 %v3009, 1.0
    %v3011 = vrcp.pop %v3010
    %v3012 = vmul.f32 1.0, %v3011
    %v3014 = vrot.slane %v2830, 6
    %v3016 = vmul.f32 %v3005, %v3014
    %v3017 = vmul.f32 %v2999, %v3006
    %v3018 = vadd.f32 %v3016, %v3017
    %v3019 = vtanh.pop %v3018
    %v3020 = vmul.f32 %v3012, %v3019
    %v3022 = vrot.slane %v3020, 6
    %3024 = vmatprep.subr.mxu0 %v2047
    %3025 = vmatpush1.msra.mxu0 %v2046
    %3026 = vmatprep.subr.mxu0 %v2043
    %3027 = vmatpush1.msra.mxu0 %v2042
    %3028 = vmatprep.subr.mxu0 %v2039
    %3029 = vmatpush1.msra.mxu0 %v2038
    %3030 = vmatprep.subr.mxu0 %v2035
    %3031 = vmatpush1.msra.mxu0 %v2034
    %3032 = vmatprep.subr.mxu0 %v2031
    %3033 = vmatpush1.msra.mxu0 %v2030
    %3034 = vmatprep.subr.mxu0 %v2027
    %3035 = vmatpush1.msra.mxu0 %v2026
    %3036 = vmatprep.subr.mxu0 %v2023
    %3037 = vmatpush1.msra.mxu0 %v2022
    %3038 = vmatprep.subr.mxu0 %v2019
    %3039 = vmatpush1.msra.mxu0 %v2018
    %3040 = vmatprep.subr.mxu0 %v2015
    %3041 = vmatpush1.msra.mxu0 %v2014
    %3042 = vmatprep.subr.mxu0 %v2011
    %3043 = vmatpush1.msra.mxu0 %v2010
    %3044 = vmatprep.subr.mxu0 %v2007
    %3045 = vmatpush1.msra.mxu0 %v2006
    %3046 = vmatprep.subr.mxu0 %v2003
    %3047 = vmatpush1.msra.mxu0 %v2002
    %3048 = vmatprep.subr.mxu0 %v1999
    %3049 = vmatpush1.msra.mxu0 %v1998
    %3050 = vmatprep.subr.mxu0 %v1995
    %3051 = vmatpush1.msra.mxu0 %v1994
    %3052 = vmatprep.subr.mxu0 %v1991
    %3053 = vmatpush1.msra.mxu0 %v1990
    %3054 = vmatprep.subr.mxu0 %v1987
    %3055 = vmatpush1.msra.mxu0 %v1986
    %3056 = vmatprep.subr.mxu0 0.0
    %3057 = vmatpush2.msra.mxu0 0.0
    %3058 = vmatprep.subr.mxu0 0.0
    %3059 = vmatpush2.msra.mxu0 0.0
    %3060 = vmatprep.subr.mxu0 0.0
    %3061 = vmatpush2.msra.mxu0 0.0
    %3062 = vmatprep.subr.mxu0 0.0
    %3063 = vmatpush2.msra.mxu0 0.0
    %3064 = vmatprep.subr.mxu0 0.0
    %3065 = vmatpush2.msra.mxu0 0.0
    %3066 = vmatprep.subr.mxu0 0.0
    %3067 = vmatpush2.msra.mxu0 0.0
    %3068 = vmatprep.subr.mxu0 0.0
    %3069 = vmatpush2.msra.mxu0 0.0
    %3070 = vmatprep.subr.mxu0 0.0
    %3071 = vmatpush2.msra.mxu0 0.0
    %3072 = vmatprep.subr.mxu0 0.0
    %3073 = vmatpush2.msra.mxu0 0.0
    %3074 = vmatprep.subr.mxu0 0.0
    %3075 = vmatpush2.msra.mxu0 0.0
    %3076 = vmatprep.subr.mxu0 0.0
    %3077 = vmatpush2.msra.mxu0 0.0
    %3078 = vmatprep.subr.mxu0 0.0
    %3079 = vmatpush2.msra.mxu0 0.0
    %3080 = vmatprep.subr.mxu0 0.0
    %3081 = vmatpush2.msra.mxu0 0.0
    %3082 = vmatprep.subr.mxu0 0.0
    %3083 = vmatpush2.msra.mxu0 0.0
    %3084 = vmatprep.subr.mxu0 0.0
    %3085 = vmatpush2.msra.mxu0 0.0
    %3086 = vmatprep.subr.mxu0 0.0
    %3087 = vmatpush2.msra.mxu0 0.0
    %3088 = vmatprep.mubr.f32.mxu0 0.0
    %3089 = vmatmul.mubr.f32.gmra.mxu0 %v3022
    %v3090 = vpop.f32.mrf.mxu0
    %v3091 = vadd.f32 0.0, %v3090
    %v3092 = vpop.f32.mrf.mxu0
    %v3093 = vadd.f32 0.0, %v3092
    %3094 = vdwg.mxu0
    %3095 = vmatprep.subr.mxu0 %v2049
    %3096 = vmatpush1.msra.mxu0 %v2048
    %3097 = vmatprep.subr.mxu0 %v2045
    %3098 = vmatpush1.msra.mxu0 %v2044
    %3099 = vmatprep.subr.mxu0 %v2041
    %3100 = vmatpush1.msra.mxu0 %v2040
    %3101 = vmatprep.subr.mxu0 %v2037
    %3102 = vmatpush1.msra.mxu0 %v2036
    %3103 = vmatprep.subr.mxu0 %v2033
    %3104 = vmatpush1.msra.mxu0 %v2032
    %3105 = vmatprep.subr.mxu0 %v2029
    %3106 = vmatpush1.msra.mxu0 %v2028
    %3107 = vmatprep.subr.mxu0 %v2025
    %3108 = vmatpush1.msra.mxu0 %v2024
    %3109 = vmatprep.subr.mxu0 %v2021
    %3110 = vmatpush1.msra.mxu0 %v2020
    %3111 = vmatprep.subr.mxu0 %v2017
    %3112 = vmatpush1.msra.mxu0 %v2016
    %3113 = vmatprep.subr.mxu0 %v2013
    %3114 = vmatpush1.msra.mxu0 %v2012
    %3115 = vmatprep.subr.mxu0 %v2009
    %3116 = vmatpush1.msra.mxu0 %v2008
    %3117 = vmatprep.subr.mxu0 %v2005
    %3118 = vmatpush1.msra.mxu0 %v2004
    %3119 = vmatprep.subr.mxu0 %v2001
    %3120 = vmatpush1.msra.mxu0 %v2000
    %3121 = vmatprep.subr.mxu0 %v1997
    %3122 = vmatpush1.msra.mxu0 %v1996
    %3123 = vmatprep.subr.mxu0 %v1993
    %3124 = vmatpush1.msra.mxu0 %v1992
    %3125 = vmatprep.subr.mxu0 %v1989
    %3126 = vmatpush1.msra.mxu0 %v1988
    %3127 = vmatprep.subr.mxu0 0.0
    %3128 = vmatpush2.msra.mxu0 0.0
    %3129 = vmatprep.subr.mxu0 0.0
    %3130 = vmatpush2.msra.mxu0 0.0
    %3131 = vmatprep.subr.mxu0 0.0
    %3132 = vmatpush2.msra.mxu0 0.0
    %3133 = vmatprep.subr.mxu0 0.0
    %3134 = vmatpush2.msra.mxu0 0.0
    %3135 = vmatprep.subr.mxu0 0.0
    %3136 = vmatpush2.msra.mxu0 0.0
    %3137 = vmatprep.subr.mxu0 0.0
    %3138 = vmatpush2.msra.mxu0 0.0
    %3139 = vmatprep.subr.mxu0 0.0
    %3140 = vmatpush2.msra.mxu0 0.0
    %3141 = vmatprep.subr.mxu0 0.0
    %3142 = vmatpush2.msra.mxu0 0.0
    %3143 = vmatprep.subr.mxu0 0.0
    %3144 = vmatpush2.msra.mxu0 0.0
    %3145 = vmatprep.subr.mxu0 0.0
    %3146 = vmatpush2.msra.mxu0 0.0
    %3147 = vmatprep.subr.mxu0 0.0
    %3148 = vmatpush2.msra.mxu0 0.0
    %3149 = vmatprep.subr.mxu0 0.0
    %3150 = vmatpush2.msra.mxu0 0.0
    %3151 = vmatprep.subr.mxu0 0.0
    %3152 = vmatpush2.msra.mxu0 0.0
    %3153 = vmatprep.subr.mxu0 0.0
    %3154 = vmatpush2.msra.mxu0 0.0
    %3155 = vmatprep.subr.mxu0 0.0
    %3156 = vmatpush2.msra.mxu0 0.0
    %3157 = vmatprep.subr.mxu0 0.0
    %3158 = vmatpush2.msra.mxu0 0.0
    %3159 = vmatprep.mubr.f32.mxu0 0.0
    %3160 = vmatmul.mubr.f32.gmra.mxu0 %v3022
    %v3161 = vpop.f32.mrf.mxu0
    %v3162 = vadd.f32 0.0, %v3161
    %v3163 = vpop.f32.mrf.mxu0
    %v3164 = vadd.f32 0.0, %v3163
    %3165 = vdwg.mxu0
    %v3166 = vadd.f32 %v2209, %v3091
    %v3167 = vadd.f32 %v2211, %v3093
    %v3168 = vadd.f32 %v2286, %v3162
    %v3169 = vadd.f32 %v2288, %v3164
    %v3170 = vxor.u32 %v3166, 2147483648
    %v3171 = vmul.f32 %v3170, 1.442695
    %v3172 = vpow.pop %v3171
    %v3173 = vadd.f32 %v3172, 1.0
    %v3174 = vrcp.pop %v3173
    %v3175 = vmul.f32 1.0, %v3174
    %v3176 = vxor.u32 %v3167, 2147483648
    %v3177 = vmul.f32 %v3176, 1.442695
    %v3178 = vpow.pop %v3177
    %v3179 = vadd.f32 %v3178, 1.0
    %v3180 = vrcp.pop %v3179
    %v3181 = vmul.f32 1.0, %v3180
    %v3182 = vtanh.pop %v3168
    %v3183 = vxor.u32 %v3169, 2147483648
    %v3184 = vmul.f32 %v3183, 1.442695
    %v3185 = vpow.pop %v3184
    %v3186 = vadd.f32 %v3185, 1.0
    %v3187 = vrcp.pop %v3186
    %v3188 = vmul.f32 1.0, %v3187
    %v3190 = vrot.slane %v3018, 6
    %v3192 = vmul.f32 %v3181, %v3190
    %v3193 = vmul.f32 %v3175, %v3182
    %v3194 = vadd.f32 %v3192, %v3193
    %v3195 = vtanh.pop %v3194
    %v3196 = vmul.f32 %v3188, %v3195
    %3197 = vmatprep.subr.mxu0 %v2047
    %3198 = vmatpush1.msra.mxu0 %v2046
    %3199 = vmatprep.subr.mxu0 %v2043
    %3200 = vmatpush1.msra.mxu0 %v2042
    %3201 = vmatprep.subr.mxu0 %v2039
    %3202 = vmatpush1.msra.mxu0 %v2038
    %3203 = vmatprep.subr.mxu0 %v2035
    %3204 = vmatpush1.msra.mxu0 %v2034
    %3205 = vmatprep.subr.mxu0 %v2031
    %3206 = vmatpush1.msra.mxu0 %v2030
    %3207 = vmatprep.subr.mxu0 %v2027
    %3208 = vmatpush1.msra.mxu0 %v2026
    %3209 = vmatprep.subr.mxu0 %v2023
    %3210 = vmatpush1.msra.mxu0 %v2022
    %3211 = vmatprep.subr.mxu0 %v2019
    %3212 = vmatpush1.msra.mxu0 %v2018
    %3213 = vmatprep.subr.mxu0 %v2015
    %3214 = vmatpush1.msra.mxu0 %v2014
    %3215 = vmatprep.subr.mxu0 %v2011
    %3216 = vmatpush1.msra.mxu0 %v2010
    %3217 = vmatprep.subr.mxu0 %v2007
    %3218 = vmatpush1.msra.mxu0 %v2006
    %3219 = vmatprep.subr.mxu0 %v2003
    %3220 = vmatpush1.msra.mxu0 %v2002
    %3221 = vmatprep.subr.mxu0 %v1999
    %3222 = vmatpush1.msra.mxu0 %v1998
    %3223 = vmatprep.subr.mxu0 %v1995
    %3224 = vmatpush1.msra.mxu0 %v1994
    %3225 = vmatprep.subr.mxu0 %v1991
    %3226 = vmatpush1.msra.mxu0 %v1990
    %3227 = vmatprep.subr.mxu0 %v1987
    %3228 = vmatpush1.msra.mxu0 %v1986
    %3229 = vmatprep.subr.mxu0 0.0
    %3230 = vmatpush2.msra.mxu0 0.0
    %3231 = vmatprep.subr.mxu0 0.0
    %3232 = vmatpush2.msra.mxu0 0.0
    %3233 = vmatprep.subr.mxu0 0.0
    %3234 = vmatpush2.msra.mxu0 0.0
    %3235 = vmatprep.subr.mxu0 0.0
    %3236 = vmatpush2.msra.mxu0 0.0
    %3237 = vmatprep.subr.mxu0 0.0
    %3238 = vmatpush2.msra.mxu0 0.0
    %3239 = vmatprep.subr.mxu0 0.0
    %3240 = vmatpush2.msra.mxu0 0.0
    %3241 = vmatprep.subr.mxu0 0.0
    %3242 = vmatpush2.msra.mxu0 0.0
    %3243 = vmatprep.subr.mxu0 0.0
    %3244 = vmatpush2.msra.mxu0 0.0
    %3245 = vmatprep.subr.mxu0 0.0
    %3246 = vmatpush2.msra.mxu0 0.0
    %3247 = vmatprep.subr.mxu0 0.0
    %3248 = vmatpush2.msra.mxu0 0.0
    %3249 = vmatprep.subr.mxu0 0.0
    %3250 = vmatpush2.msra.mxu0 0.0
    %3251 = vmatprep.subr.mxu0 0.0
    %3252 = vmatpush2.msra.mxu0 0.0
    %3253 = vmatprep.subr.mxu0 0.0
    %3254 = vmatpush2.msra.mxu0 0.0
    %3255 = vmatprep.subr.mxu0 0.0
    %3256 = vmatpush2.msra.mxu0 0.0
    %3257 = vmatprep.subr.mxu0 0.0
    %3258 = vmatpush2.msra.mxu0 0.0
    %3259 = vmatprep.subr.mxu0 0.0
    %3260 = vmatpush2.msra.mxu0 0.0
    %3261 = vmatprep.mubr.f32.mxu0 0.0
    %3262 = vmatmul.mubr.f32.gmra.mxu0 %v3196
    %v3263 = vpop.f32.mrf.mxu0
    %v3264 = vadd.f32 0.0, %v3263
    %v3265 = vpop.f32.mrf.mxu0
    %v3266 = vadd.f32 0.0, %v3265
    %3267 = vdwg.mxu0
    %3268 = vmatprep.subr.mxu0 %v2049
    %3269 = vmatpush1.msra.mxu0 %v2048
    %3270 = vmatprep.subr.mxu0 %v2045
    %3271 = vmatpush1.msra.mxu0 %v2044
    %3272 = vmatprep.subr.mxu0 %v2041
    %3273 = vmatpush1.msra.mxu0 %v2040
    %3274 = vmatprep.subr.mxu0 %v2037
    %3275 = vmatpush1.msra.mxu0 %v2036
    %3276 = vmatprep.subr.mxu0 %v2033
    %3277 = vmatpush1.msra.mxu0 %v2032
    %3278 = vmatprep.subr.mxu0 %v2029
    %3279 = vmatpush1.msra.mxu0 %v2028
    %3280 = vmatprep.subr.mxu0 %v2025
    %3281 = vmatpush1.msra.mxu0 %v2024
    %3282 = vmatprep.subr.mxu0 %v2021
    %3283 = vmatpush1.msra.mxu0 %v2020
    %3284 = vmatprep.subr.mxu0 %v2017
    %3285 = vmatpush1.msra.mxu0 %v2016
    %3286 = vmatprep.subr.mxu0 %v2013
    %3287 = vmatpush1.msra.mxu0 %v2012
    %3288 = vmatprep.subr.mxu0 %v2009
    %3289 = vmatpush1.msra.mxu0 %v2008
    %3290 = vmatprep.subr.mxu0 %v2005
    %3291 = vmatpush1.msra.mxu0 %v2004
    %3292 = vmatprep.subr.mxu0 %v2001
    %3293 = vmatpush1.msra.mxu0 %v2000
    %3294 = vmatprep.subr.mxu0 %v1997
    %3295 = vmatpush1.msra.mxu0 %v1996
    %3296 = vmatprep.subr.mxu0 %v1993
    %3297 = vmatpush1.msra.mxu0 %v1992
    %3298 = vmatprep.subr.mxu0 %v1989
    %3299 = vmatpush1.msra.mxu0 %v1988
    %3300 = vmatprep.subr.mxu0 0.0
    %3301 = vmatpush2.msra.mxu0 0.0
    %3302 = vmatprep.subr.mxu0 0.0
    %3303 = vmatpush2.msra.mxu0 0.0
    %3304 = vmatprep.subr.mxu0 0.0
    %3305 = vmatpush2.msra.mxu0 0.0
    %3306 = vmatprep.subr.mxu0 0.0
    %3307 = vmatpush2.msra.mxu0 0.0
    %3308 = vmatprep.subr.mxu0 0.0
    %3309 = vmatpush2.msra.mxu0 0.0
    %3310 = vmatprep.subr.mxu0 0.0
    %3311 = vmatpush2.msra.mxu0 0.0
    %3312 = vmatprep.subr.mxu0 0.0
    %3313 = vmatpush2.msra.mxu0 0.0
    %3314 = vmatprep.subr.mxu0 0.0
    %3315 = vmatpush2.msra.mxu0 0.0
    %3316 = vmatprep.subr.mxu0 0.0
    %3317 = vmatpush2.msra.mxu0 0.0
    %3318 = vmatprep.subr.mxu0 0.0
    %3319 = vmatpush2.msra.mxu0 0.0
    %3320 = vmatprep.subr.mxu0 0.0
    %3321 = vmatpush2.msra.mxu0 0.0
    %3322 = vmatprep.subr.mxu0 0.0
    %3323 = vmatpush2.msra.mxu0 0.0
    %3324 = vmatprep.subr.mxu0 0.0
    %3325 = vmatpush2.msra.mxu0 0.0
    %3326 = vmatprep.subr.mxu0 0.0
    %3327 = vmatpush2.msra.mxu0 0.0
    %3328 = vmatprep.subr.mxu0 0.0
    %3329 = vmatpush2.msra.mxu0 0.0
    %3330 = vmatprep.subr.mxu0 0.0
    %3331 = vmatpush2.msra.mxu0 0.0
    %3332 = vmatprep.mubr.f32.mxu0 0.0
    %3333 = vmatmul.mubr.f32.gmra.mxu0 %v3196
    %v3334 = vpop.f32.mrf.mxu0
    %v3335 = vadd.f32 0.0, %v3334
    %v3336 = vpop.f32.mrf.mxu0
    %v3337 = vadd.f32 0.0, %v3336
    %3338 = vdwg.mxu0
    %v3343 = vrot.slane %v3264, 6
    %v3344 = vrot.slane %v3266, 6
    %v3345 = vrot.slane %v3335, 6
    %v3346 = vrot.slane %v3337, 6
    %v3351 = vadd.f32 %v2209, %v3343
    %v3352 = vadd.f32 %v2211, %v3344
    %v3353 = vadd.f32 %v2286, %v3345
    %v3354 = vadd.f32 %v2288, %v3346
    %v3355 = vxor.u32 %v3351, 2147483648
    %v3356 = vmul.f32 %v3355, 1.442695
    %v3357 = vpow.pop %v3356
    %v3358 = vadd.f32 %v3357, 1.0
    %v3359 = vrcp.pop %v3358
    %v3360 = vmul.f32 1.0, %v3359
    %v3361 = vxor.u32 %v3352, 2147483648
    %v3362 = vmul.f32 %v3361, 1.442695
    %v3363 = vpow.pop %v3362
    %v3364 = vadd.f32 %v3363, 1.0
    %v3365 = vrcp.pop %v3364
    %v3366 = vmul.f32 1.0, %v3365
    %v3367 = vtanh.pop %v3353
    %v3368 = vxor.u32 %v3354, 2147483648
    %v3369 = vmul.f32 %v3368, 1.442695
    %v3370 = vpow.pop %v3369
    %v3371 = vadd.f32 %v3370, 1.0
    %v3372 = vrcp.pop %v3371
    %v3373 = vmul.f32 1.0, %v3372
    %v3375 = vrot.slane %v3194, 6
    %v3377 = vmul.f32 %v3366, %v3375
    %v3378 = vmul.f32 %v3360, %v3367
    %v3379 = vadd.f32 %v3377, %v3378
    %v3380 = vtanh.pop %v3379
    %v3381 = vmul.f32 %v3373, %v3380
    %v3383 = vrot.slane %v3381, 2
    %3385 = vmatprep.subr.mxu0 %v2047
    %3386 = vmatpush1.msra.mxu0 %v2046
    %3387 = vmatprep.subr.mxu0 %v2043
    %3388 = vmatpush1.msra.mxu0 %v2042
    %3389 = vmatprep.subr.mxu0 %v2039
    %3390 = vmatpush1.msra.mxu0 %v2038
    %3391 = vmatprep.subr.mxu0 %v2035
    %3392 = vmatpush1.msra.mxu0 %v2034
    %3393 = vmatprep.subr.mxu0 %v2031
    %3394 = vmatpush1.msra.mxu0 %v2030
    %3395 = vmatprep.subr.mxu0 %v2027
    %3396 = vmatpush1.msra.mxu0 %v2026
    %3397 = vmatprep.subr.mxu0 %v2023
    %3398 = vmatpush1.msra.mxu0 %v2022
    %3399 = vmatprep.subr.mxu0 %v2019
    %3400 = vmatpush1.msra.mxu0 %v2018
    %3401 = vmatprep.subr.mxu0 %v2015
    %3402 = vmatpush1.msra.mxu0 %v2014
    %3403 = vmatprep.subr.mxu0 %v2011
    %3404 = vmatpush1.msra.mxu0 %v2010
    %3405 = vmatprep.subr.mxu0 %v2007
    %3406 = vmatpush1.msra.mxu0 %v2006
    %3407 = vmatprep.subr.mxu0 %v2003
    %3408 = vmatpush1.msra.mxu0 %v2002
    %3409 = vmatprep.subr.mxu0 %v1999
    %3410 = vmatpush1.msra.mxu0 %v1998
    %3411 = vmatprep.subr.mxu0 %v1995
    %3412 = vmatpush1.msra.mxu0 %v1994
    %3413 = vmatprep.subr.mxu0 %v1991
    %3414 = vmatpush1.msra.mxu0 %v1990
    %3415 = vmatprep.subr.mxu0 %v1987
    %3416 = vmatpush1.msra.mxu0 %v1986
    %3417 = vmatprep.subr.mxu0 0.0
    %3418 = vmatpush2.msra.mxu0 0.0
    %3419 = vmatprep.subr.mxu0 0.0
    %3420 = vmatpush2.msra.mxu0 0.0
    %3421 = vmatprep.subr.mxu0 0.0
    %3422 = vmatpush2.msra.mxu0 0.0
    %3423 = vmatprep.subr.mxu0 0.0
    %3424 = vmatpush2.msra.mxu0 0.0
    %3425 = vmatprep.subr.mxu0 0.0
    %3426 = vmatpush2.msra.mxu0 0.0
    %3427 = vmatprep.subr.mxu0 0.0
    %3428 = vmatpush2.msra.mxu0 0.0
    %3429 = vmatprep.subr.mxu0 0.0
    %3430 = vmatpush2.msra.mxu0 0.0
    %3431 = vmatprep.subr.mxu0 0.0
    %3432 = vmatpush2.msra.mxu0 0.0
    %3433 = vmatprep.subr.mxu0 0.0
    %3434 = vmatpush2.msra.mxu0 0.0
    %3435 = vmatprep.subr.mxu0 0.0
    %3436 = vmatpush2.msra.mxu0 0.0
    %3437 = vmatprep.subr.mxu0 0.0
    %3438 = vmatpush2.msra.mxu0 0.0
    %3439 = vmatprep.subr.mxu0 0.0
    %3440 = vmatpush2.msra.mxu0 0.0
    %3441 = vmatprep.subr.mxu0 0.0
    %3442 = vmatpush2.msra.mxu0 0.0
    %3443 = vmatprep.subr.mxu0 0.0
    %3444 = vmatpush2.msra.mxu0 0.0
    %3445 = vmatprep.subr.mxu0 0.0
    %3446 = vmatpush2.msra.mxu0 0.0
    %3447 = vmatprep.subr.mxu0 0.0
    %3448 = vmatpush2.msra.mxu0 0.0
    %3449 = vmatprep.mubr.f32.mxu0 0.0
    %3450 = vmatmul.mubr.f32.gmra.mxu0 %v3383
    %v3451 = vpop.f32.mrf.mxu0
    %v3452 = vadd.f32 0.0, %v3451
    %v3453 = vpop.f32.mrf.mxu0
    %v3454 = vadd.f32 0.0, %v3453
    %3455 = vdwg.mxu0
    %3456 = vmatprep.subr.mxu0 %v2049
    %3457 = vmatpush1.msra.mxu0 %v2048
    %3458 = vmatprep.subr.mxu0 %v2045
    %3459 = vmatpush1.msra.mxu0 %v2044
    %3460 = vmatprep.subr.mxu0 %v2041
    %3461 = vmatpush1.msra.mxu0 %v2040
    %3462 = vmatprep.subr.mxu0 %v2037
    %3463 = vmatpush1.msra.mxu0 %v2036
    %3464 = vmatprep.subr.mxu0 %v2033
    %3465 = vmatpush1.msra.mxu0 %v2032
    %3466 = vmatprep.subr.mxu0 %v2029
    %3467 = vmatpush1.msra.mxu0 %v2028
    %3468 = vmatprep.subr.mxu0 %v2025
    %3469 = vmatpush1.msra.mxu0 %v2024
    %3470 = vmatprep.subr.mxu0 %v2021
    %3471 = vmatpush1.msra.mxu0 %v2020
    %3472 = vmatprep.subr.mxu0 %v2017
    %3473 = vmatpush1.msra.mxu0 %v2016
    %3474 = vmatprep.subr.mxu0 %v2013
    %3475 = vmatpush1.msra.mxu0 %v2012
    %3476 = vmatprep.subr.mxu0 %v2009
    %3477 = vmatpush1.msra.mxu0 %v2008
    %3478 = vmatprep.subr.mxu0 %v2005
    %3479 = vmatpush1.msra.mxu0 %v2004
    %3480 = vmatprep.subr.mxu0 %v2001
    %3481 = vmatpush1.msra.mxu0 %v2000
    %3482 = vmatprep.subr.mxu0 %v1997
    %3483 = vmatpush1.msra.mxu0 %v1996
    %3484 = vmatprep.subr.mxu0 %v1993
    %3485 = vmatpush1.msra.mxu0 %v1992
    %3486 = vmatprep.subr.mxu0 %v1989
    %3487 = vmatpush1.msra.mxu0 %v1988
    %3488 = vmatprep.subr.mxu0 0.0
    %3489 = vmatpush2.msra.mxu0 0.0
    %3490 = vmatprep.subr.mxu0 0.0
    %3491 = vmatpush2.msra.mxu0 0.0
    %3492 = vmatprep.subr.mxu0 0.0
    %3493 = vmatpush2.msra.mxu0 0.0
    %3494 = vmatprep.subr.mxu0 0.0
    %3495 = vmatpush2.msra.mxu0 0.0
    %3496 = vmatprep.subr.mxu0 0.0
    %3497 = vmatpush2.msra.mxu0 0.0
    %3498 = vmatprep.subr.mxu0 0.0
    %3499 = vmatpush2.msra.mxu0 0.0
    %3500 = vmatprep.subr.mxu0 0.0
    %3501 = vmatpush2.msra.mxu0 0.0
    %3502 = vmatprep.subr.mxu0 0.0
    %3503 = vmatpush2.msra.mxu0 0.0
    %3504 = vmatprep.subr.mxu0 0.0
    %3505 = vmatpush2.msra.mxu0 0.0
    %3506 = vmatprep.subr.mxu0 0.0
    %3507 = vmatpush2.msra.mxu0 0.0
    %3508 = vmatprep.subr.mxu0 0.0
    %3509 = vmatpush2.msra.mxu0 0.0
    %3510 = vmatprep.subr.mxu0 0.0
    %3511 = vmatpush2.msra.mxu0 0.0
    %3512 = vmatprep.subr.mxu0 0.0
    %3513 = vmatpush2.msra.mxu0 0.0
    %3514 = vmatprep.subr.mxu0 0.0
    %3515 = vmatpush2.msra.mxu0 0.0
    %3516 = vmatprep.subr.mxu0 0.0
    %3517 = vmatpush2.msra.mxu0 0.0
    %3518 = vmatprep.subr.mxu0 0.0
    %3519 = vmatpush2.msra.mxu0 0.0
    %3520 = vmatprep.mubr.f32.mxu0 0.0
    %3521 = vmatmul.mubr.f32.gmra.mxu0 %v3383
    %v3522 = vpop.f32.mrf.mxu0
    %v3523 = vadd.f32 0.0, %v3522
    %v3524 = vpop.f32.mrf.mxu0
    %v3525 = vadd.f32 0.0, %v3524
    %3526 = vdwg.mxu0
    %v3531 = vrot.slane %v3452, 4
    %v3532 = vrot.slane %v3454, 4
    %v3533 = vrot.slane %v3523, 4
    %v3534 = vrot.slane %v3525, 4
    %v3539 = vadd.f32 %v2209, %v3531
    %v3540 = vadd.f32 %v2211, %v3532
    %v3541 = vadd.f32 %v2286, %v3533
    %v3542 = vadd.f32 %v2288, %v3534
    %v3543 = vxor.u32 %v3539, 2147483648
    %v3544 = vmul.f32 %v3543, 1.442695
    %v3545 = vpow.pop %v3544
    %v3546 = vadd.f32 %v3545, 1.0
    %v3547 = vrcp.pop %v3546
    %v3548 = vmul.f32 1.0, %v3547
    %v3549 = vxor.u32 %v3540, 2147483648
    %v3550 = vmul.f32 %v3549, 1.442695
    %v3551 = vpow.pop %v3550
    %v3552 = vadd.f32 %v3551, 1.0
    %v3553 = vrcp.pop %v3552
    %v3554 = vmul.f32 1.0, %v3553
    %v3555 = vtanh.pop %v3541
    %v3556 = vxor.u32 %v3542, 2147483648
    %v3557 = vmul.f32 %v3556, 1.442695
    %v3558 = vpow.pop %v3557
    %v3559 = vadd.f32 %v3558, 1.0
    %v3560 = vrcp.pop %v3559
    %v3561 = vmul.f32 1.0, %v3560
    %v3563 = vrot.slane %v3379, 6
    %v3565 = vmul.f32 %v3554, %v3563
    %v3566 = vmul.f32 %v3548, %v3555
    %v3567 = vadd.f32 %v3565, %v3566
    %v3568 = vtanh.pop %v3567
    %v3569 = vmul.f32 %v3561, %v3568
    %v3571 = vrot.slane %v3569, 4
    %3573 = vmatprep.subr.mxu0 %v2047
    %3574 = vmatpush1.msra.mxu0 %v2046
    %3575 = vmatprep.subr.mxu0 %v2043
    %3576 = vmatpush1.msra.mxu0 %v2042
    %3577 = vmatprep.subr.mxu0 %v2039
    %3578 = vmatpush1.msra.mxu0 %v2038
    %3579 = vmatprep.subr.mxu0 %v2035
    %3580 = vmatpush1.msra.mxu0 %v2034
    %3581 = vmatprep.subr.mxu0 %v2031
    %3582 = vmatpush1.msra.mxu0 %v2030
    %3583 = vmatprep.subr.mxu0 %v2027
    %3584 = vmatpush1.msra.mxu0 %v2026
    %3585 = vmatprep.subr.mxu0 %v2023
    %3586 = vmatpush1.msra.mxu0 %v2022
    %3587 = vmatprep.subr.mxu0 %v2019
    %3588 = vmatpush1.msra.mxu0 %v2018
    %3589 = vmatprep.subr.mxu0 %v2015
    %3590 = vmatpush1.msra.mxu0 %v2014
    %3591 = vmatprep.subr.mxu0 %v2011
    %3592 = vmatpush1.msra.mxu0 %v2010
    %3593 = vmatprep.subr.mxu0 %v2007
    %3594 = vmatpush1.msra.mxu0 %v2006
    %3595 = vmatprep.subr.mxu0 %v2003
    %3596 = vmatpush1.msra.mxu0 %v2002
    %3597 = vmatprep.subr.mxu0 %v1999
    %3598 = vmatpush1.msra.mxu0 %v1998
    %3599 = vmatprep.subr.mxu0 %v1995
    %3600 = vmatpush1.msra.mxu0 %v1994
    %3601 = vmatprep.subr.mxu0 %v1991
    %3602 = vmatpush1.msra.mxu0 %v1990
    %3603 = vmatprep.subr.mxu0 %v1987
    %3604 = vmatpush1.msra.mxu0 %v1986
    %3605 = vmatprep.subr.mxu0 0.0
    %3606 = vmatpush2.msra.mxu0 0.0
    %3607 = vmatprep.subr.mxu0 0.0
    %3608 = vmatpush2.msra.mxu0 0.0
    %3609 = vmatprep.subr.mxu0 0.0
    %3610 = vmatpush2.msra.mxu0 0.0
    %3611 = vmatprep.subr.mxu0 0.0
    %3612 = vmatpush2.msra.mxu0 0.0
    %3613 = vmatprep.subr.mxu0 0.0
    %3614 = vmatpush2.msra.mxu0 0.0
    %3615 = vmatprep.subr.mxu0 0.0
    %3616 = vmatpush2.msra.mxu0 0.0
    %3617 = vmatprep.subr.mxu0 0.0
    %3618 = vmatpush2.msra.mxu0 0.0
    %3619 = vmatprep.subr.mxu0 0.0
    %3620 = vmatpush2.msra.mxu0 0.0
    %3621 = vmatprep.subr.mxu0 0.0
    %3622 = vmatpush2.msra.mxu0 0.0
    %3623 = vmatprep.subr.mxu0 0.0
    %3624 = vmatpush2.msra.mxu0 0.0
    %3625 = vmatprep.subr.mxu0 0.0
    %3626 = vmatpush2.msra.mxu0 0.0
    %3627 = vmatprep.subr.mxu0 0.0
    %3628 = vmatpush2.msra.mxu0 0.0
    %3629 = vmatprep.subr.mxu0 0.0
    %3630 = vmatpush2.msra.mxu0 0.0
    %3631 = vmatprep.subr.mxu0 0.0
    %3632 = vmatpush2.msra.mxu0 0.0
    %3633 = vmatprep.subr.mxu0 0.0
    %3634 = vmatpush2.msra.mxu0 0.0
    %3635 = vmatprep.subr.mxu0 0.0
    %3636 = vmatpush2.msra.mxu0 0.0
    %3637 = vmatprep.mubr.f32.mxu0 0.0
    %3638 = vmatmul.mubr.f32.gmra.mxu0 %v3571
    %v3639 = vpop.f32.mrf.mxu0
    %v3640 = vadd.f32 0.0, %v3639
    %v3641 = vpop.f32.mrf.mxu0
    %v3642 = vadd.f32 0.0, %v3641
    %3643 = vdwg.mxu0
    %3644 = vmatprep.subr.mxu0 %v2049
    %3645 = vmatpush1.msra.mxu0 %v2048
    %3646 = vmatprep.subr.mxu0 %v2045
    %3647 = vmatpush1.msra.mxu0 %v2044
    %3648 = vmatprep.subr.mxu0 %v2041
    %3649 = vmatpush1.msra.mxu0 %v2040
    %3650 = vmatprep.subr.mxu0 %v2037
    %3651 = vmatpush1.msra.mxu0 %v2036
    %3652 = vmatprep.subr.mxu0 %v2033
    %3653 = vmatpush1.msra.mxu0 %v2032
    %3654 = vmatprep.subr.mxu0 %v2029
    %3655 = vmatpush1.msra.mxu0 %v2028
    %3656 = vmatprep.subr.mxu0 %v2025
    %3657 = vmatpush1.msra.mxu0 %v2024
    %3658 = vmatprep.subr.mxu0 %v2021
    %3659 = vmatpush1.msra.mxu0 %v2020
    %3660 = vmatprep.subr.mxu0 %v2017
    %3661 = vmatpush1.msra.mxu0 %v2016
    %3662 = vmatprep.subr.mxu0 %v2013
    %3663 = vmatpush1.msra.mxu0 %v2012
    %3664 = vmatprep.subr.mxu0 %v2009
    %3665 = vmatpush1.msra.mxu0 %v2008
    %3666 = vmatprep.subr.mxu0 %v2005
    %3667 = vmatpush1.msra.mxu0 %v2004
    %3668 = vmatprep.subr.mxu0 %v2001
    %3669 = vmatpush1.msra.mxu0 %v2000
    %3670 = vmatprep.subr.mxu0 %v1997
    %3671 = vmatpush1.msra.mxu0 %v1996
    %3672 = vmatprep.subr.mxu0 %v1993
    %3673 = vmatpush1.msra.mxu0 %v1992
    %3674 = vmatprep.subr.mxu0 %v1989
    %3675 = vmatpush1.msra.mxu0 %v1988
    %3676 = vmatprep.subr.mxu0 0.0
    %3677 = vmatpush2.msra.mxu0 0.0
    %3678 = vmatprep.subr.mxu0 0.0
    %3679 = vmatpush2.msra.mxu0 0.0
    %3680 = vmatprep.subr.mxu0 0.0
    %3681 = vmatpush2.msra.mxu0 0.0
    %3682 = vmatprep.subr.mxu0 0.0
    %3683 = vmatpush2.msra.mxu0 0.0
    %3684 = vmatprep.subr.mxu0 0.0
    %3685 = vmatpush2.msra.mxu0 0.0
    %3686 = vmatprep.subr.mxu0 0.0
    %3687 = vmatpush2.msra.mxu0 0.0
    %3688 = vmatprep.subr.mxu0 0.0
    %3689 = vmatpush2.msra.mxu0 0.0
    %3690 = vmatprep.subr.mxu0 0.0
    %3691 = vmatpush2.msra.mxu0 0.0
    %3692 = vmatprep.subr.mxu0 0.0
    %3693 = vmatpush2.msra.mxu0 0.0
    %3694 = vmatprep.subr.mxu0 0.0
    %3695 = vmatpush2.msra.mxu0 0.0
    %3696 = vmatprep.subr.mxu0 0.0
    %3697 = vmatpush2.msra.mxu0 0.0
    %3698 = vmatprep.subr.mxu0 0.0
    %3699 = vmatpush2.msra.mxu0 0.0
    %3700 = vmatprep.subr.mxu0 0.0
    %3701 = vmatpush2.msra.mxu0 0.0
    %3702 = vmatprep.subr.mxu0 0.0
    %3703 = vmatpush2.msra.mxu0 0.0
    %3704 = vmatprep.subr.mxu0 0.0
    %3705 = vmatpush2.msra.mxu0 0.0
    %3706 = vmatprep.subr.mxu0 0.0
    %3707 = vmatpush2.msra.mxu0 0.0
    %3708 = vmatprep.mubr.f32.mxu0 0.0
    %3709 = vmatmul.mubr.f32.gmra.mxu0 %v3571
    %v3710 = vpop.f32.mrf.mxu0
    %v3711 = vadd.f32 0.0, %v3710
    %v3712 = vpop.f32.mrf.mxu0
    %v3713 = vadd.f32 0.0, %v3712
    %3714 = vdwg.mxu0
    %v3719 = vrot.slane %v3640, 2
    %v3720 = vrot.slane %v3642, 2
    %v3721 = vrot.slane %v3711, 2
    %v3722 = vrot.slane %v3713, 2
    %v3727 = vadd.f32 %v2209, %v3719
    %v3728 = vadd.f32 %v2211, %v3720
    %v3729 = vadd.f32 %v2286, %v3721
    %v3730 = vadd.f32 %v2288, %v3722
    %v3731 = vxor.u32 %v3727, 2147483648
    %v3732 = vmul.f32 %v3731, 1.442695
    %v3733 = vpow.pop %v3732
    %v3734 = vadd.f32 %v3733, 1.0
    %v3735 = vrcp.pop %v3734
    %v3736 = vmul.f32 1.0, %v3735
    %v3737 = vxor.u32 %v3728, 2147483648
    %v3738 = vmul.f32 %v3737, 1.442695
    %v3739 = vpow.pop %v3738
    %v3740 = vadd.f32 %v3739, 1.0
    %v3741 = vrcp.pop %v3740
    %v3742 = vmul.f32 1.0, %v3741
    %v3743 = vtanh.pop %v3729
    %v3744 = vxor.u32 %v3730, 2147483648
    %v3745 = vmul.f32 %v3744, 1.442695
    %v3746 = vpow.pop %v3745
    %v3747 = vadd.f32 %v3746, 1.0
    %v3748 = vrcp.pop %v3747
    %v3749 = vmul.f32 1.0, %v3748
    %v3751 = vrot.slane %v3567, 6
    %v3753 = vmul.f32 %v3742, %v3751
    %v3754 = vmul.f32 %v3736, %v3743
    %v3755 = vadd.f32 %v3753, %v3754
    %v3756 = vtanh.pop %v3755
    %v3757 = vmul.f32 %v3749, %v3756
    %3758 = vst [vmem:[#allocation4 - $0x4] sm:$0xc0] %v3757
    %v3759 = vld [vmem:[#allocation4] sm:$0xf]
    %v3760 = vld [vmem:[#allocation10] sm:$0xff]
    %v3761 = vld [vmem:[#allocation10 + $0x8] sm:$0xff]
    %v3762 = vld [vmem:[#allocation10 + $0x10] sm:$0xff]
    %v3763 = vld [vmem:[#allocation10 + $0x18] sm:$0xff]
    %v3764 = vld [vmem:[#allocation10 + $0x20] sm:$0xff]
    %v3765 = vld [vmem:[#allocation10 + $0x28] sm:$0xff]
    %v3766 = vld [vmem:[#allocation10 + $0x30] sm:$0xff]
    %v3767 = vld [vmem:[#allocation10 + $0x38] sm:$0xff]
    %v3768 = vld [vmem:[#allocation10 + $0x40] sm:$0xff]
    %v3769 = vld [vmem:[#allocation10 + $0x48] sm:$0xff]
    %v3770 = vld [vmem:[#allocation10 + $0x50] sm:$0xff]
    %v3771 = vld [vmem:[#allocation10 + $0x58] sm:$0xff]
    %v3772 = vld [vmem:[#allocation10 + $0x60] sm:$0xff]
    %v3773 = vld [vmem:[#allocation10 + $0x68] sm:$0xff]
    %v3774 = vld [vmem:[#allocation10 + $0x70] sm:$0xff]
    %v3775 = vld [vmem:[#allocation10 + $0x78] sm:$0xff]
    %v3776 = vld [vmem:[#allocation10 + $0x80] sm:$0xff]
    %v3777 = vld [vmem:[#allocation10 + $0x88] sm:$0xff]
    %v3778 = vld [vmem:[#allocation10 + $0x90] sm:$0xff]
    %v3779 = vld [vmem:[#allocation10 + $0x98] sm:$0xff]
    %v3780 = vld [vmem:[#allocation10 + $0xa0] sm:$0xff]
    %v3781 = vld [vmem:[#allocation10 + $0xa8] sm:$0xff]
    %v3782 = vld [vmem:[#allocation10 + $0xb0] sm:$0xff]
    %v3783 = vld [vmem:[#allocation10 + $0xb8] sm:$0xff]
    %v3784 = vld [vmem:[#allocation10 + $0xc0] sm:$0xff]
    %v3785 = vld [vmem:[#allocation10 + $0xc8] sm:$0xff]
    %v3786 = vld [vmem:[#allocation10 + $0xd0] sm:$0xff]
    %v3787 = vld [vmem:[#allocation10 + $0xd8] sm:$0xff]
    %v3788 = vld [vmem:[#allocation10 + $0xe0] sm:$0xff]
    %v3789 = vld [vmem:[#allocation10 + $0xe8] sm:$0xff]
    %v3790 = vld [vmem:[#allocation10 + $0xf0] sm:$0xff]
    %v3791 = vld [vmem:[#allocation10 + $0xf8] sm:$0xff]
    %v3792 = vld [vmem:[%s11] sm:$0x3]
    %v3794 = vlaneseq
    %v3795 = vshrl.u32 %v3794, 7
    %v3796 = vsub.s32 0, %v3795
    %v3797 = vrot.slane %v3792, %v3796
    %v3798 = vlaneseq
    %v3799 = vshrl.u32 %v3798, 7
    %v3800 = vsub.s32 1, %v3799
    %v3801 = vrot.slane %v3792, %v3800
    %3804 = vmatprep.subr.mxu0 %v3791
    %3805 = vmatpush1.msra.mxu0 %v3790
    %3806 = vmatprep.subr.mxu0 %v3789
    %3807 = vmatpush1.msra.mxu0 %v3788
    %3808 = vmatprep.subr.mxu0 %v3787
    %3809 = vmatpush1.msra.mxu0 %v3786
    %3810 = vmatprep.subr.mxu0 %v3785
    %3811 = vmatpush1.msra.mxu0 %v3784
    %3812 = vmatprep.subr.mxu0 %v3783
    %3813 = vmatpush1.msra.mxu0 %v3782
    %3814 = vmatprep.subr.mxu0 %v3781
    %3815 = vmatpush1.msra.mxu0 %v3780
    %3816 = vmatprep.subr.mxu0 %v3779
    %3817 = vmatpush1.msra.mxu0 %v3778
    %3818 = vmatprep.subr.mxu0 %v3777
    %3819 = vmatpush1.msra.mxu0 %v3776
    %3820 = vmatprep.subr.mxu0 %v3775
    %3821 = vmatpush1.msra.mxu0 %v3774
    %3822 = vmatprep.subr.mxu0 %v3773
    %3823 = vmatpush1.msra.mxu0 %v3772
    %3824 = vmatprep.subr.mxu0 %v3771
    %3825 = vmatpush1.msra.mxu0 %v3770
    %3826 = vmatprep.subr.mxu0 %v3769
    %3827 = vmatpush1.msra.mxu0 %v3768
    %3828 = vmatprep.subr.mxu0 %v3767
    %3829 = vmatpush1.msra.mxu0 %v3766
    %3830 = vmatprep.subr.mxu0 %v3765
    %3831 = vmatpush1.msra.mxu0 %v3764
    %3832 = vmatprep.subr.mxu0 %v3763
    %3833 = vmatpush1.msra.mxu0 %v3762
    %3834 = vmatprep.subr.mxu0 %v3761
    %3835 = vmatpush1.msra.mxu0 %v3760
    %3836 = vmatprep.subr.mxu0 0.0
    %3837 = vmatpush2.msra.mxu0 0.0
    %3838 = vmatprep.subr.mxu0 0.0
    %3839 = vmatpush2.msra.mxu0 0.0
    %3840 = vmatprep.subr.mxu0 0.0
    %3841 = vmatpush2.msra.mxu0 0.0
    %3842 = vmatprep.subr.mxu0 0.0
    %3843 = vmatpush2.msra.mxu0 0.0
    %3844 = vmatprep.subr.mxu0 0.0
    %3845 = vmatpush2.msra.mxu0 0.0
    %3846 = vmatprep.subr.mxu0 0.0
    %3847 = vmatpush2.msra.mxu0 0.0
    %3848 = vmatprep.subr.mxu0 0.0
    %3849 = vmatpush2.msra.mxu0 0.0
    %3850 = vmatprep.subr.mxu0 0.0
    %3851 = vmatpush2.msra.mxu0 0.0
    %3852 = vmatprep.subr.mxu0 0.0
    %3853 = vmatpush2.msra.mxu0 0.0
    %3854 = vmatprep.subr.mxu0 0.0
    %3855 = vmatpush2.msra.mxu0 0.0
    %3856 = vmatprep.subr.mxu0 0.0
    %3857 = vmatpush2.msra.mxu0 0.0
    %3858 = vmatprep.subr.mxu0 0.0
    %3859 = vmatpush2.msra.mxu0 0.0
    %3860 = vmatprep.subr.mxu0 0.0
    %3861 = vmatpush2.msra.mxu0 0.0
    %3862 = vmatprep.subr.mxu0 0.0
    %3863 = vmatpush2.msra.mxu0 0.0
    %3864 = vmatprep.subr.mxu0 0.0
    %3865 = vmatpush2.msra.mxu0 0.0
    %3866 = vmatprep.subr.mxu0 0.0
    %3867 = vmatpush2.msra.mxu0 0.0
    %3868 = vmatprep.mubr.f32.mxu0 0.0
    %3869 = vmatmul.mubr.f32.gmra.mxu0 %v3759
    %v3870 = vpop.f32.mrf.mxu0
    %v3871 = vadd.f32 %v3797, %v3870
    %v3872 = vpop.f32.mrf.mxu0
    %v3873 = vadd.f32 %v3801, %v3872
    %3874 = vdwg.mxu0
    %v3877 = vcombine.low %v3871, %v3873
    %3879 = vst [vmem:[%s25] sm:$0xff] %v3877
    %v3880 = vld [vmem:[%s12] sm:$0xf]
    %v3881 = vmul.f32 %v3873, 0.5
    %v3882 = vmul.f32 %v3881, 1.442695
    %v3883 = vpow.pop %v3882
    %v3884 = vmul.f32 %v3880, %v3883
    %v3885 = vadd.f32 %v3871, %v3884
    %3886 = vst [vmem:[%s26] sm:$0xf] %v3885
    %v3887 = vld [vmem:[#allocation12] sm:$0xff]
    %v3888 = vld [vmem:[#allocation12 + $0x8] sm:$0xff]
    %v3889 = vld [vmem:[#allocation12 + $0x10] sm:$0xff]
    %v3890 = vld [vmem:[#allocation12 + $0x18] sm:$0xff]
    %v3891 = vld [vmem:[#allocation12 + $0x20] sm:$0xff]
    %v3892 = vld [vmem:[#allocation12 + $0x28] sm:$0xff]
    %v3893 = vld [vmem:[#allocation12 + $0x30] sm:$0xff]
    %v3894 = vld [vmem:[#allocation12 + $0x38] sm:$0xff]
    %v3895 = vld [vmem:[#allocation12 + $0x40] sm:$0xff]
    %v3896 = vld [vmem:[#allocation12 + $0x48] sm:$0xff]
    %v3897 = vld [vmem:[#allocation12 + $0x50] sm:$0xff]
    %v3898 = vld [vmem:[#allocation12 + $0x58] sm:$0xff]
    %v3899 = vld [vmem:[#allocation12 + $0x60] sm:$0xff]
    %v3900 = vld [vmem:[#allocation12 + $0x68] sm:$0xff]
    %v3901 = vld [vmem:[#allocation12 + $0x70] sm:$0xff]
    %v3902 = vld [vmem:[#allocation12 + $0x78] sm:$0xff]
    %v3903 = vld [vmem:[%s14] sm:$0x1]
    %v3905 = vlaneseq
    %v3906 = vshrl.u32 %v3905, 7
    %v3907 = vsub.s32 0, %v3906
    %v3908 = vrot.slane %v3903, %v3907
    %3910 = vmatprep.subr.mxu0 0.0
    %3911 = vmatpush1.msra.mxu0 %v3902
    %3912 = vmatprep.subr.mxu0 0.0
    %3913 = vmatpush1.msra.mxu0 %v3901
    %3914 = vmatprep.subr.mxu0 0.0
    %3915 = vmatpush1.msra.mxu0 %v3900
    %3916 = vmatprep.subr.mxu0 0.0
    %3917 = vmatpush1.msra.mxu0 %v3899
    %3918 = vmatprep.subr.mxu0 0.0
    %3919 = vmatpush1.msra.mxu0 %v3898
    %3920 = vmatprep.subr.mxu0 0.0
    %3921 = vmatpush1.msra.mxu0 %v3897
    %3922 = vmatprep.subr.mxu0 0.0
    %3923 = vmatpush1.msra.mxu0 %v3896
    %3924 = vmatprep.subr.mxu0 0.0
    %3925 = vmatpush1.msra.mxu0 %v3895
    %3926 = vmatprep.subr.mxu0 0.0
    %3927 = vmatpush1.msra.mxu0 %v3894
    %3928 = vmatprep.subr.mxu0 0.0
    %3929 = vmatpush1.msra.mxu0 %v3893
    %3930 = vmatprep.subr.mxu0 0.0
    %3931 = vmatpush1.msra.mxu0 %v3892
    %3932 = vmatprep.subr.mxu0 0.0
    %3933 = vmatpush1.msra.mxu0 %v3891
    %3934 = vmatprep.subr.mxu0 0.0
    %3935 = vmatpush1.msra.mxu0 %v3890
    %3936 = vmatprep.subr.mxu0 0.0
    %3937 = vmatpush1.msra.mxu0 %v3889
    %3938 = vmatprep.subr.mxu0 0.0
    %3939 = vmatpush1.msra.mxu0 %v3888
    %3940 = vmatprep.subr.mxu0 0.0
    %3941 = vmatpush1.msra.mxu0 %v3887
    %3942 = vmatprep.subr.mxu0 0.0
    %3943 = vmatpush2.msra.mxu0 0.0
    %3944 = vmatprep.subr.mxu0 0.0
    %3945 = vmatpush2.msra.mxu0 0.0
    %3946 = vmatprep.subr.mxu0 0.0
    %3947 = vmatpush2.msra.mxu0 0.0
    %3948 = vmatprep.subr.mxu0 0.0
    %3949 = vmatpush2.msra.mxu0 0.0
    %3950 = vmatprep.subr.mxu0 0.0
    %3951 = vmatpush2.msra.mxu0 0.0
    %3952 = vmatprep.subr.mxu0 0.0
    %3953 = vmatpush2.msra.mxu0 0.0
    %3954 = vmatprep.subr.mxu0 0.0
    %3955 = vmatpush2.msra.mxu0 0.0
    %3956 = vmatprep.subr.mxu0 0.0
    %3957 = vmatpush2.msra.mxu0 0.0
    %3958 = vmatprep.subr.mxu0 0.0
    %3959 = vmatpush2.msra.mxu0 0.0
    %3960 = vmatprep.subr.mxu0 0.0
    %3961 = vmatpush2.msra.mxu0 0.0
    %3962 = vmatprep.subr.mxu0 0.0
    %3963 = vmatpush2.msra.mxu0 0.0
    %3964 = vmatprep.subr.mxu0 0.0
    %3965 = vmatpush2.msra.mxu0 0.0
    %3966 = vmatprep.subr.mxu0 0.0
    %3967 = vmatpush2.msra.mxu0 0.0
    %3968 = vmatprep.subr.mxu0 0.0
    %3969 = vmatpush2.msra.mxu0 0.0
    %3970 = vmatprep.subr.mxu0 0.0
    %3971 = vmatpush2.msra.mxu0 0.0
    %3972 = vmatprep.subr.mxu0 0.0
    %3973 = vmatpush2.msra.mxu0 0.0
    %3974 = vmatprep.mubr.f32.mxu0 0.0
    %3975 = vmatmul.mubr.f32.gmra.mxu0 %v3885
    %v3976 = vpop.f32.mrf.mxu0
    %v3977 = vadd.f32 %v3908, %v3976
    %v3978 = vpop.f32.mrf.mxu0
    %3979 = vdwg.mxu0
    %v3980 = vld [vmem:[%s1] sm:$0x3]
    %vm3981 = vcmask 123904
    %3982 = vst.msk [vmem:[#allocation3] sm:$0x3] %vm3981, %v3980
    %3983 = vst.msk [vmem:[#allocation3 + $0x2] sm:$0xff] %vm207, %v251
    %vm3984 = vcmask 128000
    %3985 = vst.msk [vmem:[#allocation3 + $0xa] sm:$0x3f] %vm3984, %v252
    %v3986 = vld [vmem:[#allocation3] sm:$0xff]
    %v3987 = vld [vmem:[#allocation3 + $0x8] sm:$0xff]
    %v3988 = vld [vmem:[%s16] sm:$0xff]
    %v3989 = vld [vmem:[%s16 + $0x8] sm:$0xff]
    %v3990 = vld [vmem:[%s16 + $0x10] sm:$0xff]
    %v3991 = vld [vmem:[%s16 + $0x18] sm:$0xff]
    %v3992 = vld [vmem:[%s16 + $0x20] sm:$0xff]
    %v3993 = vld [vmem:[%s16 + $0x28] sm:$0xff]
    %v3994 = vld [vmem:[%s16 + $0x30] sm:$0xff]
    %v3995 = vld [vmem:[%s16 + $0x38] sm:$0xff]
    %v3996 = vld [vmem:[%s16 + $0x40] sm:$0xff]
    %v3997 = vld [vmem:[%s16 + $0x48] sm:$0xff]
    %v3998 = vld [vmem:[%s16 + $0x50] sm:$0xff]
    %v3999 = vld [vmem:[%s16 + $0x58] sm:$0xff]
    %v4000 = vld [vmem:[%s16 + $0x60] sm:$0xff]
    %v4001 = vld [vmem:[%s16 + $0x68] sm:$0xff]
    %v4002 = vld [vmem:[%s16 + $0x70] sm:$0xff]
    %v4003 = vld [vmem:[%s16 + $0x78] sm:$0xff]
    %v4004 = vld [vmem:[%s16 + $0x80] sm:$0xff]
    %v4005 = vld [vmem:[%s16 + $0x88] sm:$0xff]
    %v4006 = vld [vmem:[%s16 + $0x90] sm:$0xff]
    %v4007 = vld [vmem:[%s16 + $0x98] sm:$0xff]
    %v4008 = vld [vmem:[%s16 + $0xa0] sm:$0xff]
    %v4009 = vld [vmem:[%s16 + $0xa8] sm:$0xff]
    %v4010 = vld [vmem:[%s16 + $0xb0] sm:$0xff]
    %v4011 = vld [vmem:[%s16 + $0xb8] sm:$0xff]
    %v4012 = vld [vmem:[%s16 + $0xc0] sm:$0xff]
    %v4013 = vld [vmem:[%s16 + $0xc8] sm:$0xff]
    %v4014 = vld [vmem:[%s16 + $0xd0] sm:$0xff]
    %v4015 = vld [vmem:[%s16 + $0xd8] sm:$0xff]
    %v4016 = vld [vmem:[%s16 + $0xe0] sm:$0xff]
    %v4017 = vld [vmem:[%s16 + $0xe8] sm:$0xff]
    %v4018 = vld [vmem:[%s16 + $0xf0] sm:$0xff]
    %v4019 = vld [vmem:[%s16 + $0xf8] sm:$0xff]
    %v4020 = vld [vmem:[%s16 + $0x100] sm:$0xff]
    %v4021 = vld [vmem:[%s16 + $0x108] sm:$0xff]
    %v4022 = vld [vmem:[%s16 + $0x110] sm:$0xff]
    %v4023 = vld [vmem:[%s16 + $0x118] sm:$0xff]
    %v4024 = vld [vmem:[%s16 + $0x120] sm:$0xff]
    %v4025 = vld [vmem:[%s16 + $0x128] sm:$0xff]
    %v4026 = vld [vmem:[%s16 + $0x130] sm:$0xff]
    %v4027 = vld [vmem:[%s16 + $0x138] sm:$0xff]
    %v4028 = vld [vmem:[%s16 + $0x140] sm:$0xff]
    %v4029 = vld [vmem:[%s16 + $0x148] sm:$0xff]
    %v4030 = vld [vmem:[%s16 + $0x150] sm:$0xff]
    %v4031 = vld [vmem:[%s16 + $0x158] sm:$0xff]
    %v4032 = vld [vmem:[%s16 + $0x160] sm:$0xff]
    %v4033 = vld [vmem:[%s16 + $0x168] sm:$0xff]
    %v4034 = vld [vmem:[%s16 + $0x170] sm:$0xff]
    %v4035 = vld [vmem:[%s16 + $0x178] sm:$0xff]
    %v4036 = vld [vmem:[%s18] sm:$0x7]
    %v4037 = vld [vmem:[#allocation13] sm:$0xff]
    %v4038 = vld [vmem:[#allocation13 + $0x8] sm:$0xff]
    %v4039 = vld [vmem:[#allocation13 + $0x10] sm:$0xff]
    %v4040 = vld [vmem:[#allocation13 + $0x18] sm:$0xff]
    %v4041 = vld [vmem:[#allocation13 + $0x20] sm:$0xff]
    %v4042 = vld [vmem:[#allocation13 + $0x28] sm:$0xff]
    %v4043 = vld [vmem:[%s17] sm:$0x7]
    %v4045 = vlaneseq
    %v4046 = vshrl.u32 %v4045, 7
    %v4047 = vsub.s32 0, %v4046
    %v4048 = vrot.slane %v4043, %v4047
    %v4049 = vlaneseq
    %v4050 = vshrl.u32 %v4049, 7
    %v4051 = vsub.s32 1, %v4050
    %v4052 = vrot.slane %v4043, %v4051
    %v4053 = vlaneseq
    %v4054 = vshrl.u32 %v4053, 7
    %v4055 = vsub.s32 2, %v4054
    %v4056 = vrot.slane %v4043, %v4055
    %v4061 = vsel %vm207, %v3986, 0
    %v4064 = vsel %vm207, %v3987, 0
    %4066 = vmatprep.subr.mxu0 0.0
    %4067 = vmatpush1.msra.mxu0 0.0
    %4068 = vmatprep.subr.mxu0 0.0
    %4069 = vmatpush1.msra.mxu0 0.0
    %4070 = vmatprep.subr.mxu0 0.0
    %4071 = vmatpush1.msra.mxu0 0.0
    %4072 = vmatprep.subr.mxu0 0.0
    %4073 = vmatpush1.msra.mxu0 0.0
    %4074 = vmatprep.subr.mxu0 0.0
    %4075 = vmatpush1.msra.mxu0 0.0
    %4076 = vmatprep.subr.mxu0 0.0
    %4077 = vmatpush1.msra.mxu0 0.0
    %4078 = vmatprep.subr.mxu0 0.0
    %4079 = vmatpush1.msra.mxu0 0.0
    %4080 = vmatprep.subr.mxu0 0.0
    %4081 = vmatpush1.msra.mxu0 0.0
    %4082 = vmatprep.subr.mxu0 0.0
    %4083 = vmatpush1.msra.mxu0 0.0
    %4084 = vmatprep.subr.mxu0 0.0
    %4085 = vmatpush1.msra.mxu0 0.0
    %4086 = vmatprep.subr.mxu0 0.0
    %4087 = vmatpush1.msra.mxu0 0.0
    %4088 = vmatprep.subr.mxu0 0.0
    %4089 = vmatpush1.msra.mxu0 0.0
    %4090 = vmatprep.subr.mxu0 0.0
    %4091 = vmatpush1.msra.mxu0 0.0
    %4092 = vmatprep.subr.mxu0 0.0
    %4093 = vmatpush1.msra.mxu0 0.0
    %4094 = vmatprep.subr.mxu0 %v4041
    %4095 = vmatpush1.msra.mxu0 %v4040
    %4096 = vmatprep.subr.mxu0 %v4038
    %4097 = vmatpush1.msra.mxu0 %v4037
    %4098 = vmatprep.subr.mxu0 0.0
    %4099 = vmatpush2.msra.mxu0 0.0
    %4100 = vmatprep.subr.mxu0 0.0
    %4101 = vmatpush2.msra.mxu0 0.0
    %4102 = vmatprep.subr.mxu0 0.0
    %4103 = vmatpush2.msra.mxu0 0.0
    %4104 = vmatprep.subr.mxu0 0.0
    %4105 = vmatpush2.msra.mxu0 0.0
    %4106 = vmatprep.subr.mxu0 0.0
    %4107 = vmatpush2.msra.mxu0 0.0
    %4108 = vmatprep.subr.mxu0 0.0
    %4109 = vmatpush2.msra.mxu0 0.0
    %4110 = vmatprep.subr.mxu0 0.0
    %4111 = vmatpush2.msra.mxu0 0.0
    %4112 = vmatprep.subr.mxu0 0.0
    %4113 = vmatpush2.msra.mxu0 0.0
    %4114 = vmatprep.subr.mxu0 0.0
    %4115 = vmatpush2.msra.mxu0 0.0
    %4116 = vmatprep.subr.mxu0 0.0
    %4117 = vmatpush2.msra.mxu0 0.0
    %4118 = vmatprep.subr.mxu0 0.0
    %4119 = vmatpush2.msra.mxu0 0.0
    %4120 = vmatprep.subr.mxu0 0.0
    %4121 = vmatpush2.msra.mxu0 0.0
    %4122 = vmatprep.subr.mxu0 0.0
    %4123 = vmatpush2.msra.mxu0 0.0
    %4124 = vmatprep.subr.mxu0 0.0
    %4125 = vmatpush2.msra.mxu0 0.0
    %4126 = vmatprep.subr.mxu0 0.0
    %4127 = vmatpush2.msra.mxu0 0.0
    %4128 = vmatprep.subr.mxu0 0.0
    %4129 = vmatpush2.msra.mxu0 0.0
    %4130 = vmatprep.mubr.f32.mxu0 0.0
    %4131 = vmatmul.mubr.f32.gmra.mxu0 %v4061
    %v4132 = vpop.f32.mrf.mxu0
    %v4133 = vadd.f32 %v4048, %v4132
    %v4134 = vpop.f32.mrf.mxu0
    %v4135 = vadd.f32 %v4052, %v4134
    %4136 = vmatprep.mubr.f32.mxu0 0.0
    %4137 = vmatmul.mubr.f32.gmra.mxu0 %v4064
    %v4138 = vpop.f32.mrf.mxu0
    %v4139 = vadd.f32 %v4048, %v4138
    %v4140 = vpop.f32.mrf.mxu0
    %v4141 = vadd.f32 %v4052, %v4140
    %4142 = vdwg.mxu0
    %4143 = vmatprep.subr.mxu0 0.0
    %4144 = vmatpush1.msra.mxu0 0.0
    %4145 = vmatprep.subr.mxu0 0.0
    %4146 = vmatpush1.msra.mxu0 0.0
    %4147 = vmatprep.subr.mxu0 0.0
    %4148 = vmatpush1.msra.mxu0 0.0
    %4149 = vmatprep.subr.mxu0 0.0
    %4150 = vmatpush1.msra.mxu0 0.0
    %4151 = vmatprep.subr.mxu0 0.0
    %4152 = vmatpush1.msra.mxu0 0.0
    %4153 = vmatprep.subr.mxu0 0.0
    %4154 = vmatpush1.msra.mxu0 0.0
    %4155 = vmatprep.subr.mxu0 0.0
    %4156 = vmatpush1.msra.mxu0 0.0
    %4157 = vmatprep.subr.mxu0 0.0
    %4158 = vmatpush1.msra.mxu0 0.0
    %4159 = vmatprep.subr.mxu0 0.0
    %4160 = vmatpush1.msra.mxu0 0.0
    %4161 = vmatprep.subr.mxu0 0.0
    %4162 = vmatpush1.msra.mxu0 0.0
    %4163 = vmatprep.subr.mxu0 0.0
    %4164 = vmatpush1.msra.mxu0 0.0
    %4165 = vmatprep.subr.mxu0 0.0
    %4166 = vmatpush1.msra.mxu0 0.0
    %4167 = vmatprep.subr.mxu0 0.0
    %4168 = vmatpush1.msra.mxu0 0.0
    %4169 = vmatprep.subr.mxu0 0.0
    %4170 = vmatpush1.msra.mxu0 0.0
    %4171 = vmatprep.subr.mxu0 0.0
    %4172 = vmatpush1.msra.mxu0 %v4042
    %4173 = vmatprep.subr.mxu0 0.0
    %4174 = vmatpush1.msra.mxu0 %v4039
    %4175 = vmatprep.subr.mxu0 0.0
    %4176 = vmatpush2.msra.mxu0 0.0
    %4177 = vmatprep.subr.mxu0 0.0
    %4178 = vmatpush2.msra.mxu0 0.0
    %4179 = vmatprep.subr.mxu0 0.0
    %4180 = vmatpush2.msra.mxu0 0.0
    %4181 = vmatprep.subr.mxu0 0.0
    %4182 = vmatpush2.msra.mxu0 0.0
    %4183 = vmatprep.subr.mxu0 0.0
    %4184 = vmatpush2.msra.mxu0 0.0
    %4185 = vmatprep.subr.mxu0 0.0
    %4186 = vmatpush2.msra.mxu0 0.0
    %4187 = vmatprep.subr.mxu0 0.0
    %4188 = vmatpush2.msra.mxu0 0.0
    %4189 = vmatprep.subr.mxu0 0.0
    %4190 = vmatpush2.msra.mxu0 0.0
    %4191 = vmatprep.subr.mxu0 0.0
    %4192 = vmatpush2.msra.mxu0 0.0
    %4193 = vmatprep.subr.mxu0 0.0
    %4194 = vmatpush2.msra.mxu0 0.0
    %4195 = vmatprep.subr.mxu0 0.0
    %4196 = vmatpush2.msra.mxu0 0.0
    %4197 = vmatprep.subr.mxu0 0.0
    %4198 = vmatpush2.msra.mxu0 0.0
    %4199 = vmatprep.subr.mxu0 0.0
    %4200 = vmatpush2.msra.mxu0 0.0
    %4201 = vmatprep.subr.mxu0 0.0
    %4202 = vmatpush2.msra.mxu0 0.0
    %4203 = vmatprep.subr.mxu0 0.0
    %4204 = vmatpush2.msra.mxu0 0.0
    %4205 = vmatprep.subr.mxu0 0.0
    %4206 = vmatpush2.msra.mxu0 0.0
    %4207 = vmatprep.mubr.f32.mxu0 0.0
    %4208 = vmatmul.mubr.f32.gmra.mxu0 %v4061
    %v4209 = vpop.f32.mrf.mxu0
    %v4210 = vadd.f32 %v4056, %v4209
    %v4211 = vpop.f32.mrf.mxu0
    %4212 = vmatprep.mubr.f32.mxu0 0.0
    %4213 = vmatmul.mubr.f32.gmra.mxu0 %v4064
    %v4214 = vpop.f32.mrf.mxu0
    %v4215 = vadd.f32 %v4056, %v4214
    %v4216 = vpop.f32.mrf.mxu0
    %4217 = vdwg.mxu0
    %v4219 = vlaneseq
    %v4220 = vshrl.u32 %v4219, 7
    %v4221 = vsub.s32 0, %v4220
    %v4222 = vrot.slane %v4036, %v4221
    %v4223 = vlaneseq
    %v4224 = vshrl.u32 %v4223, 7
    %v4225 = vsub.s32 1, %v4224
    %v4226 = vrot.slane %v4036, %v4225
    %v4227 = vlaneseq
    %v4228 = vshrl.u32 %v4227, 7
    %v4229 = vsub.s32 2, %v4228
    %v4230 = vrot.slane %v4036, %v4229
    %4234 = vmatprep.subr.mxu0 %v4034
    %4235 = vmatpush1.msra.mxu0 %v4033
    %4236 = vmatprep.subr.mxu0 %v4031
    %4237 = vmatpush1.msra.mxu0 %v4030
    %4238 = vmatprep.subr.mxu0 %v4028
    %4239 = vmatpush1.msra.mxu0 %v4027
    %4240 = vmatprep.subr.mxu0 %v4025
    %4241 = vmatpush1.msra.mxu0 %v4024
    %4242 = vmatprep.subr.mxu0 %v4022
    %4243 = vmatpush1.msra.mxu0 %v4021
    %4244 = vmatprep.subr.mxu0 %v4019
    %4245 = vmatpush1.msra.mxu0 %v4018
    %4246 = vmatprep.subr.mxu0 %v4016
    %4247 = vmatpush1.msra.mxu0 %v4015
    %4248 = vmatprep.subr.mxu0 %v4013
    %4249 = vmatpush1.msra.mxu0 %v4012
    %4250 = vmatprep.subr.mxu0 %v4010
    %4251 = vmatpush1.msra.mxu0 %v4009
    %4252 = vmatprep.subr.mxu0 %v4007
    %4253 = vmatpush1.msra.mxu0 %v4006
    %4254 = vmatprep.subr.mxu0 %v4004
    %4255 = vmatpush1.msra.mxu0 %v4003
    %4256 = vmatprep.subr.mxu0 %v4001
    %4257 = vmatpush1.msra.mxu0 %v4000
    %4258 = vmatprep.subr.mxu0 %v3998
    %4259 = vmatpush1.msra.mxu0 %v3997
    %4260 = vmatprep.subr.mxu0 %v3995
    %4261 = vmatpush1.msra.mxu0 %v3994
    %4262 = vmatprep.subr.mxu0 %v3992
    %4263 = vmatpush1.msra.mxu0 %v3991
    %4264 = vmatprep.subr.mxu0 %v3989
    %4265 = vmatpush1.msra.mxu0 %v3988
    %4266 = vmatprep.subr.mxu0 0.0
    %4267 = vmatpush2.msra.mxu0 0.0
    %4268 = vmatprep.subr.mxu0 0.0
    %4269 = vmatpush2.msra.mxu0 0.0
    %4270 = vmatprep.subr.mxu0 0.0
    %4271 = vmatpush2.msra.mxu0 0.0
    %4272 = vmatprep.subr.mxu0 0.0
    %4273 = vmatpush2.msra.mxu0 0.0
    %4274 = vmatprep.subr.mxu0 0.0
    %4275 = vmatpush2.msra.mxu0 0.0
    %4276 = vmatprep.subr.mxu0 0.0
    %4277 = vmatpush2.msra.mxu0 0.0
    %4278 = vmatprep.subr.mxu0 0.0
    %4279 = vmatpush2.msra.mxu0 0.0
    %4280 = vmatprep.subr.mxu0 0.0
    %4281 = vmatpush2.msra.mxu0 0.0
    %4282 = vmatprep.subr.mxu0 0.0
    %4283 = vmatpush2.msra.mxu0 0.0
    %4284 = vmatprep.subr.mxu0 0.0
    %4285 = vmatpush2.msra.mxu0 0.0
    %4286 = vmatprep.subr.mxu0 0.0
    %4287 = vmatpush2.msra.mxu0 0.0
    %4288 = vmatprep.subr.mxu0 0.0
    %4289 = vmatpush2.msra.mxu0 0.0
    %4290 = vmatprep.subr.mxu0 0.0
    %4291 = vmatpush2.msra.mxu0 0.0
    %4292 = vmatprep.subr.mxu0 0.0
    %4293 = vmatpush2.msra.mxu0 0.0
    %4294 = vmatprep.subr.mxu0 0.0
    %4295 = vmatpush2.msra.mxu0 0.0
    %4296 = vmatprep.subr.mxu0 0.0
    %4297 = vmatpush2.msra.mxu0 0.0
    %4298 = vmatprep.mubr.f32.mxu0 0.0
    %4299 = vmatmul.mubr.f32.gmra.mxu0 %v3977
    %v4300 = vpop.f32.mrf.mxu0
    %v4301 = vadd.f32 %v4222, %v4300
    %v4302 = vpop.f32.mrf.mxu0
    %v4303 = vadd.f32 %v4226, %v4302
    %4304 = vdwg.mxu0
    %4305 = vmatprep.subr.mxu0 0.0
    %4306 = vmatpush1.msra.mxu0 %v4035
    %4307 = vmatprep.subr.mxu0 0.0
    %4308 = vmatpush1.msra.mxu0 %v4032
    %4309 = vmatprep.subr.mxu0 0.0
    %4310 = vmatpush1.msra.mxu0 %v4029
    %4311 = vmatprep.subr.mxu0 0.0
    %4312 = vmatpush1.msra.mxu0 %v4026
    %4313 = vmatprep.subr.mxu0 0.0
    %4314 = vmatpush1.msra.mxu0 %v4023
    %4315 = vmatprep.subr.mxu0 0.0
    %4316 = vmatpush1.msra.mxu0 %v4020
    %4317 = vmatprep.subr.mxu0 0.0
    %4318 = vmatpush1.msra.mxu0 %v4017
    %4319 = vmatprep.subr.mxu0 0.0
    %4320 = vmatpush1.msra.mxu0 %v4014
    %4321 = vmatprep.subr.mxu0 0.0
    %4322 = vmatpush1.msra.mxu0 %v4011
    %4323 = vmatprep.subr.mxu0 0.0
    %4324 = vmatpush1.msra.mxu0 %v4008
    %4325 = vmatprep.subr.mxu0 0.0
    %4326 = vmatpush1.msra.mxu0 %v4005
    %4327 = vmatprep.subr.mxu0 0.0
    %4328 = vmatpush1.msra.mxu0 %v4002
    %4329 = vmatprep.subr.mxu0 0.0
    %4330 = vmatpush1.msra.mxu0 %v3999
    %4331 = vmatprep.subr.mxu0 0.0
    %4332 = vmatpush1.msra.mxu0 %v3996
    %4333 = vmatprep.subr.mxu0 0.0
    %4334 = vmatpush1.msra.mxu0 %v3993
    %4335 = vmatprep.subr.mxu0 0.0
    %4336 = vmatpush1.msra.mxu0 %v3990
    %4337 = vmatprep.subr.mxu0 0.0
    %4338 = vmatpush2.msra.mxu0 0.0
    %4339 = vmatprep.subr.mxu0 0.0
    %4340 = vmatpush2.msra.mxu0 0.0
    %4341 = vmatprep.subr.mxu0 0.0
    %4342 = vmatpush2.msra.mxu0 0.0
    %4343 = vmatprep.subr.mxu0 0.0
    %4344 = vmatpush2.msra.mxu0 0.0
    %4345 = vmatprep.subr.mxu0 0.0
    %4346 = vmatpush2.msra.mxu0 0.0
    %4347 = vmatprep.subr.mxu0 0.0
    %4348 = vmatpush2.msra.mxu0 0.0
    %4349 = vmatprep.subr.mxu0 0.0
    %4350 = vmatpush2.msra.mxu0 0.0
    %4351 = vmatprep.subr.mxu0 0.0
    %4352 = vmatpush2.msra.mxu0 0.0
    %4353 = vmatprep.subr.mxu0 0.0
    %4354 = vmatpush2.msra.mxu0 0.0
    %4355 = vmatprep.subr.mxu0 0.0
    %4356 = vmatpush2.msra.mxu0 0.0
    %4357 = vmatprep.subr.mxu0 0.0
    %4358 = vmatpush2.msra.mxu0 0.0
    %4359 = vmatprep.subr.mxu0 0.0
    %4360 = vmatpush2.msra.mxu0 0.0
    %4361 = vmatprep.subr.mxu0 0.0
    %4362 = vmatpush2.msra.mxu0 0.0
    %4363 = vmatprep.subr.mxu0 0.0
    %4364 = vmatpush2.msra.mxu0 0.0
    %4365 = vmatprep.subr.mxu0 0.0
    %4366 = vmatpush2.msra.mxu0 0.0
    %4367 = vmatprep.subr.mxu0 0.0
    %4368 = vmatpush2.msra.mxu0 0.0
    %4369 = vmatprep.mubr.f32.mxu0 0.0
    %4370 = vmatmul.mubr.f32.gmra.mxu0 %v3977
    %v4371 = vpop.f32.mrf.mxu0
    %v4372 = vadd.f32 %v4230, %v4371
    %v4373 = vpop.f32.mrf.mxu0
    %4374 = vdwg.mxu0
    %v4375 = vadd.f32 %v4133, %v4301
    %v4376 = vxor.u32 %v4375, 2147483648
    %v4377 = vmul.f32 %v4376, 1.442695
    %v4378 = vpow.pop %v4377
    %v4379 = vadd.f32 %v4378, 1.0
    %v4380 = vrcp.pop %v4379
    %v4381 = vmul.f32 1.0, %v4380
    %v4382 = vadd.f32 %v4135, %v4303
    %v4383 = vxor.u32 %v4382, 2147483648
    %v4384 = vmul.f32 %v4383, 1.442695
    %v4385 = vpow.pop %v4384
    %v4386 = vadd.f32 %v4385, 1.0
    %v4387 = vrcp.pop %v4386
    %v4388 = vmul.f32 1.0, %v4387
    %v4389 = vmul.f32 %v4381, %v4372
    %v4390 = vadd.f32 %v4210, %v4389
    %v4391 = vtanh.pop %v4390
    %v4392 = vsub.f32 1.0, %v4388
    %v4393 = vmul.f32 %v4392, %v4391
    %v4394 = vmul.f32 %v4388, %v3977
    %v4395 = vadd.f32 %v4393, %v4394
    %4396 = vst [vmem:[#allocation2] sm:$0x3] %v4395
    %4397 = vmatprep.subr.mxu0 %v4034
    %4398 = vmatpush1.msra.mxu0 %v4033
    %4399 = vmatprep.subr.mxu0 %v4031
    %4400 = vmatpush1.msra.mxu0 %v4030
    %4401 = vmatprep.subr.mxu0 %v4028
    %4402 = vmatpush1.msra.mxu0 %v4027
    %4403 = vmatprep.subr.mxu0 %v4025
    %4404 = vmatpush1.msra.mxu0 %v4024
    %4405 = vmatprep.subr.mxu0 %v4022
    %4406 = vmatpush1.msra.mxu0 %v4021
    %4407 = vmatprep.subr.mxu0 %v4019
    %4408 = vmatpush1.msra.mxu0 %v4018
    %4409 = vmatprep.subr.mxu0 %v4016
    %4410 = vmatpush1.msra.mxu0 %v4015
    %4411 = vmatprep.subr.mxu0 %v4013
    %4412 = vmatpush1.msra.mxu0 %v4012
    %4413 = vmatprep.subr.mxu0 %v4010
    %4414 = vmatpush1.msra.mxu0 %v4009
    %4415 = vmatprep.subr.mxu0 %v4007
    %4416 = vmatpush1.msra.mxu0 %v4006
    %4417 = vmatprep.subr.mxu0 %v4004
    %4418 = vmatpush1.msra.mxu0 %v4003
    %4419 = vmatprep.subr.mxu0 %v4001
    %4420 = vmatpush1.msra.mxu0 %v4000
    %4421 = vmatprep.subr.mxu0 %v3998
    %4422 = vmatpush1.msra.mxu0 %v3997
    %4423 = vmatprep.subr.mxu0 %v3995
    %4424 = vmatpush1.msra.mxu0 %v3994
    %4425 = vmatprep.subr.mxu0 %v3992
    %4426 = vmatpush1.msra.mxu0 %v3991
    %4427 = vmatprep.subr.mxu0 %v3989
    %4428 = vmatpush1.msra.mxu0 %v3988
    %4429 = vmatprep.subr.mxu0 0.0
    %4430 = vmatpush2.msra.mxu0 0.0
    %4431 = vmatprep.subr.mxu0 0.0
    %4432 = vmatpush2.msra.mxu0 0.0
    %4433 = vmatprep.subr.mxu0 0.0
    %4434 = vmatpush2.msra.mxu0 0.0
    %4435 = vmatprep.subr.mxu0 0.0
    %4436 = vmatpush2.msra.mxu0 0.0
    %4437 = vmatprep.subr.mxu0 0.0
    %4438 = vmatpush2.msra.mxu0 0.0
    %4439 = vmatprep.subr.mxu0 0.0
    %4440 = vmatpush2.msra.mxu0 0.0
    %4441 = vmatprep.subr.mxu0 0.0
    %4442 = vmatpush2.msra.mxu0 0.0
    %4443 = vmatprep.subr.mxu0 0.0
    %4444 = vmatpush2.msra.mxu0 0.0
    %4445 = vmatprep.subr.mxu0 0.0
    %4446 = vmatpush2.msra.mxu0 0.0
    %4447 = vmatprep.subr.mxu0 0.0
    %4448 = vmatpush2.msra.mxu0 0.0
    %4449 = vmatprep.subr.mxu0 0.0
    %4450 = vmatpush2.msra.mxu0 0.0
    %4451 = vmatprep.subr.mxu0 0.0
    %4452 = vmatpush2.msra.mxu0 0.0
    %4453 = vmatprep.subr.mxu0 0.0
    %4454 = vmatpush2.msra.mxu0 0.0
    %4455 = vmatprep.subr.mxu0 0.0
    %4456 = vmatpush2.msra.mxu0 0.0
    %4457 = vmatprep.subr.mxu0 0.0
    %4458 = vmatpush2.msra.mxu0 0.0
    %4459 = vmatprep.subr.mxu0 0.0
    %4460 = vmatpush2.msra.mxu0 0.0
    %4461 = vmatprep.mubr.f32.mxu0 0.0
    %4462 = vmatmul.mubr.f32.gmra.mxu0 %v4395
    %v4463 = vpop.f32.mrf.mxu0
    %v4464 = vadd.f32 %v4222, %v4463
    %v4465 = vpop.f32.mrf.mxu0
    %v4466 = vadd.f32 %v4226, %v4465
    %4467 = vdwg.mxu0
    %4468 = vmatprep.subr.mxu0 0.0
    %4469 = vmatpush1.msra.mxu0 %v4035
    %4470 = vmatprep.subr.mxu0 0.0
    %4471 = vmatpush1.msra.mxu0 %v4032
    %4472 = vmatprep.subr.mxu0 0.0
    %4473 = vmatpush1.msra.mxu0 %v4029
    %4474 = vmatprep.subr.mxu0 0.0
    %4475 = vmatpush1.msra.mxu0 %v4026
    %4476 = vmatprep.subr.mxu0 0.0
    %4477 = vmatpush1.msra.mxu0 %v4023
    %4478 = vmatprep.subr.mxu0 0.0
    %4479 = vmatpush1.msra.mxu0 %v4020
    %4480 = vmatprep.subr.mxu0 0.0
    %4481 = vmatpush1.msra.mxu0 %v4017
    %4482 = vmatprep.subr.mxu0 0.0
    %4483 = vmatpush1.msra.mxu0 %v4014
    %4484 = vmatprep.subr.mxu0 0.0
    %4485 = vmatpush1.msra.mxu0 %v4011
    %4486 = vmatprep.subr.mxu0 0.0
    %4487 = vmatpush1.msra.mxu0 %v4008
    %4488 = vmatprep.subr.mxu0 0.0
    %4489 = vmatpush1.msra.mxu0 %v4005
    %4490 = vmatprep.subr.mxu0 0.0
    %4491 = vmatpush1.msra.mxu0 %v4002
    %4492 = vmatprep.subr.mxu0 0.0
    %4493 = vmatpush1.msra.mxu0 %v3999
    %4494 = vmatprep.subr.mxu0 0.0
    %4495 = vmatpush1.msra.mxu0 %v3996
    %4496 = vmatprep.subr.mxu0 0.0
    %4497 = vmatpush1.msra.mxu0 %v3993
    %4498 = vmatprep.subr.mxu0 0.0
    %4499 = vmatpush1.msra.mxu0 %v3990
    %4500 = vmatprep.subr.mxu0 0.0
    %4501 = vmatpush2.msra.mxu0 0.0
    %4502 = vmatprep.subr.mxu0 0.0
    %4503 = vmatpush2.msra.mxu0 0.0
    %4504 = vmatprep.subr.mxu0 0.0
    %4505 = vmatpush2.msra.mxu0 0.0
    %4506 = vmatprep.subr.mxu0 0.0
    %4507 = vmatpush2.msra.mxu0 0.0
    %4508 = vmatprep.subr.mxu0 0.0
    %4509 = vmatpush2.msra.mxu0 0.0
    %4510 = vmatprep.subr.mxu0 0.0
    %4511 = vmatpush2.msra.mxu0 0.0
    %4512 = vmatprep.subr.mxu0 0.0
    %4513 = vmatpush2.msra.mxu0 0.0
    %4514 = vmatprep.subr.mxu0 0.0
    %4515 = vmatpush2.msra.mxu0 0.0
    %4516 = vmatprep.subr.mxu0 0.0
    %4517 = vmatpush2.msra.mxu0 0.0
    %4518 = vmatprep.subr.mxu0 0.0
    %4519 = vmatpush2.msra.mxu0 0.0
    %4520 = vmatprep.subr.mxu0 0.0
    %4521 = vmatpush2.msra.mxu0 0.0
    %4522 = vmatprep.subr.mxu0 0.0
    %4523 = vmatpush2.msra.mxu0 0.0
    %4524 = vmatprep.subr.mxu0 0.0
    %4525 = vmatpush2.msra.mxu0 0.0
    %4526 = vmatprep.subr.mxu0 0.0
    %4527 = vmatpush2.msra.mxu0 0.0
    %4528 = vmatprep.subr.mxu0 0.0
    %4529 = vmatpush2.msra.mxu0 0.0
    %4530 = vmatprep.subr.mxu0 0.0
    %4531 = vmatpush2.msra.mxu0 0.0
    %4532 = vmatprep.mubr.f32.mxu0 0.0
    %4533 = vmatmul.mubr.f32.gmra.mxu0 %v4395
    %v4534 = vpop.f32.mrf.mxu0
    %v4535 = vadd.f32 %v4230, %v4534
    %v4536 = vpop.f32.mrf.mxu0
    %4537 = vdwg.mxu0
    %v4539 = vrot.slane %v4464, 6
    %v4541 = vadd.f32 %v4133, %v4539
    %v4542 = vxor.u32 %v4541, 2147483648
    %v4543 = vmul.f32 %v4542, 1.442695
    %v4544 = vpow.pop %v4543
    %v4545 = vadd.f32 %v4544, 1.0
    %v4546 = vrcp.pop %v4545
    %v4547 = vmul.f32 1.0, %v4546
    %v4549 = vrot.slane %v4466, 6
    %v4551 = vadd.f32 %v4135, %v4549
    %v4552 = vxor.u32 %v4551, 2147483648
    %v4553 = vmul.f32 %v4552, 1.442695
    %v4554 = vpow.pop %v4553
    %v4555 = vadd.f32 %v4554, 1.0
    %v4556 = vrcp.pop %v4555
    %v4557 = vmul.f32 1.0, %v4556
    %v4559 = vrot.slane %v4535, 6
    %v4561 = vmul.f32 %v4547, %v4559
    %v4562 = vadd.f32 %v4210, %v4561
    %v4563 = vtanh.pop %v4562
    %v4564 = vsub.f32 1.0, %v4557
    %v4565 = vmul.f32 %v4564, %v4563
    %v4567 = vrot.slane %v4395, 6
    %v4569 = vmul.f32 %v4557, %v4567
    %v4570 = vadd.f32 %v4565, %v4569
    %4571 = vst [vmem:[#allocation2] sm:$0xc] %v4570
    %v4573 = vrot.slane %v4570, 2
    %4575 = vmatprep.subr.mxu0 %v4034
    %4576 = vmatpush1.msra.mxu0 %v4033
    %4577 = vmatprep.subr.mxu0 %v4031
    %4578 = vmatpush1.msra.mxu0 %v4030
    %4579 = vmatprep.subr.mxu0 %v4028
    %4580 = vmatpush1.msra.mxu0 %v4027
    %4581 = vmatprep.subr.mxu0 %v4025
    %4582 = vmatpush1.msra.mxu0 %v4024
    %4583 = vmatprep.subr.mxu0 %v4022
    %4584 = vmatpush1.msra.mxu0 %v4021
    %4585 = vmatprep.subr.mxu0 %v4019
    %4586 = vmatpush1.msra.mxu0 %v4018
    %4587 = vmatprep.subr.mxu0 %v4016
    %4588 = vmatpush1.msra.mxu0 %v4015
    %4589 = vmatprep.subr.mxu0 %v4013
    %4590 = vmatpush1.msra.mxu0 %v4012
    %4591 = vmatprep.subr.mxu0 %v4010
    %4592 = vmatpush1.msra.mxu0 %v4009
    %4593 = vmatprep.subr.mxu0 %v4007
    %4594 = vmatpush1.msra.mxu0 %v4006
    %4595 = vmatprep.subr.mxu0 %v4004
    %4596 = vmatpush1.msra.mxu0 %v4003
    %4597 = vmatprep.subr.mxu0 %v4001
    %4598 = vmatpush1.msra.mxu0 %v4000
    %4599 = vmatprep.subr.mxu0 %v3998
    %4600 = vmatpush1.msra.mxu0 %v3997
    %4601 = vmatprep.subr.mxu0 %v3995
    %4602 = vmatpush1.msra.mxu0 %v3994
    %4603 = vmatprep.subr.mxu0 %v3992
    %4604 = vmatpush1.msra.mxu0 %v3991
    %4605 = vmatprep.subr.mxu0 %v3989
    %4606 = vmatpush1.msra.mxu0 %v3988
    %4607 = vmatprep.subr.mxu0 0.0
    %4608 = vmatpush2.msra.mxu0 0.0
    %4609 = vmatprep.subr.mxu0 0.0
    %4610 = vmatpush2.msra.mxu0 0.0
    %4611 = vmatprep.subr.mxu0 0.0
    %4612 = vmatpush2.msra.mxu0 0.0
    %4613 = vmatprep.subr.mxu0 0.0
    %4614 = vmatpush2.msra.mxu0 0.0
    %4615 = vmatprep.subr.mxu0 0.0
    %4616 = vmatpush2.msra.mxu0 0.0
    %4617 = vmatprep.subr.mxu0 0.0
    %4618 = vmatpush2.msra.mxu0 0.0
    %4619 = vmatprep.subr.mxu0 0.0
    %4620 = vmatpush2.msra.mxu0 0.0
    %4621 = vmatprep.subr.mxu0 0.0
    %4622 = vmatpush2.msra.mxu0 0.0
    %4623 = vmatprep.subr.mxu0 0.0
    %4624 = vmatpush2.msra.mxu0 0.0
    %4625 = vmatprep.subr.mxu0 0.0
    %4626 = vmatpush2.msra.mxu0 0.0
    %4627 = vmatprep.subr.mxu0 0.0
    %4628 = vmatpush2.msra.mxu0 0.0
    %4629 = vmatprep.subr.mxu0 0.0
    %4630 = vmatpush2.msra.mxu0 0.0
    %4631 = vmatprep.subr.mxu0 0.0
    %4632 = vmatpush2.msra.mxu0 0.0
    %4633 = vmatprep.subr.mxu0 0.0
    %4634 = vmatpush2.msra.mxu0 0.0
    %4635 = vmatprep.subr.mxu0 0.0
    %4636 = vmatpush2.msra.mxu0 0.0
    %4637 = vmatprep.subr.mxu0 0.0
    %4638 = vmatpush2.msra.mxu0 0.0
    %4639 = vmatprep.mubr.f32.mxu0 0.0
    %4640 = vmatmul.mubr.f32.gmra.mxu0 %v4573
    %v4641 = vpop.f32.mrf.mxu0
    %v4642 = vadd.f32 %v4222, %v4641
    %v4643 = vpop.f32.mrf.mxu0
    %v4644 = vadd.f32 %v4226, %v4643
    %4645 = vdwg.mxu0
    %4646 = vmatprep.subr.mxu0 0.0
    %4647 = vmatpush1.msra.mxu0 %v4035
    %4648 = vmatprep.subr.mxu0 0.0
    %4649 = vmatpush1.msra.mxu0 %v4032
    %4650 = vmatprep.subr.mxu0 0.0
    %4651 = vmatpush1.msra.mxu0 %v4029
    %4652 = vmatprep.subr.mxu0 0.0
    %4653 = vmatpush1.msra.mxu0 %v4026
    %4654 = vmatprep.subr.mxu0 0.0
    %4655 = vmatpush1.msra.mxu0 %v4023
    %4656 = vmatprep.subr.mxu0 0.0
    %4657 = vmatpush1.msra.mxu0 %v4020
    %4658 = vmatprep.subr.mxu0 0.0
    %4659 = vmatpush1.msra.mxu0 %v4017
    %4660 = vmatprep.subr.mxu0 0.0
    %4661 = vmatpush1.msra.mxu0 %v4014
    %4662 = vmatprep.subr.mxu0 0.0
    %4663 = vmatpush1.msra.mxu0 %v4011
    %4664 = vmatprep.subr.mxu0 0.0
    %4665 = vmatpush1.msra.mxu0 %v4008
    %4666 = vmatprep.subr.mxu0 0.0
    %4667 = vmatpush1.msra.mxu0 %v4005
    %4668 = vmatprep.subr.mxu0 0.0
    %4669 = vmatpush1.msra.mxu0 %v4002
    %4670 = vmatprep.subr.mxu0 0.0
    %4671 = vmatpush1.msra.mxu0 %v3999
    %4672 = vmatprep.subr.mxu0 0.0
    %4673 = vmatpush1.msra.mxu0 %v3996
    %4674 = vmatprep.subr.mxu0 0.0
    %4675 = vmatpush1.msra.mxu0 %v3993
    %4676 = vmatprep.subr.mxu0 0.0
    %4677 = vmatpush1.msra.mxu0 %v3990
    %4678 = vmatprep.subr.mxu0 0.0
    %4679 = vmatpush2.msra.mxu0 0.0
    %4680 = vmatprep.subr.mxu0 0.0
    %4681 = vmatpush2.msra.mxu0 0.0
    %4682 = vmatprep.subr.mxu0 0.0
    %4683 = vmatpush2.msra.mxu0 0.0
    %4684 = vmatprep.subr.mxu0 0.0
    %4685 = vmatpush2.msra.mxu0 0.0
    %4686 = vmatprep.subr.mxu0 0.0
    %4687 = vmatpush2.msra.mxu0 0.0
    %4688 = vmatprep.subr.mxu0 0.0
    %4689 = vmatpush2.msra.mxu0 0.0
    %4690 = vmatprep.subr.mxu0 0.0
    %4691 = vmatpush2.msra.mxu0 0.0
    %4692 = vmatprep.subr.mxu0 0.0
    %4693 = vmatpush2.msra.mxu0 0.0
    %4694 = vmatprep.subr.mxu0 0.0
    %4695 = vmatpush2.msra.mxu0 0.0
    %4696 = vmatprep.subr.mxu0 0.0
    %4697 = vmatpush2.msra.mxu0 0.0
    %4698 = vmatprep.subr.mxu0 0.0
    %4699 = vmatpush2.msra.mxu0 0.0
    %4700 = vmatprep.subr.mxu0 0.0
    %4701 = vmatpush2.msra.mxu0 0.0
    %4702 = vmatprep.subr.mxu0 0.0
    %4703 = vmatpush2.msra.mxu0 0.0
    %4704 = vmatprep.subr.mxu0 0.0
    %4705 = vmatpush2.msra.mxu0 0.0
    %4706 = vmatprep.subr.mxu0 0.0
    %4707 = vmatpush2.msra.mxu0 0.0
    %4708 = vmatprep.subr.mxu0 0.0
    %4709 = vmatpush2.msra.mxu0 0.0
    %4710 = vmatprep.mubr.f32.mxu0 0.0
    %4711 = vmatmul.mubr.f32.gmra.mxu0 %v4573
    %v4712 = vpop.f32.mrf.mxu0
    %v4713 = vadd.f32 %v4230, %v4712
    %v4714 = vpop.f32.mrf.mxu0
    %4715 = vdwg.mxu0
    %v4717 = vrot.slane %v4642, 4
    %v4719 = vadd.f32 %v4133, %v4717
    %v4720 = vxor.u32 %v4719, 2147483648
    %v4721 = vmul.f32 %v4720, 1.442695
    %v4722 = vpow.pop %v4721
    %v4723 = vadd.f32 %v4722, 1.0
    %v4724 = vrcp.pop %v4723
    %v4725 = vmul.f32 1.0, %v4724
    %v4727 = vrot.slane %v4644, 4
    %v4729 = vadd.f32 %v4135, %v4727
    %v4730 = vxor.u32 %v4729, 2147483648
    %v4731 = vmul.f32 %v4730, 1.442695
    %v4732 = vpow.pop %v4731
    %v4733 = vadd.f32 %v4732, 1.0
    %v4734 = vrcp.pop %v4733
    %v4735 = vmul.f32 1.0, %v4734
    %v4737 = vrot.slane %v4713, 4
    %v4739 = vmul.f32 %v4725, %v4737
    %v4740 = vadd.f32 %v4210, %v4739
    %v4741 = vtanh.pop %v4740
    %v4742 = vsub.f32 1.0, %v4735
    %v4743 = vmul.f32 %v4742, %v4741
    %v4744 = vrot.slane %v4570, 6
    %v4746 = vmul.f32 %v4735, %v4744
    %v4747 = vadd.f32 %v4743, %v4746
    %4748 = vst [vmem:[#allocation2] sm:$0x30] %v4747
    %v4750 = vrot.slane %v4747, 4
    %4752 = vmatprep.subr.mxu0 %v4034
    %4753 = vmatpush1.msra.mxu0 %v4033
    %4754 = vmatprep.subr.mxu0 %v4031
    %4755 = vmatpush1.msra.mxu0 %v4030
    %4756 = vmatprep.subr.mxu0 %v4028
    %4757 = vmatpush1.msra.mxu0 %v4027
    %4758 = vmatprep.subr.mxu0 %v4025
    %4759 = vmatpush1.msra.mxu0 %v4024
    %4760 = vmatprep.subr.mxu0 %v4022
    %4761 = vmatpush1.msra.mxu0 %v4021
    %4762 = vmatprep.subr.mxu0 %v4019
    %4763 = vmatpush1.msra.mxu0 %v4018
    %4764 = vmatprep.subr.mxu0 %v4016
    %4765 = vmatpush1.msra.mxu0 %v4015
    %4766 = vmatprep.subr.mxu0 %v4013
    %4767 = vmatpush1.msra.mxu0 %v4012
    %4768 = vmatprep.subr.mxu0 %v4010
    %4769 = vmatpush1.msra.mxu0 %v4009
    %4770 = vmatprep.subr.mxu0 %v4007
    %4771 = vmatpush1.msra.mxu0 %v4006
    %4772 = vmatprep.subr.mxu0 %v4004
    %4773 = vmatpush1.msra.mxu0 %v4003
    %4774 = vmatprep.subr.mxu0 %v4001
    %4775 = vmatpush1.msra.mxu0 %v4000
    %4776 = vmatprep.subr.mxu0 %v3998
    %4777 = vmatpush1.msra.mxu0 %v3997
    %4778 = vmatprep.subr.mxu0 %v3995
    %4779 = vmatpush1.msra.mxu0 %v3994
    %4780 = vmatprep.subr.mxu0 %v3992
    %4781 = vmatpush1.msra.mxu0 %v3991
    %4782 = vmatprep.subr.mxu0 %v3989
    %4783 = vmatpush1.msra.mxu0 %v3988
    %4784 = vmatprep.subr.mxu0 0.0
    %4785 = vmatpush2.msra.mxu0 0.0
    %4786 = vmatprep.subr.mxu0 0.0
    %4787 = vmatpush2.msra.mxu0 0.0
    %4788 = vmatprep.subr.mxu0 0.0
    %4789 = vmatpush2.msra.mxu0 0.0
    %4790 = vmatprep.subr.mxu0 0.0
    %4791 = vmatpush2.msra.mxu0 0.0
    %4792 = vmatprep.subr.mxu0 0.0
    %4793 = vmatpush2.msra.mxu0 0.0
    %4794 = vmatprep.subr.mxu0 0.0
    %4795 = vmatpush2.msra.mxu0 0.0
    %4796 = vmatprep.subr.mxu0 0.0
    %4797 = vmatpush2.msra.mxu0 0.0
    %4798 = vmatprep.subr.mxu0 0.0
    %4799 = vmatpush2.msra.mxu0 0.0
    %4800 = vmatprep.subr.mxu0 0.0
    %4801 = vmatpush2.msra.mxu0 0.0
    %4802 = vmatprep.subr.mxu0 0.0
    %4803 = vmatpush2.msra.mxu0 0.0
    %4804 = vmatprep.subr.mxu0 0.0
    %4805 = vmatpush2.msra.mxu0 0.0
    %4806 = vmatprep.subr.mxu0 0.0
    %4807 = vmatpush2.msra.mxu0 0.0
    %4808 = vmatprep.subr.mxu0 0.0
    %4809 = vmatpush2.msra.mxu0 0.0
    %4810 = vmatprep.subr.mxu0 0.0
    %4811 = vmatpush2.msra.mxu0 0.0
    %4812 = vmatprep.subr.mxu0 0.0
    %4813 = vmatpush2.msra.mxu0 0.0
    %4814 = vmatprep.subr.mxu0 0.0
    %4815 = vmatpush2.msra.mxu0 0.0
    %4816 = vmatprep.mubr.f32.mxu0 0.0
    %4817 = vmatmul.mubr.f32.gmra.mxu0 %v4750
    %v4818 = vpop.f32.mrf.mxu0
    %v4819 = vadd.f32 %v4222, %v4818
    %v4820 = vpop.f32.mrf.mxu0
    %v4821 = vadd.f32 %v4226, %v4820
    %4822 = vdwg.mxu0
    %4823 = vmatprep.subr.mxu0 0.0
    %4824 = vmatpush1.msra.mxu0 %v4035
    %4825 = vmatprep.subr.mxu0 0.0
    %4826 = vmatpush1.msra.mxu0 %v4032
    %4827 = vmatprep.subr.mxu0 0.0
    %4828 = vmatpush1.msra.mxu0 %v4029
    %4829 = vmatprep.subr.mxu0 0.0
    %4830 = vmatpush1.msra.mxu0 %v4026
    %4831 = vmatprep.subr.mxu0 0.0
    %4832 = vmatpush1.msra.mxu0 %v4023
    %4833 = vmatprep.subr.mxu0 0.0
    %4834 = vmatpush1.msra.mxu0 %v4020
    %4835 = vmatprep.subr.mxu0 0.0
    %4836 = vmatpush1.msra.mxu0 %v4017
    %4837 = vmatprep.subr.mxu0 0.0
    %4838 = vmatpush1.msra.mxu0 %v4014
    %4839 = vmatprep.subr.mxu0 0.0
    %4840 = vmatpush1.msra.mxu0 %v4011
    %4841 = vmatprep.subr.mxu0 0.0
    %4842 = vmatpush1.msra.mxu0 %v4008
    %4843 = vmatprep.subr.mxu0 0.0
    %4844 = vmatpush1.msra.mxu0 %v4005
    %4845 = vmatprep.subr.mxu0 0.0
    %4846 = vmatpush1.msra.mxu0 %v4002
    %4847 = vmatprep.subr.mxu0 0.0
    %4848 = vmatpush1.msra.mxu0 %v3999
    %4849 = vmatprep.subr.mxu0 0.0
    %4850 = vmatpush1.msra.mxu0 %v3996
    %4851 = vmatprep.subr.mxu0 0.0
    %4852 = vmatpush1.msra.mxu0 %v3993
    %4853 = vmatprep.subr.mxu0 0.0
    %4854 = vmatpush1.msra.mxu0 %v3990
    %4855 = vmatprep.subr.mxu0 0.0
    %4856 = vmatpush2.msra.mxu0 0.0
    %4857 = vmatprep.subr.mxu0 0.0
    %4858 = vmatpush2.msra.mxu0 0.0
    %4859 = vmatprep.subr.mxu0 0.0
    %4860 = vmatpush2.msra.mxu0 0.0
    %4861 = vmatprep.subr.mxu0 0.0
    %4862 = vmatpush2.msra.mxu0 0.0
    %4863 = vmatprep.subr.mxu0 0.0
    %4864 = vmatpush2.msra.mxu0 0.0
    %4865 = vmatprep.subr.mxu0 0.0
    %4866 = vmatpush2.msra.mxu0 0.0
    %4867 = vmatprep.subr.mxu0 0.0
    %4868 = vmatpush2.msra.mxu0 0.0
    %4869 = vmatprep.subr.mxu0 0.0
    %4870 = vmatpush2.msra.mxu0 0.0
    %4871 = vmatprep.subr.mxu0 0.0
    %4872 = vmatpush2.msra.mxu0 0.0
    %4873 = vmatprep.subr.mxu0 0.0
    %4874 = vmatpush2.msra.mxu0 0.0
    %4875 = vmatprep.subr.mxu0 0.0
    %4876 = vmatpush2.msra.mxu0 0.0
    %4877 = vmatprep.subr.mxu0 0.0
    %4878 = vmatpush2.msra.mxu0 0.0
    %4879 = vmatprep.subr.mxu0 0.0
    %4880 = vmatpush2.msra.mxu0 0.0
    %4881 = vmatprep.subr.mxu0 0.0
    %4882 = vmatpush2.msra.mxu0 0.0
    %4883 = vmatprep.subr.mxu0 0.0
    %4884 = vmatpush2.msra.mxu0 0.0
    %4885 = vmatprep.subr.mxu0 0.0
    %4886 = vmatpush2.msra.mxu0 0.0
    %4887 = vmatprep.mubr.f32.mxu0 0.0
    %4888 = vmatmul.mubr.f32.gmra.mxu0 %v4750
    %v4889 = vpop.f32.mrf.mxu0
    %v4890 = vadd.f32 %v4230, %v4889
    %v4891 = vpop.f32.mrf.mxu0
    %4892 = vdwg.mxu0
    %v4894 = vrot.slane %v4819, 2
    %v4896 = vadd.f32 %v4133, %v4894
    %v4897 = vxor.u32 %v4896, 2147483648
    %v4898 = vmul.f32 %v4897, 1.442695
    %v4899 = vpow.pop %v4898
    %v4900 = vadd.f32 %v4899, 1.0
    %v4901 = vrcp.pop %v4900
    %v4902 = vmul.f32 1.0, %v4901
    %v4904 = vrot.slane %v4821, 2
    %v4906 = vadd.f32 %v4135, %v4904
    %v4907 = vxor.u32 %v4906, 2147483648
    %v4908 = vmul.f32 %v4907, 1.442695
    %v4909 = vpow.pop %v4908
    %v4910 = vadd.f32 %v4909, 1.0
    %v4911 = vrcp.pop %v4910
    %v4912 = vmul.f32 1.0, %v4911
    %v4914 = vrot.slane %v4890, 2
    %v4916 = vmul.f32 %v4902, %v4914
    %v4917 = vadd.f32 %v4210, %v4916
    %v4918 = vtanh.pop %v4917
    %v4919 = vsub.f32 1.0, %v4912
    %v4920 = vmul.f32 %v4919, %v4918
    %v4921 = vrot.slane %v4747, 6
    %v4923 = vmul.f32 %v4912, %v4921
    %v4924 = vadd.f32 %v4920, %v4923
    %4925 = vst [vmem:[#allocation2] sm:$0xc0] %v4924
    %v4927 = vrot.slane %v4924, 6
    %4929 = vmatprep.subr.mxu0 %v4034
    %4930 = vmatpush1.msra.mxu0 %v4033
    %4931 = vmatprep.subr.mxu0 %v4031
    %4932 = vmatpush1.msra.mxu0 %v4030
    %4933 = vmatprep.subr.mxu0 %v4028
    %4934 = vmatpush1.msra.mxu0 %v4027
    %4935 = vmatprep.subr.mxu0 %v4025
    %4936 = vmatpush1.msra.mxu0 %v4024
    %4937 = vmatprep.subr.mxu0 %v4022
    %4938 = vmatpush1.msra.mxu0 %v4021
    %4939 = vmatprep.subr.mxu0 %v4019
    %4940 = vmatpush1.msra.mxu0 %v4018
    %4941 = vmatprep.subr.mxu0 %v4016
    %4942 = vmatpush1.msra.mxu0 %v4015
    %4943 = vmatprep.subr.mxu0 %v4013
    %4944 = vmatpush1.msra.mxu0 %v4012
    %4945 = vmatprep.subr.mxu0 %v4010
    %4946 = vmatpush1.msra.mxu0 %v4009
    %4947 = vmatprep.subr.mxu0 %v4007
    %4948 = vmatpush1.msra.mxu0 %v4006
    %4949 = vmatprep.subr.mxu0 %v4004
    %4950 = vmatpush1.msra.mxu0 %v4003
    %4951 = vmatprep.subr.mxu0 %v4001
    %4952 = vmatpush1.msra.mxu0 %v4000
    %4953 = vmatprep.subr.mxu0 %v3998
    %4954 = vmatpush1.msra.mxu0 %v3997
    %4955 = vmatprep.subr.mxu0 %v3995
    %4956 = vmatpush1.msra.mxu0 %v3994
    %4957 = vmatprep.subr.mxu0 %v3992
    %4958 = vmatpush1.msra.mxu0 %v3991
    %4959 = vmatprep.subr.mxu0 %v3989
    %4960 = vmatpush1.msra.mxu0 %v3988
    %4961 = vmatprep.subr.mxu0 0.0
    %4962 = vmatpush2.msra.mxu0 0.0
    %4963 = vmatprep.subr.mxu0 0.0
    %4964 = vmatpush2.msra.mxu0 0.0
    %4965 = vmatprep.subr.mxu0 0.0
    %4966 = vmatpush2.msra.mxu0 0.0
    %4967 = vmatprep.subr.mxu0 0.0
    %4968 = vmatpush2.msra.mxu0 0.0
    %4969 = vmatprep.subr.mxu0 0.0
    %4970 = vmatpush2.msra.mxu0 0.0
    %4971 = vmatprep.subr.mxu0 0.0
    %4972 = vmatpush2.msra.mxu0 0.0
    %4973 = vmatprep.subr.mxu0 0.0
    %4974 = vmatpush2.msra.mxu0 0.0
    %4975 = vmatprep.subr.mxu0 0.0
    %4976 = vmatpush2.msra.mxu0 0.0
    %4977 = vmatprep.subr.mxu0 0.0
    %4978 = vmatpush2.msra.mxu0 0.0
    %4979 = vmatprep.subr.mxu0 0.0
    %4980 = vmatpush2.msra.mxu0 0.0
    %4981 = vmatprep.subr.mxu0 0.0
    %4982 = vmatpush2.msra.mxu0 0.0
    %4983 = vmatprep.subr.mxu0 0.0
    %4984 = vmatpush2.msra.mxu0 0.0
    %4985 = vmatprep.subr.mxu0 0.0
    %4986 = vmatpush2.msra.mxu0 0.0
    %4987 = vmatprep.subr.mxu0 0.0
    %4988 = vmatpush2.msra.mxu0 0.0
    %4989 = vmatprep.subr.mxu0 0.0
    %4990 = vmatpush2.msra.mxu0 0.0
    %4991 = vmatprep.subr.mxu0 0.0
    %4992 = vmatpush2.msra.mxu0 0.0
    %4993 = vmatprep.mubr.f32.mxu0 0.0
    %4994 = vmatmul.mubr.f32.gmra.mxu0 %v4927
    %v4995 = vpop.f32.mrf.mxu0
    %v4996 = vadd.f32 %v4222, %v4995
    %v4997 = vpop.f32.mrf.mxu0
    %v4998 = vadd.f32 %v4226, %v4997
    %4999 = vdwg.mxu0
    %5000 = vmatprep.subr.mxu0 0.0
    %5001 = vmatpush1.msra.mxu0 %v4035
    %5002 = vmatprep.subr.mxu0 0.0
    %5003 = vmatpush1.msra.mxu0 %v4032
    %5004 = vmatprep.subr.mxu0 0.0
    %5005 = vmatpush1.msra.mxu0 %v4029
    %5006 = vmatprep.subr.mxu0 0.0
    %5007 = vmatpush1.msra.mxu0 %v4026
    %5008 = vmatprep.subr.mxu0 0.0
    %5009 = vmatpush1.msra.mxu0 %v4023
    %5010 = vmatprep.subr.mxu0 0.0
    %5011 = vmatpush1.msra.mxu0 %v4020
    %5012 = vmatprep.subr.mxu0 0.0
    %5013 = vmatpush1.msra.mxu0 %v4017
    %5014 = vmatprep.subr.mxu0 0.0
    %5015 = vmatpush1.msra.mxu0 %v4014
    %5016 = vmatprep.subr.mxu0 0.0
    %5017 = vmatpush1.msra.mxu0 %v4011
    %5018 = vmatprep.subr.mxu0 0.0
    %5019 = vmatpush1.msra.mxu0 %v4008
    %5020 = vmatprep.subr.mxu0 0.0
    %5021 = vmatpush1.msra.mxu0 %v4005
    %5022 = vmatprep.subr.mxu0 0.0
    %5023 = vmatpush1.msra.mxu0 %v4002
    %5024 = vmatprep.subr.mxu0 0.0
    %5025 = vmatpush1.msra.mxu0 %v3999
    %5026 = vmatprep.subr.mxu0 0.0
    %5027 = vmatpush1.msra.mxu0 %v3996
    %5028 = vmatprep.subr.mxu0 0.0
    %5029 = vmatpush1.msra.mxu0 %v3993
    %5030 = vmatprep.subr.mxu0 0.0
    %5031 = vmatpush1.msra.mxu0 %v3990
    %5032 = vmatprep.subr.mxu0 0.0
    %5033 = vmatpush2.msra.mxu0 0.0
    %5034 = vmatprep.subr.mxu0 0.0
    %5035 = vmatpush2.msra.mxu0 0.0
    %5036 = vmatprep.subr.mxu0 0.0
    %5037 = vmatpush2.msra.mxu0 0.0
    %5038 = vmatprep.subr.mxu0 0.0
    %5039 = vmatpush2.msra.mxu0 0.0
    %5040 = vmatprep.subr.mxu0 0.0
    %5041 = vmatpush2.msra.mxu0 0.0
    %5042 = vmatprep.subr.mxu0 0.0
    %5043 = vmatpush2.msra.mxu0 0.0
    %5044 = vmatprep.subr.mxu0 0.0
    %5045 = vmatpush2.msra.mxu0 0.0
    %5046 = vmatprep.subr.mxu0 0.0
    %5047 = vmatpush2.msra.mxu0 0.0
    %5048 = vmatprep.subr.mxu0 0.0
    %5049 = vmatpush2.msra.mxu0 0.0
    %5050 = vmatprep.subr.mxu0 0.0
    %5051 = vmatpush2.msra.mxu0 0.0
    %5052 = vmatprep.subr.mxu0 0.0
    %5053 = vmatpush2.msra.mxu0 0.0
    %5054 = vmatprep.subr.mxu0 0.0
    %5055 = vmatpush2.msra.mxu0 0.0
    %5056 = vmatprep.subr.mxu0 0.0
    %5057 = vmatpush2.msra.mxu0 0.0
    %5058 = vmatprep.subr.mxu0 0.0
    %5059 = vmatpush2.msra.mxu0 0.0
    %5060 = vmatprep.subr.mxu0 0.0
    %5061 = vmatpush2.msra.mxu0 0.0
    %5062 = vmatprep.subr.mxu0 0.0
    %5063 = vmatpush2.msra.mxu0 0.0
    %5064 = vmatprep.mubr.f32.mxu0 0.0
    %5065 = vmatmul.mubr.f32.gmra.mxu0 %v4927
    %v5066 = vpop.f32.mrf.mxu0
    %v5067 = vadd.f32 %v4230, %v5066
    %v5068 = vpop.f32.mrf.mxu0
    %5069 = vdwg.mxu0
    %v5070 = vadd.f32 %v4139, %v4996
    %v5071 = vxor.u32 %v5070, 2147483648
    %v5072 = vmul.f32 %v5071, 1.442695
    %v5073 = vpow.pop %v5072
    %v5074 = vadd.f32 %v5073, 1.0
    %v5075 = vrcp.pop %v5074
    %v5076 = vmul.f32 1.0, %v5075
    %v5077 = vadd.f32 %v4141, %v4998
    %v5078 = vxor.u32 %v5077, 2147483648
    %v5079 = vmul.f32 %v5078, 1.442695
    %v5080 = vpow.pop %v5079
    %v5081 = vadd.f32 %v5080, 1.0
    %v5082 = vrcp.pop %v5081
    %v5083 = vmul.f32 1.0, %v5082
    %v5084 = vmul.f32 %v5076, %v5067
    %v5085 = vadd.f32 %v4215, %v5084
    %v5086 = vtanh.pop %v5085
    %v5087 = vsub.f32 1.0, %v5083
    %v5088 = vmul.f32 %v5087, %v5086
    %v5089 = vmul.f32 %v5083, %v4927
    %v5090 = vadd.f32 %v5088, %v5089
    %5091 = vst [vmem:[#allocation2 + $0x8] sm:$0x3] %v5090
    %5092 = vmatprep.subr.mxu0 %v4034
    %5093 = vmatpush1.msra.mxu0 %v4033
    %5094 = vmatprep.subr.mxu0 %v4031
    %5095 = vmatpush1.msra.mxu0 %v4030
    %5096 = vmatprep.subr.mxu0 %v4028
    %5097 = vmatpush1.msra.mxu0 %v4027
    %5098 = vmatprep.subr.mxu0 %v4025
    %5099 = vmatpush1.msra.mxu0 %v4024
    %5100 = vmatprep.subr.mxu0 %v4022
    %5101 = vmatpush1.msra.mxu0 %v4021
    %5102 = vmatprep.subr.mxu0 %v4019
    %5103 = vmatpush1.msra.mxu0 %v4018
    %5104 = vmatprep.subr.mxu0 %v4016
    %5105 = vmatpush1.msra.mxu0 %v4015
    %5106 = vmatprep.subr.mxu0 %v4013
    %5107 = vmatpush1.msra.mxu0 %v4012
    %5108 = vmatprep.subr.mxu0 %v4010
    %5109 = vmatpush1.msra.mxu0 %v4009
    %5110 = vmatprep.subr.mxu0 %v4007
    %5111 = vmatpush1.msra.mxu0 %v4006
    %5112 = vmatprep.subr.mxu0 %v4004
    %5113 = vmatpush1.msra.mxu0 %v4003
    %5114 = vmatprep.subr.mxu0 %v4001
    %5115 = vmatpush1.msra.mxu0 %v4000
    %5116 = vmatprep.subr.mxu0 %v3998
    %5117 = vmatpush1.msra.mxu0 %v3997
    %5118 = vmatprep.subr.mxu0 %v3995
    %5119 = vmatpush1.msra.mxu0 %v3994
    %5120 = vmatprep.subr.mxu0 %v3992
    %5121 = vmatpush1.msra.mxu0 %v3991
    %5122 = vmatprep.subr.mxu0 %v3989
    %5123 = vmatpush1.msra.mxu0 %v3988
    %5124 = vmatprep.subr.mxu0 0.0
    %5125 = vmatpush2.msra.mxu0 0.0
    %5126 = vmatprep.subr.mxu0 0.0
    %5127 = vmatpush2.msra.mxu0 0.0
    %5128 = vmatprep.subr.mxu0 0.0
    %5129 = vmatpush2.msra.mxu0 0.0
    %5130 = vmatprep.subr.mxu0 0.0
    %5131 = vmatpush2.msra.mxu0 0.0
    %5132 = vmatprep.subr.mxu0 0.0
    %5133 = vmatpush2.msra.mxu0 0.0
    %5134 = vmatprep.subr.mxu0 0.0
    %5135 = vmatpush2.msra.mxu0 0.0
    %5136 = vmatprep.subr.mxu0 0.0
    %5137 = vmatpush2.msra.mxu0 0.0
    %5138 = vmatprep.subr.mxu0 0.0
    %5139 = vmatpush2.msra.mxu0 0.0
    %5140 = vmatprep.subr.mxu0 0.0
    %5141 = vmatpush2.msra.mxu0 0.0
    %5142 = vmatprep.subr.mxu0 0.0
    %5143 = vmatpush2.msra.mxu0 0.0
    %5144 = vmatprep.subr.mxu0 0.0
    %5145 = vmatpush2.msra.mxu0 0.0
    %5146 = vmatprep.subr.mxu0 0.0
    %5147 = vmatpush2.msra.mxu0 0.0
    %5148 = vmatprep.subr.mxu0 0.0
    %5149 = vmatpush2.msra.mxu0 0.0
    %5150 = vmatprep.subr.mxu0 0.0
    %5151 = vmatpush2.msra.mxu0 0.0
    %5152 = vmatprep.subr.mxu0 0.0
    %5153 = vmatpush2.msra.mxu0 0.0
    %5154 = vmatprep.subr.mxu0 0.0
    %5155 = vmatpush2.msra.mxu0 0.0
    %5156 = vmatprep.mubr.f32.mxu0 0.0
    %5157 = vmatmul.mubr.f32.gmra.mxu0 %v5090
    %v5158 = vpop.f32.mrf.mxu0
    %v5159 = vadd.f32 %v4222, %v5158
    %v5160 = vpop.f32.mrf.mxu0
    %v5161 = vadd.f32 %v4226, %v5160
    %5162 = vdwg.mxu0
    %5163 = vmatprep.subr.mxu0 0.0
    %5164 = vmatpush1.msra.mxu0 %v4035
    %5165 = vmatprep.subr.mxu0 0.0
    %5166 = vmatpush1.msra.mxu0 %v4032
    %5167 = vmatprep.subr.mxu0 0.0
    %5168 = vmatpush1.msra.mxu0 %v4029
    %5169 = vmatprep.subr.mxu0 0.0
    %5170 = vmatpush1.msra.mxu0 %v4026
    %5171 = vmatprep.subr.mxu0 0.0
    %5172 = vmatpush1.msra.mxu0 %v4023
    %5173 = vmatprep.subr.mxu0 0.0
    %5174 = vmatpush1.msra.mxu0 %v4020
    %5175 = vmatprep.subr.mxu0 0.0
    %5176 = vmatpush1.msra.mxu0 %v4017
    %5177 = vmatprep.subr.mxu0 0.0
    %5178 = vmatpush1.msra.mxu0 %v4014
    %5179 = vmatprep.subr.mxu0 0.0
    %5180 = vmatpush1.msra.mxu0 %v4011
    %5181 = vmatprep.subr.mxu0 0.0
    %5182 = vmatpush1.msra.mxu0 %v4008
    %5183 = vmatprep.subr.mxu0 0.0
    %5184 = vmatpush1.msra.mxu0 %v4005
    %5185 = vmatprep.subr.mxu0 0.0
    %5186 = vmatpush1.msra.mxu0 %v4002
    %5187 = vmatprep.subr.mxu0 0.0
    %5188 = vmatpush1.msra.mxu0 %v3999
    %5189 = vmatprep.subr.mxu0 0.0
    %5190 = vmatpush1.msra.mxu0 %v3996
    %5191 = vmatprep.subr.mxu0 0.0
    %5192 = vmatpush1.msra.mxu0 %v3993
    %5193 = vmatprep.subr.mxu0 0.0
    %5194 = vmatpush1.msra.mxu0 %v3990
    %5195 = vmatprep.subr.mxu0 0.0
    %5196 = vmatpush2.msra.mxu0 0.0
    %5197 = vmatprep.subr.mxu0 0.0
    %5198 = vmatpush2.msra.mxu0 0.0
    %5199 = vmatprep.subr.mxu0 0.0
    %5200 = vmatpush2.msra.mxu0 0.0
    %5201 = vmatprep.subr.mxu0 0.0
    %5202 = vmatpush2.msra.mxu0 0.0
    %5203 = vmatprep.subr.mxu0 0.0
    %5204 = vmatpush2.msra.mxu0 0.0
    %5205 = vmatprep.subr.mxu0 0.0
    %5206 = vmatpush2.msra.mxu0 0.0
    %5207 = vmatprep.subr.mxu0 0.0
    %5208 = vmatpush2.msra.mxu0 0.0
    %5209 = vmatprep.subr.mxu0 0.0
    %5210 = vmatpush2.msra.mxu0 0.0
    %5211 = vmatprep.subr.mxu0 0.0
    %5212 = vmatpush2.msra.mxu0 0.0
    %5213 = vmatprep.subr.mxu0 0.0
    %5214 = vmatpush2.msra.mxu0 0.0
    %5215 = vmatprep.subr.mxu0 0.0
    %5216 = vmatpush2.msra.mxu0 0.0
    %5217 = vmatprep.subr.mxu0 0.0
    %5218 = vmatpush2.msra.mxu0 0.0
    %5219 = vmatprep.subr.mxu0 0.0
    %5220 = vmatpush2.msra.mxu0 0.0
    %5221 = vmatprep.subr.mxu0 0.0
    %5222 = vmatpush2.msra.mxu0 0.0
    %5223 = vmatprep.subr.mxu0 0.0
    %5224 = vmatpush2.msra.mxu0 0.0
    %5225 = vmatprep.subr.mxu0 0.0
    %5226 = vmatpush2.msra.mxu0 0.0
    %5227 = vmatprep.mubr.f32.mxu0 0.0
    %5228 = vmatmul.mubr.f32.gmra.mxu0 %v5090
    %v5229 = vpop.f32.mrf.mxu0
    %v5230 = vadd.f32 %v4230, %v5229
    %v5231 = vpop.f32.mrf.mxu0
    %5232 = vdwg.mxu0
    %v5234 = vrot.slane %v5159, 6
    %v5236 = vadd.f32 %v4139, %v5234
    %v5237 = vxor.u32 %v5236, 2147483648
    %v5238 = vmul.f32 %v5237, 1.442695
    %v5239 = vpow.pop %v5238
    %v5240 = vadd.f32 %v5239, 1.0
    %v5241 = vrcp.pop %v5240
    %v5242 = vmul.f32 1.0, %v5241
    %v5244 = vrot.slane %v5161, 6
    %v5246 = vadd.f32 %v4141, %v5244
    %v5247 = vxor.u32 %v5246, 2147483648
    %v5248 = vmul.f32 %v5247, 1.442695
    %v5249 = vpow.pop %v5248
    %v5250 = vadd.f32 %v5249, 1.0
    %v5251 = vrcp.pop %v5250
    %v5252 = vmul.f32 1.0, %v5251
    %v5254 = vrot.slane %v5230, 6
    %v5256 = vmul.f32 %v5242, %v5254
    %v5257 = vadd.f32 %v4215, %v5256
    %v5258 = vtanh.pop %v5257
    %v5259 = vsub.f32 1.0, %v5252
    %v5260 = vmul.f32 %v5259, %v5258
    %v5262 = vrot.slane %v5090, 6
    %v5264 = vmul.f32 %v5252, %v5262
    %v5265 = vadd.f32 %v5260, %v5264
    %5266 = vst [vmem:[#allocation2 + $0x8] sm:$0xc] %v5265
    %v5268 = vrot.slane %v5265, 2
    %5270 = vmatprep.subr.mxu0 %v4034
    %5271 = vmatpush1.msra.mxu0 %v4033
    %5272 = vmatprep.subr.mxu0 %v4031
    %5273 = vmatpush1.msra.mxu0 %v4030
    %5274 = vmatprep.subr.mxu0 %v4028
    %5275 = vmatpush1.msra.mxu0 %v4027
    %5276 = vmatprep.subr.mxu0 %v4025
    %5277 = vmatpush1.msra.mxu0 %v4024
    %5278 = vmatprep.subr.mxu0 %v4022
    %5279 = vmatpush1.msra.mxu0 %v4021
    %5280 = vmatprep.subr.mxu0 %v4019
    %5281 = vmatpush1.msra.mxu0 %v4018
    %5282 = vmatprep.subr.mxu0 %v4016
    %5283 = vmatpush1.msra.mxu0 %v4015
    %5284 = vmatprep.subr.mxu0 %v4013
    %5285 = vmatpush1.msra.mxu0 %v4012
    %5286 = vmatprep.subr.mxu0 %v4010
    %5287 = vmatpush1.msra.mxu0 %v4009
    %5288 = vmatprep.subr.mxu0 %v4007
    %5289 = vmatpush1.msra.mxu0 %v4006
    %5290 = vmatprep.subr.mxu0 %v4004
    %5291 = vmatpush1.msra.mxu0 %v4003
    %5292 = vmatprep.subr.mxu0 %v4001
    %5293 = vmatpush1.msra.mxu0 %v4000
    %5294 = vmatprep.subr.mxu0 %v3998
    %5295 = vmatpush1.msra.mxu0 %v3997
    %5296 = vmatprep.subr.mxu0 %v3995
    %5297 = vmatpush1.msra.mxu0 %v3994
    %5298 = vmatprep.subr.mxu0 %v3992
    %5299 = vmatpush1.msra.mxu0 %v3991
    %5300 = vmatprep.subr.mxu0 %v3989
    %5301 = vmatpush1.msra.mxu0 %v3988
    %5302 = vmatprep.subr.mxu0 0.0
    %5303 = vmatpush2.msra.mxu0 0.0
    %5304 = vmatprep.subr.mxu0 0.0
    %5305 = vmatpush2.msra.mxu0 0.0
    %5306 = vmatprep.subr.mxu0 0.0
    %5307 = vmatpush2.msra.mxu0 0.0
    %5308 = vmatprep.subr.mxu0 0.0
    %5309 = vmatpush2.msra.mxu0 0.0
    %5310 = vmatprep.subr.mxu0 0.0
    %5311 = vmatpush2.msra.mxu0 0.0
    %5312 = vmatprep.subr.mxu0 0.0
    %5313 = vmatpush2.msra.mxu0 0.0
    %5314 = vmatprep.subr.mxu0 0.0
    %5315 = vmatpush2.msra.mxu0 0.0
    %5316 = vmatprep.subr.mxu0 0.0
    %5317 = vmatpush2.msra.mxu0 0.0
    %5318 = vmatprep.subr.mxu0 0.0
    %5319 = vmatpush2.msra.mxu0 0.0
    %5320 = vmatprep.subr.mxu0 0.0
    %5321 = vmatpush2.msra.mxu0 0.0
    %5322 = vmatprep.subr.mxu0 0.0
    %5323 = vmatpush2.msra.mxu0 0.0
    %5324 = vmatprep.subr.mxu0 0.0
    %5325 = vmatpush2.msra.mxu0 0.0
    %5326 = vmatprep.subr.mxu0 0.0
    %5327 = vmatpush2.msra.mxu0 0.0
    %5328 = vmatprep.subr.mxu0 0.0
    %5329 = vmatpush2.msra.mxu0 0.0
    %5330 = vmatprep.subr.mxu0 0.0
    %5331 = vmatpush2.msra.mxu0 0.0
    %5332 = vmatprep.subr.mxu0 0.0
    %5333 = vmatpush2.msra.mxu0 0.0
    %5334 = vmatprep.mubr.f32.mxu0 0.0
    %5335 = vmatmul.mubr.f32.gmra.mxu0 %v5268
    %v5336 = vpop.f32.mrf.mxu0
    %v5337 = vadd.f32 %v4222, %v5336
    %v5338 = vpop.f32.mrf.mxu0
    %v5339 = vadd.f32 %v4226, %v5338
    %5340 = vdwg.mxu0
    %5341 = vmatprep.subr.mxu0 0.0
    %5342 = vmatpush1.msra.mxu0 %v4035
    %5343 = vmatprep.subr.mxu0 0.0
    %5344 = vmatpush1.msra.mxu0 %v4032
    %5345 = vmatprep.subr.mxu0 0.0
    %5346 = vmatpush1.msra.mxu0 %v4029
    %5347 = vmatprep.subr.mxu0 0.0
    %5348 = vmatpush1.msra.mxu0 %v4026
    %5349 = vmatprep.subr.mxu0 0.0
    %5350 = vmatpush1.msra.mxu0 %v4023
    %5351 = vmatprep.subr.mxu0 0.0
    %5352 = vmatpush1.msra.mxu0 %v4020
    %5353 = vmatprep.subr.mxu0 0.0
    %5354 = vmatpush1.msra.mxu0 %v4017
    %5355 = vmatprep.subr.mxu0 0.0
    %5356 = vmatpush1.msra.mxu0 %v4014
    %5357 = vmatprep.subr.mxu0 0.0
    %5358 = vmatpush1.msra.mxu0 %v4011
    %5359 = vmatprep.subr.mxu0 0.0
    %5360 = vmatpush1.msra.mxu0 %v4008
    %5361 = vmatprep.subr.mxu0 0.0
    %5362 = vmatpush1.msra.mxu0 %v4005
    %5363 = vmatprep.subr.mxu0 0.0
    %5364 = vmatpush1.msra.mxu0 %v4002
    %5365 = vmatprep.subr.mxu0 0.0
    %5366 = vmatpush1.msra.mxu0 %v3999
    %5367 = vmatprep.subr.mxu0 0.0
    %5368 = vmatpush1.msra.mxu0 %v3996
    %5369 = vmatprep.subr.mxu0 0.0
    %5370 = vmatpush1.msra.mxu0 %v3993
    %5371 = vmatprep.subr.mxu0 0.0
    %5372 = vmatpush1.msra.mxu0 %v3990
    %5373 = vmatprep.subr.mxu0 0.0
    %5374 = vmatpush2.msra.mxu0 0.0
    %5375 = vmatprep.subr.mxu0 0.0
    %5376 = vmatpush2.msra.mxu0 0.0
    %5377 = vmatprep.subr.mxu0 0.0
    %5378 = vmatpush2.msra.mxu0 0.0
    %5379 = vmatprep.subr.mxu0 0.0
    %5380 = vmatpush2.msra.mxu0 0.0
    %5381 = vmatprep.subr.mxu0 0.0
    %5382 = vmatpush2.msra.mxu0 0.0
    %5383 = vmatprep.subr.mxu0 0.0
    %5384 = vmatpush2.msra.mxu0 0.0
    %5385 = vmatprep.subr.mxu0 0.0
    %5386 = vmatpush2.msra.mxu0 0.0
    %5387 = vmatprep.subr.mxu0 0.0
    %5388 = vmatpush2.msra.mxu0 0.0
    %5389 = vmatprep.subr.mxu0 0.0
    %5390 = vmatpush2.msra.mxu0 0.0
    %5391 = vmatprep.subr.mxu0 0.0
    %5392 = vmatpush2.msra.mxu0 0.0
    %5393 = vmatprep.subr.mxu0 0.0
    %5394 = vmatpush2.msra.mxu0 0.0
    %5395 = vmatprep.subr.mxu0 0.0
    %5396 = vmatpush2.msra.mxu0 0.0
    %5397 = vmatprep.subr.mxu0 0.0
    %5398 = vmatpush2.msra.mxu0 0.0
    %5399 = vmatprep.subr.mxu0 0.0
    %5400 = vmatpush2.msra.mxu0 0.0
    %5401 = vmatprep.subr.mxu0 0.0
    %5402 = vmatpush2.msra.mxu0 0.0
    %5403 = vmatprep.subr.mxu0 0.0
    %5404 = vmatpush2.msra.mxu0 0.0
    %5405 = vmatprep.mubr.f32.mxu0 0.0
    %5406 = vmatmul.mubr.f32.gmra.mxu0 %v5268
    %v5407 = vpop.f32.mrf.mxu0
    %v5408 = vadd.f32 %v4230, %v5407
    %v5409 = vpop.f32.mrf.mxu0
    %5410 = vdwg.mxu0
    %v5412 = vrot.slane %v5337, 4
    %v5414 = vadd.f32 %v4139, %v5412
    %v5415 = vxor.u32 %v5414, 2147483648
    %v5416 = vmul.f32 %v5415, 1.442695
    %v5417 = vpow.pop %v5416
    %v5418 = vadd.f32 %v5417, 1.0
    %v5419 = vrcp.pop %v5418
    %v5420 = vmul.f32 1.0, %v5419
    %v5422 = vrot.slane %v5339, 4
    %v5424 = vadd.f32 %v4141, %v5422
    %v5425 = vxor.u32 %v5424, 2147483648
    %v5426 = vmul.f32 %v5425, 1.442695
    %v5427 = vpow.pop %v5426
    %v5428 = vadd.f32 %v5427, 1.0
    %v5429 = vrcp.pop %v5428
    %v5430 = vmul.f32 1.0, %v5429
    %v5432 = vrot.slane %v5408, 4
    %v5434 = vmul.f32 %v5420, %v5432
    %v5435 = vadd.f32 %v4215, %v5434
    %v5436 = vtanh.pop %v5435
    %v5437 = vsub.f32 1.0, %v5430
    %v5438 = vmul.f32 %v5437, %v5436
    %v5439 = vrot.slane %v5265, 6
    %v5441 = vmul.f32 %v5430, %v5439
    %v5442 = vadd.f32 %v5438, %v5441
    %5443 = vst [vmem:[#allocation2 + $0x8] sm:$0x30] %v5442
    %v5445 = vrot.slane %v5442, 4
    %5447 = vmatprep.subr.mxu0 %v4034
    %5448 = vmatpush1.msra.mxu0 %v4033
    %5449 = vmatprep.subr.mxu0 %v4031
    %5450 = vmatpush1.msra.mxu0 %v4030
    %5451 = vmatprep.subr.mxu0 %v4028
    %5452 = vmatpush1.msra.mxu0 %v4027
    %5453 = vmatprep.subr.mxu0 %v4025
    %5454 = vmatpush1.msra.mxu0 %v4024
    %5455 = vmatprep.subr.mxu0 %v4022
    %5456 = vmatpush1.msra.mxu0 %v4021
    %5457 = vmatprep.subr.mxu0 %v4019
    %5458 = vmatpush1.msra.mxu0 %v4018
    %5459 = vmatprep.subr.mxu0 %v4016
    %5460 = vmatpush1.msra.mxu0 %v4015
    %5461 = vmatprep.subr.mxu0 %v4013
    %5462 = vmatpush1.msra.mxu0 %v4012
    %5463 = vmatprep.subr.mxu0 %v4010
    %5464 = vmatpush1.msra.mxu0 %v4009
    %5465 = vmatprep.subr.mxu0 %v4007
    %5466 = vmatpush1.msra.mxu0 %v4006
    %5467 = vmatprep.subr.mxu0 %v4004
    %5468 = vmatpush1.msra.mxu0 %v4003
    %5469 = vmatprep.subr.mxu0 %v4001
    %5470 = vmatpush1.msra.mxu0 %v4000
    %5471 = vmatprep.subr.mxu0 %v3998
    %5472 = vmatpush1.msra.mxu0 %v3997
    %5473 = vmatprep.subr.mxu0 %v3995
    %5474 = vmatpush1.msra.mxu0 %v3994
    %5475 = vmatprep.subr.mxu0 %v3992
    %5476 = vmatpush1.msra.mxu0 %v3991
    %5477 = vmatprep.subr.mxu0 %v3989
    %5478 = vmatpush1.msra.mxu0 %v3988
    %5479 = vmatprep.subr.mxu0 0.0
    %5480 = vmatpush2.msra.mxu0 0.0
    %5481 = vmatprep.subr.mxu0 0.0
    %5482 = vmatpush2.msra.mxu0 0.0
    %5483 = vmatprep.subr.mxu0 0.0
    %5484 = vmatpush2.msra.mxu0 0.0
    %5485 = vmatprep.subr.mxu0 0.0
    %5486 = vmatpush2.msra.mxu0 0.0
    %5487 = vmatprep.subr.mxu0 0.0
    %5488 = vmatpush2.msra.mxu0 0.0
    %5489 = vmatprep.subr.mxu0 0.0
    %5490 = vmatpush2.msra.mxu0 0.0
    %5491 = vmatprep.subr.mxu0 0.0
    %5492 = vmatpush2.msra.mxu0 0.0
    %5493 = vmatprep.subr.mxu0 0.0
    %5494 = vmatpush2.msra.mxu0 0.0
    %5495 = vmatprep.subr.mxu0 0.0
    %5496 = vmatpush2.msra.mxu0 0.0
    %5497 = vmatprep.subr.mxu0 0.0
    %5498 = vmatpush2.msra.mxu0 0.0
    %5499 = vmatprep.subr.mxu0 0.0
    %5500 = vmatpush2.msra.mxu0 0.0
    %5501 = vmatprep.subr.mxu0 0.0
    %5502 = vmatpush2.msra.mxu0 0.0
    %5503 = vmatprep.subr.mxu0 0.0
    %5504 = vmatpush2.msra.mxu0 0.0
    %5505 = vmatprep.subr.mxu0 0.0
    %5506 = vmatpush2.msra.mxu0 0.0
    %5507 = vmatprep.subr.mxu0 0.0
    %5508 = vmatpush2.msra.mxu0 0.0
    %5509 = vmatprep.subr.mxu0 0.0
    %5510 = vmatpush2.msra.mxu0 0.0
    %5511 = vmatprep.mubr.f32.mxu0 0.0
    %5512 = vmatmul.mubr.f32.gmra.mxu0 %v5445
    %v5513 = vpop.f32.mrf.mxu0
    %v5514 = vadd.f32 %v4222, %v5513
    %v5515 = vpop.f32.mrf.mxu0
    %v5516 = vadd.f32 %v4226, %v5515
    %5517 = vdwg.mxu0
    %5518 = vmatprep.subr.mxu0 0.0
    %5519 = vmatpush1.msra.mxu0 %v4035
    %5520 = vmatprep.subr.mxu0 0.0
    %5521 = vmatpush1.msra.mxu0 %v4032
    %5522 = vmatprep.subr.mxu0 0.0
    %5523 = vmatpush1.msra.mxu0 %v4029
    %5524 = vmatprep.subr.mxu0 0.0
    %5525 = vmatpush1.msra.mxu0 %v4026
    %5526 = vmatprep.subr.mxu0 0.0
    %5527 = vmatpush1.msra.mxu0 %v4023
    %5528 = vmatprep.subr.mxu0 0.0
    %5529 = vmatpush1.msra.mxu0 %v4020
    %5530 = vmatprep.subr.mxu0 0.0
    %5531 = vmatpush1.msra.mxu0 %v4017
    %5532 = vmatprep.subr.mxu0 0.0
    %5533 = vmatpush1.msra.mxu0 %v4014
    %5534 = vmatprep.subr.mxu0 0.0
    %5535 = vmatpush1.msra.mxu0 %v4011
    %5536 = vmatprep.subr.mxu0 0.0
    %5537 = vmatpush1.msra.mxu0 %v4008
    %5538 = vmatprep.subr.mxu0 0.0
    %5539 = vmatpush1.msra.mxu0 %v4005
    %5540 = vmatprep.subr.mxu0 0.0
    %5541 = vmatpush1.msra.mxu0 %v4002
    %5542 = vmatprep.subr.mxu0 0.0
    %5543 = vmatpush1.msra.mxu0 %v3999
    %5544 = vmatprep.subr.mxu0 0.0
    %5545 = vmatpush1.msra.mxu0 %v3996
    %5546 = vmatprep.subr.mxu0 0.0
    %5547 = vmatpush1.msra.mxu0 %v3993
    %5548 = vmatprep.subr.mxu0 0.0
    %5549 = vmatpush1.msra.mxu0 %v3990
    %5550 = vmatprep.subr.mxu0 0.0
    %5551 = vmatpush2.msra.mxu0 0.0
    %5552 = vmatprep.subr.mxu0 0.0
    %5553 = vmatpush2.msra.mxu0 0.0
    %5554 = vmatprep.subr.mxu0 0.0
    %5555 = vmatpush2.msra.mxu0 0.0
    %5556 = vmatprep.subr.mxu0 0.0
    %5557 = vmatpush2.msra.mxu0 0.0
    %5558 = vmatprep.subr.mxu0 0.0
    %5559 = vmatpush2.msra.mxu0 0.0
    %5560 = vmatprep.subr.mxu0 0.0
    %5561 = vmatpush2.msra.mxu0 0.0
    %5562 = vmatprep.subr.mxu0 0.0
    %5563 = vmatpush2.msra.mxu0 0.0
    %5564 = vmatprep.subr.mxu0 0.0
    %5565 = vmatpush2.msra.mxu0 0.0
    %5566 = vmatprep.subr.mxu0 0.0
    %5567 = vmatpush2.msra.mxu0 0.0
    %5568 = vmatprep.subr.mxu0 0.0
    %5569 = vmatpush2.msra.mxu0 0.0
    %5570 = vmatprep.subr.mxu0 0.0
    %5571 = vmatpush2.msra.mxu0 0.0
    %5572 = vmatprep.subr.mxu0 0.0
    %5573 = vmatpush2.msra.mxu0 0.0
    %5574 = vmatprep.subr.mxu0 0.0
    %5575 = vmatpush2.msra.mxu0 0.0
    %5576 = vmatprep.subr.mxu0 0.0
    %5577 = vmatpush2.msra.mxu0 0.0
    %5578 = vmatprep.subr.mxu0 0.0
    %5579 = vmatpush2.msra.mxu0 0.0
    %5580 = vmatprep.subr.mxu0 0.0
    %5581 = vmatpush2.msra.mxu0 0.0
    %5582 = vmatprep.mubr.f32.mxu0 0.0
    %5583 = vmatmul.mubr.f32.gmra.mxu0 %v5445
    %v5584 = vpop.f32.mrf.mxu0
    %v5585 = vadd.f32 %v4230, %v5584
    %v5586 = vpop.f32.mrf.mxu0
    %5587 = vdwg.mxu0
    %v5589 = vrot.slane %v5514, 2
    %v5591 = vadd.f32 %v4139, %v5589
    %v5592 = vxor.u32 %v5591, 2147483648
    %v5593 = vmul.f32 %v5592, 1.442695
    %v5594 = vpow.pop %v5593
    %v5595 = vadd.f32 %v5594, 1.0
    %v5596 = vrcp.pop %v5595
    %v5597 = vmul.f32 1.0, %v5596
    %v5599 = vrot.slane %v5516, 2
    %v5601 = vadd.f32 %v4141, %v5599
    %v5602 = vxor.u32 %v5601, 2147483648
    %v5603 = vmul.f32 %v5602, 1.442695
    %v5604 = vpow.pop %v5603
    %v5605 = vadd.f32 %v5604, 1.0
    %v5606 = vrcp.pop %v5605
    %v5607 = vmul.f32 1.0, %v5606
    %v5609 = vrot.slane %v5585, 2
    %v5611 = vmul.f32 %v5597, %v5609
    %v5612 = vadd.f32 %v4215, %v5611
    %v5613 = vtanh.pop %v5612
    %v5614 = vsub.f32 1.0, %v5607
    %v5615 = vmul.f32 %v5614, %v5613
    %v5616 = vrot.slane %v5442, 6
    %v5618 = vmul.f32 %v5607, %v5616
    %v5619 = vadd.f32 %v5615, %v5618
    %5620 = vst [vmem:[#allocation2 + $0x8] sm:$0xc0] %v5619
    %v5621 = vld [vmem:[#allocation2] sm:$0xff]
    %v5622 = vld [vmem:[#allocation2 + $0x8] sm:$0xff]
    %v5623 = vld [vmem:[#allocation16] sm:$0xff]
    %v5624 = vld [vmem:[#allocation16 + $0x8] sm:$0xff]
    %v5625 = vld [vmem:[#allocation16 + $0x10] sm:$0xff]
    %v5626 = vld [vmem:[#allocation16 + $0x18] sm:$0xff]
    %v5627 = vld [vmem:[#allocation16 + $0x20] sm:$0xff]
    %v5628 = vld [vmem:[#allocation16 + $0x28] sm:$0xff]
    %v5629 = vld [vmem:[#allocation16 + $0x30] sm:$0xff]
    %v5630 = vld [vmem:[#allocation16 + $0x38] sm:$0xff]
    %v5631 = vld [vmem:[#allocation16 + $0x40] sm:$0xff]
    %v5632 = vld [vmem:[#allocation16 + $0x48] sm:$0xff]
    %v5633 = vld [vmem:[#allocation16 + $0x50] sm:$0xff]
    %v5634 = vld [vmem:[#allocation16 + $0x58] sm:$0xff]
    %v5635 = vld [vmem:[#allocation16 + $0x60] sm:$0xff]
    %v5636 = vld [vmem:[#allocation16 + $0x68] sm:$0xff]
    %v5637 = vld [vmem:[#allocation16 + $0x70] sm:$0xff]
    %v5638 = vld [vmem:[#allocation16 + $0x78] sm:$0xff]
    %v5639 = vld [vmem:[#allocation16 + $0x80] sm:$0xff]
    %v5640 = vld [vmem:[#allocation16 + $0x88] sm:$0xff]
    %v5641 = vld [vmem:[#allocation16 + $0x90] sm:$0xff]
    %v5642 = vld [vmem:[#allocation16 + $0x98] sm:$0xff]
    %v5643 = vld [vmem:[#allocation16 + $0xa0] sm:$0xff]
    %v5644 = vld [vmem:[#allocation16 + $0xa8] sm:$0xff]
    %v5645 = vld [vmem:[#allocation16 + $0xb0] sm:$0xff]
    %v5646 = vld [vmem:[#allocation16 + $0xb8] sm:$0xff]
    %v5647 = vld [vmem:[#allocation16 + $0xc0] sm:$0xff]
    %v5648 = vld [vmem:[#allocation16 + $0xc8] sm:$0xff]
    %v5649 = vld [vmem:[#allocation16 + $0xd0] sm:$0xff]
    %v5650 = vld [vmem:[#allocation16 + $0xd8] sm:$0xff]
    %v5651 = vld [vmem:[#allocation16 + $0xe0] sm:$0xff]
    %v5652 = vld [vmem:[#allocation16 + $0xe8] sm:$0xff]
    %v5653 = vld [vmem:[#allocation16 + $0xf0] sm:$0xff]
    %v5654 = vld [vmem:[#allocation16 + $0xf8] sm:$0xff]
    %v5655 = vld [vmem:[#allocation16 + $0x100] sm:$0xff]
    %v5656 = vld [vmem:[#allocation16 + $0x108] sm:$0xff]
    %v5657 = vld [vmem:[#allocation16 + $0x110] sm:$0xff]
    %v5658 = vld [vmem:[#allocation16 + $0x118] sm:$0xff]
    %v5659 = vld [vmem:[#allocation16 + $0x120] sm:$0xff]
    %v5660 = vld [vmem:[#allocation16 + $0x128] sm:$0xff]
    %v5661 = vld [vmem:[#allocation16 + $0x130] sm:$0xff]
    %v5662 = vld [vmem:[#allocation16 + $0x138] sm:$0xff]
    %v5663 = vld [vmem:[#allocation16 + $0x140] sm:$0xff]
    %v5664 = vld [vmem:[#allocation16 + $0x148] sm:$0xff]
    %v5665 = vld [vmem:[#allocation16 + $0x150] sm:$0xff]
    %v5666 = vld [vmem:[#allocation16 + $0x158] sm:$0xff]
    %v5667 = vld [vmem:[#allocation16 + $0x160] sm:$0xff]
    %v5668 = vld [vmem:[#allocation16 + $0x168] sm:$0xff]
    %v5669 = vld [vmem:[#allocation16 + $0x170] sm:$0xff]
    %v5670 = vld [vmem:[#allocation16 + $0x178] sm:$0xff]
    %v5671 = vld [vmem:[%s22] sm:$0x7]
    %v5672 = vld [vmem:[#allocation15] sm:$0xff]
    %v5673 = vld [vmem:[#allocation15 + $0x8] sm:$0xff]
    %v5674 = vld [vmem:[#allocation15 + $0x10] sm:$0xff]
    %v5675 = vld [vmem:[#allocation15 + $0x18] sm:$0xff]
    %v5676 = vld [vmem:[#allocation15 + $0x20] sm:$0xff]
    %v5677 = vld [vmem:[#allocation15 + $0x28] sm:$0xff]
    %v5678 = vld [vmem:[#allocation15 + $0x30] sm:$0xff]
    %v5679 = vld [vmem:[#allocation15 + $0x38] sm:$0xff]
    %v5680 = vld [vmem:[#allocation15 + $0x40] sm:$0xff]
    %v5681 = vld [vmem:[#allocation15 + $0x48] sm:$0xff]
    %v5682 = vld [vmem:[#allocation15 + $0x50] sm:$0xff]
    %v5683 = vld [vmem:[#allocation15 + $0x58] sm:$0xff]
    %v5684 = vld [vmem:[#allocation15 + $0x60] sm:$0xff]
    %v5685 = vld [vmem:[#allocation15 + $0x68] sm:$0xff]
    %v5686 = vld [vmem:[#allocation15 + $0x70] sm:$0xff]
    %v5687 = vld [vmem:[#allocation15 + $0x78] sm:$0xff]
    %v5688 = vld [vmem:[#allocation15 + $0x80] sm:$0xff]
    %v5689 = vld [vmem:[#allocation15 + $0x88] sm:$0xff]
    %v5690 = vld [vmem:[#allocation15 + $0x90] sm:$0xff]
    %v5691 = vld [vmem:[#allocation15 + $0x98] sm:$0xff]
    %v5692 = vld [vmem:[#allocation15 + $0xa0] sm:$0xff]
    %v5693 = vld [vmem:[#allocation15 + $0xa8] sm:$0xff]
    %v5694 = vld [vmem:[#allocation15 + $0xb0] sm:$0xff]
    %v5695 = vld [vmem:[#allocation15 + $0xb8] sm:$0xff]
    %v5696 = vld [vmem:[#allocation15 + $0xc0] sm:$0xff]
    %v5697 = vld [vmem:[#allocation15 + $0xc8] sm:$0xff]
    %v5698 = vld [vmem:[#allocation15 + $0xd0] sm:$0xff]
    %v5699 = vld [vmem:[#allocation15 + $0xd8] sm:$0xff]
    %v5700 = vld [vmem:[#allocation15 + $0xe0] sm:$0xff]
    %v5701 = vld [vmem:[#allocation15 + $0xe8] sm:$0xff]
    %v5702 = vld [vmem:[#allocation15 + $0xf0] sm:$0xff]
    %v5703 = vld [vmem:[#allocation15 + $0xf8] sm:$0xff]
    %v5704 = vld [vmem:[#allocation15 + $0x100] sm:$0xff]
    %v5705 = vld [vmem:[#allocation15 + $0x108] sm:$0xff]
    %v5706 = vld [vmem:[#allocation15 + $0x110] sm:$0xff]
    %v5707 = vld [vmem:[#allocation15 + $0x118] sm:$0xff]
    %v5708 = vld [vmem:[#allocation15 + $0x120] sm:$0xff]
    %v5709 = vld [vmem:[#allocation15 + $0x128] sm:$0xff]
    %v5710 = vld [vmem:[#allocation15 + $0x130] sm:$0xff]
    %v5711 = vld [vmem:[#allocation15 + $0x138] sm:$0xff]
    %v5712 = vld [vmem:[#allocation15 + $0x140] sm:$0xff]
    %v5713 = vld [vmem:[#allocation15 + $0x148] sm:$0xff]
    %v5714 = vld [vmem:[#allocation15 + $0x150] sm:$0xff]
    %v5715 = vld [vmem:[#allocation15 + $0x158] sm:$0xff]
    %v5716 = vld [vmem:[#allocation15 + $0x160] sm:$0xff]
    %v5717 = vld [vmem:[#allocation15 + $0x168] sm:$0xff]
    %v5718 = vld [vmem:[#allocation15 + $0x170] sm:$0xff]
    %v5719 = vld [vmem:[#allocation15 + $0x178] sm:$0xff]
    %v5720 = vld [vmem:[%s21] sm:$0x7]
    %v5722 = vlaneseq
    %v5723 = vshrl.u32 %v5722, 7
    %v5724 = vsub.s32 0, %v5723
    %v5725 = vrot.slane %v5720, %v5724
    %v5726 = vlaneseq
    %v5727 = vshrl.u32 %v5726, 7
    %v5728 = vsub.s32 1, %v5727
    %v5729 = vrot.slane %v5720, %v5728
    %v5730 = vlaneseq
    %v5731 = vshrl.u32 %v5730, 7
    %v5732 = vsub.s32 2, %v5731
    %v5733 = vrot.slane %v5720, %v5732
    %5737 = vmatprep.subr.mxu0 %v5718
    %5738 = vmatpush1.msra.mxu0 %v5717
    %5739 = vmatprep.subr.mxu0 %v5715
    %5740 = vmatpush1.msra.mxu0 %v5714
    %5741 = vmatprep.subr.mxu0 %v5712
    %5742 = vmatpush1.msra.mxu0 %v5711
    %5743 = vmatprep.subr.mxu0 %v5709
    %5744 = vmatpush1.msra.mxu0 %v5708
    %5745 = vmatprep.subr.mxu0 %v5706
    %5746 = vmatpush1.msra.mxu0 %v5705
    %5747 = vmatprep.subr.mxu0 %v5703
    %5748 = vmatpush1.msra.mxu0 %v5702
    %5749 = vmatprep.subr.mxu0 %v5700
    %5750 = vmatpush1.msra.mxu0 %v5699
    %5751 = vmatprep.subr.mxu0 %v5697
    %5752 = vmatpush1.msra.mxu0 %v5696
    %5753 = vmatprep.subr.mxu0 %v5694
    %5754 = vmatpush1.msra.mxu0 %v5693
    %5755 = vmatprep.subr.mxu0 %v5691
    %5756 = vmatpush1.msra.mxu0 %v5690
    %5757 = vmatprep.subr.mxu0 %v5688
    %5758 = vmatpush1.msra.mxu0 %v5687
    %5759 = vmatprep.subr.mxu0 %v5685
    %5760 = vmatpush1.msra.mxu0 %v5684
    %5761 = vmatprep.subr.mxu0 %v5682
    %5762 = vmatpush1.msra.mxu0 %v5681
    %5763 = vmatprep.subr.mxu0 %v5679
    %5764 = vmatpush1.msra.mxu0 %v5678
    %5765 = vmatprep.subr.mxu0 %v5676
    %5766 = vmatpush1.msra.mxu0 %v5675
    %5767 = vmatprep.subr.mxu0 %v5673
    %5768 = vmatpush1.msra.mxu0 %v5672
    %5769 = vmatprep.subr.mxu0 0.0
    %5770 = vmatpush2.msra.mxu0 0.0
    %5771 = vmatprep.subr.mxu0 0.0
    %5772 = vmatpush2.msra.mxu0 0.0
    %5773 = vmatprep.subr.mxu0 0.0
    %5774 = vmatpush2.msra.mxu0 0.0
    %5775 = vmatprep.subr.mxu0 0.0
    %5776 = vmatpush2.msra.mxu0 0.0
    %5777 = vmatprep.subr.mxu0 0.0
    %5778 = vmatpush2.msra.mxu0 0.0
    %5779 = vmatprep.subr.mxu0 0.0
    %5780 = vmatpush2.msra.mxu0 0.0
    %5781 = vmatprep.subr.mxu0 0.0
    %5782 = vmatpush2.msra.mxu0 0.0
    %5783 = vmatprep.subr.mxu0 0.0
    %5784 = vmatpush2.msra.mxu0 0.0
    %5785 = vmatprep.subr.mxu0 0.0
    %5786 = vmatpush2.msra.mxu0 0.0
    %5787 = vmatprep.subr.mxu0 0.0
    %5788 = vmatpush2.msra.mxu0 0.0
    %5789 = vmatprep.subr.mxu0 0.0
    %5790 = vmatpush2.msra.mxu0 0.0
    %5791 = vmatprep.subr.mxu0 0.0
    %5792 = vmatpush2.msra.mxu0 0.0
    %5793 = vmatprep.subr.mxu0 0.0
    %5794 = vmatpush2.msra.mxu0 0.0
    %5795 = vmatprep.subr.mxu0 0.0
    %5796 = vmatpush2.msra.mxu0 0.0
    %5797 = vmatprep.subr.mxu0 0.0
    %5798 = vmatpush2.msra.mxu0 0.0
    %5799 = vmatprep.subr.mxu0 0.0
    %5800 = vmatpush2.msra.mxu0 0.0
    %5801 = vmatprep.mubr.f32.mxu0 0.0
    %5802 = vmatmul.mubr.f32.gmra.mxu0 %v5621
    %v5803 = vpop.f32.mrf.mxu0
    %v5804 = vadd.f32 %v5725, %v5803
    %v5805 = vpop.f32.mrf.mxu0
    %v5806 = vadd.f32 %v5729, %v5805
    %5807 = vmatprep.mubr.f32.mxu0 0.0
    %5808 = vmatmul.mubr.f32.gmra.mxu0 %v5622
    %v5809 = vpop.f32.mrf.mxu0
    %v5810 = vadd.f32 %v5725, %v5809
    %v5811 = vpop.f32.mrf.mxu0
    %v5812 = vadd.f32 %v5729, %v5811
    %5813 = vdwg.mxu0
    %5814 = vmatprep.subr.mxu0 0.0
    %5815 = vmatpush1.msra.mxu0 %v5719
    %5816 = vmatprep.subr.mxu0 0.0
    %5817 = vmatpush1.msra.mxu0 %v5716
    %5818 = vmatprep.subr.mxu0 0.0
    %5819 = vmatpush1.msra.mxu0 %v5713
    %5820 = vmatprep.subr.mxu0 0.0
    %5821 = vmatpush1.msra.mxu0 %v5710
    %5822 = vmatprep.subr.mxu0 0.0
    %5823 = vmatpush1.msra.mxu0 %v5707
    %5824 = vmatprep.subr.mxu0 0.0
    %5825 = vmatpush1.msra.mxu0 %v5704
    %5826 = vmatprep.subr.mxu0 0.0
    %5827 = vmatpush1.msra.mxu0 %v5701
    %5828 = vmatprep.subr.mxu0 0.0
    %5829 = vmatpush1.msra.mxu0 %v5698
    %5830 = vmatprep.subr.mxu0 0.0
    %5831 = vmatpush1.msra.mxu0 %v5695
    %5832 = vmatprep.subr.mxu0 0.0
    %5833 = vmatpush1.msra.mxu0 %v5692
    %5834 = vmatprep.subr.mxu0 0.0
    %5835 = vmatpush1.msra.mxu0 %v5689
    %5836 = vmatprep.subr.mxu0 0.0
    %5837 = vmatpush1.msra.mxu0 %v5686
    %5838 = vmatprep.subr.mxu0 0.0
    %5839 = vmatpush1.msra.mxu0 %v5683
    %5840 = vmatprep.subr.mxu0 0.0
    %5841 = vmatpush1.msra.mxu0 %v5680
    %5842 = vmatprep.subr.mxu0 0.0
    %5843 = vmatpush1.msra.mxu0 %v5677
    %5844 = vmatprep.subr.mxu0 0.0
    %5845 = vmatpush1.msra.mxu0 %v5674
    %5846 = vmatprep.subr.mxu0 0.0
    %5847 = vmatpush2.msra.mxu0 0.0
    %5848 = vmatprep.subr.mxu0 0.0
    %5849 = vmatpush2.msra.mxu0 0.0
    %5850 = vmatprep.subr.mxu0 0.0
    %5851 = vmatpush2.msra.mxu0 0.0
    %5852 = vmatprep.subr.mxu0 0.0
    %5853 = vmatpush2.msra.mxu0 0.0
    %5854 = vmatprep.subr.mxu0 0.0
    %5855 = vmatpush2.msra.mxu0 0.0
    %5856 = vmatprep.subr.mxu0 0.0
    %5857 = vmatpush2.msra.mxu0 0.0
    %5858 = vmatprep.subr.mxu0 0.0
    %5859 = vmatpush2.msra.mxu0 0.0
    %5860 = vmatprep.subr.mxu0 0.0
    %5861 = vmatpush2.msra.mxu0 0.0
    %5862 = vmatprep.subr.mxu0 0.0
    %5863 = vmatpush2.msra.mxu0 0.0
    %5864 = vmatprep.subr.mxu0 0.0
    %5865 = vmatpush2.msra.mxu0 0.0
    %5866 = vmatprep.subr.mxu0 0.0
    %5867 = vmatpush2.msra.mxu0 0.0
    %5868 = vmatprep.subr.mxu0 0.0
    %5869 = vmatpush2.msra.mxu0 0.0
    %5870 = vmatprep.subr.mxu0 0.0
    %5871 = vmatpush2.msra.mxu0 0.0
    %5872 = vmatprep.subr.mxu0 0.0
    %5873 = vmatpush2.msra.mxu0 0.0
    %5874 = vmatprep.subr.mxu0 0.0
    %5875 = vmatpush2.msra.mxu0 0.0
    %5876 = vmatprep.subr.mxu0 0.0
    %5877 = vmatpush2.msra.mxu0 0.0
    %5878 = vmatprep.mubr.f32.mxu0 0.0
    %5879 = vmatmul.mubr.f32.gmra.mxu0 %v5621
    %v5880 = vpop.f32.mrf.mxu0
    %v5881 = vadd.f32 %v5733, %v5880
    %v5882 = vpop.f32.mrf.mxu0
    %5883 = vmatprep.mubr.f32.mxu0 0.0
    %5884 = vmatmul.mubr.f32.gmra.mxu0 %v5622
    %v5885 = vpop.f32.mrf.mxu0
    %v5886 = vadd.f32 %v5733, %v5885
    %v5887 = vpop.f32.mrf.mxu0
    %5888 = vdwg.mxu0
    %v5890 = vlaneseq
    %v5891 = vshrl.u32 %v5890, 7
    %v5892 = vsub.s32 0, %v5891
    %v5893 = vrot.slane %v5671, %v5892
    %v5894 = vlaneseq
    %v5895 = vshrl.u32 %v5894, 7
    %v5896 = vsub.s32 1, %v5895
    %v5897 = vrot.slane %v5671, %v5896
    %v5898 = vlaneseq
    %v5899 = vshrl.u32 %v5898, 7
    %v5900 = vsub.s32 2, %v5899
    %v5901 = vrot.slane %v5671, %v5900
    %v5906 = vrot.slane %v3977, 2
    %5908 = vmatprep.subr.mxu0 %v5669
    %5909 = vmatpush1.msra.mxu0 %v5668
    %5910 = vmatprep.subr.mxu0 %v5666
    %5911 = vmatpush1.msra.mxu0 %v5665
    %5912 = vmatprep.subr.mxu0 %v5663
    %5913 = vmatpush1.msra.mxu0 %v5662
    %5914 = vmatprep.subr.mxu0 %v5660
    %5915 = vmatpush1.msra.mxu0 %v5659
    %5916 = vmatprep.subr.mxu0 %v5657
    %5917 = vmatpush1.msra.mxu0 %v5656
    %5918 = vmatprep.subr.mxu0 %v5654
    %5919 = vmatpush1.msra.mxu0 %v5653
    %5920 = vmatprep.subr.mxu0 %v5651
    %5921 = vmatpush1.msra.mxu0 %v5650
    %5922 = vmatprep.subr.mxu0 %v5648
    %5923 = vmatpush1.msra.mxu0 %v5647
    %5924 = vmatprep.subr.mxu0 %v5645
    %5925 = vmatpush1.msra.mxu0 %v5644
    %5926 = vmatprep.subr.mxu0 %v5642
    %5927 = vmatpush1.msra.mxu0 %v5641
    %5928 = vmatprep.subr.mxu0 %v5639
    %5929 = vmatpush1.msra.mxu0 %v5638
    %5930 = vmatprep.subr.mxu0 %v5636
    %5931 = vmatpush1.msra.mxu0 %v5635
    %5932 = vmatprep.subr.mxu0 %v5633
    %5933 = vmatpush1.msra.mxu0 %v5632
    %5934 = vmatprep.subr.mxu0 %v5630
    %5935 = vmatpush1.msra.mxu0 %v5629
    %5936 = vmatprep.subr.mxu0 %v5627
    %5937 = vmatpush1.msra.mxu0 %v5626
    %5938 = vmatprep.subr.mxu0 %v5624
    %5939 = vmatpush1.msra.mxu0 %v5623
    %5940 = vmatprep.subr.mxu0 0.0
    %5941 = vmatpush2.msra.mxu0 0.0
    %5942 = vmatprep.subr.mxu0 0.0
    %5943 = vmatpush2.msra.mxu0 0.0
    %5944 = vmatprep.subr.mxu0 0.0
    %5945 = vmatpush2.msra.mxu0 0.0
    %5946 = vmatprep.subr.mxu0 0.0
    %5947 = vmatpush2.msra.mxu0 0.0
    %5948 = vmatprep.subr.mxu0 0.0
    %5949 = vmatpush2.msra.mxu0 0.0
    %5950 = vmatprep.subr.mxu0 0.0
    %5951 = vmatpush2.msra.mxu0 0.0
    %5952 = vmatprep.subr.mxu0 0.0
    %5953 = vmatpush2.msra.mxu0 0.0
    %5954 = vmatprep.subr.mxu0 0.0
    %5955 = vmatpush2.msra.mxu0 0.0
    %5956 = vmatprep.subr.mxu0 0.0
    %5957 = vmatpush2.msra.mxu0 0.0
    %5958 = vmatprep.subr.mxu0 0.0
    %5959 = vmatpush2.msra.mxu0 0.0
    %5960 = vmatprep.subr.mxu0 0.0
    %5961 = vmatpush2.msra.mxu0 0.0
    %5962 = vmatprep.subr.mxu0 0.0
    %5963 = vmatpush2.msra.mxu0 0.0
    %5964 = vmatprep.subr.mxu0 0.0
    %5965 = vmatpush2.msra.mxu0 0.0
    %5966 = vmatprep.subr.mxu0 0.0
    %5967 = vmatpush2.msra.mxu0 0.0
    %5968 = vmatprep.subr.mxu0 0.0
    %5969 = vmatpush2.msra.mxu0 0.0
    %5970 = vmatprep.subr.mxu0 0.0
    %5971 = vmatpush2.msra.mxu0 0.0
    %5972 = vmatprep.mubr.f32.mxu0 0.0
    %5973 = vmatmul.mubr.f32.gmra.mxu0 %v5906
    %v5974 = vpop.f32.mrf.mxu0
    %v5975 = vadd.f32 %v5893, %v5974
    %v5976 = vpop.f32.mrf.mxu0
    %v5977 = vadd.f32 %v5897, %v5976
    %5978 = vdwg.mxu0
    %5979 = vmatprep.subr.mxu0 0.0
    %5980 = vmatpush1.msra.mxu0 %v5670
    %5981 = vmatprep.subr.mxu0 0.0
    %5982 = vmatpush1.msra.mxu0 %v5667
    %5983 = vmatprep.subr.mxu0 0.0
    %5984 = vmatpush1.msra.mxu0 %v5664
    %5985 = vmatprep.subr.mxu0 0.0
    %5986 = vmatpush1.msra.mxu0 %v5661
    %5987 = vmatprep.subr.mxu0 0.0
    %5988 = vmatpush1.msra.mxu0 %v5658
    %5989 = vmatprep.subr.mxu0 0.0
    %5990 = vmatpush1.msra.mxu0 %v5655
    %5991 = vmatprep.subr.mxu0 0.0
    %5992 = vmatpush1.msra.mxu0 %v5652
    %5993 = vmatprep.subr.mxu0 0.0
    %5994 = vmatpush1.msra.mxu0 %v5649
    %5995 = vmatprep.subr.mxu0 0.0
    %5996 = vmatpush1.msra.mxu0 %v5646
    %5997 = vmatprep.subr.mxu0 0.0
    %5998 = vmatpush1.msra.mxu0 %v5643
    %5999 = vmatprep.subr.mxu0 0.0
    %6000 = vmatpush1.msra.mxu0 %v5640
    %6001 = vmatprep.subr.mxu0 0.0
    %6002 = vmatpush1.msra.mxu0 %v5637
    %6003 = vmatprep.subr.mxu0 0.0
    %6004 = vmatpush1.msra.mxu0 %v5634
    %6005 = vmatprep.subr.mxu0 0.0
    %6006 = vmatpush1.msra.mxu0 %v5631
    %6007 = vmatprep.subr.mxu0 0.0
    %6008 = vmatpush1.msra.mxu0 %v5628
    %6009 = vmatprep.subr.mxu0 0.0
    %6010 = vmatpush1.msra.mxu0 %v5625
    %6011 = vmatprep.subr.mxu0 0.0
    %6012 = vmatpush2.msra.mxu0 0.0
    %6013 = vmatprep.subr.mxu0 0.0
    %6014 = vmatpush2.msra.mxu0 0.0
    %6015 = vmatprep.subr.mxu0 0.0
    %6016 = vmatpush2.msra.mxu0 0.0
    %6017 = vmatprep.subr.mxu0 0.0
    %6018 = vmatpush2.msra.mxu0 0.0
    %6019 = vmatprep.subr.mxu0 0.0
    %6020 = vmatpush2.msra.mxu0 0.0
    %6021 = vmatprep.subr.mxu0 0.0
    %6022 = vmatpush2.msra.mxu0 0.0
    %6023 = vmatprep.subr.mxu0 0.0
    %6024 = vmatpush2.msra.mxu0 0.0
    %6025 = vmatprep.subr.mxu0 0.0
    %6026 = vmatpush2.msra.mxu0 0.0
    %6027 = vmatprep.subr.mxu0 0.0
    %6028 = vmatpush2.msra.mxu0 0.0
    %6029 = vmatprep.subr.mxu0 0.0
    %6030 = vmatpush2.msra.mxu0 0.0
    %6031 = vmatprep.subr.mxu0 0.0
    %6032 = vmatpush2.msra.mxu0 0.0
    %6033 = vmatprep.subr.mxu0 0.0
    %6034 = vmatpush2.msra.mxu0 0.0
    %6035 = vmatprep.subr.mxu0 0.0
    %6036 = vmatpush2.msra.mxu0 0.0
    %6037 = vmatprep.subr.mxu0 0.0
    %6038 = vmatpush2.msra.mxu0 0.0
    %6039 = vmatprep.subr.mxu0 0.0
    %6040 = vmatpush2.msra.mxu0 0.0
    %6041 = vmatprep.subr.mxu0 0.0
    %6042 = vmatpush2.msra.mxu0 0.0
    %6043 = vmatprep.mubr.f32.mxu0 0.0
    %6044 = vmatmul.mubr.f32.gmra.mxu0 %v5906
    %v6045 = vpop.f32.mrf.mxu0
    %v6046 = vadd.f32 %v5901, %v6045
    %v6047 = vpop.f32.mrf.mxu0
    %6048 = vdwg.mxu0
    %v6049 = vadd.f32 %v5804, %v5975
    %v6050 = vxor.u32 %v6049, 2147483648
    %v6051 = vmul.f32 %v6050, 1.442695
    %v6052 = vpow.pop %v6051
    %v6053 = vadd.f32 %v6052, 1.0
    %v6054 = vrcp.pop %v6053
    %v6055 = vmul.f32 1.0, %v6054
    %v6056 = vadd.f32 %v5806, %v5977
    %v6057 = vxor.u32 %v6056, 2147483648
    %v6058 = vmul.f32 %v6057, 1.442695
    %v6059 = vpow.pop %v6058
    %v6060 = vadd.f32 %v6059, 1.0
    %v6061 = vrcp.pop %v6060
    %v6062 = vmul.f32 1.0, %v6061
    %v6063 = vmul.f32 %v6055, %v6046
    %v6064 = vadd.f32 %v5881, %v6063
    %v6065 = vtanh.pop %v6064
    %v6066 = vsub.f32 1.0, %v6062
    %v6067 = vmul.f32 %v6066, %v6065
    %v6068 = vmul.f32 %v6062, %v5906
    %v6069 = vadd.f32 %v6067, %v6068
    %6070 = vst [vmem:[#allocation2] sm:$0x3] %v6069
    %6071 = vmatprep.subr.mxu0 %v5669
    %6072 = vmatpush1.msra.mxu0 %v5668
    %6073 = vmatprep.subr.mxu0 %v5666
    %6074 = vmatpush1.msra.mxu0 %v5665
    %6075 = vmatprep.subr.mxu0 %v5663
    %6076 = vmatpush1.msra.mxu0 %v5662
    %6077 = vmatprep.subr.mxu0 %v5660
    %6078 = vmatpush1.msra.mxu0 %v5659
    %6079 = vmatprep.subr.mxu0 %v5657
    %6080 = vmatpush1.msra.mxu0 %v5656
    %6081 = vmatprep.subr.mxu0 %v5654
    %6082 = vmatpush1.msra.mxu0 %v5653
    %6083 = vmatprep.subr.mxu0 %v5651
    %6084 = vmatpush1.msra.mxu0 %v5650
    %6085 = vmatprep.subr.mxu0 %v5648
    %6086 = vmatpush1.msra.mxu0 %v5647
    %6087 = vmatprep.subr.mxu0 %v5645
    %6088 = vmatpush1.msra.mxu0 %v5644
    %6089 = vmatprep.subr.mxu0 %v5642
    %6090 = vmatpush1.msra.mxu0 %v5641
    %6091 = vmatprep.subr.mxu0 %v5639
    %6092 = vmatpush1.msra.mxu0 %v5638
    %6093 = vmatprep.subr.mxu0 %v5636
    %6094 = vmatpush1.msra.mxu0 %v5635
    %6095 = vmatprep.subr.mxu0 %v5633
    %6096 = vmatpush1.msra.mxu0 %v5632
    %6097 = vmatprep.subr.mxu0 %v5630
    %6098 = vmatpush1.msra.mxu0 %v5629
    %6099 = vmatprep.subr.mxu0 %v5627
    %6100 = vmatpush1.msra.mxu0 %v5626
    %6101 = vmatprep.subr.mxu0 %v5624
    %6102 = vmatpush1.msra.mxu0 %v5623
    %6103 = vmatprep.subr.mxu0 0.0
    %6104 = vmatpush2.msra.mxu0 0.0
    %6105 = vmatprep.subr.mxu0 0.0
    %6106 = vmatpush2.msra.mxu0 0.0
    %6107 = vmatprep.subr.mxu0 0.0
    %6108 = vmatpush2.msra.mxu0 0.0
    %6109 = vmatprep.subr.mxu0 0.0
    %6110 = vmatpush2.msra.mxu0 0.0
    %6111 = vmatprep.subr.mxu0 0.0
    %6112 = vmatpush2.msra.mxu0 0.0
    %6113 = vmatprep.subr.mxu0 0.0
    %6114 = vmatpush2.msra.mxu0 0.0
    %6115 = vmatprep.subr.mxu0 0.0
    %6116 = vmatpush2.msra.mxu0 0.0
    %6117 = vmatprep.subr.mxu0 0.0
    %6118 = vmatpush2.msra.mxu0 0.0
    %6119 = vmatprep.subr.mxu0 0.0
    %6120 = vmatpush2.msra.mxu0 0.0
    %6121 = vmatprep.subr.mxu0 0.0
    %6122 = vmatpush2.msra.mxu0 0.0
    %6123 = vmatprep.subr.mxu0 0.0
    %6124 = vmatpush2.msra.mxu0 0.0
    %6125 = vmatprep.subr.mxu0 0.0
    %6126 = vmatpush2.msra.mxu0 0.0
    %6127 = vmatprep.subr.mxu0 0.0
    %6128 = vmatpush2.msra.mxu0 0.0
    %6129 = vmatprep.subr.mxu0 0.0
    %6130 = vmatpush2.msra.mxu0 0.0
    %6131 = vmatprep.subr.mxu0 0.0
    %6132 = vmatpush2.msra.mxu0 0.0
    %6133 = vmatprep.subr.mxu0 0.0
    %6134 = vmatpush2.msra.mxu0 0.0
    %6135 = vmatprep.mubr.f32.mxu0 0.0
    %6136 = vmatmul.mubr.f32.gmra.mxu0 %v6069
    %v6137 = vpop.f32.mrf.mxu0
    %v6138 = vadd.f32 %v5893, %v6137
    %v6139 = vpop.f32.mrf.mxu0
    %v6140 = vadd.f32 %v5897, %v6139
    %6141 = vdwg.mxu0
    %6142 = vmatprep.subr.mxu0 0.0
    %6143 = vmatpush1.msra.mxu0 %v5670
    %6144 = vmatprep.subr.mxu0 0.0
    %6145 = vmatpush1.msra.mxu0 %v5667
    %6146 = vmatprep.subr.mxu0 0.0
    %6147 = vmatpush1.msra.mxu0 %v5664
    %6148 = vmatprep.subr.mxu0 0.0
    %6149 = vmatpush1.msra.mxu0 %v5661
    %6150 = vmatprep.subr.mxu0 0.0
    %6151 = vmatpush1.msra.mxu0 %v5658
    %6152 = vmatprep.subr.mxu0 0.0
    %6153 = vmatpush1.msra.mxu0 %v5655
    %6154 = vmatprep.subr.mxu0 0.0
    %6155 = vmatpush1.msra.mxu0 %v5652
    %6156 = vmatprep.subr.mxu0 0.0
    %6157 = vmatpush1.msra.mxu0 %v5649
    %6158 = vmatprep.subr.mxu0 0.0
    %6159 = vmatpush1.msra.mxu0 %v5646
    %6160 = vmatprep.subr.mxu0 0.0
    %6161 = vmatpush1.msra.mxu0 %v5643
    %6162 = vmatprep.subr.mxu0 0.0
    %6163 = vmatpush1.msra.mxu0 %v5640
    %6164 = vmatprep.subr.mxu0 0.0
    %6165 = vmatpush1.msra.mxu0 %v5637
    %6166 = vmatprep.subr.mxu0 0.0
    %6167 = vmatpush1.msra.mxu0 %v5634
    %6168 = vmatprep.subr.mxu0 0.0
    %6169 = vmatpush1.msra.mxu0 %v5631
    %6170 = vmatprep.subr.mxu0 0.0
    %6171 = vmatpush1.msra.mxu0 %v5628
    %6172 = vmatprep.subr.mxu0 0.0
    %6173 = vmatpush1.msra.mxu0 %v5625
    %6174 = vmatprep.subr.mxu0 0.0
    %6175 = vmatpush2.msra.mxu0 0.0
    %6176 = vmatprep.subr.mxu0 0.0
    %6177 = vmatpush2.msra.mxu0 0.0
    %6178 = vmatprep.subr.mxu0 0.0
    %6179 = vmatpush2.msra.mxu0 0.0
    %6180 = vmatprep.subr.mxu0 0.0
    %6181 = vmatpush2.msra.mxu0 0.0
    %6182 = vmatprep.subr.mxu0 0.0
    %6183 = vmatpush2.msra.mxu0 0.0
    %6184 = vmatprep.subr.mxu0 0.0
    %6185 = vmatpush2.msra.mxu0 0.0
    %6186 = vmatprep.subr.mxu0 0.0
    %6187 = vmatpush2.msra.mxu0 0.0
    %6188 = vmatprep.subr.mxu0 0.0
    %6189 = vmatpush2.msra.mxu0 0.0
    %6190 = vmatprep.subr.mxu0 0.0
    %6191 = vmatpush2.msra.mxu0 0.0
    %6192 = vmatprep.subr.mxu0 0.0
    %6193 = vmatpush2.msra.mxu0 0.0
    %6194 = vmatprep.subr.mxu0 0.0
    %6195 = vmatpush2.msra.mxu0 0.0
    %6196 = vmatprep.subr.mxu0 0.0
    %6197 = vmatpush2.msra.mxu0 0.0
    %6198 = vmatprep.subr.mxu0 0.0
    %6199 = vmatpush2.msra.mxu0 0.0
    %6200 = vmatprep.subr.mxu0 0.0
    %6201 = vmatpush2.msra.mxu0 0.0
    %6202 = vmatprep.subr.mxu0 0.0
    %6203 = vmatpush2.msra.mxu0 0.0
    %6204 = vmatprep.subr.mxu0 0.0
    %6205 = vmatpush2.msra.mxu0 0.0
    %6206 = vmatprep.mubr.f32.mxu0 0.0
    %6207 = vmatmul.mubr.f32.gmra.mxu0 %v6069
    %v6208 = vpop.f32.mrf.mxu0
    %v6209 = vadd.f32 %v5901, %v6208
    %v6210 = vpop.f32.mrf.mxu0
    %6211 = vdwg.mxu0
    %v6213 = vrot.slane %v6138, 6
    %v6215 = vadd.f32 %v5804, %v6213
    %v6216 = vxor.u32 %v6215, 2147483648
    %v6217 = vmul.f32 %v6216, 1.442695
    %v6218 = vpow.pop %v6217
    %v6219 = vadd.f32 %v6218, 1.0
    %v6220 = vrcp.pop %v6219
    %v6221 = vmul.f32 1.0, %v6220
    %v6223 = vrot.slane %v6140, 6
    %v6225 = vadd.f32 %v5806, %v6223
    %v6226 = vxor.u32 %v6225, 2147483648
    %v6227 = vmul.f32 %v6226, 1.442695
    %v6228 = vpow.pop %v6227
    %v6229 = vadd.f32 %v6228, 1.0
    %v6230 = vrcp.pop %v6229
    %v6231 = vmul.f32 1.0, %v6230
    %v6233 = vrot.slane %v6209, 6
    %v6235 = vmul.f32 %v6221, %v6233
    %v6236 = vadd.f32 %v5881, %v6235
    %v6237 = vtanh.pop %v6236
    %v6238 = vsub.f32 1.0, %v6231
    %v6239 = vmul.f32 %v6238, %v6237
    %v6241 = vrot.slane %v6069, 6
    %v6243 = vmul.f32 %v6231, %v6241
    %v6244 = vadd.f32 %v6239, %v6243
    %6245 = vst [vmem:[#allocation2] sm:$0xc] %v6244
    %v6247 = vrot.slane %v6244, 2
    %6249 = vmatprep.subr.mxu0 %v5669
    %6250 = vmatpush1.msra.mxu0 %v5668
    %6251 = vmatprep.subr.mxu0 %v5666
    %6252 = vmatpush1.msra.mxu0 %v5665
    %6253 = vmatprep.subr.mxu0 %v5663
    %6254 = vmatpush1.msra.mxu0 %v5662
    %6255 = vmatprep.subr.mxu0 %v5660
    %6256 = vmatpush1.msra.mxu0 %v5659
    %6257 = vmatprep.subr.mxu0 %v5657
    %6258 = vmatpush1.msra.mxu0 %v5656
    %6259 = vmatprep.subr.mxu0 %v5654
    %6260 = vmatpush1.msra.mxu0 %v5653
    %6261 = vmatprep.subr.mxu0 %v5651
    %6262 = vmatpush1.msra.mxu0 %v5650
    %6263 = vmatprep.subr.mxu0 %v5648
    %6264 = vmatpush1.msra.mxu0 %v5647
    %6265 = vmatprep.subr.mxu0 %v5645
    %6266 = vmatpush1.msra.mxu0 %v5644
    %6267 = vmatprep.subr.mxu0 %v5642
    %6268 = vmatpush1.msra.mxu0 %v5641
    %6269 = vmatprep.subr.mxu0 %v5639
    %6270 = vmatpush1.msra.mxu0 %v5638
    %6271 = vmatprep.subr.mxu0 %v5636
    %6272 = vmatpush1.msra.mxu0 %v5635
    %6273 = vmatprep.subr.mxu0 %v5633
    %6274 = vmatpush1.msra.mxu0 %v5632
    %6275 = vmatprep.subr.mxu0 %v5630
    %6276 = vmatpush1.msra.mxu0 %v5629
    %6277 = vmatprep.subr.mxu0 %v5627
    %6278 = vmatpush1.msra.mxu0 %v5626
    %6279 = vmatprep.subr.mxu0 %v5624
    %6280 = vmatpush1.msra.mxu0 %v5623
    %6281 = vmatprep.subr.mxu0 0.0
    %6282 = vmatpush2.msra.mxu0 0.0
    %6283 = vmatprep.subr.mxu0 0.0
    %6284 = vmatpush2.msra.mxu0 0.0
    %6285 = vmatprep.subr.mxu0 0.0
    %6286 = vmatpush2.msra.mxu0 0.0
    %6287 = vmatprep.subr.mxu0 0.0
    %6288 = vmatpush2.msra.mxu0 0.0
    %6289 = vmatprep.subr.mxu0 0.0
    %6290 = vmatpush2.msra.mxu0 0.0
    %6291 = vmatprep.subr.mxu0 0.0
    %6292 = vmatpush2.msra.mxu0 0.0
    %6293 = vmatprep.subr.mxu0 0.0
    %6294 = vmatpush2.msra.mxu0 0.0
    %6295 = vmatprep.subr.mxu0 0.0
    %6296 = vmatpush2.msra.mxu0 0.0
    %6297 = vmatprep.subr.mxu0 0.0
    %6298 = vmatpush2.msra.mxu0 0.0
    %6299 = vmatprep.subr.mxu0 0.0
    %6300 = vmatpush2.msra.mxu0 0.0
    %6301 = vmatprep.subr.mxu0 0.0
    %6302 = vmatpush2.msra.mxu0 0.0
    %6303 = vmatprep.subr.mxu0 0.0
    %6304 = vmatpush2.msra.mxu0 0.0
    %6305 = vmatprep.subr.mxu0 0.0
    %6306 = vmatpush2.msra.mxu0 0.0
    %6307 = vmatprep.subr.mxu0 0.0
    %6308 = vmatpush2.msra.mxu0 0.0
    %6309 = vmatprep.subr.mxu0 0.0
    %6310 = vmatpush2.msra.mxu0 0.0
    %6311 = vmatprep.subr.mxu0 0.0
    %6312 = vmatpush2.msra.mxu0 0.0
    %6313 = vmatprep.mubr.f32.mxu0 0.0
    %6314 = vmatmul.mubr.f32.gmra.mxu0 %v6247
    %v6315 = vpop.f32.mrf.mxu0
    %v6316 = vadd.f32 %v5893, %v6315
    %v6317 = vpop.f32.mrf.mxu0
    %v6318 = vadd.f32 %v5897, %v6317
    %6319 = vdwg.mxu0
    %6320 = vmatprep.subr.mxu0 0.0
    %6321 = vmatpush1.msra.mxu0 %v5670
    %6322 = vmatprep.subr.mxu0 0.0
    %6323 = vmatpush1.msra.mxu0 %v5667
    %6324 = vmatprep.subr.mxu0 0.0
    %6325 = vmatpush1.msra.mxu0 %v5664
    %6326 = vmatprep.subr.mxu0 0.0
    %6327 = vmatpush1.msra.mxu0 %v5661
    %6328 = vmatprep.subr.mxu0 0.0
    %6329 = vmatpush1.msra.mxu0 %v5658
    %6330 = vmatprep.subr.mxu0 0.0
    %6331 = vmatpush1.msra.mxu0 %v5655
    %6332 = vmatprep.subr.mxu0 0.0
    %6333 = vmatpush1.msra.mxu0 %v5652
    %6334 = vmatprep.subr.mxu0 0.0
    %6335 = vmatpush1.msra.mxu0 %v5649
    %6336 = vmatprep.subr.mxu0 0.0
    %6337 = vmatpush1.msra.mxu0 %v5646
    %6338 = vmatprep.subr.mxu0 0.0
    %6339 = vmatpush1.msra.mxu0 %v5643
    %6340 = vmatprep.subr.mxu0 0.0
    %6341 = vmatpush1.msra.mxu0 %v5640
    %6342 = vmatprep.subr.mxu0 0.0
    %6343 = vmatpush1.msra.mxu0 %v5637
    %6344 = vmatprep.subr.mxu0 0.0
    %6345 = vmatpush1.msra.mxu0 %v5634
    %6346 = vmatprep.subr.mxu0 0.0
    %6347 = vmatpush1.msra.mxu0 %v5631
    %6348 = vmatprep.subr.mxu0 0.0
    %6349 = vmatpush1.msra.mxu0 %v5628
    %6350 = vmatprep.subr.mxu0 0.0
    %6351 = vmatpush1.msra.mxu0 %v5625
    %6352 = vmatprep.subr.mxu0 0.0
    %6353 = vmatpush2.msra.mxu0 0.0
    %6354 = vmatprep.subr.mxu0 0.0
    %6355 = vmatpush2.msra.mxu0 0.0
    %6356 = vmatprep.subr.mxu0 0.0
    %6357 = vmatpush2.msra.mxu0 0.0
    %6358 = vmatprep.subr.mxu0 0.0
    %6359 = vmatpush2.msra.mxu0 0.0
    %6360 = vmatprep.subr.mxu0 0.0
    %6361 = vmatpush2.msra.mxu0 0.0
    %6362 = vmatprep.subr.mxu0 0.0
    %6363 = vmatpush2.msra.mxu0 0.0
    %6364 = vmatprep.subr.mxu0 0.0
    %6365 = vmatpush2.msra.mxu0 0.0
    %6366 = vmatprep.subr.mxu0 0.0
    %6367 = vmatpush2.msra.mxu0 0.0
    %6368 = vmatprep.subr.mxu0 0.0
    %6369 = vmatpush2.msra.mxu0 0.0
    %6370 = vmatprep.subr.mxu0 0.0
    %6371 = vmatpush2.msra.mxu0 0.0
    %6372 = vmatprep.subr.mxu0 0.0
    %6373 = vmatpush2.msra.mxu0 0.0
    %6374 = vmatprep.subr.mxu0 0.0
    %6375 = vmatpush2.msra.mxu0 0.0
    %6376 = vmatprep.subr.mxu0 0.0
    %6377 = vmatpush2.msra.mxu0 0.0
    %6378 = vmatprep.subr.mxu0 0.0
    %6379 = vmatpush2.msra.mxu0 0.0
    %6380 = vmatprep.subr.mxu0 0.0
    %6381 = vmatpush2.msra.mxu0 0.0
    %6382 = vmatprep.subr.mxu0 0.0
    %6383 = vmatpush2.msra.mxu0 0.0
    %6384 = vmatprep.mubr.f32.mxu0 0.0
    %6385 = vmatmul.mubr.f32.gmra.mxu0 %v6247
    %v6386 = vpop.f32.mrf.mxu0
    %v6387 = vadd.f32 %v5901, %v6386
    %v6388 = vpop.f32.mrf.mxu0
    %6389 = vdwg.mxu0
    %v6391 = vrot.slane %v6316, 4
    %v6393 = vadd.f32 %v5804, %v6391
    %v6394 = vxor.u32 %v6393, 2147483648
    %v6395 = vmul.f32 %v6394, 1.442695
    %v6396 = vpow.pop %v6395
    %v6397 = vadd.f32 %v6396, 1.0
    %v6398 = vrcp.pop %v6397
    %v6399 = vmul.f32 1.0, %v6398
    %v6401 = vrot.slane %v6318, 4
    %v6403 = vadd.f32 %v5806, %v6401
    %v6404 = vxor.u32 %v6403, 2147483648
    %v6405 = vmul.f32 %v6404, 1.442695
    %v6406 = vpow.pop %v6405
    %v6407 = vadd.f32 %v6406, 1.0
    %v6408 = vrcp.pop %v6407
    %v6409 = vmul.f32 1.0, %v6408
    %v6411 = vrot.slane %v6387, 4
    %v6413 = vmul.f32 %v6399, %v6411
    %v6414 = vadd.f32 %v5881, %v6413
    %v6415 = vtanh.pop %v6414
    %v6416 = vsub.f32 1.0, %v6409
    %v6417 = vmul.f32 %v6416, %v6415
    %v6418 = vrot.slane %v6244, 6
    %v6420 = vmul.f32 %v6409, %v6418
    %v6421 = vadd.f32 %v6417, %v6420
    %6422 = vst [vmem:[#allocation2] sm:$0x30] %v6421
    %v6424 = vrot.slane %v6421, 4
    %6426 = vmatprep.subr.mxu0 %v5669
    %6427 = vmatpush1.msra.mxu0 %v5668
    %6428 = vmatprep.subr.mxu0 %v5666
    %6429 = vmatpush1.msra.mxu0 %v5665
    %6430 = vmatprep.subr.mxu0 %v5663
    %6431 = vmatpush1.msra.mxu0 %v5662
    %6432 = vmatprep.subr.mxu0 %v5660
    %6433 = vmatpush1.msra.mxu0 %v5659
    %6434 = vmatprep.subr.mxu0 %v5657
    %6435 = vmatpush1.msra.mxu0 %v5656
    %6436 = vmatprep.subr.mxu0 %v5654
    %6437 = vmatpush1.msra.mxu0 %v5653
    %6438 = vmatprep.subr.mxu0 %v5651
    %6439 = vmatpush1.msra.mxu0 %v5650
    %6440 = vmatprep.subr.mxu0 %v5648
    %6441 = vmatpush1.msra.mxu0 %v5647
    %6442 = vmatprep.subr.mxu0 %v5645
    %6443 = vmatpush1.msra.mxu0 %v5644
    %6444 = vmatprep.subr.mxu0 %v5642
    %6445 = vmatpush1.msra.mxu0 %v5641
    %6446 = vmatprep.subr.mxu0 %v5639
    %6447 = vmatpush1.msra.mxu0 %v5638
    %6448 = vmatprep.subr.mxu0 %v5636
    %6449 = vmatpush1.msra.mxu0 %v5635
    %6450 = vmatprep.subr.mxu0 %v5633
    %6451 = vmatpush1.msra.mxu0 %v5632
    %6452 = vmatprep.subr.mxu0 %v5630
    %6453 = vmatpush1.msra.mxu0 %v5629
    %6454 = vmatprep.subr.mxu0 %v5627
    %6455 = vmatpush1.msra.mxu0 %v5626
    %6456 = vmatprep.subr.mxu0 %v5624
    %6457 = vmatpush1.msra.mxu0 %v5623
    %6458 = vmatprep.subr.mxu0 0.0
    %6459 = vmatpush2.msra.mxu0 0.0
    %6460 = vmatprep.subr.mxu0 0.0
    %6461 = vmatpush2.msra.mxu0 0.0
    %6462 = vmatprep.subr.mxu0 0.0
    %6463 = vmatpush2.msra.mxu0 0.0
    %6464 = vmatprep.subr.mxu0 0.0
    %6465 = vmatpush2.msra.mxu0 0.0
    %6466 = vmatprep.subr.mxu0 0.0
    %6467 = vmatpush2.msra.mxu0 0.0
    %6468 = vmatprep.subr.mxu0 0.0
    %6469 = vmatpush2.msra.mxu0 0.0
    %6470 = vmatprep.subr.mxu0 0.0
    %6471 = vmatpush2.msra.mxu0 0.0
    %6472 = vmatprep.subr.mxu0 0.0
    %6473 = vmatpush2.msra.mxu0 0.0
    %6474 = vmatprep.subr.mxu0 0.0
    %6475 = vmatpush2.msra.mxu0 0.0
    %6476 = vmatprep.subr.mxu0 0.0
    %6477 = vmatpush2.msra.mxu0 0.0
    %6478 = vmatprep.subr.mxu0 0.0
    %6479 = vmatpush2.msra.mxu0 0.0
    %6480 = vmatprep.subr.mxu0 0.0
    %6481 = vmatpush2.msra.mxu0 0.0
    %6482 = vmatprep.subr.mxu0 0.0
    %6483 = vmatpush2.msra.mxu0 0.0
    %6484 = vmatprep.subr.mxu0 0.0
    %6485 = vmatpush2.msra.mxu0 0.0
    %6486 = vmatprep.subr.mxu0 0.0
    %6487 = vmatpush2.msra.mxu0 0.0
    %6488 = vmatprep.subr.mxu0 0.0
    %6489 = vmatpush2.msra.mxu0 0.0
    %6490 = vmatprep.mubr.f32.mxu0 0.0
    %6491 = vmatmul.mubr.f32.gmra.mxu0 %v6424
    %v6492 = vpop.f32.mrf.mxu0
    %v6493 = vadd.f32 %v5893, %v6492
    %v6494 = vpop.f32.mrf.mxu0
    %v6495 = vadd.f32 %v5897, %v6494
    %6496 = vdwg.mxu0
    %6497 = vmatprep.subr.mxu0 0.0
    %6498 = vmatpush1.msra.mxu0 %v5670
    %6499 = vmatprep.subr.mxu0 0.0
    %6500 = vmatpush1.msra.mxu0 %v5667
    %6501 = vmatprep.subr.mxu0 0.0
    %6502 = vmatpush1.msra.mxu0 %v5664
    %6503 = vmatprep.subr.mxu0 0.0
    %6504 = vmatpush1.msra.mxu0 %v5661
    %6505 = vmatprep.subr.mxu0 0.0
    %6506 = vmatpush1.msra.mxu0 %v5658
    %6507 = vmatprep.subr.mxu0 0.0
    %6508 = vmatpush1.msra.mxu0 %v5655
    %6509 = vmatprep.subr.mxu0 0.0
    %6510 = vmatpush1.msra.mxu0 %v5652
    %6511 = vmatprep.subr.mxu0 0.0
    %6512 = vmatpush1.msra.mxu0 %v5649
    %6513 = vmatprep.subr.mxu0 0.0
    %6514 = vmatpush1.msra.mxu0 %v5646
    %6515 = vmatprep.subr.mxu0 0.0
    %6516 = vmatpush1.msra.mxu0 %v5643
    %6517 = vmatprep.subr.mxu0 0.0
    %6518 = vmatpush1.msra.mxu0 %v5640
    %6519 = vmatprep.subr.mxu0 0.0
    %6520 = vmatpush1.msra.mxu0 %v5637
    %6521 = vmatprep.subr.mxu0 0.0
    %6522 = vmatpush1.msra.mxu0 %v5634
    %6523 = vmatprep.subr.mxu0 0.0
    %6524 = vmatpush1.msra.mxu0 %v5631
    %6525 = vmatprep.subr.mxu0 0.0
    %6526 = vmatpush1.msra.mxu0 %v5628
    %6527 = vmatprep.subr.mxu0 0.0
    %6528 = vmatpush1.msra.mxu0 %v5625
    %6529 = vmatprep.subr.mxu0 0.0
    %6530 = vmatpush2.msra.mxu0 0.0
    %6531 = vmatprep.subr.mxu0 0.0
    %6532 = vmatpush2.msra.mxu0 0.0
    %6533 = vmatprep.subr.mxu0 0.0
    %6534 = vmatpush2.msra.mxu0 0.0
    %6535 = vmatprep.subr.mxu0 0.0
    %6536 = vmatpush2.msra.mxu0 0.0
    %6537 = vmatprep.subr.mxu0 0.0
    %6538 = vmatpush2.msra.mxu0 0.0
    %6539 = vmatprep.subr.mxu0 0.0
    %6540 = vmatpush2.msra.mxu0 0.0
    %6541 = vmatprep.subr.mxu0 0.0
    %6542 = vmatpush2.msra.mxu0 0.0
    %6543 = vmatprep.subr.mxu0 0.0
    %6544 = vmatpush2.msra.mxu0 0.0
    %6545 = vmatprep.subr.mxu0 0.0
    %6546 = vmatpush2.msra.mxu0 0.0
    %6547 = vmatprep.subr.mxu0 0.0
    %6548 = vmatpush2.msra.mxu0 0.0
    %6549 = vmatprep.subr.mxu0 0.0
    %6550 = vmatpush2.msra.mxu0 0.0
    %6551 = vmatprep.subr.mxu0 0.0
    %6552 = vmatpush2.msra.mxu0 0.0
    %6553 = vmatprep.subr.mxu0 0.0
    %6554 = vmatpush2.msra.mxu0 0.0
    %6555 = vmatprep.subr.mxu0 0.0
    %6556 = vmatpush2.msra.mxu0 0.0
    %6557 = vmatprep.subr.mxu0 0.0
    %6558 = vmatpush2.msra.mxu0 0.0
    %6559 = vmatprep.subr.mxu0 0.0
    %6560 = vmatpush2.msra.mxu0 0.0
    %6561 = vmatprep.mubr.f32.mxu0 0.0
    %6562 = vmatmul.mubr.f32.gmra.mxu0 %v6424
    %v6563 = vpop.f32.mrf.mxu0
    %v6564 = vadd.f32 %v5901, %v6563
    %v6565 = vpop.f32.mrf.mxu0
    %6566 = vdwg.mxu0
    %v6568 = vrot.slane %v6493, 2
    %v6570 = vadd.f32 %v5804, %v6568
    %v6571 = vxor.u32 %v6570, 2147483648
    %v6572 = vmul.f32 %v6571, 1.442695
    %v6573 = vpow.pop %v6572
    %v6574 = vadd.f32 %v6573, 1.0
    %v6575 = vrcp.pop %v6574
    %v6576 = vmul.f32 1.0, %v6575
    %v6578 = vrot.slane %v6495, 2
    %v6580 = vadd.f32 %v5806, %v6578
    %v6581 = vxor.u32 %v6580, 2147483648
    %v6582 = vmul.f32 %v6581, 1.442695
    %v6583 = vpow.pop %v6582
    %v6584 = vadd.f32 %v6583, 1.0
    %v6585 = vrcp.pop %v6584
    %v6586 = vmul.f32 1.0, %v6585
    %v6588 = vrot.slane %v6564, 2
    %v6590 = vmul.f32 %v6576, %v6588
    %v6591 = vadd.f32 %v5881, %v6590
    %v6592 = vtanh.pop %v6591
    %v6593 = vsub.f32 1.0, %v6586
    %v6594 = vmul.f32 %v6593, %v6592
    %v6595 = vrot.slane %v6421, 6
    %v6597 = vmul.f32 %v6586, %v6595
    %v6598 = vadd.f32 %v6594, %v6597
    %6599 = vst [vmem:[#allocation2] sm:$0xc0] %v6598
    %v6601 = vrot.slane %v6598, 6
    %6603 = vmatprep.subr.mxu0 %v5669
    %6604 = vmatpush1.msra.mxu0 %v5668
    %6605 = vmatprep.subr.mxu0 %v5666
    %6606 = vmatpush1.msra.mxu0 %v5665
    %6607 = vmatprep.subr.mxu0 %v5663
    %6608 = vmatpush1.msra.mxu0 %v5662
    %6609 = vmatprep.subr.mxu0 %v5660
    %6610 = vmatpush1.msra.mxu0 %v5659
    %6611 = vmatprep.subr.mxu0 %v5657
    %6612 = vmatpush1.msra.mxu0 %v5656
    %6613 = vmatprep.subr.mxu0 %v5654
    %6614 = vmatpush1.msra.mxu0 %v5653
    %6615 = vmatprep.subr.mxu0 %v5651
    %6616 = vmatpush1.msra.mxu0 %v5650
    %6617 = vmatprep.subr.mxu0 %v5648
    %6618 = vmatpush1.msra.mxu0 %v5647
    %6619 = vmatprep.subr.mxu0 %v5645
    %6620 = vmatpush1.msra.mxu0 %v5644
    %6621 = vmatprep.subr.mxu0 %v5642
    %6622 = vmatpush1.msra.mxu0 %v5641
    %6623 = vmatprep.subr.mxu0 %v5639
    %6624 = vmatpush1.msra.mxu0 %v5638
    %6625 = vmatprep.subr.mxu0 %v5636
    %6626 = vmatpush1.msra.mxu0 %v5635
    %6627 = vmatprep.subr.mxu0 %v5633
    %6628 = vmatpush1.msra.mxu0 %v5632
    %6629 = vmatprep.subr.mxu0 %v5630
    %6630 = vmatpush1.msra.mxu0 %v5629
    %6631 = vmatprep.subr.mxu0 %v5627
    %6632 = vmatpush1.msra.mxu0 %v5626
    %6633 = vmatprep.subr.mxu0 %v5624
    %6634 = vmatpush1.msra.mxu0 %v5623
    %6635 = vmatprep.subr.mxu0 0.0
    %6636 = vmatpush2.msra.mxu0 0.0
    %6637 = vmatprep.subr.mxu0 0.0
    %6638 = vmatpush2.msra.mxu0 0.0
    %6639 = vmatprep.subr.mxu0 0.0
    %6640 = vmatpush2.msra.mxu0 0.0
    %6641 = vmatprep.subr.mxu0 0.0
    %6642 = vmatpush2.msra.mxu0 0.0
    %6643 = vmatprep.subr.mxu0 0.0
    %6644 = vmatpush2.msra.mxu0 0.0
    %6645 = vmatprep.subr.mxu0 0.0
    %6646 = vmatpush2.msra.mxu0 0.0
    %6647 = vmatprep.subr.mxu0 0.0
    %6648 = vmatpush2.msra.mxu0 0.0
    %6649 = vmatprep.subr.mxu0 0.0
    %6650 = vmatpush2.msra.mxu0 0.0
    %6651 = vmatprep.subr.mxu0 0.0
    %6652 = vmatpush2.msra.mxu0 0.0
    %6653 = vmatprep.subr.mxu0 0.0
    %6654 = vmatpush2.msra.mxu0 0.0
    %6655 = vmatprep.subr.mxu0 0.0
    %6656 = vmatpush2.msra.mxu0 0.0
    %6657 = vmatprep.subr.mxu0 0.0
    %6658 = vmatpush2.msra.mxu0 0.0
    %6659 = vmatprep.subr.mxu0 0.0
    %6660 = vmatpush2.msra.mxu0 0.0
    %6661 = vmatprep.subr.mxu0 0.0
    %6662 = vmatpush2.msra.mxu0 0.0
    %6663 = vmatprep.subr.mxu0 0.0
    %6664 = vmatpush2.msra.mxu0 0.0
    %6665 = vmatprep.subr.mxu0 0.0
    %6666 = vmatpush2.msra.mxu0 0.0
    %6667 = vmatprep.mubr.f32.mxu0 0.0
    %6668 = vmatmul.mubr.f32.gmra.mxu0 %v6601
    %v6669 = vpop.f32.mrf.mxu0
    %v6670 = vadd.f32 %v5893, %v6669
    %v6671 = vpop.f32.mrf.mxu0
    %v6672 = vadd.f32 %v5897, %v6671
    %6673 = vdwg.mxu0
    %6674 = vmatprep.subr.mxu0 0.0
    %6675 = vmatpush1.msra.mxu0 %v5670
    %6676 = vmatprep.subr.mxu0 0.0
    %6677 = vmatpush1.msra.mxu0 %v5667
    %6678 = vmatprep.subr.mxu0 0.0
    %6679 = vmatpush1.msra.mxu0 %v5664
    %6680 = vmatprep.subr.mxu0 0.0
    %6681 = vmatpush1.msra.mxu0 %v5661
    %6682 = vmatprep.subr.mxu0 0.0
    %6683 = vmatpush1.msra.mxu0 %v5658
    %6684 = vmatprep.subr.mxu0 0.0
    %6685 = vmatpush1.msra.mxu0 %v5655
    %6686 = vmatprep.subr.mxu0 0.0
    %6687 = vmatpush1.msra.mxu0 %v5652
    %6688 = vmatprep.subr.mxu0 0.0
    %6689 = vmatpush1.msra.mxu0 %v5649
    %6690 = vmatprep.subr.mxu0 0.0
    %6691 = vmatpush1.msra.mxu0 %v5646
    %6692 = vmatprep.subr.mxu0 0.0
    %6693 = vmatpush1.msra.mxu0 %v5643
    %6694 = vmatprep.subr.mxu0 0.0
    %6695 = vmatpush1.msra.mxu0 %v5640
    %6696 = vmatprep.subr.mxu0 0.0
    %6697 = vmatpush1.msra.mxu0 %v5637
    %6698 = vmatprep.subr.mxu0 0.0
    %6699 = vmatpush1.msra.mxu0 %v5634
    %6700 = vmatprep.subr.mxu0 0.0
    %6701 = vmatpush1.msra.mxu0 %v5631
    %6702 = vmatprep.subr.mxu0 0.0
    %6703 = vmatpush1.msra.mxu0 %v5628
    %6704 = vmatprep.subr.mxu0 0.0
    %6705 = vmatpush1.msra.mxu0 %v5625
    %6706 = vmatprep.subr.mxu0 0.0
    %6707 = vmatpush2.msra.mxu0 0.0
    %6708 = vmatprep.subr.mxu0 0.0
    %6709 = vmatpush2.msra.mxu0 0.0
    %6710 = vmatprep.subr.mxu0 0.0
    %6711 = vmatpush2.msra.mxu0 0.0
    %6712 = vmatprep.subr.mxu0 0.0
    %6713 = vmatpush2.msra.mxu0 0.0
    %6714 = vmatprep.subr.mxu0 0.0
    %6715 = vmatpush2.msra.mxu0 0.0
    %6716 = vmatprep.subr.mxu0 0.0
    %6717 = vmatpush2.msra.mxu0 0.0
    %6718 = vmatprep.subr.mxu0 0.0
    %6719 = vmatpush2.msra.mxu0 0.0
    %6720 = vmatprep.subr.mxu0 0.0
    %6721 = vmatpush2.msra.mxu0 0.0
    %6722 = vmatprep.subr.mxu0 0.0
    %6723 = vmatpush2.msra.mxu0 0.0
    %6724 = vmatprep.subr.mxu0 0.0
    %6725 = vmatpush2.msra.mxu0 0.0
    %6726 = vmatprep.subr.mxu0 0.0
    %6727 = vmatpush2.msra.mxu0 0.0
    %6728 = vmatprep.subr.mxu0 0.0
    %6729 = vmatpush2.msra.mxu0 0.0
    %6730 = vmatprep.subr.mxu0 0.0
    %6731 = vmatpush2.msra.mxu0 0.0
    %6732 = vmatprep.subr.mxu0 0.0
    %6733 = vmatpush2.msra.mxu0 0.0
    %6734 = vmatprep.subr.mxu0 0.0
    %6735 = vmatpush2.msra.mxu0 0.0
    %6736 = vmatprep.subr.mxu0 0.0
    %6737 = vmatpush2.msra.mxu0 0.0
    %6738 = vmatprep.mubr.f32.mxu0 0.0
    %6739 = vmatmul.mubr.f32.gmra.mxu0 %v6601
    %v6740 = vpop.f32.mrf.mxu0
    %v6741 = vadd.f32 %v5901, %v6740
    %v6742 = vpop.f32.mrf.mxu0
    %6743 = vdwg.mxu0
    %v6744 = vadd.f32 %v5810, %v6670
    %v6745 = vxor.u32 %v6744, 2147483648
    %v6746 = vmul.f32 %v6745, 1.442695
    %v6747 = vpow.pop %v6746
    %v6748 = vadd.f32 %v6747, 1.0
    %v6749 = vrcp.pop %v6748
    %v6750 = vmul.f32 1.0, %v6749
    %v6751 = vadd.f32 %v5812, %v6672
    %v6752 = vxor.u32 %v6751, 2147483648
    %v6753 = vmul.f32 %v6752, 1.442695
    %v6754 = vpow.pop %v6753
    %v6755 = vadd.f32 %v6754, 1.0
    %v6756 = vrcp.pop %v6755
    %v6757 = vmul.f32 1.0, %v6756
    %v6758 = vmul.f32 %v6750, %v6741
    %v6759 = vadd.f32 %v5886, %v6758
    %v6760 = vtanh.pop %v6759
    %v6761 = vsub.f32 1.0, %v6757
    %v6762 = vmul.f32 %v6761, %v6760
    %v6763 = vmul.f32 %v6757, %v6601
    %v6764 = vadd.f32 %v6762, %v6763
    %6765 = vst [vmem:[#allocation2 + $0x8] sm:$0x3] %v6764
    %6766 = vmatprep.subr.mxu0 %v5669
    %6767 = vmatpush1.msra.mxu0 %v5668
    %6768 = vmatprep.subr.mxu0 %v5666
    %6769 = vmatpush1.msra.mxu0 %v5665
    %6770 = vmatprep.subr.mxu0 %v5663
    %6771 = vmatpush1.msra.mxu0 %v5662
    %6772 = vmatprep.subr.mxu0 %v5660
    %6773 = vmatpush1.msra.mxu0 %v5659
    %6774 = vmatprep.subr.mxu0 %v5657
    %6775 = vmatpush1.msra.mxu0 %v5656
    %6776 = vmatprep.subr.mxu0 %v5654
    %6777 = vmatpush1.msra.mxu0 %v5653
    %6778 = vmatprep.subr.mxu0 %v5651
    %6779 = vmatpush1.msra.mxu0 %v5650
    %6780 = vmatprep.subr.mxu0 %v5648
    %6781 = vmatpush1.msra.mxu0 %v5647
    %6782 = vmatprep.subr.mxu0 %v5645
    %6783 = vmatpush1.msra.mxu0 %v5644
    %6784 = vmatprep.subr.mxu0 %v5642
    %6785 = vmatpush1.msra.mxu0 %v5641
    %6786 = vmatprep.subr.mxu0 %v5639
    %6787 = vmatpush1.msra.mxu0 %v5638
    %6788 = vmatprep.subr.mxu0 %v5636
    %6789 = vmatpush1.msra.mxu0 %v5635
    %6790 = vmatprep.subr.mxu0 %v5633
    %6791 = vmatpush1.msra.mxu0 %v5632
    %6792 = vmatprep.subr.mxu0 %v5630
    %6793 = vmatpush1.msra.mxu0 %v5629
    %6794 = vmatprep.subr.mxu0 %v5627
    %6795 = vmatpush1.msra.mxu0 %v5626
    %6796 = vmatprep.subr.mxu0 %v5624
    %6797 = vmatpush1.msra.mxu0 %v5623
    %6798 = vmatprep.subr.mxu0 0.0
    %6799 = vmatpush2.msra.mxu0 0.0
    %6800 = vmatprep.subr.mxu0 0.0
    %6801 = vmatpush2.msra.mxu0 0.0
    %6802 = vmatprep.subr.mxu0 0.0
    %6803 = vmatpush2.msra.mxu0 0.0
    %6804 = vmatprep.subr.mxu0 0.0
    %6805 = vmatpush2.msra.mxu0 0.0
    %6806 = vmatprep.subr.mxu0 0.0
    %6807 = vmatpush2.msra.mxu0 0.0
    %6808 = vmatprep.subr.mxu0 0.0
    %6809 = vmatpush2.msra.mxu0 0.0
    %6810 = vmatprep.subr.mxu0 0.0
    %6811 = vmatpush2.msra.mxu0 0.0
    %6812 = vmatprep.subr.mxu0 0.0
    %6813 = vmatpush2.msra.mxu0 0.0
    %6814 = vmatprep.subr.mxu0 0.0
    %6815 = vmatpush2.msra.mxu0 0.0
    %6816 = vmatprep.subr.mxu0 0.0
    %6817 = vmatpush2.msra.mxu0 0.0
    %6818 = vmatprep.subr.mxu0 0.0
    %6819 = vmatpush2.msra.mxu0 0.0
    %6820 = vmatprep.subr.mxu0 0.0
    %6821 = vmatpush2.msra.mxu0 0.0
    %6822 = vmatprep.subr.mxu0 0.0
    %6823 = vmatpush2.msra.mxu0 0.0
    %6824 = vmatprep.subr.mxu0 0.0
    %6825 = vmatpush2.msra.mxu0 0.0
    %6826 = vmatprep.subr.mxu0 0.0
    %6827 = vmatpush2.msra.mxu0 0.0
    %6828 = vmatprep.subr.mxu0 0.0
    %6829 = vmatpush2.msra.mxu0 0.0
    %6830 = vmatprep.mubr.f32.mxu0 0.0
    %6831 = vmatmul.mubr.f32.gmra.mxu0 %v6764
    %v6832 = vpop.f32.mrf.mxu0
    %v6833 = vadd.f32 %v5893, %v6832
    %v6834 = vpop.f32.mrf.mxu0
    %v6835 = vadd.f32 %v5897, %v6834
    %6836 = vdwg.mxu0
    %6837 = vmatprep.subr.mxu0 0.0
    %6838 = vmatpush1.msra.mxu0 %v5670
    %6839 = vmatprep.subr.mxu0 0.0
    %6840 = vmatpush1.msra.mxu0 %v5667
    %6841 = vmatprep.subr.mxu0 0.0
    %6842 = vmatpush1.msra.mxu0 %v5664
    %6843 = vmatprep.subr.mxu0 0.0
    %6844 = vmatpush1.msra.mxu0 %v5661
    %6845 = vmatprep.subr.mxu0 0.0
    %6846 = vmatpush1.msra.mxu0 %v5658
    %6847 = vmatprep.subr.mxu0 0.0
    %6848 = vmatpush1.msra.mxu0 %v5655
    %6849 = vmatprep.subr.mxu0 0.0
    %6850 = vmatpush1.msra.mxu0 %v5652
    %6851 = vmatprep.subr.mxu0 0.0
    %6852 = vmatpush1.msra.mxu0 %v5649
    %6853 = vmatprep.subr.mxu0 0.0
    %6854 = vmatpush1.msra.mxu0 %v5646
    %6855 = vmatprep.subr.mxu0 0.0
    %6856 = vmatpush1.msra.mxu0 %v5643
    %6857 = vmatprep.subr.mxu0 0.0
    %6858 = vmatpush1.msra.mxu0 %v5640
    %6859 = vmatprep.subr.mxu0 0.0
    %6860 = vmatpush1.msra.mxu0 %v5637
    %6861 = vmatprep.subr.mxu0 0.0
    %6862 = vmatpush1.msra.mxu0 %v5634
    %6863 = vmatprep.subr.mxu0 0.0
    %6864 = vmatpush1.msra.mxu0 %v5631
    %6865 = vmatprep.subr.mxu0 0.0
    %6866 = vmatpush1.msra.mxu0 %v5628
    %6867 = vmatprep.subr.mxu0 0.0
    %6868 = vmatpush1.msra.mxu0 %v5625
    %6869 = vmatprep.subr.mxu0 0.0
    %6870 = vmatpush2.msra.mxu0 0.0
    %6871 = vmatprep.subr.mxu0 0.0
    %6872 = vmatpush2.msra.mxu0 0.0
    %6873 = vmatprep.subr.mxu0 0.0
    %6874 = vmatpush2.msra.mxu0 0.0
    %6875 = vmatprep.subr.mxu0 0.0
    %6876 = vmatpush2.msra.mxu0 0.0
    %6877 = vmatprep.subr.mxu0 0.0
    %6878 = vmatpush2.msra.mxu0 0.0
    %6879 = vmatprep.subr.mxu0 0.0
    %6880 = vmatpush2.msra.mxu0 0.0
    %6881 = vmatprep.subr.mxu0 0.0
    %6882 = vmatpush2.msra.mxu0 0.0
    %6883 = vmatprep.subr.mxu0 0.0
    %6884 = vmatpush2.msra.mxu0 0.0
    %6885 = vmatprep.subr.mxu0 0.0
    %6886 = vmatpush2.msra.mxu0 0.0
    %6887 = vmatprep.subr.mxu0 0.0
    %6888 = vmatpush2.msra.mxu0 0.0
    %6889 = vmatprep.subr.mxu0 0.0
    %6890 = vmatpush2.msra.mxu0 0.0
    %6891 = vmatprep.subr.mxu0 0.0
    %6892 = vmatpush2.msra.mxu0 0.0
    %6893 = vmatprep.subr.mxu0 0.0
    %6894 = vmatpush2.msra.mxu0 0.0
    %6895 = vmatprep.subr.mxu0 0.0
    %6896 = vmatpush2.msra.mxu0 0.0
    %6897 = vmatprep.subr.mxu0 0.0
    %6898 = vmatpush2.msra.mxu0 0.0
    %6899 = vmatprep.subr.mxu0 0.0
    %6900 = vmatpush2.msra.mxu0 0.0
    %6901 = vmatprep.mubr.f32.mxu0 0.0
    %6902 = vmatmul.mubr.f32.gmra.mxu0 %v6764
    %v6903 = vpop.f32.mrf.mxu0
    %v6904 = vadd.f32 %v5901, %v6903
    %v6905 = vpop.f32.mrf.mxu0
    %6906 = vdwg.mxu0
    %v6908 = vrot.slane %v6833, 6
    %v6910 = vadd.f32 %v5810, %v6908
    %v6911 = vxor.u32 %v6910, 2147483648
    %v6912 = vmul.f32 %v6911, 1.442695
    %v6913 = vpow.pop %v6912
    %v6914 = vadd.f32 %v6913, 1.0
    %v6915 = vrcp.pop %v6914
    %v6916 = vmul.f32 1.0, %v6915
    %v6918 = vrot.slane %v6835, 6
    %v6920 = vadd.f32 %v5812, %v6918
    %v6921 = vxor.u32 %v6920, 2147483648
    %v6922 = vmul.f32 %v6921, 1.442695
    %v6923 = vpow.pop %v6922
    %v6924 = vadd.f32 %v6923, 1.0
    %v6925 = vrcp.pop %v6924
    %v6926 = vmul.f32 1.0, %v6925
    %v6928 = vrot.slane %v6904, 6
    %v6930 = vmul.f32 %v6916, %v6928
    %v6931 = vadd.f32 %v5886, %v6930
    %v6932 = vtanh.pop %v6931
    %v6933 = vsub.f32 1.0, %v6926
    %v6934 = vmul.f32 %v6933, %v6932
    %v6936 = vrot.slane %v6764, 6
    %v6938 = vmul.f32 %v6926, %v6936
    %v6939 = vadd.f32 %v6934, %v6938
    %6940 = vst [vmem:[#allocation2 + $0x8] sm:$0xc] %v6939
    %v6942 = vrot.slane %v6939, 2
    %6944 = vmatprep.subr.mxu0 %v5669
    %6945 = vmatpush1.msra.mxu0 %v5668
    %6946 = vmatprep.subr.mxu0 %v5666
    %6947 = vmatpush1.msra.mxu0 %v5665
    %6948 = vmatprep.subr.mxu0 %v5663
    %6949 = vmatpush1.msra.mxu0 %v5662
    %6950 = vmatprep.subr.mxu0 %v5660
    %6951 = vmatpush1.msra.mxu0 %v5659
    %6952 = vmatprep.subr.mxu0 %v5657
    %6953 = vmatpush1.msra.mxu0 %v5656
    %6954 = vmatprep.subr.mxu0 %v5654
    %6955 = vmatpush1.msra.mxu0 %v5653
    %6956 = vmatprep.subr.mxu0 %v5651
    %6957 = vmatpush1.msra.mxu0 %v5650
    %6958 = vmatprep.subr.mxu0 %v5648
    %6959 = vmatpush1.msra.mxu0 %v5647
    %6960 = vmatprep.subr.mxu0 %v5645
    %6961 = vmatpush1.msra.mxu0 %v5644
    %6962 = vmatprep.subr.mxu0 %v5642
    %6963 = vmatpush1.msra.mxu0 %v5641
    %6964 = vmatprep.subr.mxu0 %v5639
    %6965 = vmatpush1.msra.mxu0 %v5638
    %6966 = vmatprep.subr.mxu0 %v5636
    %6967 = vmatpush1.msra.mxu0 %v5635
    %6968 = vmatprep.subr.mxu0 %v5633
    %6969 = vmatpush1.msra.mxu0 %v5632
    %6970 = vmatprep.subr.mxu0 %v5630
    %6971 = vmatpush1.msra.mxu0 %v5629
    %6972 = vmatprep.subr.mxu0 %v5627
    %6973 = vmatpush1.msra.mxu0 %v5626
    %6974 = vmatprep.subr.mxu0 %v5624
    %6975 = vmatpush1.msra.mxu0 %v5623
    %6976 = vmatprep.subr.mxu0 0.0
    %6977 = vmatpush2.msra.mxu0 0.0
    %6978 = vmatprep.subr.mxu0 0.0
    %6979 = vmatpush2.msra.mxu0 0.0
    %6980 = vmatprep.subr.mxu0 0.0
    %6981 = vmatpush2.msra.mxu0 0.0
    %6982 = vmatprep.subr.mxu0 0.0
    %6983 = vmatpush2.msra.mxu0 0.0
    %6984 = vmatprep.subr.mxu0 0.0
    %6985 = vmatpush2.msra.mxu0 0.0
    %6986 = vmatprep.subr.mxu0 0.0
    %6987 = vmatpush2.msra.mxu0 0.0
    %6988 = vmatprep.subr.mxu0 0.0
    %6989 = vmatpush2.msra.mxu0 0.0
    %6990 = vmatprep.subr.mxu0 0.0
    %6991 = vmatpush2.msra.mxu0 0.0
    %6992 = vmatprep.subr.mxu0 0.0
    %6993 = vmatpush2.msra.mxu0 0.0
    %6994 = vmatprep.subr.mxu0 0.0
    %6995 = vmatpush2.msra.mxu0 0.0
    %6996 = vmatprep.subr.mxu0 0.0
    %6997 = vmatpush2.msra.mxu0 0.0
    %6998 = vmatprep.subr.mxu0 0.0
    %6999 = vmatpush2.msra.mxu0 0.0
    %7000 = vmatprep.subr.mxu0 0.0
    %7001 = vmatpush2.msra.mxu0 0.0
    %7002 = vmatprep.subr.mxu0 0.0
    %7003 = vmatpush2.msra.mxu0 0.0
    %7004 = vmatprep.subr.mxu0 0.0
    %7005 = vmatpush2.msra.mxu0 0.0
    %7006 = vmatprep.subr.mxu0 0.0
    %7007 = vmatpush2.msra.mxu0 0.0
    %7008 = vmatprep.mubr.f32.mxu0 0.0
    %7009 = vmatmul.mubr.f32.gmra.mxu0 %v6942
    %v7010 = vpop.f32.mrf.mxu0
    %v7011 = vadd.f32 %v5893, %v7010
    %v7012 = vpop.f32.mrf.mxu0
    %v7013 = vadd.f32 %v5897, %v7012
    %7014 = vdwg.mxu0
    %7015 = vmatprep.subr.mxu0 0.0
    %7016 = vmatpush1.msra.mxu0 %v5670
    %7017 = vmatprep.subr.mxu0 0.0
    %7018 = vmatpush1.msra.mxu0 %v5667
    %7019 = vmatprep.subr.mxu0 0.0
    %7020 = vmatpush1.msra.mxu0 %v5664
    %7021 = vmatprep.subr.mxu0 0.0
    %7022 = vmatpush1.msra.mxu0 %v5661
    %7023 = vmatprep.subr.mxu0 0.0
    %7024 = vmatpush1.msra.mxu0 %v5658
    %7025 = vmatprep.subr.mxu0 0.0
    %7026 = vmatpush1.msra.mxu0 %v5655
    %7027 = vmatprep.subr.mxu0 0.0
    %7028 = vmatpush1.msra.mxu0 %v5652
    %7029 = vmatprep.subr.mxu0 0.0
    %7030 = vmatpush1.msra.mxu0 %v5649
    %7031 = vmatprep.subr.mxu0 0.0
    %7032 = vmatpush1.msra.mxu0 %v5646
    %7033 = vmatprep.subr.mxu0 0.0
    %7034 = vmatpush1.msra.mxu0 %v5643
    %7035 = vmatprep.subr.mxu0 0.0
    %7036 = vmatpush1.msra.mxu0 %v5640
    %7037 = vmatprep.subr.mxu0 0.0
    %7038 = vmatpush1.msra.mxu0 %v5637
    %7039 = vmatprep.subr.mxu0 0.0
    %7040 = vmatpush1.msra.mxu0 %v5634
    %7041 = vmatprep.subr.mxu0 0.0
    %7042 = vmatpush1.msra.mxu0 %v5631
    %7043 = vmatprep.subr.mxu0 0.0
    %7044 = vmatpush1.msra.mxu0 %v5628
    %7045 = vmatprep.subr.mxu0 0.0
    %7046 = vmatpush1.msra.mxu0 %v5625
    %7047 = vmatprep.subr.mxu0 0.0
    %7048 = vmatpush2.msra.mxu0 0.0
    %7049 = vmatprep.subr.mxu0 0.0
    %7050 = vmatpush2.msra.mxu0 0.0
    %7051 = vmatprep.subr.mxu0 0.0
    %7052 = vmatpush2.msra.mxu0 0.0
    %7053 = vmatprep.subr.mxu0 0.0
    %7054 = vmatpush2.msra.mxu0 0.0
    %7055 = vmatprep.subr.mxu0 0.0
    %7056 = vmatpush2.msra.mxu0 0.0
    %7057 = vmatprep.subr.mxu0 0.0
    %7058 = vmatpush2.msra.mxu0 0.0
    %7059 = vmatprep.subr.mxu0 0.0
    %7060 = vmatpush2.msra.mxu0 0.0
    %7061 = vmatprep.subr.mxu0 0.0
    %7062 = vmatpush2.msra.mxu0 0.0
    %7063 = vmatprep.subr.mxu0 0.0
    %7064 = vmatpush2.msra.mxu0 0.0
    %7065 = vmatprep.subr.mxu0 0.0
    %7066 = vmatpush2.msra.mxu0 0.0
    %7067 = vmatprep.subr.mxu0 0.0
    %7068 = vmatpush2.msra.mxu0 0.0
    %7069 = vmatprep.subr.mxu0 0.0
    %7070 = vmatpush2.msra.mxu0 0.0
    %7071 = vmatprep.subr.mxu0 0.0
    %7072 = vmatpush2.msra.mxu0 0.0
    %7073 = vmatprep.subr.mxu0 0.0
    %7074 = vmatpush2.msra.mxu0 0.0
    %7075 = vmatprep.subr.mxu0 0.0
    %7076 = vmatpush2.msra.mxu0 0.0
    %7077 = vmatprep.subr.mxu0 0.0
    %7078 = vmatpush2.msra.mxu0 0.0
    %7079 = vmatprep.mubr.f32.mxu0 0.0
    %7080 = vmatmul.mubr.f32.gmra.mxu0 %v6942
    %v7081 = vpop.f32.mrf.mxu0
    %v7082 = vadd.f32 %v5901, %v7081
    %v7083 = vpop.f32.mrf.mxu0
    %7084 = vdwg.mxu0
    %v7086 = vrot.slane %v7011, 4
    %v7088 = vadd.f32 %v5810, %v7086
    %v7089 = vxor.u32 %v7088, 2147483648
    %v7090 = vmul.f32 %v7089, 1.442695
    %v7091 = vpow.pop %v7090
    %v7092 = vadd.f32 %v7091, 1.0
    %v7093 = vrcp.pop %v7092
    %v7094 = vmul.f32 1.0, %v7093
    %v7096 = vrot.slane %v7013, 4
    %v7098 = vadd.f32 %v5812, %v7096
    %v7099 = vxor.u32 %v7098, 2147483648
    %v7100 = vmul.f32 %v7099, 1.442695
    %v7101 = vpow.pop %v7100
    %v7102 = vadd.f32 %v7101, 1.0
    %v7103 = vrcp.pop %v7102
    %v7104 = vmul.f32 1.0, %v7103
    %v7106 = vrot.slane %v7082, 4
    %v7108 = vmul.f32 %v7094, %v7106
    %v7109 = vadd.f32 %v5886, %v7108
    %v7110 = vtanh.pop %v7109
    %v7111 = vsub.f32 1.0, %v7104
    %v7112 = vmul.f32 %v7111, %v7110
    %v7113 = vrot.slane %v6939, 6
    %v7115 = vmul.f32 %v7104, %v7113
    %v7116 = vadd.f32 %v7112, %v7115
    %7117 = vst [vmem:[#allocation2 + $0x8] sm:$0x30] %v7116
    %v7119 = vrot.slane %v7116, 4
    %7121 = vmatprep.subr.mxu0 %v5669
    %7122 = vmatpush1.msra.mxu0 %v5668
    %7123 = vmatprep.subr.mxu0 %v5666
    %7124 = vmatpush1.msra.mxu0 %v5665
    %7125 = vmatprep.subr.mxu0 %v5663
    %7126 = vmatpush1.msra.mxu0 %v5662
    %7127 = vmatprep.subr.mxu0 %v5660
    %7128 = vmatpush1.msra.mxu0 %v5659
    %7129 = vmatprep.subr.mxu0 %v5657
    %7130 = vmatpush1.msra.mxu0 %v5656
    %7131 = vmatprep.subr.mxu0 %v5654
    %7132 = vmatpush1.msra.mxu0 %v5653
    %7133 = vmatprep.subr.mxu0 %v5651
    %7134 = vmatpush1.msra.mxu0 %v5650
    %7135 = vmatprep.subr.mxu0 %v5648
    %7136 = vmatpush1.msra.mxu0 %v5647
    %7137 = vmatprep.subr.mxu0 %v5645
    %7138 = vmatpush1.msra.mxu0 %v5644
    %7139 = vmatprep.subr.mxu0 %v5642
    %7140 = vmatpush1.msra.mxu0 %v5641
    %7141 = vmatprep.subr.mxu0 %v5639
    %7142 = vmatpush1.msra.mxu0 %v5638
    %7143 = vmatprep.subr.mxu0 %v5636
    %7144 = vmatpush1.msra.mxu0 %v5635
    %7145 = vmatprep.subr.mxu0 %v5633
    %7146 = vmatpush1.msra.mxu0 %v5632
    %7147 = vmatprep.subr.mxu0 %v5630
    %7148 = vmatpush1.msra.mxu0 %v5629
    %7149 = vmatprep.subr.mxu0 %v5627
    %7150 = vmatpush1.msra.mxu0 %v5626
    %7151 = vmatprep.subr.mxu0 %v5624
    %7152 = vmatpush1.msra.mxu0 %v5623
    %7153 = vmatprep.subr.mxu0 0.0
    %7154 = vmatpush2.msra.mxu0 0.0
    %7155 = vmatprep.subr.mxu0 0.0
    %7156 = vmatpush2.msra.mxu0 0.0
    %7157 = vmatprep.subr.mxu0 0.0
    %7158 = vmatpush2.msra.mxu0 0.0
    %7159 = vmatprep.subr.mxu0 0.0
    %7160 = vmatpush2.msra.mxu0 0.0
    %7161 = vmatprep.subr.mxu0 0.0
    %7162 = vmatpush2.msra.mxu0 0.0
    %7163 = vmatprep.subr.mxu0 0.0
    %7164 = vmatpush2.msra.mxu0 0.0
    %7165 = vmatprep.subr.mxu0 0.0
    %7166 = vmatpush2.msra.mxu0 0.0
    %7167 = vmatprep.subr.mxu0 0.0
    %7168 = vmatpush2.msra.mxu0 0.0
    %7169 = vmatprep.subr.mxu0 0.0
    %7170 = vmatpush2.msra.mxu0 0.0
    %7171 = vmatprep.subr.mxu0 0.0
    %7172 = vmatpush2.msra.mxu0 0.0
    %7173 = vmatprep.subr.mxu0 0.0
    %7174 = vmatpush2.msra.mxu0 0.0
    %7175 = vmatprep.subr.mxu0 0.0
    %7176 = vmatpush2.msra.mxu0 0.0
    %7177 = vmatprep.subr.mxu0 0.0
    %7178 = vmatpush2.msra.mxu0 0.0
    %7179 = vmatprep.subr.mxu0 0.0
    %7180 = vmatpush2.msra.mxu0 0.0
    %7181 = vmatprep.subr.mxu0 0.0
    %7182 = vmatpush2.msra.mxu0 0.0
    %7183 = vmatprep.subr.mxu0 0.0
    %7184 = vmatpush2.msra.mxu0 0.0
    %7185 = vmatprep.mubr.f32.mxu0 0.0
    %7186 = vmatmul.mubr.f32.gmra.mxu0 %v7119
    %v7187 = vpop.f32.mrf.mxu0
    %v7188 = vadd.f32 %v5893, %v7187
    %v7189 = vpop.f32.mrf.mxu0
    %v7190 = vadd.f32 %v5897, %v7189
    %7191 = vdwg.mxu0
    %7192 = vmatprep.subr.mxu0 0.0
    %7193 = vmatpush1.msra.mxu0 %v5670
    %7194 = vmatprep.subr.mxu0 0.0
    %7195 = vmatpush1.msra.mxu0 %v5667
    %7196 = vmatprep.subr.mxu0 0.0
    %7197 = vmatpush1.msra.mxu0 %v5664
    %7198 = vmatprep.subr.mxu0 0.0
    %7199 = vmatpush1.msra.mxu0 %v5661
    %7200 = vmatprep.subr.mxu0 0.0
    %7201 = vmatpush1.msra.mxu0 %v5658
    %7202 = vmatprep.subr.mxu0 0.0
    %7203 = vmatpush1.msra.mxu0 %v5655
    %7204 = vmatprep.subr.mxu0 0.0
    %7205 = vmatpush1.msra.mxu0 %v5652
    %7206 = vmatprep.subr.mxu0 0.0
    %7207 = vmatpush1.msra.mxu0 %v5649
    %7208 = vmatprep.subr.mxu0 0.0
    %7209 = vmatpush1.msra.mxu0 %v5646
    %7210 = vmatprep.subr.mxu0 0.0
    %7211 = vmatpush1.msra.mxu0 %v5643
    %7212 = vmatprep.subr.mxu0 0.0
    %7213 = vmatpush1.msra.mxu0 %v5640
    %7214 = vmatprep.subr.mxu0 0.0
    %7215 = vmatpush1.msra.mxu0 %v5637
    %7216 = vmatprep.subr.mxu0 0.0
    %7217 = vmatpush1.msra.mxu0 %v5634
    %7218 = vmatprep.subr.mxu0 0.0
    %7219 = vmatpush1.msra.mxu0 %v5631
    %7220 = vmatprep.subr.mxu0 0.0
    %7221 = vmatpush1.msra.mxu0 %v5628
    %7222 = vmatprep.subr.mxu0 0.0
    %7223 = vmatpush1.msra.mxu0 %v5625
    %7224 = vmatprep.subr.mxu0 0.0
    %7225 = vmatpush2.msra.mxu0 0.0
    %7226 = vmatprep.subr.mxu0 0.0
    %7227 = vmatpush2.msra.mxu0 0.0
    %7228 = vmatprep.subr.mxu0 0.0
    %7229 = vmatpush2.msra.mxu0 0.0
    %7230 = vmatprep.subr.mxu0 0.0
    %7231 = vmatpush2.msra.mxu0 0.0
    %7232 = vmatprep.subr.mxu0 0.0
    %7233 = vmatpush2.msra.mxu0 0.0
    %7234 = vmatprep.subr.mxu0 0.0
    %7235 = vmatpush2.msra.mxu0 0.0
    %7236 = vmatprep.subr.mxu0 0.0
    %7237 = vmatpush2.msra.mxu0 0.0
    %7238 = vmatprep.subr.mxu0 0.0
    %7239 = vmatpush2.msra.mxu0 0.0
    %7240 = vmatprep.subr.mxu0 0.0
    %7241 = vmatpush2.msra.mxu0 0.0
    %7242 = vmatprep.subr.mxu0 0.0
    %7243 = vmatpush2.msra.mxu0 0.0
    %7244 = vmatprep.subr.mxu0 0.0
    %7245 = vmatpush2.msra.mxu0 0.0
    %7246 = vmatprep.subr.mxu0 0.0
    %7247 = vmatpush2.msra.mxu0 0.0
    %7248 = vmatprep.subr.mxu0 0.0
    %7249 = vmatpush2.msra.mxu0 0.0
    %7250 = vmatprep.subr.mxu0 0.0
    %7251 = vmatpush2.msra.mxu0 0.0
    %7252 = vmatprep.subr.mxu0 0.0
    %7253 = vmatpush2.msra.mxu0 0.0
    %7254 = vmatprep.subr.mxu0 0.0
    %7255 = vmatpush2.msra.mxu0 0.0
    %7256 = vmatprep.mubr.f32.mxu0 0.0
    %7257 = vmatmul.mubr.f32.gmra.mxu0 %v7119
    %v7258 = vpop.f32.mrf.mxu0
    %v7259 = vadd.f32 %v5901, %v7258
    %v7260 = vpop.f32.mrf.mxu0
    %7261 = vdwg.mxu0
    %v7263 = vrot.slane %v7188, 2
    %v7265 = vadd.f32 %v5810, %v7263
    %v7266 = vxor.u32 %v7265, 2147483648
    %v7267 = vmul.f32 %v7266, 1.442695
    %v7268 = vpow.pop %v7267
    %v7269 = vadd.f32 %v7268, 1.0
    %v7270 = vrcp.pop %v7269
    %v7271 = vmul.f32 1.0, %v7270
    %v7273 = vrot.slane %v7190, 2
    %v7275 = vadd.f32 %v5812, %v7273
    %v7276 = vxor.u32 %v7275, 2147483648
    %v7277 = vmul.f32 %v7276, 1.442695
    %v7278 = vpow.pop %v7277
    %v7279 = vadd.f32 %v7278, 1.0
    %v7280 = vrcp.pop %v7279
    %v7281 = vmul.f32 1.0, %v7280
    %v7283 = vrot.slane %v7259, 2
    %v7285 = vmul.f32 %v7271, %v7283
    %v7286 = vadd.f32 %v5886, %v7285
    %v7287 = vtanh.pop %v7286
    %v7288 = vsub.f32 1.0, %v7281
    %v7289 = vmul.f32 %v7288, %v7287
    %v7290 = vrot.slane %v7116, 6
    %v7292 = vmul.f32 %v7281, %v7290
    %v7293 = vadd.f32 %v7289, %v7292
    %7294 = vst [vmem:[#allocation2 + $0x8] sm:$0xc0] %v7293
    %v7295 = vld [vmem:[#allocation2] sm:$0xff]
    %v7296 = vld [vmem:[#allocation2 + $0x8] sm:$0xff]
    %v7297 = vld [vmem:[#allocation18] sm:$0xff]
    %v7298 = vld [vmem:[#allocation18 + $0x8] sm:$0xff]
    %v7299 = vld [vmem:[#allocation18 + $0x10] sm:$0xff]
    %v7300 = vld [vmem:[#allocation18 + $0x18] sm:$0xff]
    %v7301 = vld [vmem:[#allocation18 + $0x20] sm:$0xff]
    %v7302 = vld [vmem:[#allocation18 + $0x28] sm:$0xff]
    %v7303 = vld [vmem:[#allocation18 + $0x30] sm:$0xff]
    %v7304 = vld [vmem:[#allocation18 + $0x38] sm:$0xff]
    %v7305 = vld [vmem:[#allocation18 + $0x40] sm:$0xff]
    %v7306 = vld [vmem:[#allocation18 + $0x48] sm:$0xff]
    %v7307 = vld [vmem:[#allocation18 + $0x50] sm:$0xff]
    %v7308 = vld [vmem:[#allocation18 + $0x58] sm:$0xff]
    %v7309 = vld [vmem:[#allocation18 + $0x60] sm:$0xff]
    %v7310 = vld [vmem:[#allocation18 + $0x68] sm:$0xff]
    %v7311 = vld [vmem:[#allocation18 + $0x70] sm:$0xff]
    %v7312 = vld [vmem:[#allocation18 + $0x78] sm:$0xff]
    %v7313 = vld [vmem:[%s24] sm:$0x1]
    %v7315 = vlaneseq
    %v7316 = vshrl.u32 %v7315, 7
    %v7317 = vsub.s32 0, %v7316
    %v7318 = vrot.slane %v7313, %v7317
    %7320 = vmatprep.subr.mxu0 0.0
    %7321 = vmatpush1.msra.mxu0 %v7312
    %7322 = vmatprep.subr.mxu0 0.0
    %7323 = vmatpush1.msra.mxu0 %v7311
    %7324 = vmatprep.subr.mxu0 0.0
    %7325 = vmatpush1.msra.mxu0 %v7310
    %7326 = vmatprep.subr.mxu0 0.0
    %7327 = vmatpush1.msra.mxu0 %v7309
    %7328 = vmatprep.subr.mxu0 0.0
    %7329 = vmatpush1.msra.mxu0 %v7308
    %7330 = vmatprep.subr.mxu0 0.0
    %7331 = vmatpush1.msra.mxu0 %v7307
    %7332 = vmatprep.subr.mxu0 0.0
    %7333 = vmatpush1.msra.mxu0 %v7306
    %7334 = vmatprep.subr.mxu0 0.0
    %7335 = vmatpush1.msra.mxu0 %v7305
    %7336 = vmatprep.subr.mxu0 0.0
    %7337 = vmatpush1.msra.mxu0 %v7304
    %7338 = vmatprep.subr.mxu0 0.0
    %7339 = vmatpush1.msra.mxu0 %v7303
    %7340 = vmatprep.subr.mxu0 0.0
    %7341 = vmatpush1.msra.mxu0 %v7302
    %7342 = vmatprep.subr.mxu0 0.0
    %7343 = vmatpush1.msra.mxu0 %v7301
    %7344 = vmatprep.subr.mxu0 0.0
    %7345 = vmatpush1.msra.mxu0 %v7300
    %7346 = vmatprep.subr.mxu0 0.0
    %7347 = vmatpush1.msra.mxu0 %v7299
    %7348 = vmatprep.subr.mxu0 0.0
    %7349 = vmatpush1.msra.mxu0 %v7298
    %7350 = vmatprep.subr.mxu0 0.0
    %7351 = vmatpush1.msra.mxu0 %v7297
    %7352 = vmatprep.subr.mxu0 0.0
    %7353 = vmatpush2.msra.mxu0 0.0
    %7354 = vmatprep.subr.mxu0 0.0
    %7355 = vmatpush2.msra.mxu0 0.0
    %7356 = vmatprep.subr.mxu0 0.0
    %7357 = vmatpush2.msra.mxu0 0.0
    %7358 = vmatprep.subr.mxu0 0.0
    %7359 = vmatpush2.msra.mxu0 0.0
    %7360 = vmatprep.subr.mxu0 0.0
    %7361 = vmatpush2.msra.mxu0 0.0
    %7362 = vmatprep.subr.mxu0 0.0
    %7363 = vmatpush2.msra.mxu0 0.0
    %7364 = vmatprep.subr.mxu0 0.0
    %7365 = vmatpush2.msra.mxu0 0.0
    %7366 = vmatprep.subr.mxu0 0.0
    %7367 = vmatpush2.msra.mxu0 0.0
    %7368 = vmatprep.subr.mxu0 0.0
    %7369 = vmatpush2.msra.mxu0 0.0
    %7370 = vmatprep.subr.mxu0 0.0
    %7371 = vmatpush2.msra.mxu0 0.0
    %7372 = vmatprep.subr.mxu0 0.0
    %7373 = vmatpush2.msra.mxu0 0.0
    %7374 = vmatprep.subr.mxu0 0.0
    %7375 = vmatpush2.msra.mxu0 0.0
    %7376 = vmatprep.subr.mxu0 0.0
    %7377 = vmatpush2.msra.mxu0 0.0
    %7378 = vmatprep.subr.mxu0 0.0
    %7379 = vmatpush2.msra.mxu0 0.0
    %7380 = vmatprep.subr.mxu0 0.0
    %7381 = vmatpush2.msra.mxu0 0.0
    %7382 = vmatprep.subr.mxu0 0.0
    %7383 = vmatpush2.msra.mxu0 0.0
    %7384 = vmatprep.mubr.f32.mxu0 0.0
    %7385 = vmatmul.mubr.f32.gmra.mxu0 %v7295
    %v7386 = vpop.f32.mrf.mxu0
    %v7387 = vadd.f32 %v7318, %v7386
    %v7388 = vpop.f32.mrf.mxu0
    %7389 = vmatprep.mubr.f32.mxu0 0.0
    %7390 = vmatmul.mubr.f32.gmra.mxu0 %v7296
    %v7391 = vpop.f32.mrf.mxu0
    %v7392 = vadd.f32 %v7318, %v7391
    %v7393 = vpop.f32.mrf.mxu0
    %7394 = vdwg.mxu0
    %7395 = vst [vmem:[%s27] sm:$0xff] %v7387
    %7396 = vst [vmem:[%s27 + $0x8] sm:$0xff] %v7392
    // Predicated region
    $region138: #{_lambda_.1} parent=1 // pred_check
      _
    $region139: #{_lambda_.1} parent=1 // pred_check_branch
      %7398 = sbr.rel (0) target = $region141
    $region140: #{_lambda_.1} parent=1 // pred_region
      _
    $region141: #{_lambda_.1} parent=1 // pred_fallthru
      _
    // Predicated region
    $region142: #{_lambda_.1} parent=1 // pred_check
      _
    $region143: #{_lambda_.1} parent=1 // pred_check_branch
      %7400 = sbr.rel (0) target = $region145
    $region144: #{_lambda_.1} parent=1 // pred_region
      _
    $region145: #{_lambda_.1} parent=1 // pred_fallthru
      _
    // Predicated region
    $region146: #{_lambda_.1} parent=1 // pred_check
      _
    $region147: #{_lambda_.1} parent=1 // pred_check_branch
      %7402 = sbr.rel (0) target = $region149
    $region148: #{_lambda_.1} parent=1 // pred_region
      _
    $region149: #{_lambda_.1} parent=1 // pred_fallthru
      _
    // Predicated region
    $region150: #{_lambda_.1} parent=1 // pred_check
      _
    $region151: #{_lambda_.1} parent=1 // pred_check_branch
      %7404 = sbr.rel (0) target = $region153
    $region152: #{_lambda_.1} parent=1 // pred_region
      _
    $region153: #{_lambda_.1} parent=1 // pred_fallthru
      _
    // Predicated region
    $region154: #{_lambda_.1} parent=1 // pred_check
      _
    $region155: #{_lambda_.1} parent=1 // pred_check_branch
      %7406 = sbr.rel (0) target = $region157
    $region156: #{_lambda_.1} parent=1 // pred_region
      _
    $region157: #{_lambda_.1} parent=1 // pred_fallthru
      _
    // Predicated region
    $region158: #{_lambda_.1} parent=1 // pred_check
      _
    $region159: #{_lambda_.1} parent=1 // pred_check_branch
      %7408 = sbr.rel (0) target = $region161
    $region160: #{_lambda_.1} parent=1 // pred_region
      _
    $region161: #{_lambda_.1} parent=1 // pred_fallthru
      _
    %7409 = vsyncpa [#allocation6], 1
    %7410 = vsyncpa [#allocation8], 1
    %7411 = vsyncpa [#allocation11], 1
    %7412 = vsyncpa [#allocation14], 1
    %7413 = vsyncpa [#allocation17], 1

</llo_original>
